<compile_context>
chip_gen: v6e
topology: v6e:2x2x1
jax: 0.10.0
libtpu: 0.0.40
codegen_flags: <defaults>
</compile_context>

<pallas_src>
import functools
import math

import numpy as np
import jax
import jax.numpy as jnp
from jax.experimental import pallas as pl
from jax.experimental.pallas import tpu as pltpu

# ---------------- config (small, consistent with the module) ----------------
HIDDEN = 128          # config['model']['hidden_dim']
ENC_HIDDEN = 256      # stand-in for CodeBERT hidden size -> projection is a real Linear
NUM_HEADS = 4         # config['model']['num_heads']
NUM_LAYERS = 4        # config['model']['num_layers']  (// 2 = 2 layers per encoder)
SEQ = 128             # config['model']['max_seq_length']
NUM_STATEMENTS = 10
NUM_FUNCTIONS = 5

VULN_TYPES = [
    'reentrancy', 'integer_overflow', 'timestamp_dependence', 'unchecked_call',
    'tx_origin', 'transaction_order_dependence', 'unhandled_exceptions',
]
N_VULN = len(VULN_TYPES)
N_TX_LAYERS = NUM_LAYERS // 2 * 2   # 2 function + 2 contract layers, stacked


# ------------------------------ pooling matrices ------------------------------
def make_statement_pool_matrix(seq_len, actual_statements, num_slots=NUM_STATEMENTS):
    """Mirrors _encode_statements chunked mean pooling (including dropped tail tokens
    when seq_len % actual != 0 -- same as the PyTorch reference)."""
    P = np.zeros((num_slots, seq_len), np.float32)
    actual = min(actual_statements, num_slots)
    if actual == 0:
        P[0, :] = 1.0 / seq_len
    else:
        tps = seq_len // actual
        for i in range(actual):
            start = i * tps
            end = min((i + 1) * tps, seq_len)
            P[i, start:end] = 1.0 / (end - start)
    return jnp.asarray(P)


def make_function_pool_matrix(num_in=NUM_STATEMENTS, num_out=NUM_FUNCTIONS):
    """Mirrors _encode_functions pooling (10 -> 5)."""
    P = np.zeros((num_out, num_in), np.float32)
    if num_in <= num_out:
        for i in range(num_in):
            P[i, i] = 1.0
    else:
        chunk = num_in // num_out
        for i in range(num_out):
            start = i * chunk
            end = (i + 1) * chunk if i < num_out - 1 else num_in
            P[i, start:end] = 1.0 / (end - start)
    return jnp.asarray(P)


# ------------------------------ fused Pallas kernel ---------------------------
def _layer_norm(x, w, b, eps=1e-5):
    mean = jnp.mean(x, axis=-1, keepdims=True)
    var = jnp.mean(jnp.square(x - mean), axis=-1, keepdims=True)
    return (x - mean) * jax.lax.rsqrt(var + eps) * w + b


def _fused_encoder_kernel(
    # per-batch inputs
    x_ref, scale_ref,
    # weights (resident in VMEM, constant index maps)
    proj_w_ref, proj_b_ref, p_stmt_ref, p_func_ref,
    qkv_w_ref, qkv_b_ref, out_w_ref, out_b_ref,
    ln1_w_ref, ln1_b_ref, ff1_w_ref, ff1_b_ref,
    ff2_w_ref, ff2_b_ref, ln2_w_ref, ln2_b_ref,
    vuln_w_ref, vuln_b_ref,
    # outputs
    tok_o_ref, stmt_o_ref, func_o_ref, contract_o_ref, vuln_o_ref,
    *, num_heads, d_model,
):
    head_dim = d_model // num_heads
    scale = 1.0 / math.sqrt(head_dim)

    def tx_layer(h, l):
        # nn.TransformerEncoderLayer (norm_first=False, activation=relu), eval mode.
        qkv = jnp.dot(h, qkv_w_ref[l], preferred_element_type=jnp.float32) + qkv_b_ref[l]
        q = qkv[:, :d_model]
        k = qkv[:, d_model:2 * d_model]
        v = qkv[:, 2 * d_model:]
        # batched heads: (H, T, head_dim)
        qh = jnp.stack([q[:, i * head_dim:(i + 1) * head_dim] for i in range(num_heads)], axis=0)
        kh = jnp.stack([k[:, i * head_dim:(i + 1) * head_dim] for i in range(num_heads)], axis=0)
        vh = jnp.stack([v[:, i * head_dim:(i + 1) * head_dim] for i in range(num_heads)], axis=0)
        s = jnp.einsum('htd,hsd->hts', qh, kh, preferred_element_type=jnp.float32) * scale
        p = jax.nn.softmax(s, axis=-1)
        o = jnp.einsum('hts,hsd->htd', p, vh, preferred_element_type=jnp.float32)
        attn = jnp.concatenate([o[i] for i in range(num_heads)], axis=-1)          # (T, D)
        attn = jnp.dot(attn, out_w_ref[l], preferred_element_type=jnp.float32) + out_b_ref[l]
        h1 = _layer_norm(h + attn, ln1_w_ref[l], ln1_b_ref[l])
        ffh = jax.nn.relu(
            jnp.dot(h1, ff1_w_ref[l], preferred_element_type=jnp.float32) + ff1_b_ref[l])
        ff = jnp.dot(ffh, ff2_w_ref[l], preferred_element_type=jnp.float32) + ff2_b_ref[l]
        return _layer_norm(h1 + ff, ln2_w_ref[l], ln2_b_ref[l])

    # ---- projection (CodeBERT hidden -> hidden_dim) ----
    x = x_ref[0]                                                        # (SEQ, ENC_HIDDEN)
    tokens = jnp.dot(x, proj_w_ref[...], preferred_element_type=jnp.float32) + proj_b_ref[...]
    tok_o_ref[0] = tokens                                               # (SEQ, D)

    # ---- statement pooling as a single matmul ----
    stmts = jnp.dot(p_stmt_ref[...], tokens, preferred_element_type=jnp.float32)   # (10, D)
    stmt_o_ref[0] = stmts

    # ---- function encoder: 2 transformer layers + pool 10 -> 5 ----
    f = stmts
    f = tx_layer(f, 0)
    f = tx_layer(f, 1)
    funcs = jnp.dot(p_func_ref[...], f, preferred_element_type=jnp.float32)        # (5, D)
    func_o_ref[0] = funcs

    # ---- contract encoder: 2 transformer layers + mean over seq ----
    c = funcs
    c = tx_layer(c, 2)
    c = tx_layer(c, 3)
    contract = jnp.mean(c, axis=0, keepdims=True)                                  # (1, D)
    contract_o_ref[0] = contract

    # ---- 7 vulnerability heads fused into one lane-dense matmul ----
    vuln = jnp.dot(contract, vuln_w_ref[...], preferred_element_type=jnp.float32) + vuln_b_ref[...]
    vuln_o_ref[0] = vuln * scale_ref[0]                                             # (1, 7*D)


def fused_encoder_pallas(token_hidden, scale_flat, packed):
    b, s, enc_d = token_hidden.shape
    d = HIDDEN
    kern = functools.partial(_fused_encoder_kernel, num_heads=NUM_HEADS, d_model=d)

    def wspec(arr):
        shape = arr.shape
        return pl.BlockSpec(shape, lambda i, _n=len(shape): (0,) * _n)

    weight_args = [
        packed['proj_w'], packed['proj_b'], packed['p_stmt'], packed['p_func'],
        packed['qkv_w'], packed['qkv_b'], packed['out_w'], packed['out_b'],
        packed['ln1_w'], packed['ln1_b'], packed['ff1_w'], packed['ff1_b'],
        packed['ff2_w'], packed['ff2_b'], packed['ln2_w'], packed['ln2_b'],
        packed['vuln_w'], packed['vuln_b'],
    ]

    out_shapes = (
        jax.ShapeDtypeStruct((b, s, d), jnp.float32),                 # tokens
        jax.ShapeDtypeStruct((b, NUM_STATEMENTS, d), jnp.float32),    # statements
        jax.ShapeDtypeStruct((b, NUM_FUNCTIONS, d), jnp.float32),     # functions
        jax.ShapeDtypeStruct((b, 1, d), jnp.float32),                 # contract
        jax.ShapeDtypeStruct((b, 1, N_VULN * d), jnp.float32),        # vuln (lane-dense)
    )
    out_specs = (
        pl.BlockSpec((1, s, d), lambda i: (i, 0, 0)),
        pl.BlockSpec((1, NUM_STATEMENTS, d), lambda i: (i, 0, 0)),
        pl.BlockSpec((1, NUM_FUNCTIONS, d), lambda i: (i, 0, 0)),
        pl.BlockSpec((1, 1, d), lambda i: (i, 0, 0)),
        pl.BlockSpec((1, 1, N_VULN * d), lambda i: (i, 0, 0)),
    )
    in_specs = [
        pl.BlockSpec((1, s, enc_d), lambda i: (i, 0, 0)),             # token_hidden
        pl.BlockSpec((1, 1, N_VULN * d), lambda i: (i, 0, 0)),        # per-type scale
    ] + [wspec(w) for w in weight_args]

    return pl.pallas_call(
        kern,
        out_shape=out_shapes,
        grid=(b,),
        in_specs=in_specs,
        out_specs=out_specs,
        compiler_params=pltpu.CompilerParams(
            dimension_semantics=("parallel",),      # v7x: 2 TCs split the batch
            vmem_limit_bytes=32 * 1024 * 1024,
        ),
    )(token_hidden, scale_flat, *weight_args)


# ------------------------------ parameter init -------------------------------
def _uniform(key, shape, fan_in):
    bound = 1.0 / math.sqrt(fan_in)
    return jax.random.uniform(key, shape, jnp.float32, -bound, bound)


def init_transformer_layer(key, d):
    ks = jax.random.split(key, 6)
    return dict(
        qkv_w=_uniform(ks[0], (d, 3 * d), d),
        qkv_b=jnp.zeros((1, 3 * d), jnp.float32),
        out_w=_uniform(ks[1], (d, d), d),
        out_b=jnp.zeros((1, d), jnp.float32),
        ln1_w=jnp.ones((1, d), jnp.float32),
        ln1_b=jnp.zeros((1, d), jnp.float32),
        ff1_w=_uniform(ks[2], (d, 4 * d), d),
        ff1_b=_uniform(ks[3], (1, 4 * d), d),
        ff2_w=_uniform(ks[4], (4 * d, d), 4 * d),
        ff2_b=_uniform(ks[5], (1, d), 4 * d),
        ln2_w=jnp.ones((1, d), jnp.float32),
        ln2_b=jnp.zeros((1, d), jnp.float32),
    )


def init_params(key):
    n_enc_layers = NUM_LAYERS // 2
    keys = jax.random.split(key, 4 + 2 * n_enc_layers)
    return dict(
        proj_w=_uniform(keys[0], (ENC_HIDDEN, HIDDEN), ENC_HIDDEN),
        proj_b=_uniform(keys[1], (1, HIDDEN), ENC_HIDDEN),
        vuln_w=_uniform(keys[2], (N_VULN, HIDDEN, HIDDEN), HIDDEN),
        vuln_b=_uniform(keys[3], (N_VULN, 1, HIDDEN), HIDDEN),
        function_layers=[init_transformer_layer(keys[4 + i], HIDDEN)
                         for i in range(n_enc_layers)],
        contract_layers=[init_transformer_layer(keys[4 + n_enc_layers + i], HIDDEN)
                         for i in range(n_enc_layers)],
    )


def pack_params(params, actual_statements):
    """Stack per-layer weights along a leading layer axis and flatten vuln heads so the
    whole forward runs inside one pallas_call with all weights VMEM-resident."""
    layers = list(params['function_layers']) + list(params['contract_layers'])

    def stack(name):
        return jnp.stack([lp[name] for lp in layers], axis=0)

    d = HIDDEN
    packed = dict(
        proj_w=params['proj_w'], proj_b=params['proj_b'],
        p_stmt=make_statement_pool_matrix(SEQ, actual_statements),
        p_func=make_function_pool_matrix(),
        qkv_w=stack('qkv_w'), qkv_b=stack('qkv_b'),
        out_w=stack('out_w'), out_b=stack('out_b'),
        ln1_w=stack('ln1_w'), ln1_b=stack('ln1_b'),
        ff1_w=stack('ff1_w'), ff1_b=stack('ff1_b'),
        ff2_w=stack('ff2_w'), ff2_b=stack('ff2_b'),
        ln2_w=stack('ln2_w'), ln2_b=stack('ln2_b'),
        # (7, D, D) [in,out] -> (D, 7*D) so all 7 heads are one lane-dense matmul
        vuln_w=jnp.transpose(params['vuln_w'], (1, 0, 2)).reshape(d, N_VULN * d),
        vuln_b=params['vuln_b'].reshape(1, N_VULN * d),
    )
    return packed


# --------------------------------- forward -----------------------------------
def encoder_forward(params, token_hidden, pattern_counts, actual_statements=10):
    """token_hidden: (B, SEQ, ENC_HIDDEN) — frozen token-encoder last_hidden_state.
       pattern_counts: (B, 7) float — per-type vulnerability-pattern regex counts."""
    b = token_hidden.shape[0]
    d = HIDDEN

    packed = pack_params(params, actual_statements)

    # per-type scale (1 + 0.1*count), pre-broadcast to 7*D lanes for the fused vuln head
    scale = 1.0 + 0.1 * pattern_counts.astype(jnp.float32)            # (B, 7)
    scale_flat = jnp.repeat(scale, d, axis=1).reshape(b, 1, N_VULN * d)

    tokens, statements, functions, contract3, vuln_flat = fused_encoder_pallas(
        token_hidden.astype(jnp.float32), scale_flat, packed)

    contract = contract3[:, 0, :]                                      # (B, D)
    vuln_mat = vuln_flat[:, 0, :].reshape(b, N_VULN, d)                # (B, 7, D)
    vuln_features = {name: vuln_mat[:, i, :][:, None, :]               # (B, 1, D)
                     for i, name in enumerate(VULN_TYPES)}

    # shapes match the PyTorch batched (_batch_results) path
    return {
        'tokens': tokens[:, None, :, :],          # (B, 1, SEQ, D)
        'statements': statements[:, None, :, :],  # (B, 1, 10, D)
        'functions': functions[:, None, :, :],    # (B, 1, 5, D)
        'contract': contract,                     # (B, D)
        'vulnerability_features': vuln_features,  # each (B, 1, D)
    }


# ----------------------------------- main -------------------------------------
if __name__ == "__main__":
    key = jax.random.PRNGKey(0)
    kp, kx = jax.random.split(key)
    params = init_params(kp)

    B = 2
    # TODO(synk): RobertaTokenizer + pretrained CodeBERT are host-side / checkpoint-
    # dependent; this tensor stands in for token_encoder(**inputs).last_hidden_state.
    token_hidden = jax.random.normal(kx, (B, SEQ, ENC_HIDDEN), jnp.float32)
    # TODO(synk): regex pattern counting over the source string is done host-side.
    pattern_counts = jnp.array([[1., 0., 2., 0., 1., 0., 3.],
                                [0., 2., 0., 1., 0., 0., 1.]], jnp.float32)

    out = encoder_forward(params, token_hidden, pattern_counts, actual_statements=10)
    out = jax.block_until_ready(out)

    assert out['tokens'].shape == (B, 1, SEQ, HIDDEN)
    assert out['statements'].shape == (B, 1, NUM_STATEMENTS, HIDDEN)
    assert out['functions'].shape == (B, 1, NUM_FUNCTIONS, HIDDEN)
    assert out['contract'].shape == (B, HIDDEN)
    assert all(v.shape == (B, 1, HIDDEN) for v in out['vulnerability_features'].values())
    assert all(bool(jnp.all(jnp.isfinite(v))) for v in
               [out['tokens'], out['statements'], out['functions'], out['contract']])
    print("KERNEL_OK")
</pallas_src>

<mosaic_0001>
module attributes {stable_mosaic.version = 11 : i64} {
  func.func @_fused_encoder_kernel(%arg0: i32, %arg1: memref<1x128x256xf32, #tpu.memory_space<vmem>>, %arg2: memref<1x1x896xf32, #tpu.memory_space<vmem>>, %arg3: memref<256x128xf32, #tpu.memory_space<vmem>>, %arg4: memref<1x128xf32, #tpu.memory_space<vmem>>, %arg5: memref<10x128xf32, #tpu.memory_space<vmem>>, %arg6: memref<5x10xf32, #tpu.memory_space<vmem>>, %arg7: memref<4x128x384xf32, #tpu.memory_space<vmem>>, %arg8: memref<4x1x384xf32, #tpu.memory_space<vmem>>, %arg9: memref<4x128x128xf32, #tpu.memory_space<vmem>>, %arg10: memref<4x1x128xf32, #tpu.memory_space<vmem>>, %arg11: memref<4x1x128xf32, #tpu.memory_space<vmem>>, %arg12: memref<4x1x128xf32, #tpu.memory_space<vmem>>, %arg13: memref<4x128x512xf32, #tpu.memory_space<vmem>>, %arg14: memref<4x1x512xf32, #tpu.memory_space<vmem>>, %arg15: memref<4x512x128xf32, #tpu.memory_space<vmem>>, %arg16: memref<4x1x128xf32, #tpu.memory_space<vmem>>, %arg17: memref<4x1x128xf32, #tpu.memory_space<vmem>>, %arg18: memref<4x1x128xf32, #tpu.memory_space<vmem>>, %arg19: memref<128x896xf32, #tpu.memory_space<vmem>>, %arg20: memref<1x896xf32, #tpu.memory_space<vmem>>, %arg21: memref<1x128x128xf32, #tpu.memory_space<vmem>>, %arg22: memref<1x10x128xf32, #tpu.memory_space<vmem>>, %arg23: memref<1x5x128xf32, #tpu.memory_space<vmem>>, %arg24: memref<1x1x128xf32, #tpu.memory_space<vmem>>, %arg25: memref<1x1x896xf32, #tpu.memory_space<vmem>>) attributes {dimension_semantics = [#tpu.dimension_semantics<parallel>], iteration_bounds = array<i64: 2>, scalar_prefetch = 0 : i64, scratch_operands = 0 : i64, tpu.core_type = #tpu.core_type<tc>, window_params = [{transform_indices = @transform_0, window_bounds = array<i64: 1, 128, 256>}, {transform_indices = @transform_1, window_bounds = array<i64: 1, 1, 896>}, {pipeline_mode = #tpu.pipeline_mode<synchronous>, transform_indices = @transform_2, window_bounds = array<i64: 256, 128>}, {pipeline_mode = #tpu.pipeline_mode<synchronous>, transform_indices = @transform_3, window_bounds = array<i64: 1, 128>}, {pipeline_mode = #tpu.pipeline_mode<synchronous>, transform_indices = @transform_4, window_bounds = array<i64: 10, 128>}, {pipeline_mode = #tpu.pipeline_mode<synchronous>, transform_indices = @transform_5, window_bounds = array<i64: 5, 10>}, {pipeline_mode = #tpu.pipeline_mode<synchronous>, transform_indices = @transform_6, window_bounds = array<i64: 4, 128, 384>}, {pipeline_mode = #tpu.pipeline_mode<synchronous>, transform_indices = @transform_7, window_bounds = array<i64: 4, 1, 384>}, {pipeline_mode = #tpu.pipeline_mode<synchronous>, transform_indices = @transform_8, window_bounds = array<i64: 4, 128, 128>}, {pipeline_mode = #tpu.pipeline_mode<synchronous>, transform_indices = @transform_9, window_bounds = array<i64: 4, 1, 128>}, {pipeline_mode = #tpu.pipeline_mode<synchronous>, transform_indices = @transform_10, window_bounds = array<i64: 4, 1, 128>}, {pipeline_mode = #tpu.pipeline_mode<synchronous>, transform_indices = @transform_11, window_bounds = array<i64: 4, 1, 128>}, {pipeline_mode = #tpu.pipeline_mode<synchronous>, transform_indices = @transform_12, window_bounds = array<i64: 4, 128, 512>}, {pipeline_mode = #tpu.pipeline_mode<synchronous>, transform_indices = @transform_13, window_bounds = array<i64: 4, 1, 512>}, {pipeline_mode = #tpu.pipeline_mode<synchronous>, transform_indices = @transform_14, window_bounds = array<i64: 4, 512, 128>}, {pipeline_mode = #tpu.pipeline_mode<synchronous>, transform_indices = @transform_15, window_bounds = array<i64: 4, 1, 128>}, {pipeline_mode = #tpu.pipeline_mode<synchronous>, transform_indices = @transform_16, window_bounds = array<i64: 4, 1, 128>}, {pipeline_mode = #tpu.pipeline_mode<synchronous>, transform_indices = @transform_17, window_bounds = array<i64: 4, 1, 128>}, {pipeline_mode = #tpu.pipeline_mode<synchronous>, transform_indices = @transform_18, window_bounds = array<i64: 128, 896>}, {pipeline_mode = #tpu.pipeline_mode<synchronous>, transform_indices = @transform_19, window_bounds = array<i64: 1, 896>}, {transform_indices = @transform_20, window_bounds = array<i64: 1, 128, 128>}, {transform_indices = @transform_21, window_bounds = array<i64: 1, 10, 128>}, {transform_indices = @transform_22, window_bounds = array<i64: 1, 5, 128>}, {transform_indices = @transform_23, window_bounds = array<i64: 1, 1, 128>}, {transform_indices = @transform_24, window_bounds = array<i64: 1, 1, 896>}]} {
    %c0 = arith.constant 0 : index
    %c0_0 = arith.constant 0 : index
    %c0_1 = arith.constant 0 : index
    %0 = vector.load %arg1[%c0, %c0_0, %c0_1] : memref<1x128x256xf32, #tpu.memory_space<vmem>>, vector<1x128x256xf32>
    %1 = vector.shape_cast %0 : vector<1x128x256xf32> to vector<128x256xf32>
    %c0_2 = arith.constant 0 : index
    %c0_3 = arith.constant 0 : index
    %2 = vector.load %arg3[%c0_2, %c0_3] : memref<256x128xf32, #tpu.memory_space<vmem>>, vector<256x128xf32>
    %cst = arith.constant dense<0.000000e+00> : vector<128x128xf32>
    %3 = tpu.matmul %1, %2, %cst {dimension_numbers = #tpu.dot_dimension_numbers<[1], [0], [0], [1], [0, 0, 1, 1], [], []>} : vector<128x256xf32>, vector<256x128xf32>, vector<128x128xf32> -> vector<128x128xf32>
    %c0_4 = arith.constant 0 : index
    %c0_5 = arith.constant 0 : index
    %4 = vector.load %arg4[%c0_4, %c0_5] : memref<1x128xf32, #tpu.memory_space<vmem>>, vector<1x128xf32>
    %5 = vector.broadcast %4 : vector<1x128xf32> to vector<128x128xf32>
    %6 = arith.addf %3, %5 : vector<128x128xf32>
    %c0_6 = arith.constant 0 : index
    %c0_7 = arith.constant 0 : index
    %c0_8 = arith.constant 0 : index
    %7 = vector.load %arg21[%c0_6, %c0_7, %c0_8] : memref<1x128x128xf32, #tpu.memory_space<vmem>>, vector<1x128x128xf32>
    %8 = vector.shape_cast %7 : vector<1x128x128xf32> to vector<128x128xf32>
    %9 = vector.shape_cast %6 : vector<128x128xf32> to vector<1x128x128xf32>
    tpu.vector_store %arg21[%c0_6, %c0_7, %c0_8], %9 {strides = array<i32>} : memref<1x128x128xf32, #tpu.memory_space<vmem>>, vector<1x128x128xf32>,
    %c0_9 = arith.constant 0 : index
    %c0_10 = arith.constant 0 : index
    %10 = vector.load %arg5[%c0_9, %c0_10] : memref<10x128xf32, #tpu.memory_space<vmem>>, vector<10x128xf32>
    %cst_11 = arith.constant dense<0.000000e+00> : vector<10x128xf32>
    %11 = tpu.matmul %10, %6, %cst_11 {dimension_numbers = #tpu.dot_dimension_numbers<[1], [0], [0], [1], [0, 0, 1, 1], [], []>} : vector<10x128xf32>, vector<128x128xf32>, vector<10x128xf32> -> vector<10x128xf32>
    %c0_12 = arith.constant 0 : index
    %c0_13 = arith.constant 0 : index
    %c0_14 = arith.constant 0 : index
    %12 = vector.load %arg22[%c0_12, %c0_13, %c0_14] : memref<1x10x128xf32, #tpu.memory_space<vmem>>, vector<1x10x128xf32>
    %13 = vector.shape_cast %12 : vector<1x10x128xf32> to vector<10x128xf32>
    %14 = vector.shape_cast %11 : vector<10x128xf32> to vector<1x10x128xf32>
    tpu.vector_store %arg22[%c0_12, %c0_13, %c0_14], %14 {strides = array<i32>} : memref<1x10x128xf32, #tpu.memory_space<vmem>>, vector<1x10x128xf32>,
    %c0_15 = arith.constant 0 : index
    %c0_16 = arith.constant 0 : index
    %c0_17 = arith.constant 0 : index
    %15 = vector.load %arg7[%c0_15, %c0_16, %c0_17] : memref<4x128x384xf32, #tpu.memory_space<vmem>>, vector<1x128x384xf32>
    %16 = vector.shape_cast %15 : vector<1x128x384xf32> to vector<128x384xf32>
    %cst_18 = arith.constant dense<0.000000e+00> : vector<10x384xf32>
    %17 = tpu.matmul %11, %16, %cst_18 {dimension_numbers = #tpu.dot_dimension_numbers<[1], [0], [0], [1], [0, 0, 1, 1], [], []>} : vector<10x128xf32>, vector<128x384xf32>, vector<10x384xf32> -> vector<10x384xf32>
    %c0_19 = arith.constant 0 : index
    %c0_20 = arith.constant 0 : index
    %c0_21 = arith.constant 0 : index
    %18 = vector.load %arg8[%c0_19, %c0_20, %c0_21] : memref<4x1x384xf32, #tpu.memory_space<vmem>>, vector<1x1x384xf32>
    %19 = vector.shape_cast %18 : vector<1x1x384xf32> to vector<1x384xf32>
    %20 = vector.broadcast %19 : vector<1x384xf32> to vector<10x384xf32>
    %21 = arith.addf %17, %20 : vector<10x384xf32>
    %22 = vector.extract_strided_slice %21 {offsets = [0, 0], sizes = [10, 128], strides = [1, 1]} : vector<10x384xf32> to vector<10x128xf32>
    %23 = vector.extract_strided_slice %21 {offsets = [0, 128], sizes = [10, 128], strides = [1, 1]} : vector<10x384xf32> to vector<10x128xf32>
    %24 = vector.extract_strided_slice %21 {offsets = [0, 256], sizes = [10, 128], strides = [1, 1]} : vector<10x384xf32> to vector<10x128xf32>
    %25 = vector.extract_strided_slice %22 {offsets = [0, 0], sizes = [10, 32], strides = [1, 1]} : vector<10x128xf32> to vector<10x32xf32>
    %26 = vector.extract_strided_slice %22 {offsets = [0, 32], sizes = [10, 32], strides = [1, 1]} : vector<10x128xf32> to vector<10x32xf32>
    %27 = vector.extract_strided_slice %22 {offsets = [0, 64], sizes = [10, 32], strides = [1, 1]} : vector<10x128xf32> to vector<10x32xf32>
    %28 = vector.extract_strided_slice %22 {offsets = [0, 96], sizes = [10, 32], strides = [1, 1]} : vector<10x128xf32> to vector<10x32xf32>
    %29 = vector.shape_cast %25 : vector<10x32xf32> to vector<1x10x32xf32>
    %30 = vector.shape_cast %26 : vector<10x32xf32> to vector<1x10x32xf32>
    %31 = vector.shape_cast %27 : vector<10x32xf32> to vector<1x10x32xf32>
    %32 = vector.shape_cast %28 : vector<10x32xf32> to vector<1x10x32xf32>
    %33 = tpu.concatenate %29, %30, %31, %32 in 0 : vector<1x10x32xf32>, vector<1x10x32xf32>, vector<1x10x32xf32>, vector<1x10x32xf32> -> vector<4x10x32xf32>
    %34 = vector.extract_strided_slice %23 {offsets = [0, 0], sizes = [10, 32], strides = [1, 1]} : vector<10x128xf32> to vector<10x32xf32>
    %35 = vector.extract_strided_slice %23 {offsets = [0, 32], sizes = [10, 32], strides = [1, 1]} : vector<10x128xf32> to vector<10x32xf32>
    %36 = vector.extract_strided_slice %23 {offsets = [0, 64], sizes = [10, 32], strides = [1, 1]} : vector<10x128xf32> to vector<10x32xf32>
    %37 = vector.extract_strided_slice %23 {offsets = [0, 96], sizes = [10, 32], strides = [1, 1]} : vector<10x128xf32> to vector<10x32xf32>
    %38 = vector.shape_cast %34 : vector<10x32xf32> to vector<1x10x32xf32>
    %39 = vector.shape_cast %35 : vector<10x32xf32> to vector<1x10x32xf32>
    %40 = vector.shape_cast %36 : vector<10x32xf32> to vector<1x10x32xf32>
    %41 = vector.shape_cast %37 : vector<10x32xf32> to vector<1x10x32xf32>
    %42 = tpu.concatenate %38, %39, %40, %41 in 0 : vector<1x10x32xf32>, vector<1x10x32xf32>, vector<1x10x32xf32>, vector<1x10x32xf32> -> vector<4x10x32xf32>
    %43 = vector.extract_strided_slice %24 {offsets = [0, 0], sizes = [10, 32], strides = [1, 1]} : vector<10x128xf32> to vector<10x32xf32>
    %44 = vector.extract_strided_slice %24 {offsets = [0, 32], sizes = [10, 32], strides = [1, 1]} : vector<10x128xf32> to vector<10x32xf32>
    %45 = vector.extract_strided_slice %24 {offsets = [0, 64], sizes = [10, 32], strides = [1, 1]} : vector<10x128xf32> to vector<10x32xf32>
    %46 = vector.extract_strided_slice %24 {offsets = [0, 96], sizes = [10, 32], strides = [1, 1]} : vector<10x128xf32> to vector<10x32xf32>
    %47 = vector.shape_cast %43 : vector<10x32xf32> to vector<1x10x32xf32>
    %48 = vector.shape_cast %44 : vector<10x32xf32> to vector<1x10x32xf32>
    %49 = vector.shape_cast %45 : vector<10x32xf32> to vector<1x10x32xf32>
    %50 = vector.shape_cast %46 : vector<10x32xf32> to vector<1x10x32xf32>
    %51 = tpu.concatenate %47, %48, %49, %50 in 0 : vector<1x10x32xf32>, vector<1x10x32xf32>, vector<1x10x32xf32>, vector<1x10x32xf32> -> vector<4x10x32xf32>
    "tpu.trace_start"() <{level = 10 : i32, message = "htd,hsd->hts"}> : () -> ()
    %cst_22 = arith.constant dense<0.000000e+00> : vector<4x10x10xf32>
    %52 = tpu.matmul %33, %42, %cst_22 {dimension_numbers = #tpu.dot_dimension_numbers<[2], [2], [1], [1], [0, 0, 0, 1, 1, 1], [0], [0]>} : vector<4x10x32xf32>, vector<4x10x32xf32>, vector<4x10x10xf32> -> vector<4x10x10xf32>
    "tpu.trace_stop"() : () -> ()
    %cst_23 = arith.constant 0.176776692 : f32
    %53 = vector.broadcast %cst_23 : f32 to vector<4x10x10xf32>
    %54 = arith.mulf %52, %53 : vector<4x10x10xf32>
    %cst_24 = arith.constant dense<0xFF800000> : vector<4x10xf32>
    %55 = vector.multi_reduction <maximumf>, %54, %cst_24 [2] : vector<4x10x10xf32> to vector<4x10xf32>
    %cst_25 = arith.constant 0xFF800000 : f32
    %56 = vector.broadcast %cst_25 : f32 to vector<4x10xf32>
    %57 = arith.maximumf %56, %55 : vector<4x10xf32>
    %58 = vector.shape_cast %57 : vector<4x10xf32> to vector<4x10x1xf32>
    %59 = vector.broadcast %58 : vector<4x10x1xf32> to vector<4x10x10xf32>
    %60 = arith.subf %54, %59 : vector<4x10x10xf32>
    %61 = math.exp %60 : vector<4x10x10xf32>
    %cst_26 = arith.constant dense<0.000000e+00> : vector<4x10xf32>
    %62 = vector.multi_reduction <add>, %61, %cst_26 [2] : vector<4x10x10xf32> to vector<4x10xf32>
    %63 = vector.shape_cast %62 : vector<4x10xf32> to vector<4x10x1xf32>
    %64 = vector.broadcast %63 : vector<4x10x1xf32> to vector<4x10x10xf32>
    %65 = arith.divf %61, %64 : vector<4x10x10xf32>
    "tpu.trace_start"() <{level = 10 : i32, message = "hts,hsd->htd"}> : () -> ()
    %cst_27 = arith.constant dense<0.000000e+00> : vector<4x10x32xf32>
    %66 = tpu.matmul %65, %51, %cst_27 {dimension_numbers = #tpu.dot_dimension_numbers<[2], [1], [1], [2], [0, 0, 0, 1, 1, 2], [0], [0]>} : vector<4x10x10xf32>, vector<4x10x32xf32>, vector<4x10x32xf32> -> vector<4x10x32xf32>
    "tpu.trace_stop"() : () -> ()
    %67 = vector.extract_strided_slice %66 {offsets = [0, 0, 0], sizes = [1, 10, 32], strides = [1, 1, 1]} : vector<4x10x32xf32> to vector<1x10x32xf32>
    %68 = vector.shape_cast %67 : vector<1x10x32xf32> to vector<10x32xf32>
    %69 = vector.extract_strided_slice %66 {offsets = [1, 0, 0], sizes = [1, 10, 32], strides = [1, 1, 1]} : vector<4x10x32xf32> to vector<1x10x32xf32>
    %70 = vector.shape_cast %69 : vector<1x10x32xf32> to vector<10x32xf32>
    %71 = vector.extract_strided_slice %66 {offsets = [2, 0, 0], sizes = [1, 10, 32], strides = [1, 1, 1]} : vector<4x10x32xf32> to vector<1x10x32xf32>
    %72 = vector.shape_cast %71 : vector<1x10x32xf32> to vector<10x32xf32>
    %73 = vector.extract_strided_slice %66 {offsets = [3, 0, 0], sizes = [1, 10, 32], strides = [1, 1, 1]} : vector<4x10x32xf32> to vector<1x10x32xf32>
    %74 = vector.shape_cast %73 : vector<1x10x32xf32> to vector<10x32xf32>
    %75 = tpu.concatenate %68, %70, %72, %74 in 1 : vector<10x32xf32>, vector<10x32xf32>, vector<10x32xf32>, vector<10x32xf32> -> vector<10x128xf32>
    %c0_28 = arith.constant 0 : index
    %c0_29 = arith.constant 0 : index
    %c0_30 = arith.constant 0 : index
    %76 = vector.load %arg9[%c0_28, %c0_29, %c0_30] : memref<4x128x128xf32, #tpu.memory_space<vmem>>, vector<1x128x128xf32>
    %77 = vector.shape_cast %76 : vector<1x128x128xf32> to vector<128x128xf32>
    %cst_31 = arith.constant dense<0.000000e+00> : vector<10x128xf32>
    %78 = tpu.matmul %75, %77, %cst_31 {dimension_numbers = #tpu.dot_dimension_numbers<[1], [0], [0], [1], [0, 0, 1, 1], [], []>} : vector<10x128xf32>, vector<128x128xf32>, vector<10x128xf32> -> vector<10x128xf32>
    %c0_32 = arith.constant 0 : index
    %c0_33 = arith.constant 0 : index
    %c0_34 = arith.constant 0 : index
    %79 = vector.load %arg10[%c0_32, %c0_33, %c0_34] : memref<4x1x128xf32, #tpu.memory_space<vmem>>, vector<1x1x128xf32>
    %80 = vector.shape_cast %79 : vector<1x1x128xf32> to vector<1x128xf32>
    %81 = vector.broadcast %80 : vector<1x128xf32> to vector<10x128xf32>
    %82 = arith.addf %78, %81 : vector<10x128xf32>
    %83 = arith.addf %11, %82 : vector<10x128xf32>
    %c0_35 = arith.constant 0 : index
    %c0_36 = arith.constant 0 : index
    %c0_37 = arith.constant 0 : index
    %84 = vector.load %arg11[%c0_35, %c0_36, %c0_37] : memref<4x1x128xf32, #tpu.memory_space<vmem>>, vector<1x1x128xf32>
    %85 = vector.shape_cast %84 : vector<1x1x128xf32> to vector<1x128xf32>
    %c0_38 = arith.constant 0 : index
    %c0_39 = arith.constant 0 : index
    %c0_40 = arith.constant 0 : index
    %86 = vector.load %arg12[%c0_38, %c0_39, %c0_40] : memref<4x1x128xf32, #tpu.memory_space<vmem>>, vector<1x1x128xf32>
    %87 = vector.shape_cast %86 : vector<1x1x128xf32> to vector<1x128xf32>
    %cst_41 = arith.constant dense<0.000000e+00> : vector<10xf32>
    %88 = vector.multi_reduction <add>, %83, %cst_41 [1] : vector<10x128xf32> to vector<10xf32>
    %89 = vector.shape_cast %88 : vector<10xf32> to vector<10x1xf32>
    %cst_42 = arith.constant 1.280000e+02 : f32
    %90 = vector.broadcast %cst_42 : f32 to vector<10x1xf32>
    %91 = arith.divf %89, %90 : vector<10x1xf32>
    %92 = vector.broadcast %91 : vector<10x1xf32> to vector<10x128xf32>
    %93 = arith.subf %83, %92 : vector<10x128xf32>
    %94 = arith.mulf %93, %93 : vector<10x128xf32>
    %cst_43 = arith.constant dense<0.000000e+00> : vector<10xf32>
    %95 = vector.multi_reduction <add>, %94, %cst_43 [1] : vector<10x128xf32> to vector<10xf32>
    %96 = vector.shape_cast %95 : vector<10xf32> to vector<10x1xf32>
    %cst_44 = arith.constant 1.280000e+02 : f32
    %97 = vector.broadcast %cst_44 : f32 to vector<10x1xf32>
    %98 = arith.divf %96, %97 : vector<10x1xf32>
    %99 = vector.broadcast %91 : vector<10x1xf32> to vector<10x128xf32>
    %100 = arith.subf %83, %99 : vector<10x128xf32>
    %cst_45 = arith.constant 9.99999974E-6 : f32
    %101 = vector.broadcast %cst_45 : f32 to vector<10x1xf32>
    %102 = arith.addf %98, %101 : vector<10x1xf32>
    %103 = math.rsqrt %102 : vector<10x1xf32>
    %104 = vector.broadcast %103 : vector<10x1xf32> to vector<10x128xf32>
    %105 = arith.mulf %100, %104 : vector<10x128xf32>
    %106 = vector.broadcast %85 : vector<1x128xf32> to vector<10x128xf32>
    %107 = arith.mulf %105, %106 : vector<10x128xf32>
    %108 = vector.broadcast %87 : vector<1x128xf32> to vector<10x128xf32>
    %109 = arith.addf %107, %108 : vector<10x128xf32>
    %c0_46 = arith.constant 0 : index
    %c0_47 = arith.constant 0 : index
    %c0_48 = arith.constant 0 : index
    %110 = vector.load %arg13[%c0_46, %c0_47, %c0_48] : memref<4x128x512xf32, #tpu.memory_space<vmem>>, vector<1x128x512xf32>
    %111 = vector.shape_cast %110 : vector<1x128x512xf32> to vector<128x512xf32>
    %cst_49 = arith.constant dense<0.000000e+00> : vector<10x512xf32>
    %112 = tpu.matmul %109, %111, %cst_49 {dimension_numbers = #tpu.dot_dimension_numbers<[1], [0], [0], [1], [0, 0, 1, 1], [], []>} : vector<10x128xf32>, vector<128x512xf32>, vector<10x512xf32> -> vector<10x512xf32>
    %c0_50 = arith.constant 0 : index
    %c0_51 = arith.constant 0 : index
    %c0_52 = arith.constant 0 : index
    %113 = vector.load %arg14[%c0_50, %c0_51, %c0_52] : memref<4x1x512xf32, #tpu.memory_space<vmem>>, vector<1x1x512xf32>
    %114 = vector.shape_cast %113 : vector<1x1x512xf32> to vector<1x512xf32>
    %115 = vector.broadcast %114 : vector<1x512xf32> to vector<10x512xf32>
    %116 = arith.addf %112, %115 : vector<10x512xf32>
    %cst_53 = arith.constant 0.000000e+00 : f32
    %117 = vector.broadcast %cst_53 : f32 to vector<10x512xf32>
    %118 = arith.maximumf %116, %117 : vector<10x512xf32>
    %c0_54 = arith.constant 0 : index
    %c0_55 = arith.constant 0 : index
    %c0_56 = arith.constant 0 : index
    %119 = vector.load %arg15[%c0_54, %c0_55, %c0_56] : memref<4x512x128xf32, #tpu.memory_space<vmem>>, vector<1x512x128xf32>
    %120 = vector.shape_cast %119 : vector<1x512x128xf32> to vector<512x128xf32>
    %cst_57 = arith.constant dense<0.000000e+00> : vector<10x128xf32>
    %121 = tpu.matmul %118, %120, %cst_57 {dimension_numbers = #tpu.dot_dimension_numbers<[1], [0], [0], [1], [0, 0, 1, 1], [], []>} : vector<10x512xf32>, vector<512x128xf32>, vector<10x128xf32> -> vector<10x128xf32>
    %c0_58 = arith.constant 0 : index
    %c0_59 = arith.constant 0 : index
    %c0_60 = arith.constant 0 : index
    %122 = vector.load %arg16[%c0_58, %c0_59, %c0_60] : memref<4x1x128xf32, #tpu.memory_space<vmem>>, vector<1x1x128xf32>
    %123 = vector.shape_cast %122 : vector<1x1x128xf32> to vector<1x128xf32>
    %124 = vector.broadcast %123 : vector<1x128xf32> to vector<10x128xf32>
    %125 = arith.addf %121, %124 : vector<10x128xf32>
    %126 = arith.addf %109, %125 : vector<10x128xf32>
    %c0_61 = arith.constant 0 : index
    %c0_62 = arith.constant 0 : index
    %c0_63 = arith.constant 0 : index
    %127 = vector.load %arg17[%c0_61, %c0_62, %c0_63] : memref<4x1x128xf32, #tpu.memory_space<vmem>>, vector<1x1x128xf32>
    %128 = vector.shape_cast %127 : vector<1x1x128xf32> to vector<1x128xf32>
    %c0_64 = arith.constant 0 : index
    %c0_65 = arith.constant 0 : index
    %c0_66 = arith.constant 0 : index
    %129 = vector.load %arg18[%c0_64, %c0_65, %c0_66] : memref<4x1x128xf32, #tpu.memory_space<vmem>>, vector<1x1x128xf32>
    %130 = vector.shape_cast %129 : vector<1x1x128xf32> to vector<1x128xf32>
    %cst_67 = arith.constant dense<0.000000e+00> : vector<10xf32>
    %131 = vector.multi_reduction <add>, %126, %cst_67 [1] : vector<10x128xf32> to vector<10xf32>
    %132 = vector.shape_cast %131 : vector<10xf32> to vector<10x1xf32>
    %cst_68 = arith.constant 1.280000e+02 : f32
    %133 = vector.broadcast %cst_68 : f32 to vector<10x1xf32>
    %134 = arith.divf %132, %133 : vector<10x1xf32>
    %135 = vector.broadcast %134 : vector<10x1xf32> to vector<10x128xf32>
    %136 = arith.subf %126, %135 : vector<10x128xf32>
    %137 = arith.mulf %136, %136 : vector<10x128xf32>
    %cst_69 = arith.constant dense<0.000000e+00> : vector<10xf32>
    %138 = vector.multi_reduction <add>, %137, %cst_69 [1] : vector<10x128xf32> to vector<10xf32>
    %139 = vector.shape_cast %138 : vector<10xf32> to vector<10x1xf32>
    %cst_70 = arith.constant 1.280000e+02 : f32
    %140 = vector.broadcast %cst_70 : f32 to vector<10x1xf32>
    %141 = arith.divf %139, %140 : vector<10x1xf32>
    %142 = vector.broadcast %134 : vector<10x1xf32> to vector<10x128xf32>
    %143 = arith.subf %126, %142 : vector<10x128xf32>
    %cst_71 = arith.constant 9.99999974E-6 : f32
    %144 = vector.broadcast %cst_71 : f32 to vector<10x1xf32>
    %145 = arith.addf %141, %144 : vector<10x1xf32>
    %146 = math.rsqrt %145 : vector<10x1xf32>
    %147 = vector.broadcast %146 : vector<10x1xf32> to vector<10x128xf32>
    %148 = arith.mulf %143, %147 : vector<10x128xf32>
    %149 = vector.broadcast %128 : vector<1x128xf32> to vector<10x128xf32>
    %150 = arith.mulf %148, %149 : vector<10x128xf32>
    %151 = vector.broadcast %130 : vector<1x128xf32> to vector<10x128xf32>
    %152 = arith.addf %150, %151 : vector<10x128xf32>
    %c1 = arith.constant 1 : index
    %c0_72 = arith.constant 0 : index
    %c0_73 = arith.constant 0 : index
    %153 = vector.load %arg7[%c1, %c0_72, %c0_73] : memref<4x128x384xf32, #tpu.memory_space<vmem>>, vector<1x128x384xf32>
    %154 = vector.shape_cast %153 : vector<1x128x384xf32> to vector<128x384xf32>
    %cst_74 = arith.constant dense<0.000000e+00> : vector<10x384xf32>
    %155 = tpu.matmul %152, %154, %cst_74 {dimension_numbers = #tpu.dot_dimension_numbers<[1], [0], [0], [1], [0, 0, 1, 1], [], []>} : vector<10x128xf32>, vector<128x384xf32>, vector<10x384xf32> -> vector<10x384xf32>
    %c1_75 = arith.constant 1 : index
    %c0_76 = arith.constant 0 : index
    %c0_77 = arith.constant 0 : index
    %156 = vector.load %arg8[%c1_75, %c0_76, %c0_77] : memref<4x1x384xf32, #tpu.memory_space<vmem>>, vector<1x1x384xf32>
    %157 = vector.shape_cast %156 : vector<1x1x384xf32> to vector<1x384xf32>
    %158 = vector.broadcast %157 : vector<1x384xf32> to vector<10x384xf32>
    %159 = arith.addf %155, %158 : vector<10x384xf32>
    %160 = vector.extract_strided_slice %159 {offsets = [0, 0], sizes = [10, 128], strides = [1, 1]} : vector<10x384xf32> to vector<10x128xf32>
    %161 = vector.extract_strided_slice %159 {offsets = [0, 128], sizes = [10, 128], strides = [1, 1]} : vector<10x384xf32> to vector<10x128xf32>
    %162 = vector.extract_strided_slice %159 {offsets = [0, 256], sizes = [10, 128], strides = [1, 1]} : vector<10x384xf32> to vector<10x128xf32>
    %163 = vector.extract_strided_slice %160 {offsets = [0, 0], sizes = [10, 32], strides = [1, 1]} : vector<10x128xf32> to vector<10x32xf32>
    %164 = vector.extract_strided_slice %160 {offsets = [0, 32], sizes = [10, 32], strides = [1, 1]} : vector<10x128xf32> to vector<10x32xf32>
    %165 = vector.extract_strided_slice %160 {offsets = [0, 64], sizes = [10, 32], strides = [1, 1]} : vector<10x128xf32> to vector<10x32xf32>
    %166 = vector.extract_strided_slice %160 {offsets = [0, 96], sizes = [10, 32], strides = [1, 1]} : vector<10x128xf32> to vector<10x32xf32>
    %167 = vector.shape_cast %163 : vector<10x32xf32> to vector<1x10x32xf32>
    %168 = vector.shape_cast %164 : vector<10x32xf32> to vector<1x10x32xf32>
    %169 = vector.shape_cast %165 : vector<10x32xf32> to vector<1x10x32xf32>
    %170 = vector.shape_cast %166 : vector<10x32xf32> to vector<1x10x32xf32>
    %171 = tpu.concatenate %167, %168, %169, %170 in 0 : vector<1x10x32xf32>, vector<1x10x32xf32>, vector<1x10x32xf32>, vector<1x10x32xf32> -> vector<4x10x32xf32>
    %172 = vector.extract_strided_slice %161 {offsets = [0, 0], sizes = [10, 32], strides = [1, 1]} : vector<10x128xf32> to vector<10x32xf32>
    %173 = vector.extract_strided_slice %161 {offsets = [0, 32], sizes = [10, 32], strides = [1, 1]} : vector<10x128xf32> to vector<10x32xf32>
    %174 = vector.extract_strided_slice %161 {offsets = [0, 64], sizes = [10, 32], strides = [1, 1]} : vector<10x128xf32> to vector<10x32xf32>
    %175 = vector.extract_strided_slice %161 {offsets = [0, 96], sizes = [10, 32], strides = [1, 1]} : vector<10x128xf32> to vector<10x32xf32>
    %176 = vector.shape_cast %172 : vector<10x32xf32> to vector<1x10x32xf32>
    %177 = vector.shape_cast %173 : vector<10x32xf32> to vector<1x10x32xf32>
    %178 = vector.shape_cast %174 : vector<10x32xf32> to vector<1x10x32xf32>
    %179 = vector.shape_cast %175 : vector<10x32xf32> to vector<1x10x32xf32>
    %180 = tpu.concatenate %176, %177, %178, %179 in 0 : vector<1x10x32xf32>, vector<1x10x32xf32>, vector<1x10x32xf32>, vector<1x10x32xf32> -> vector<4x10x32xf32>
    %181 = vector.extract_strided_slice %162 {offsets = [0, 0], sizes = [10, 32], strides = [1, 1]} : vector<10x128xf32> to vector<10x32xf32>
    %182 = vector.extract_strided_slice %162 {offsets = [0, 32], sizes = [10, 32], strides = [1, 1]} : vector<10x128xf32> to vector<10x32xf32>
    %183 = vector.extract_strided_slice %162 {offsets = [0, 64], sizes = [10, 32], strides = [1, 1]} : vector<10x128xf32> to vector<10x32xf32>
    %184 = vector.extract_strided_slice %162 {offsets = [0, 96], sizes = [10, 32], strides = [1, 1]} : vector<10x128xf32> to vector<10x32xf32>
    %185 = vector.shape_cast %181 : vector<10x32xf32> to vector<1x10x32xf32>
    %186 = vector.shape_cast %182 : vector<10x32xf32> to vector<1x10x32xf32>
    %187 = vector.shape_cast %183 : vector<10x32xf32> to vector<1x10x32xf32>
    %188 = vector.shape_cast %184 : vector<10x32xf32> to vector<1x10x32xf32>
    %189 = tpu.concatenate %185, %186, %187, %188 in 0 : vector<1x10x32xf32>, vector<1x10x32xf32>, vector<1x10x32xf32>, vector<1x10x32xf32> -> vector<4x10x32xf32>
    "tpu.trace_start"() <{level = 10 : i32, message = "htd,hsd->hts"}> : () -> ()
    %cst_78 = arith.constant dense<0.000000e+00> : vector<4x10x10xf32>
    %190 = tpu.matmul %171, %180, %cst_78 {dimension_numbers = #tpu.dot_dimension_numbers<[2], [2], [1], [1], [0, 0, 0, 1, 1, 1], [0], [0]>} : vector<4x10x32xf32>, vector<4x10x32xf32>, vector<4x10x10xf32> -> vector<4x10x10xf32>
    "tpu.trace_stop"() : () -> ()
    %cst_79 = arith.constant 0.176776692 : f32
    %191 = vector.broadcast %cst_79 : f32 to vector<4x10x10xf32>
    %192 = arith.mulf %190, %191 : vector<4x10x10xf32>
    %cst_80 = arith.constant dense<0xFF800000> : vector<4x10xf32>
    %193 = vector.multi_reduction <maximumf>, %192, %cst_80 [2] : vector<4x10x10xf32> to vector<4x10xf32>
    %cst_81 = arith.constant 0xFF800000 : f32
    %194 = vector.broadcast %cst_81 : f32 to vector<4x10xf32>
    %195 = arith.maximumf %194, %193 : vector<4x10xf32>
    %196 = vector.shape_cast %195 : vector<4x10xf32> to vector<4x10x1xf32>
    %197 = vector.broadcast %196 : vector<4x10x1xf32> to vector<4x10x10xf32>
    %198 = arith.subf %192, %197 : vector<4x10x10xf32>
    %199 = math.exp %198 : vector<4x10x10xf32>
    %cst_82 = arith.constant dense<0.000000e+00> : vector<4x10xf32>
    %200 = vector.multi_reduction <add>, %199, %cst_82 [2] : vector<4x10x10xf32> to vector<4x10xf32>
    %201 = vector.shape_cast %200 : vector<4x10xf32> to vector<4x10x1xf32>
    %202 = vector.broadcast %201 : vector<4x10x1xf32> to vector<4x10x10xf32>
    %203 = arith.divf %199, %202 : vector<4x10x10xf32>
    "tpu.trace_start"() <{level = 10 : i32, message = "hts,hsd->htd"}> : () -> ()
    %cst_83 = arith.constant dense<0.000000e+00> : vector<4x10x32xf32>
    %204 = tpu.matmul %203, %189, %cst_83 {dimension_numbers = #tpu.dot_dimension_numbers<[2], [1], [1], [2], [0, 0, 0, 1, 1, 2], [0], [0]>} : vector<4x10x10xf32>, vector<4x10x32xf32>, vector<4x10x32xf32> -> vector<4x10x32xf32>
    "tpu.trace_stop"() : () -> ()
    %205 = vector.extract_strided_slice %204 {offsets = [0, 0, 0], sizes = [1, 10, 32], strides = [1, 1, 1]} : vector<4x10x32xf32> to vector<1x10x32xf32>
    %206 = vector.shape_cast %205 : vector<1x10x32xf32> to vector<10x32xf32>
    %207 = vector.extract_strided_slice %204 {offsets = [1, 0, 0], sizes = [1, 10, 32], strides = [1, 1, 1]} : vector<4x10x32xf32> to vector<1x10x32xf32>
    %208 = vector.shape_cast %207 : vector<1x10x32xf32> to vector<10x32xf32>
    %209 = vector.extract_strided_slice %204 {offsets = [2, 0, 0], sizes = [1, 10, 32], strides = [1, 1, 1]} : vector<4x10x32xf32> to vector<1x10x32xf32>
    %210 = vector.shape_cast %209 : vector<1x10x32xf32> to vector<10x32xf32>
    %211 = vector.extract_strided_slice %204 {offsets = [3, 0, 0], sizes = [1, 10, 32], strides = [1, 1, 1]} : vector<4x10x32xf32> to vector<1x10x32xf32>
    %212 = vector.shape_cast %211 : vector<1x10x32xf32> to vector<10x32xf32>
    %213 = tpu.concatenate %206, %208, %210, %212 in 1 : vector<10x32xf32>, vector<10x32xf32>, vector<10x32xf32>, vector<10x32xf32> -> vector<10x128xf32>
    %c1_84 = arith.constant 1 : index
    %c0_85 = arith.constant 0 : index
    %c0_86 = arith.constant 0 : index
    %214 = vector.load %arg9[%c1_84, %c0_85, %c0_86] : memref<4x128x128xf32, #tpu.memory_space<vmem>>, vector<1x128x128xf32>
    %215 = vector.shape_cast %214 : vector<1x128x128xf32> to vector<128x128xf32>
    %cst_87 = arith.constant dense<0.000000e+00> : vector<10x128xf32>
    %216 = tpu.matmul %213, %215, %cst_87 {dimension_numbers = #tpu.dot_dimension_numbers<[1], [0], [0], [1], [0, 0, 1, 1], [], []>} : vector<10x128xf32>, vector<128x128xf32>, vector<10x128xf32> -> vector<10x128xf32>
    %c1_88 = arith.constant 1 : index
    %c0_89 = arith.constant 0 : index
    %c0_90 = arith.constant 0 : index
    %217 = vector.load %arg10[%c1_88, %c0_89, %c0_90] : memref<4x1x128xf32, #tpu.memory_space<vmem>>, vector<1x1x128xf32>
    %218 = vector.shape_cast %217 : vector<1x1x128xf32> to vector<1x128xf32>
    %219 = vector.broadcast %218 : vector<1x128xf32> to vector<10x128xf32>
    %220 = arith.addf %216, %219 : vector<10x128xf32>
    %221 = arith.addf %152, %220 : vector<10x128xf32>
    %c1_91 = arith.constant 1 : index
    %c0_92 = arith.constant 0 : index
    %c0_93 = arith.constant 0 : index
    %222 = vector.load %arg11[%c1_91, %c0_92, %c0_93] : memref<4x1x128xf32, #tpu.memory_space<vmem>>, vector<1x1x128xf32>
    %223 = vector.shape_cast %222 : vector<1x1x128xf32> to vector<1x128xf32>
    %c1_94 = arith.constant 1 : index
    %c0_95 = arith.constant 0 : index
    %c0_96 = arith.constant 0 : index
    %224 = vector.load %arg12[%c1_94, %c0_95, %c0_96] : memref<4x1x128xf32, #tpu.memory_space<vmem>>, vector<1x1x128xf32>
    %225 = vector.shape_cast %224 : vector<1x1x128xf32> to vector<1x128xf32>
    %cst_97 = arith.constant dense<0.000000e+00> : vector<10xf32>
    %226 = vector.multi_reduction <add>, %221, %cst_97 [1] : vector<10x128xf32> to vector<10xf32>
    %227 = vector.shape_cast %226 : vector<10xf32> to vector<10x1xf32>
    %cst_98 = arith.constant 1.280000e+02 : f32
    %228 = vector.broadcast %cst_98 : f32 to vector<10x1xf32>
    %229 = arith.divf %227, %228 : vector<10x1xf32>
    %230 = vector.broadcast %229 : vector<10x1xf32> to vector<10x128xf32>
    %231 = arith.subf %221, %230 : vector<10x128xf32>
    %232 = arith.mulf %231, %231 : vector<10x128xf32>
    %cst_99 = arith.constant dense<0.000000e+00> : vector<10xf32>
    %233 = vector.multi_reduction <add>, %232, %cst_99 [1] : vector<10x128xf32> to vector<10xf32>
    %234 = vector.shape_cast %233 : vector<10xf32> to vector<10x1xf32>
    %cst_100 = arith.constant 1.280000e+02 : f32
    %235 = vector.broadcast %cst_100 : f32 to vector<10x1xf32>
    %236 = arith.divf %234, %235 : vector<10x1xf32>
    %237 = vector.broadcast %229 : vector<10x1xf32> to vector<10x128xf32>
    %238 = arith.subf %221, %237 : vector<10x128xf32>
    %cst_101 = arith.constant 9.99999974E-6 : f32
    %239 = vector.broadcast %cst_101 : f32 to vector<10x1xf32>
    %240 = arith.addf %236, %239 : vector<10x1xf32>
    %241 = math.rsqrt %240 : vector<10x1xf32>
    %242 = vector.broadcast %241 : vector<10x1xf32> to vector<10x128xf32>
    %243 = arith.mulf %238, %242 : vector<10x128xf32>
    %244 = vector.broadcast %223 : vector<1x128xf32> to vector<10x128xf32>
    %245 = arith.mulf %243, %244 : vector<10x128xf32>
    %246 = vector.broadcast %225 : vector<1x128xf32> to vector<10x128xf32>
    %247 = arith.addf %245, %246 : vector<10x128xf32>
    %c1_102 = arith.constant 1 : index
    %c0_103 = arith.constant 0 : index
    %c0_104 = arith.constant 0 : index
    %248 = vector.load %arg13[%c1_102, %c0_103, %c0_104] : memref<4x128x512xf32, #tpu.memory_space<vmem>>, vector<1x128x512xf32>
    %249 = vector.shape_cast %248 : vector<1x128x512xf32> to vector<128x512xf32>
    %cst_105 = arith.constant dense<0.000000e+00> : vector<10x512xf32>
    %250 = tpu.matmul %247, %249, %cst_105 {dimension_numbers = #tpu.dot_dimension_numbers<[1], [0], [0], [1], [0, 0, 1, 1], [], []>} : vector<10x128xf32>, vector<128x512xf32>, vector<10x512xf32> -> vector<10x512xf32>
    %c1_106 = arith.constant 1 : index
    %c0_107 = arith.constant 0 : index
    %c0_108 = arith.constant 0 : index
    %251 = vector.load %arg14[%c1_106, %c0_107, %c0_108] : memref<4x1x512xf32, #tpu.memory_space<vmem>>, vector<1x1x512xf32>
    %252 = vector.shape_cast %251 : vector<1x1x512xf32> to vector<1x512xf32>
    %253 = vector.broadcast %252 : vector<1x512xf32> to vector<10x512xf32>
    %254 = arith.addf %250, %253 : vector<10x512xf32>
    %cst_109 = arith.constant 0.000000e+00 : f32
    %255 = vector.broadcast %cst_109 : f32 to vector<10x512xf32>
    %256 = arith.maximumf %254, %255 : vector<10x512xf32>
    %c1_110 = arith.constant 1 : index
    %c0_111 = arith.constant 0 : index
    %c0_112 = arith.constant 0 : index
    %257 = vector.load %arg15[%c1_110, %c0_111, %c0_112] : memref<4x512x128xf32, #tpu.memory_space<vmem>>, vector<1x512x128xf32>
    %258 = vector.shape_cast %257 : vector<1x512x128xf32> to vector<512x128xf32>
    %cst_113 = arith.constant dense<0.000000e+00> : vector<10x128xf32>
    %259 = tpu.matmul %256, %258, %cst_113 {dimension_numbers = #tpu.dot_dimension_numbers<[1], [0], [0], [1], [0, 0, 1, 1], [], []>} : vector<10x512xf32>, vector<512x128xf32>, vector<10x128xf32> -> vector<10x128xf32>
    %c1_114 = arith.constant 1 : index
    %c0_115 = arith.constant 0 : index
    %c0_116 = arith.constant 0 : index
    %260 = vector.load %arg16[%c1_114, %c0_115, %c0_116] : memref<4x1x128xf32, #tpu.memory_space<vmem>>, vector<1x1x128xf32>
    %261 = vector.shape_cast %260 : vector<1x1x128xf32> to vector<1x128xf32>
    %262 = vector.broadcast %261 : vector<1x128xf32> to vector<10x128xf32>
    %263 = arith.addf %259, %262 : vector<10x128xf32>
    %264 = arith.addf %247, %263 : vector<10x128xf32>
    %c1_117 = arith.constant 1 : index
    %c0_118 = arith.constant 0 : index
    %c0_119 = arith.constant 0 : index
    %265 = vector.load %arg17[%c1_117, %c0_118, %c0_119] : memref<4x1x128xf32, #tpu.memory_space<vmem>>, vector<1x1x128xf32>
    %266 = vector.shape_cast %265 : vector<1x1x128xf32> to vector<1x128xf32>
    %c1_120 = arith.constant 1 : index
    %c0_121 = arith.constant 0 : index
    %c0_122 = arith.constant 0 : index
    %267 = vector.load %arg18[%c1_120, %c0_121, %c0_122] : memref<4x1x128xf32, #tpu.memory_space<vmem>>, vector<1x1x128xf32>
    %268 = vector.shape_cast %267 : vector<1x1x128xf32> to vector<1x128xf32>
    %cst_123 = arith.constant dense<0.000000e+00> : vector<10xf32>
    %269 = vector.multi_reduction <add>, %264, %cst_123 [1] : vector<10x128xf32> to vector<10xf32>
    %270 = vector.shape_cast %269 : vector<10xf32> to vector<10x1xf32>
    %cst_124 = arith.constant 1.280000e+02 : f32
    %271 = vector.broadcast %cst_124 : f32 to vector<10x1xf32>
    %272 = arith.divf %270, %271 : vector<10x1xf32>
    %273 = vector.broadcast %272 : vector<10x1xf32> to vector<10x128xf32>
    %274 = arith.subf %264, %273 : vector<10x128xf32>
    %275 = arith.mulf %274, %274 : vector<10x128xf32>
    %cst_125 = arith.constant dense<0.000000e+00> : vector<10xf32>
    %276 = vector.multi_reduction <add>, %275, %cst_125 [1] : vector<10x128xf32> to vector<10xf32>
    %277 = vector.shape_cast %276 : vector<10xf32> to vector<10x1xf32>
    %cst_126 = arith.constant 1.280000e+02 : f32
    %278 = vector.broadcast %cst_126 : f32 to vector<10x1xf32>
    %279 = arith.divf %277, %278 : vector<10x1xf32>
    %280 = vector.broadcast %272 : vector<10x1xf32> to vector<10x128xf32>
    %281 = arith.subf %264, %280 : vector<10x128xf32>
    %cst_127 = arith.constant 9.99999974E-6 : f32
    %282 = vector.broadcast %cst_127 : f32 to vector<10x1xf32>
    %283 = arith.addf %279, %282 : vector<10x1xf32>
    %284 = math.rsqrt %283 : vector<10x1xf32>
    %285 = vector.broadcast %284 : vector<10x1xf32> to vector<10x128xf32>
    %286 = arith.mulf %281, %285 : vector<10x128xf32>
    %287 = vector.broadcast %266 : vector<1x128xf32> to vector<10x128xf32>
    %288 = arith.mulf %286, %287 : vector<10x128xf32>
    %289 = vector.broadcast %268 : vector<1x128xf32> to vector<10x128xf32>
    %290 = arith.addf %288, %289 : vector<10x128xf32>
    %c0_128 = arith.constant 0 : index
    %c0_129 = arith.constant 0 : index
    %291 = vector.load %arg6[%c0_128, %c0_129] : memref<5x10xf32, #tpu.memory_space<vmem>>, vector<5x10xf32>
    %cst_130 = arith.constant dense<0.000000e+00> : vector<5x128xf32>
    %292 = tpu.matmul %291, %290, %cst_130 {dimension_numbers = #tpu.dot_dimension_numbers<[1], [0], [0], [1], [0, 0, 1, 1], [], []>} : vector<5x10xf32>, vector<10x128xf32>, vector<5x128xf32> -> vector<5x128xf32>
    %c0_131 = arith.constant 0 : index
    %c0_132 = arith.constant 0 : index
    %c0_133 = arith.constant 0 : index
    %293 = vector.load %arg23[%c0_131, %c0_132, %c0_133] : memref<1x5x128xf32, #tpu.memory_space<vmem>>, vector<1x5x128xf32>
    %294 = vector.shape_cast %293 : vector<1x5x128xf32> to vector<5x128xf32>
    %295 = vector.shape_cast %292 : vector<5x128xf32> to vector<1x5x128xf32>
    tpu.vector_store %arg23[%c0_131, %c0_132, %c0_133], %295 {strides = array<i32>} : memref<1x5x128xf32, #tpu.memory_space<vmem>>, vector<1x5x128xf32>,
    %c2 = arith.constant 2 : index
    %c0_134 = arith.constant 0 : index
    %c0_135 = arith.constant 0 : index
    %296 = vector.load %arg7[%c2, %c0_134, %c0_135] : memref<4x128x384xf32, #tpu.memory_space<vmem>>, vector<1x128x384xf32>
    %297 = vector.shape_cast %296 : vector<1x128x384xf32> to vector<128x384xf32>
    %cst_136 = arith.constant dense<0.000000e+00> : vector<5x384xf32>
    %298 = tpu.matmul %292, %297, %cst_136 {dimension_numbers = #tpu.dot_dimension_numbers<[1], [0], [0], [1], [0, 0, 1, 1], [], []>} : vector<5x128xf32>, vector<128x384xf32>, vector<5x384xf32> -> vector<5x384xf32>
    %c2_137 = arith.constant 2 : index
    %c0_138 = arith.constant 0 : index
    %c0_139 = arith.constant 0 : index
    %299 = vector.load %arg8[%c2_137, %c0_138, %c0_139] : memref<4x1x384xf32, #tpu.memory_space<vmem>>, vector<1x1x384xf32>
    %300 = vector.shape_cast %299 : vector<1x1x384xf32> to vector<1x384xf32>
    %301 = vector.broadcast %300 : vector<1x384xf32> to vector<5x384xf32>
    %302 = arith.addf %298, %301 : vector<5x384xf32>
    %303 = vector.extract_strided_slice %302 {offsets = [0, 0], sizes = [5, 128], strides = [1, 1]} : vector<5x384xf32> to vector<5x128xf32>
    %304 = vector.extract_strided_slice %302 {offsets = [0, 128], sizes = [5, 128], strides = [1, 1]} : vector<5x384xf32> to vector<5x128xf32>
    %305 = vector.extract_strided_slice %302 {offsets = [0, 256], sizes = [5, 128], strides = [1, 1]} : vector<5x384xf32> to vector<5x128xf32>
    %306 = vector.extract_strided_slice %303 {offsets = [0, 0], sizes = [5, 32], strides = [1, 1]} : vector<5x128xf32> to vector<5x32xf32>
    %307 = vector.extract_strided_slice %303 {offsets = [0, 32], sizes = [5, 32], strides = [1, 1]} : vector<5x128xf32> to vector<5x32xf32>
    %308 = vector.extract_strided_slice %303 {offsets = [0, 64], sizes = [5, 32], strides = [1, 1]} : vector<5x128xf32> to vector<5x32xf32>
    %309 = vector.extract_strided_slice %303 {offsets = [0, 96], sizes = [5, 32], strides = [1, 1]} : vector<5x128xf32> to vector<5x32xf32>
    %310 = vector.shape_cast %306 : vector<5x32xf32> to vector<1x5x32xf32>
    %311 = vector.shape_cast %307 : vector<5x32xf32> to vector<1x5x32xf32>
    %312 = vector.shape_cast %308 : vector<5x32xf32> to vector<1x5x32xf32>
    %313 = vector.shape_cast %309 : vector<5x32xf32> to vector<1x5x32xf32>
    %314 = tpu.concatenate %310, %311, %312, %313 in 0 : vector<1x5x32xf32>, vector<1x5x32xf32>, vector<1x5x32xf32>, vector<1x5x32xf32> -> vector<4x5x32xf32>
    %315 = vector.extract_strided_slice %304 {offsets = [0, 0], sizes = [5, 32], strides = [1, 1]} : vector<5x128xf32> to vector<5x32xf32>
    %316 = vector.extract_strided_slice %304 {offsets = [0, 32], sizes = [5, 32], strides = [1, 1]} : vector<5x128xf32> to vector<5x32xf32>
    %317 = vector.extract_strided_slice %304 {offsets = [0, 64], sizes = [5, 32], strides = [1, 1]} : vector<5x128xf32> to vector<5x32xf32>
    %318 = vector.extract_strided_slice %304 {offsets = [0, 96], sizes = [5, 32], strides = [1, 1]} : vector<5x128xf32> to vector<5x32xf32>
    %319 = vector.shape_cast %315 : vector<5x32xf32> to vector<1x5x32xf32>
    %320 = vector.shape_cast %316 : vector<5x32xf32> to vector<1x5x32xf32>
    %321 = vector.shape_cast %317 : vector<5x32xf32> to vector<1x5x32xf32>
    %322 = vector.shape_cast %318 : vector<5x32xf32> to vector<1x5x32xf32>
    %323 = tpu.concatenate %319, %320, %321, %322 in 0 : vector<1x5x32xf32>, vector<1x5x32xf32>, vector<1x5x32xf32>, vector<1x5x32xf32> -> vector<4x5x32xf32>
    %324 = vector.extract_strided_slice %305 {offsets = [0, 0], sizes = [5, 32], strides = [1, 1]} : vector<5x128xf32> to vector<5x32xf32>
    %325 = vector.extract_strided_slice %305 {offsets = [0, 32], sizes = [5, 32], strides = [1, 1]} : vector<5x128xf32> to vector<5x32xf32>
    %326 = vector.extract_strided_slice %305 {offsets = [0, 64], sizes = [5, 32], strides = [1, 1]} : vector<5x128xf32> to vector<5x32xf32>
    %327 = vector.extract_strided_slice %305 {offsets = [0, 96], sizes = [5, 32], strides = [1, 1]} : vector<5x128xf32> to vector<5x32xf32>
    %328 = vector.shape_cast %324 : vector<5x32xf32> to vector<1x5x32xf32>
    %329 = vector.shape_cast %325 : vector<5x32xf32> to vector<1x5x32xf32>
    %330 = vector.shape_cast %326 : vector<5x32xf32> to vector<1x5x32xf32>
    %331 = vector.shape_cast %327 : vector<5x32xf32> to vector<1x5x32xf32>
    %332 = tpu.concatenate %328, %329, %330, %331 in 0 : vector<1x5x32xf32>, vector<1x5x32xf32>, vector<1x5x32xf32>, vector<1x5x32xf32> -> vector<4x5x32xf32>
    "tpu.trace_start"() <{level = 10 : i32, message = "htd,hsd->hts"}> : () -> ()
    %cst_140 = arith.constant dense<0.000000e+00> : vector<4x5x5xf32>
    %333 = tpu.matmul %314, %323, %cst_140 {dimension_numbers = #tpu.dot_dimension_numbers<[2], [2], [1], [1], [0, 0, 0, 1, 1, 1], [0], [0]>} : vector<4x5x32xf32>, vector<4x5x32xf32>, vector<4x5x5xf32> -> vector<4x5x5xf32>
    "tpu.trace_stop"() : () -> ()
    %cst_141 = arith.constant 0.176776692 : f32
    %334 = vector.broadcast %cst_141 : f32 to vector<4x5x5xf32>
    %335 = arith.mulf %333, %334 : vector<4x5x5xf32>
    %cst_142 = arith.constant dense<0xFF800000> : vector<4x5xf32>
    %336 = vector.multi_reduction <maximumf>, %335, %cst_142 [2] : vector<4x5x5xf32> to vector<4x5xf32>
    %cst_143 = arith.constant 0xFF800000 : f32
    %337 = vector.broadcast %cst_143 : f32 to vector<4x5xf32>
    %338 = arith.maximumf %337, %336 : vector<4x5xf32>
    %339 = vector.shape_cast %338 : vector<4x5xf32> to vector<4x5x1xf32>
    %340 = vector.broadcast %339 : vector<4x5x1xf32> to vector<4x5x5xf32>
    %341 = arith.subf %335, %340 : vector<4x5x5xf32>
    %342 = math.exp %341 : vector<4x5x5xf32>
    %cst_144 = arith.constant dense<0.000000e+00> : vector<4x5xf32>
    %343 = vector.multi_reduction <add>, %342, %cst_144 [2] : vector<4x5x5xf32> to vector<4x5xf32>
    %344 = vector.shape_cast %343 : vector<4x5xf32> to vector<4x5x1xf32>
    %345 = vector.broadcast %344 : vector<4x5x1xf32> to vector<4x5x5xf32>
    %346 = arith.divf %342, %345 : vector<4x5x5xf32>
    "tpu.trace_start"() <{level = 10 : i32, message = "hts,hsd->htd"}> : () -> ()
    %cst_145 = arith.constant dense<0.000000e+00> : vector<4x5x32xf32>
    %347 = tpu.matmul %346, %332, %cst_145 {dimension_numbers = #tpu.dot_dimension_numbers<[2], [1], [1], [2], [0, 0, 0, 1, 1, 2], [0], [0]>} : vector<4x5x5xf32>, vector<4x5x32xf32>, vector<4x5x32xf32> -> vector<4x5x32xf32>
    "tpu.trace_stop"() : () -> ()
    %348 = vector.extract_strided_slice %347 {offsets = [0, 0, 0], sizes = [1, 5, 32], strides = [1, 1, 1]} : vector<4x5x32xf32> to vector<1x5x32xf32>
    %349 = vector.shape_cast %348 : vector<1x5x32xf32> to vector<5x32xf32>
    %350 = vector.extract_strided_slice %347 {offsets = [1, 0, 0], sizes = [1, 5, 32], strides = [1, 1, 1]} : vector<4x5x32xf32> to vector<1x5x32xf32>
    %351 = vector.shape_cast %350 : vector<1x5x32xf32> to vector<5x32xf32>
    %352 = vector.extract_strided_slice %347 {offsets = [2, 0, 0], sizes = [1, 5, 32], strides = [1, 1, 1]} : vector<4x5x32xf32> to vector<1x5x32xf32>
    %353 = vector.shape_cast %352 : vector<1x5x32xf32> to vector<5x32xf32>
    %354 = vector.extract_strided_slice %347 {offsets = [3, 0, 0], sizes = [1, 5, 32], strides = [1, 1, 1]} : vector<4x5x32xf32> to vector<1x5x32xf32>
    %355 = vector.shape_cast %354 : vector<1x5x32xf32> to vector<5x32xf32>
    %356 = tpu.concatenate %349, %351, %353, %355 in 1 : vector<5x32xf32>, vector<5x32xf32>, vector<5x32xf32>, vector<5x32xf32> -> vector<5x128xf32>
    %c2_146 = arith.constant 2 : index
    %c0_147 = arith.constant 0 : index
    %c0_148 = arith.constant 0 : index
    %357 = vector.load %arg9[%c2_146, %c0_147, %c0_148] : memref<4x128x128xf32, #tpu.memory_space<vmem>>, vector<1x128x128xf32>
    %358 = vector.shape_cast %357 : vector<1x128x128xf32> to vector<128x128xf32>
    %cst_149 = arith.constant dense<0.000000e+00> : vector<5x128xf32>
    %359 = tpu.matmul %356, %358, %cst_149 {dimension_numbers = #tpu.dot_dimension_numbers<[1], [0], [0], [1], [0, 0, 1, 1], [], []>} : vector<5x128xf32>, vector<128x128xf32>, vector<5x128xf32> -> vector<5x128xf32>
    %c2_150 = arith.constant 2 : index
    %c0_151 = arith.constant 0 : index
    %c0_152 = arith.constant 0 : index
    %360 = vector.load %arg10[%c2_150, %c0_151, %c0_152] : memref<4x1x128xf32, #tpu.memory_space<vmem>>, vector<1x1x128xf32>
    %361 = vector.shape_cast %360 : vector<1x1x128xf32> to vector<1x128xf32>
    %362 = vector.broadcast %361 : vector<1x128xf32> to vector<5x128xf32>
    %363 = arith.addf %359, %362 : vector<5x128xf32>
    %364 = arith.addf %292, %363 : vector<5x128xf32>
    %c2_153 = arith.constant 2 : index
    %c0_154 = arith.constant 0 : index
    %c0_155 = arith.constant 0 : index
    %365 = vector.load %arg11[%c2_153, %c0_154, %c0_155] : memref<4x1x128xf32, #tpu.memory_space<vmem>>, vector<1x1x128xf32>
    %366 = vector.shape_cast %365 : vector<1x1x128xf32> to vector<1x128xf32>
    %c2_156 = arith.constant 2 : index
    %c0_157 = arith.constant 0 : index
    %c0_158 = arith.constant 0 : index
    %367 = vector.load %arg12[%c2_156, %c0_157, %c0_158] : memref<4x1x128xf32, #tpu.memory_space<vmem>>, vector<1x1x128xf32>
    %368 = vector.shape_cast %367 : vector<1x1x128xf32> to vector<1x128xf32>
    %cst_159 = arith.constant dense<0.000000e+00> : vector<5xf32>
    %369 = vector.multi_reduction <add>, %364, %cst_159 [1] : vector<5x128xf32> to vector<5xf32>
    %370 = vector.shape_cast %369 : vector<5xf32> to vector<5x1xf32>
    %cst_160 = arith.constant 1.280000e+02 : f32
    %371 = vector.broadcast %cst_160 : f32 to vector<5x1xf32>
    %372 = arith.divf %370, %371 : vector<5x1xf32>
    %373 = vector.broadcast %372 : vector<5x1xf32> to vector<5x128xf32>
    %374 = arith.subf %364, %373 : vector<5x128xf32>
    %375 = arith.mulf %374, %374 : vector<5x128xf32>
    %cst_161 = arith.constant dense<0.000000e+00> : vector<5xf32>
    %376 = vector.multi_reduction <add>, %375, %cst_161 [1] : vector<5x128xf32> to vector<5xf32>
    %377 = vector.shape_cast %376 : vector<5xf32> to vector<5x1xf32>
    %cst_162 = arith.constant 1.280000e+02 : f32
    %378 = vector.broadcast %cst_162 : f32 to vector<5x1xf32>
    %379 = arith.divf %377, %378 : vector<5x1xf32>
    %380 = vector.broadcast %372 : vector<5x1xf32> to vector<5x128xf32>
    %381 = arith.subf %364, %380 : vector<5x128xf32>
    %cst_163 = arith.constant 9.99999974E-6 : f32
    %382 = vector.broadcast %cst_163 : f32 to vector<5x1xf32>
    %383 = arith.addf %379, %382 : vector<5x1xf32>
    %384 = math.rsqrt %383 : vector<5x1xf32>
    %385 = vector.broadcast %384 : vector<5x1xf32> to vector<5x128xf32>
    %386 = arith.mulf %381, %385 : vector<5x128xf32>
    %387 = vector.broadcast %366 : vector<1x128xf32> to vector<5x128xf32>
    %388 = arith.mulf %386, %387 : vector<5x128xf32>
    %389 = vector.broadcast %368 : vector<1x128xf32> to vector<5x128xf32>
    %390 = arith.addf %388, %389 : vector<5x128xf32>
    %c2_164 = arith.constant 2 : index
    %c0_165 = arith.constant 0 : index
    %c0_166 = arith.constant 0 : index
    %391 = vector.load %arg13[%c2_164, %c0_165, %c0_166] : memref<4x128x512xf32, #tpu.memory_space<vmem>>, vector<1x128x512xf32>
    %392 = vector.shape_cast %391 : vector<1x128x512xf32> to vector<128x512xf32>
    %cst_167 = arith.constant dense<0.000000e+00> : vector<5x512xf32>
    %393 = tpu.matmul %390, %392, %cst_167 {dimension_numbers = #tpu.dot_dimension_numbers<[1], [0], [0], [1], [0, 0, 1, 1], [], []>} : vector<5x128xf32>, vector<128x512xf32>, vector<5x512xf32> -> vector<5x512xf32>
    %c2_168 = arith.constant 2 : index
    %c0_169 = arith.constant 0 : index
    %c0_170 = arith.constant 0 : index
    %394 = vector.load %arg14[%c2_168, %c0_169, %c0_170] : memref<4x1x512xf32, #tpu.memory_space<vmem>>, vector<1x1x512xf32>
    %395 = vector.shape_cast %394 : vector<1x1x512xf32> to vector<1x512xf32>
    %396 = vector.broadcast %395 : vector<1x512xf32> to vector<5x512xf32>
    %397 = arith.addf %393, %396 : vector<5x512xf32>
    %cst_171 = arith.constant 0.000000e+00 : f32
    %398 = vector.broadcast %cst_171 : f32 to vector<5x512xf32>
    %399 = arith.maximumf %397, %398 : vector<5x512xf32>
    %c2_172 = arith.constant 2 : index
    %c0_173 = arith.constant 0 : index
    %c0_174 = arith.constant 0 : index
    %400 = vector.load %arg15[%c2_172, %c0_173, %c0_174] : memref<4x512x128xf32, #tpu.memory_space<vmem>>, vector<1x512x128xf32>
    %401 = vector.shape_cast %400 : vector<1x512x128xf32> to vector<512x128xf32>
    %cst_175 = arith.constant dense<0.000000e+00> : vector<5x128xf32>
    %402 = tpu.matmul %399, %401, %cst_175 {dimension_numbers = #tpu.dot_dimension_numbers<[1], [0], [0], [1], [0, 0, 1, 1], [], []>} : vector<5x512xf32>, vector<512x128xf32>, vector<5x128xf32> -> vector<5x128xf32>
    %c2_176 = arith.constant 2 : index
    %c0_177 = arith.constant 0 : index
    %c0_178 = arith.constant 0 : index
    %403 = vector.load %arg16[%c2_176, %c0_177, %c0_178] : memref<4x1x128xf32, #tpu.memory_space<vmem>>, vector<1x1x128xf32>
    %404 = vector.shape_cast %403 : vector<1x1x128xf32> to vector<1x128xf32>
    %405 = vector.broadcast %404 : vector<1x128xf32> to vector<5x128xf32>
    %406 = arith.addf %402, %405 : vector<5x128xf32>
    %407 = arith.addf %390, %406 : vector<5x128xf32>
    %c2_179 = arith.constant 2 : index
    %c0_180 = arith.constant 0 : index
    %c0_181 = arith.constant 0 : index
    %408 = vector.load %arg17[%c2_179, %c0_180, %c0_181] : memref<4x1x128xf32, #tpu.memory_space<vmem>>, vector<1x1x128xf32>
    %409 = vector.shape_cast %408 : vector<1x1x128xf32> to vector<1x128xf32>
    %c2_182 = arith.constant 2 : index
    %c0_183 = arith.constant 0 : index
    %c0_184 = arith.constant 0 : index
    %410 = vector.load %arg18[%c2_182, %c0_183, %c0_184] : memref<4x1x128xf32, #tpu.memory_space<vmem>>, vector<1x1x128xf32>
    %411 = vector.shape_cast %410 : vector<1x1x128xf32> to vector<1x128xf32>
    %cst_185 = arith.constant dense<0.000000e+00> : vector<5xf32>
    %412 = vector.multi_reduction <add>, %407, %cst_185 [1] : vector<5x128xf32> to vector<5xf32>
    %413 = vector.shape_cast %412 : vector<5xf32> to vector<5x1xf32>
    %cst_186 = arith.constant 1.280000e+02 : f32
    %414 = vector.broadcast %cst_186 : f32 to vector<5x1xf32>
    %415 = arith.divf %413, %414 : vector<5x1xf32>
    %416 = vector.broadcast %415 : vector<5x1xf32> to vector<5x128xf32>
    %417 = arith.subf %407, %416 : vector<5x128xf32>
    %418 = arith.mulf %417, %417 : vector<5x128xf32>
    %cst_187 = arith.constant dense<0.000000e+00> : vector<5xf32>
    %419 = vector.multi_reduction <add>, %418, %cst_187 [1] : vector<5x128xf32> to vector<5xf32>
    %420 = vector.shape_cast %419 : vector<5xf32> to vector<5x1xf32>
    %cst_188 = arith.constant 1.280000e+02 : f32
    %421 = vector.broadcast %cst_188 : f32 to vector<5x1xf32>
    %422 = arith.divf %420, %421 : vector<5x1xf32>
    %423 = vector.broadcast %415 : vector<5x1xf32> to vector<5x128xf32>
    %424 = arith.subf %407, %423 : vector<5x128xf32>
    %cst_189 = arith.constant 9.99999974E-6 : f32
    %425 = vector.broadcast %cst_189 : f32 to vector<5x1xf32>
    %426 = arith.addf %422, %425 : vector<5x1xf32>
    %427 = math.rsqrt %426 : vector<5x1xf32>
    %428 = vector.broadcast %427 : vector<5x1xf32> to vector<5x128xf32>
    %429 = arith.mulf %424, %428 : vector<5x128xf32>
    %430 = vector.broadcast %409 : vector<1x128xf32> to vector<5x128xf32>
    %431 = arith.mulf %429, %430 : vector<5x128xf32>
    %432 = vector.broadcast %411 : vector<1x128xf32> to vector<5x128xf32>
    %433 = arith.addf %431, %432 : vector<5x128xf32>
    %c3 = arith.constant 3 : index
    %c0_190 = arith.constant 0 : index
    %c0_191 = arith.constant 0 : index
    %434 = vector.load %arg7[%c3, %c0_190, %c0_191] : memref<4x128x384xf32, #tpu.memory_space<vmem>>, vector<1x128x384xf32>
    %435 = vector.shape_cast %434 : vector<1x128x384xf32> to vector<128x384xf32>
    %cst_192 = arith.constant dense<0.000000e+00> : vector<5x384xf32>
    %436 = tpu.matmul %433, %435, %cst_192 {dimension_numbers = #tpu.dot_dimension_numbers<[1], [0], [0], [1], [0, 0, 1, 1], [], []>} : vector<5x128xf32>, vector<128x384xf32>, vector<5x384xf32> -> vector<5x384xf32>
    %c3_193 = arith.constant 3 : index
    %c0_194 = arith.constant 0 : index
    %c0_195 = arith.constant 0 : index
    %437 = vector.load %arg8[%c3_193, %c0_194, %c0_195] : memref<4x1x384xf32, #tpu.memory_space<vmem>>, vector<1x1x384xf32>
    %438 = vector.shape_cast %437 : vector<1x1x384xf32> to vector<1x384xf32>
    %439 = vector.broadcast %438 : vector<1x384xf32> to vector<5x384xf32>
    %440 = arith.addf %436, %439 : vector<5x384xf32>
    %441 = vector.extract_strided_slice %440 {offsets = [0, 0], sizes = [5, 128], strides = [1, 1]} : vector<5x384xf32> to vector<5x128xf32>
    %442 = vector.extract_strided_slice %440 {offsets = [0, 128], sizes = [5, 128], strides = [1, 1]} : vector<5x384xf32> to vector<5x128xf32>
    %443 = vector.extract_strided_slice %440 {offsets = [0, 256], sizes = [5, 128], strides = [1, 1]} : vector<5x384xf32> to vector<5x128xf32>
    %444 = vector.extract_strided_slice %441 {offsets = [0, 0], sizes = [5, 32], strides = [1, 1]} : vector<5x128xf32> to vector<5x32xf32>
    %445 = vector.extract_strided_slice %441 {offsets = [0, 32], sizes = [5, 32], strides = [1, 1]} : vector<5x128xf32> to vector<5x32xf32>
    %446 = vector.extract_strided_slice %441 {offsets = [0, 64], sizes = [5, 32], strides = [1, 1]} : vector<5x128xf32> to vector<5x32xf32>
    %447 = vector.extract_strided_slice %441 {offsets = [0, 96], sizes = [5, 32], strides = [1, 1]} : vector<5x128xf32> to vector<5x32xf32>
    %448 = vector.shape_cast %444 : vector<5x32xf32> to vector<1x5x32xf32>
    %449 = vector.shape_cast %445 : vector<5x32xf32> to vector<1x5x32xf32>
    %450 = vector.shape_cast %446 : vector<5x32xf32> to vector<1x5x32xf32>
    %451 = vector.shape_cast %447 : vector<5x32xf32> to vector<1x5x32xf32>
    %452 = tpu.concatenate %448, %449, %450, %451 in 0 : vector<1x5x32xf32>, vector<1x5x32xf32>, vector<1x5x32xf32>, vector<1x5x32xf32> -> vector<4x5x32xf32>
    %453 = vector.extract_strided_slice %442 {offsets = [0, 0], sizes = [5, 32], strides = [1, 1]} : vector<5x128xf32> to vector<5x32xf32>
    %454 = vector.extract_strided_slice %442 {offsets = [0, 32], sizes = [5, 32], strides = [1, 1]} : vector<5x128xf32> to vector<5x32xf32>
    %455 = vector.extract_strided_slice %442 {offsets = [0, 64], sizes = [5, 32], strides = [1, 1]} : vector<5x128xf32> to vector<5x32xf32>
    %456 = vector.extract_strided_slice %442 {offsets = [0, 96], sizes = [5, 32], strides = [1, 1]} : vector<5x128xf32> to vector<5x32xf32>
    %457 = vector.shape_cast %453 : vector<5x32xf32> to vector<1x5x32xf32>
    %458 = vector.shape_cast %454 : vector<5x32xf32> to vector<1x5x32xf32>
    %459 = vector.shape_cast %455 : vector<5x32xf32> to vector<1x5x32xf32>
    %460 = vector.shape_cast %456 : vector<5x32xf32> to vector<1x5x32xf32>
    %461 = tpu.concatenate %457, %458, %459, %460 in 0 : vector<1x5x32xf32>, vector<1x5x32xf32>, vector<1x5x32xf32>, vector<1x5x32xf32> -> vector<4x5x32xf32>
    %462 = vector.extract_strided_slice %443 {offsets = [0, 0], sizes = [5, 32], strides = [1, 1]} : vector<5x128xf32> to vector<5x32xf32>
    %463 = vector.extract_strided_slice %443 {offsets = [0, 32], sizes = [5, 32], strides = [1, 1]} : vector<5x128xf32> to vector<5x32xf32>
    %464 = vector.extract_strided_slice %443 {offsets = [0, 64], sizes = [5, 32], strides = [1, 1]} : vector<5x128xf32> to vector<5x32xf32>
    %465 = vector.extract_strided_slice %443 {offsets = [0, 96], sizes = [5, 32], strides = [1, 1]} : vector<5x128xf32> to vector<5x32xf32>
    %466 = vector.shape_cast %462 : vector<5x32xf32> to vector<1x5x32xf32>
    %467 = vector.shape_cast %463 : vector<5x32xf32> to vector<1x5x32xf32>
    %468 = vector.shape_cast %464 : vector<5x32xf32> to vector<1x5x32xf32>
    %469 = vector.shape_cast %465 : vector<5x32xf32> to vector<1x5x32xf32>
    %470 = tpu.concatenate %466, %467, %468, %469 in 0 : vector<1x5x32xf32>, vector<1x5x32xf32>, vector<1x5x32xf32>, vector<1x5x32xf32> -> vector<4x5x32xf32>
    "tpu.trace_start"() <{level = 10 : i32, message = "htd,hsd->hts"}> : () -> ()
    %cst_196 = arith.constant dense<0.000000e+00> : vector<4x5x5xf32>
    %471 = tpu.matmul %452, %461, %cst_196 {dimension_numbers = #tpu.dot_dimension_numbers<[2], [2], [1], [1], [0, 0, 0, 1, 1, 1], [0], [0]>} : vector<4x5x32xf32>, vector<4x5x32xf32>, vector<4x5x5xf32> -> vector<4x5x5xf32>
    "tpu.trace_stop"() : () -> ()
    %cst_197 = arith.constant 0.176776692 : f32
    %472 = vector.broadcast %cst_197 : f32 to vector<4x5x5xf32>
    %473 = arith.mulf %471, %472 : vector<4x5x5xf32>
    %cst_198 = arith.constant dense<0xFF800000> : vector<4x5xf32>
    %474 = vector.multi_reduction <maximumf>, %473, %cst_198 [2] : vector<4x5x5xf32> to vector<4x5xf32>
    %cst_199 = arith.constant 0xFF800000 : f32
    %475 = vector.broadcast %cst_199 : f32 to vector<4x5xf32>
    %476 = arith.maximumf %475, %474 : vector<4x5xf32>
    %477 = vector.shape_cast %476 : vector<4x5xf32> to vector<4x5x1xf32>
    %478 = vector.broadcast %477 : vector<4x5x1xf32> to vector<4x5x5xf32>
    %479 = arith.subf %473, %478 : vector<4x5x5xf32>
    %480 = math.exp %479 : vector<4x5x5xf32>
    %cst_200 = arith.constant dense<0.000000e+00> : vector<4x5xf32>
    %481 = vector.multi_reduction <add>, %480, %cst_200 [2] : vector<4x5x5xf32> to vector<4x5xf32>
    %482 = vector.shape_cast %481 : vector<4x5xf32> to vector<4x5x1xf32>
    %483 = vector.broadcast %482 : vector<4x5x1xf32> to vector<4x5x5xf32>
    %484 = arith.divf %480, %483 : vector<4x5x5xf32>
    "tpu.trace_start"() <{level = 10 : i32, message = "hts,hsd->htd"}> : () -> ()
    %cst_201 = arith.constant dense<0.000000e+00> : vector<4x5x32xf32>
    %485 = tpu.matmul %484, %470, %cst_201 {dimension_numbers = #tpu.dot_dimension_numbers<[2], [1], [1], [2], [0, 0, 0, 1, 1, 2], [0], [0]>} : vector<4x5x5xf32>, vector<4x5x32xf32>, vector<4x5x32xf32> -> vector<4x5x32xf32>
    "tpu.trace_stop"() : () -> ()
    %486 = vector.extract_strided_slice %485 {offsets = [0, 0, 0], sizes = [1, 5, 32], strides = [1, 1, 1]} : vector<4x5x32xf32> to vector<1x5x32xf32>
    %487 = vector.shape_cast %486 : vector<1x5x32xf32> to vector<5x32xf32>
    %488 = vector.extract_strided_slice %485 {offsets = [1, 0, 0], sizes = [1, 5, 32], strides = [1, 1, 1]} : vector<4x5x32xf32> to vector<1x5x32xf32>
    %489 = vector.shape_cast %488 : vector<1x5x32xf32> to vector<5x32xf32>
    %490 = vector.extract_strided_slice %485 {offsets = [2, 0, 0], sizes = [1, 5, 32], strides = [1, 1, 1]} : vector<4x5x32xf32> to vector<1x5x32xf32>
    %491 = vector.shape_cast %490 : vector<1x5x32xf32> to vector<5x32xf32>
    %492 = vector.extract_strided_slice %485 {offsets = [3, 0, 0], sizes = [1, 5, 32], strides = [1, 1, 1]} : vector<4x5x32xf32> to vector<1x5x32xf32>
    %493 = vector.shape_cast %492 : vector<1x5x32xf32> to vector<5x32xf32>
    %494 = tpu.concatenate %487, %489, %491, %493 in 1 : vector<5x32xf32>, vector<5x32xf32>, vector<5x32xf32>, vector<5x32xf32> -> vector<5x128xf32>
    %c3_202 = arith.constant 3 : index
    %c0_203 = arith.constant 0 : index
    %c0_204 = arith.constant 0 : index
    %495 = vector.load %arg9[%c3_202, %c0_203, %c0_204] : memref<4x128x128xf32, #tpu.memory_space<vmem>>, vector<1x128x128xf32>
    %496 = vector.shape_cast %495 : vector<1x128x128xf32> to vector<128x128xf32>
    %cst_205 = arith.constant dense<0.000000e+00> : vector<5x128xf32>
    %497 = tpu.matmul %494, %496, %cst_205 {dimension_numbers = #tpu.dot_dimension_numbers<[1], [0], [0], [1], [0, 0, 1, 1], [], []>} : vector<5x128xf32>, vector<128x128xf32>, vector<5x128xf32> -> vector<5x128xf32>
    %c3_206 = arith.constant 3 : index
    %c0_207 = arith.constant 0 : index
    %c0_208 = arith.constant 0 : index
    %498 = vector.load %arg10[%c3_206, %c0_207, %c0_208] : memref<4x1x128xf32, #tpu.memory_space<vmem>>, vector<1x1x128xf32>
    %499 = vector.shape_cast %498 : vector<1x1x128xf32> to vector<1x128xf32>
    %500 = vector.broadcast %499 : vector<1x128xf32> to vector<5x128xf32>
    %501 = arith.addf %497, %500 : vector<5x128xf32>
    %502 = arith.addf %433, %501 : vector<5x128xf32>
    %c3_209 = arith.constant 3 : index
    %c0_210 = arith.constant 0 : index
    %c0_211 = arith.constant 0 : index
    %503 = vector.load %arg11[%c3_209, %c0_210, %c0_211] : memref<4x1x128xf32, #tpu.memory_space<vmem>>, vector<1x1x128xf32>
    %504 = vector.shape_cast %503 : vector<1x1x128xf32> to vector<1x128xf32>
    %c3_212 = arith.constant 3 : index
    %c0_213 = arith.constant 0 : index
    %c0_214 = arith.constant 0 : index
    %505 = vector.load %arg12[%c3_212, %c0_213, %c0_214] : memref<4x1x128xf32, #tpu.memory_space<vmem>>, vector<1x1x128xf32>
    %506 = vector.shape_cast %505 : vector<1x1x128xf32> to vector<1x128xf32>
    %cst_215 = arith.constant dense<0.000000e+00> : vector<5xf32>
    %507 = vector.multi_reduction <add>, %502, %cst_215 [1] : vector<5x128xf32> to vector<5xf32>
    %508 = vector.shape_cast %507 : vector<5xf32> to vector<5x1xf32>
    %cst_216 = arith.constant 1.280000e+02 : f32
    %509 = vector.broadcast %cst_216 : f32 to vector<5x1xf32>
    %510 = arith.divf %508, %509 : vector<5x1xf32>
    %511 = vector.broadcast %510 : vector<5x1xf32> to vector<5x128xf32>
    %512 = arith.subf %502, %511 : vector<5x128xf32>
    %513 = arith.mulf %512, %512 : vector<5x128xf32>
    %cst_217 = arith.constant dense<0.000000e+00> : vector<5xf32>
    %514 = vector.multi_reduction <add>, %513, %cst_217 [1] : vector<5x128xf32> to vector<5xf32>
    %515 = vector.shape_cast %514 : vector<5xf32> to vector<5x1xf32>
    %cst_218 = arith.constant 1.280000e+02 : f32
    %516 = vector.broadcast %cst_218 : f32 to vector<5x1xf32>
    %517 = arith.divf %515, %516 : vector<5x1xf32>
    %518 = vector.broadcast %510 : vector<5x1xf32> to vector<5x128xf32>
    %519 = arith.subf %502, %518 : vector<5x128xf32>
    %cst_219 = arith.constant 9.99999974E-6 : f32
    %520 = vector.broadcast %cst_219 : f32 to vector<5x1xf32>
    %521 = arith.addf %517, %520 : vector<5x1xf32>
    %522 = math.rsqrt %521 : vector<5x1xf32>
    %523 = vector.broadcast %522 : vector<5x1xf32> to vector<5x128xf32>
    %524 = arith.mulf %519, %523 : vector<5x128xf32>
    %525 = vector.broadcast %504 : vector<1x128xf32> to vector<5x128xf32>
    %526 = arith.mulf %524, %525 : vector<5x128xf32>
    %527 = vector.broadcast %506 : vector<1x128xf32> to vector<5x128xf32>
    %528 = arith.addf %526, %527 : vector<5x128xf32>
    %c3_220 = arith.constant 3 : index
    %c0_221 = arith.constant 0 : index
    %c0_222 = arith.constant 0 : index
    %529 = vector.load %arg13[%c3_220, %c0_221, %c0_222] : memref<4x128x512xf32, #tpu.memory_space<vmem>>, vector<1x128x512xf32>
    %530 = vector.shape_cast %529 : vector<1x128x512xf32> to vector<128x512xf32>
    %cst_223 = arith.constant dense<0.000000e+00> : vector<5x512xf32>
    %531 = tpu.matmul %528, %530, %cst_223 {dimension_numbers = #tpu.dot_dimension_numbers<[1], [0], [0], [1], [0, 0, 1, 1], [], []>} : vector<5x128xf32>, vector<128x512xf32>, vector<5x512xf32> -> vector<5x512xf32>
    %c3_224 = arith.constant 3 : index
    %c0_225 = arith.constant 0 : index
    %c0_226 = arith.constant 0 : index
    %532 = vector.load %arg14[%c3_224, %c0_225, %c0_226] : memref<4x1x512xf32, #tpu.memory_space<vmem>>, vector<1x1x512xf32>
    %533 = vector.shape_cast %532 : vector<1x1x512xf32> to vector<1x512xf32>
    %534 = vector.broadcast %533 : vector<1x512xf32> to vector<5x512xf32>
    %535 = arith.addf %531, %534 : vector<5x512xf32>
    %cst_227 = arith.constant 0.000000e+00 : f32
    %536 = vector.broadcast %cst_227 : f32 to vector<5x512xf32>
    %537 = arith.maximumf %535, %536 : vector<5x512xf32>
    %c3_228 = arith.constant 3 : index
    %c0_229 = arith.constant 0 : index
    %c0_230 = arith.constant 0 : index
    %538 = vector.load %arg15[%c3_228, %c0_229, %c0_230] : memref<4x512x128xf32, #tpu.memory_space<vmem>>, vector<1x512x128xf32>
    %539 = vector.shape_cast %538 : vector<1x512x128xf32> to vector<512x128xf32>
    %cst_231 = arith.constant dense<0.000000e+00> : vector<5x128xf32>
    %540 = tpu.matmul %537, %539, %cst_231 {dimension_numbers = #tpu.dot_dimension_numbers<[1], [0], [0], [1], [0, 0, 1, 1], [], []>} : vector<5x512xf32>, vector<512x128xf32>, vector<5x128xf32> -> vector<5x128xf32>
    %c3_232 = arith.constant 3 : index
    %c0_233 = arith.constant 0 : index
    %c0_234 = arith.constant 0 : index
    %541 = vector.load %arg16[%c3_232, %c0_233, %c0_234] : memref<4x1x128xf32, #tpu.memory_space<vmem>>, vector<1x1x128xf32>
    %542 = vector.shape_cast %541 : vector<1x1x128xf32> to vector<1x128xf32>
    %543 = vector.broadcast %542 : vector<1x128xf32> to vector<5x128xf32>
    %544 = arith.addf %540, %543 : vector<5x128xf32>
    %545 = arith.addf %528, %544 : vector<5x128xf32>
    %c3_235 = arith.constant 3 : index
    %c0_236 = arith.constant 0 : index
    %c0_237 = arith.constant 0 : index
    %546 = vector.load %arg17[%c3_235, %c0_236, %c0_237] : memref<4x1x128xf32, #tpu.memory_space<vmem>>, vector<1x1x128xf32>
    %547 = vector.shape_cast %546 : vector<1x1x128xf32> to vector<1x128xf32>
    %c3_238 = arith.constant 3 : index
    %c0_239 = arith.constant 0 : index
    %c0_240 = arith.constant 0 : index
    %548 = vector.load %arg18[%c3_238, %c0_239, %c0_240] : memref<4x1x128xf32, #tpu.memory_space<vmem>>, vector<1x1x128xf32>
    %549 = vector.shape_cast %548 : vector<1x1x128xf32> to vector<1x128xf32>
    %cst_241 = arith.constant dense<0.000000e+00> : vector<5xf32>
    %550 = vector.multi_reduction <add>, %545, %cst_241 [1] : vector<5x128xf32> to vector<5xf32>
    %551 = vector.shape_cast %550 : vector<5xf32> to vector<5x1xf32>
    %cst_242 = arith.constant 1.280000e+02 : f32
    %552 = vector.broadcast %cst_242 : f32 to vector<5x1xf32>
    %553 = arith.divf %551, %552 : vector<5x1xf32>
    %554 = vector.broadcast %553 : vector<5x1xf32> to vector<5x128xf32>
    %555 = arith.subf %545, %554 : vector<5x128xf32>
    %556 = arith.mulf %555, %555 : vector<5x128xf32>
    %cst_243 = arith.constant dense<0.000000e+00> : vector<5xf32>
    %557 = vector.multi_reduction <add>, %556, %cst_243 [1] : vector<5x128xf32> to vector<5xf32>
    %558 = vector.shape_cast %557 : vector<5xf32> to vector<5x1xf32>
    %cst_244 = arith.constant 1.280000e+02 : f32
    %559 = vector.broadcast %cst_244 : f32 to vector<5x1xf32>
    %560 = arith.divf %558, %559 : vector<5x1xf32>
    %561 = vector.broadcast %553 : vector<5x1xf32> to vector<5x128xf32>
    %562 = arith.subf %545, %561 : vector<5x128xf32>
    %cst_245 = arith.constant 9.99999974E-6 : f32
    %563 = vector.broadcast %cst_245 : f32 to vector<5x1xf32>
    %564 = arith.addf %560, %563 : vector<5x1xf32>
    %565 = math.rsqrt %564 : vector<5x1xf32>
    %566 = vector.broadcast %565 : vector<5x1xf32> to vector<5x128xf32>
    %567 = arith.mulf %562, %566 : vector<5x128xf32>
    %568 = vector.broadcast %547 : vector<1x128xf32> to vector<5x128xf32>
    %569 = arith.mulf %567, %568 : vector<5x128xf32>
    %570 = vector.broadcast %549 : vector<1x128xf32> to vector<5x128xf32>
    %571 = arith.addf %569, %570 : vector<5x128xf32>
    %cst_246 = arith.constant dense<0.000000e+00> : vector<128xf32>
    %572 = vector.multi_reduction <add>, %571, %cst_246 [0] : vector<5x128xf32> to vector<128xf32>
    %573 = vector.shape_cast %572 : vector<128xf32> to vector<1x128xf32>
    %cst_247 = arith.constant 5.000000e+00 : f32
    %574 = vector.broadcast %cst_247 : f32 to vector<1x128xf32>
    %575 = arith.divf %573, %574 : vector<1x128xf32>
    %c0_248 = arith.constant 0 : index
    %c0_249 = arith.constant 0 : index
    %c0_250 = arith.constant 0 : index
    %576 = vector.load %arg24[%c0_248, %c0_249, %c0_250] : memref<1x1x128xf32, #tpu.memory_space<vmem>>, vector<1x1x128xf32>
    %577 = vector.shape_cast %576 : vector<1x1x128xf32> to vector<1x128xf32>
    %578 = vector.shape_cast %575 : vector<1x128xf32> to vector<1x1x128xf32>
    tpu.vector_store %arg24[%c0_248, %c0_249, %c0_250], %578 {strides = array<i32>} : memref<1x1x128xf32, #tpu.memory_space<vmem>>, vector<1x1x128xf32>,
    %c0_251 = arith.constant 0 : index
    %c0_252 = arith.constant 0 : index
    %579 = vector.load %arg19[%c0_251, %c0_252] : memref<128x896xf32, #tpu.memory_space<vmem>>, vector<128x896xf32>
    %cst_253 = arith.constant dense<0.000000e+00> : vector<1x896xf32>
    %580 = tpu.matmul %575, %579, %cst_253 {dimension_numbers = #tpu.dot_dimension_numbers<[1], [0], [0], [1], [0, 0, 1, 1], [], []>} : vector<1x128xf32>, vector<128x896xf32>, vector<1x896xf32> -> vector<1x896xf32>
    %c0_254 = arith.constant 0 : index
    %c0_255 = arith.constant 0 : index
    %581 = vector.load %arg20[%c0_254, %c0_255] : memref<1x896xf32, #tpu.memory_space<vmem>>, vector<1x896xf32>
    %582 = arith.addf %580, %581 : vector<1x896xf32>
    %c0_256 = arith.constant 0 : index
    %c0_257 = arith.constant 0 : index
    %c0_258 = arith.constant 0 : index
    %583 = vector.load %arg2[%c0_256, %c0_257, %c0_258] : memref<1x1x896xf32, #tpu.memory_space<vmem>>, vector<1x1x896xf32>
    %584 = vector.shape_cast %583 : vector<1x1x896xf32> to vector<1x896xf32>
    %585 = arith.mulf %582, %584 : vector<1x896xf32>
    %c0_259 = arith.constant 0 : index
    %c0_260 = arith.constant 0 : index
    %c0_261 = arith.constant 0 : index
    %586 = vector.load %arg25[%c0_259, %c0_260, %c0_261] : memref<1x1x896xf32, #tpu.memory_space<vmem>>, vector<1x1x896xf32>
    %587 = vector.shape_cast %586 : vector<1x1x896xf32> to vector<1x896xf32>
    %588 = vector.shape_cast %585 : vector<1x896xf32> to vector<1x1x896xf32>
    tpu.vector_store %arg25[%c0_259, %c0_260, %c0_261], %588 {strides = array<i32>} : memref<1x1x896xf32, #tpu.memory_space<vmem>>, vector<1x1x896xf32>,
    return
  }
  func.func @transform_0(%arg0: i32) -> (i32, i32, i32) {
    %c0_i32 = arith.constant 0 : i32
    %c0_i32_0 = arith.constant 0 : i32
    %c0_i32_1 = arith.constant 0 : i32
    return %arg0, %c0_i32, %c0_i32_0 : i32, i32, i32
  }
  func.func @transform_1(%arg0: i32) -> (i32, i32, i32) {
    %c0_i32 = arith.constant 0 : i32
    %c0_i32_0 = arith.constant 0 : i32
    %c0_i32_1 = arith.constant 0 : i32
    return %arg0, %c0_i32, %c0_i32_0 : i32, i32, i32
  }
  func.func @transform_2(%arg0: i32) -> (i32, i32) {
    %c0_i32 = arith.constant 0 : i32
    %c0_i32_0 = arith.constant 0 : i32
    %c0_i32_1 = arith.constant 0 : i32
    return %c0_i32, %c0_i32_0 : i32, i32
  }
  func.func @transform_3(%arg0: i32) -> (i32, i32) {
    %c0_i32 = arith.constant 0 : i32
    %c0_i32_0 = arith.constant 0 : i32
    %c0_i32_1 = arith.constant 0 : i32
    return %c0_i32, %c0_i32_0 : i32, i32
  }
  func.func @transform_4(%arg0: i32) -> (i32, i32) {
    %c0_i32 = arith.constant 0 : i32
    %c0_i32_0 = arith.constant 0 : i32
    %c0_i32_1 = arith.constant 0 : i32
    return %c0_i32, %c0_i32_0 : i32, i32
  }
  func.func @transform_5(%arg0: i32) -> (i32, i32) {
    %c0_i32 = arith.constant 0 : i32
    %c0_i32_0 = arith.constant 0 : i32
    %c0_i32_1 = arith.constant 0 : i32
    return %c0_i32, %c0_i32_0 : i32, i32
  }
  func.func @transform_6(%arg0: i32) -> (i32, i32, i32) {
    %c0_i32 = arith.constant 0 : i32
    %c0_i32_0 = arith.constant 0 : i32
    %c0_i32_1 = arith.constant 0 : i32
    %c0_i32_2 = arith.constant 0 : i32
    return %c0_i32, %c0_i32_0, %c0_i32_1 : i32, i32, i32
  }
  func.func @transform_7(%arg0: i32) -> (i32, i32, i32) {
    %c0_i32 = arith.constant 0 : i32
    %c0_i32_0 = arith.constant 0 : i32
    %c0_i32_1 = arith.constant 0 : i32
    %c0_i32_2 = arith.constant 0 : i32
    return %c0_i32, %c0_i32_0, %c0_i32_1 : i32, i32, i32
  }
  func.func @transform_8(%arg0: i32) -> (i32, i32, i32) {
    %c0_i32 = arith.constant 0 : i32
    %c0_i32_0 = arith.constant 0 : i32
    %c0_i32_1 = arith.constant 0 : i32
    %c0_i32_2 = arith.constant 0 : i32
    return %c0_i32, %c0_i32_0, %c0_i32_1 : i32, i32, i32
  }
  func.func @transform_9(%arg0: i32) -> (i32, i32, i32) {
    %c0_i32 = arith.constant 0 : i32
    %c0_i32_0 = arith.constant 0 : i32
    %c0_i32_1 = arith.constant 0 : i32
    %c0_i32_2 = arith.constant 0 : i32
    return %c0_i32, %c0_i32_0, %c0_i32_1 : i32, i32, i32
  }
  func.func @transform_10(%arg0: i32) -> (i32, i32, i32) {
    %c0_i32 = arith.constant 0 : i32
    %c0_i32_0 = arith.constant 0 : i32
    %c0_i32_1 = arith.constant 0 : i32
    %c0_i32_2 = arith.constant 0 : i32
    return %c0_i32, %c0_i32_0, %c0_i32_1 : i32, i32, i32
  }
  func.func @transform_11(%arg0: i32) -> (i32, i32, i32) {
    %c0_i32 = arith.constant 0 : i32
    %c0_i32_0 = arith.constant 0 : i32
    %c0_i32_1 = arith.constant 0 : i32
    %c0_i32_2 = arith.constant 0 : i32
    return %c0_i32, %c0_i32_0, %c0_i32_1 : i32, i32, i32
  }
  func.func @transform_12(%arg0: i32) -> (i32, i32, i32) {
    %c0_i32 = arith.constant 0 : i32
    %c0_i32_0 = arith.constant 0 : i32
    %c0_i32_1 = arith.constant 0 : i32
    %c0_i32_2 = arith.constant 0 : i32
    return %c0_i32, %c0_i32_0, %c0_i32_1 : i32, i32, i32
  }
  func.func @transform_13(%arg0: i32) -> (i32, i32, i32) {
    %c0_i32 = arith.constant 0 : i32
    %c0_i32_0 = arith.constant 0 : i32
    %c0_i32_1 = arith.constant 0 : i32
    %c0_i32_2 = arith.constant 0 : i32
    return %c0_i32, %c0_i32_0, %c0_i32_1 : i32, i32, i32
  }
  func.func @transform_14(%arg0: i32) -> (i32, i32, i32) {
    %c0_i32 = arith.constant 0 : i32
    %c0_i32_0 = arith.constant 0 : i32
    %c0_i32_1 = arith.constant 0 : i32
    %c0_i32_2 = arith.constant 0 : i32
    return %c0_i32, %c0_i32_0, %c0_i32_1 : i32, i32, i32
  }
  func.func @transform_15(%arg0: i32) -> (i32, i32, i32) {
    %c0_i32 = arith.constant 0 : i32
    %c0_i32_0 = arith.constant 0 : i32
    %c0_i32_1 = arith.constant 0 : i32
    %c0_i32_2 = arith.constant 0 : i32
    return %c0_i32, %c0_i32_0, %c0_i32_1 : i32, i32, i32
  }
  func.func @transform_16(%arg0: i32) -> (i32, i32, i32) {
    %c0_i32 = arith.constant 0 : i32
    %c0_i32_0 = arith.constant 0 : i32
    %c0_i32_1 = arith.constant 0 : i32
    %c0_i32_2 = arith.constant 0 : i32
    return %c0_i32, %c0_i32_0, %c0_i32_1 : i32, i32, i32
  }
  func.func @transform_17(%arg0: i32) -> (i32, i32, i32) {
    %c0_i32 = arith.constant 0 : i32
    %c0_i32_0 = arith.constant 0 : i32
    %c0_i32_1 = arith.constant 0 : i32
    %c0_i32_2 = arith.constant 0 : i32
    return %c0_i32, %c0_i32_0, %c0_i32_1 : i32, i32, i32
  }
  func.func @transform_18(%arg0: i32) -> (i32, i32) {
    %c0_i32 = arith.constant 0 : i32
    %c0_i32_0 = arith.constant 0 : i32
    %c0_i32_1 = arith.constant 0 : i32
    return %c0_i32, %c0_i32_0 : i32, i32
  }
  func.func @transform_19(%arg0: i32) -> (i32, i32) {
    %c0_i32 = arith.constant 0 : i32
    %c0_i32_0 = arith.constant 0 : i32
    %c0_i32_1 = arith.constant 0 : i32
    return %c0_i32, %c0_i32_0 : i32, i32
  }
  func.func @transform_20(%arg0: i32) -> (i32, i32, i32) {
    %c0_i32 = arith.constant 0 : i32
    %c0_i32_0 = arith.constant 0 : i32
    %c0_i32_1 = arith.constant 0 : i32
    return %arg0, %c0_i32, %c0_i32_0 : i32, i32, i32
  }
  func.func @transform_21(%arg0: i32) -> (i32, i32, i32) {
    %c0_i32 = arith.constant 0 : i32
    %c0_i32_0 = arith.constant 0 : i32
    %c0_i32_1 = arith.constant 0 : i32
    return %arg0, %c0_i32, %c0_i32_0 : i32, i32, i32
  }
  func.func @transform_22(%arg0: i32) -> (i32, i32, i32) {
    %c0_i32 = arith.constant 0 : i32
    %c0_i32_0 = arith.constant 0 : i32
    %c0_i32_1 = arith.constant 0 : i32
    return %arg0, %c0_i32, %c0_i32_0 : i32, i32, i32
  }
  func.func @transform_23(%arg0: i32) -> (i32, i32, i32) {
    %c0_i32 = arith.constant 0 : i32
    %c0_i32_0 = arith.constant 0 : i32
    %c0_i32_1 = arith.constant 0 : i32
    return %arg0, %c0_i32, %c0_i32_0 : i32, i32, i32
  }
  func.func @transform_24(%arg0: i32) -> (i32, i32, i32) {
    %c0_i32 = arith.constant 0 : i32
    %c0_i32_0 = arith.constant 0 : i32
    %c0_i32_1 = arith.constant 0 : i32
    return %arg0, %c0_i32, %c0_i32_0 : i32, i32, i32
  }
}

</mosaic_0001>

<llo_original>
// kernel: tpu_custom_call.1
$region0: #{tpu_custom_call.1}
  #allocation0 [shape = 'u32[]', space=smem, size = 0x4, offset = 0x4, fixed_abs, tag = 'smem constant byte address 0x4 - core index']
  #allocation1 [shape = 'u32[144,128]{1,0:T(1,128)}', space=vmem, size = 0x12000, scoped, tag = 'internal scratch']
  %s0 = inlined_call_operand.hbm [shape: f32[2,128,256], index: 0, kind: input, shape index: {}]
  %s1 = inlined_call_operand.hbm [shape: f32[2,1,896], index: 1, kind: input, shape index: {}]
  %s2 = inlined_call_operand.hbm [shape: f32[256,128], index: 2, kind: input, shape index: {}]
  %s3 = inlined_call_operand.hbm [shape: f32[1,128], index: 3, kind: input, shape index: {}]
  %s4 = inlined_call_operand.hbm [shape: f32[10,128], index: 4, kind: input, shape index: {}]
  %s5 = inlined_call_operand.hbm [shape: f32[5,10], index: 5, kind: input, shape index: {}]
  %s6 = inlined_call_operand.hbm [shape: f32[4,128,384], index: 6, kind: input, shape index: {}]
  %s7 = inlined_call_operand.hbm [shape: f32[4,1,384], index: 7, kind: input, shape index: {}]
  %s8 = inlined_call_operand.hbm [shape: f32[4,128,128], index: 8, kind: input, shape index: {}]
  %s9 = inlined_call_operand.hbm [shape: f32[4,1,128], index: 9, kind: input, shape index: {}]
  %s10 = inlined_call_operand.hbm [shape: f32[4,1,128], index: 10, kind: input, shape index: {}]
  %s11 = inlined_call_operand.hbm [shape: f32[4,1,128], index: 11, kind: input, shape index: {}]
  %s12 = inlined_call_operand.hbm [shape: f32[4,128,512], index: 12, kind: input, shape index: {}]
  %s13 = inlined_call_operand.vmem [shape: f32[4,1,512], index: 13, kind: input, shape index: {}]
  %s14 = inlined_call_operand.hbm [shape: f32[4,512,128], index: 14, kind: input, shape index: {}]
  %s15 = inlined_call_operand.vmem [shape: f32[4,1,128], index: 15, kind: input, shape index: {}]
  %s16 = inlined_call_operand.hbm [shape: f32[4,1,128], index: 16, kind: input, shape index: {}]
  %s17 = inlined_call_operand.vmem [shape: f32[4,1,128], index: 17, kind: input, shape index: {}]
  %s18 = inlined_call_operand.hbm [shape: f32[128,896], index: 18, kind: input, shape index: {}]
  %s19 = inlined_call_operand.vmem [shape: f32[1,896], index: 19, kind: input, shape index: {}]
  %s20 = inlined_call_operand.hbm [shape: f32[2,128,128], index: 20, kind: output, shape index: {0}]
  %s21 = inlined_call_operand.vmem [shape: f32[2,10,128], index: 21, kind: output, shape index: {1}]
  %s22 = inlined_call_operand.vmem [shape: f32[2,5,128], index: 22, kind: output, shape index: {2}]
  %s23 = inlined_call_operand.hbm [shape: f32[2,1,128], index: 23, kind: output, shape index: {3}]
  %s24 = inlined_call_operand.hbm [shape: f32[2,1,896], index: 24, kind: output, shape index: {4}]
  %25 = xla_tuple %s20, %s21, %s22, %s23, %s24
  %s26 = sld [smem:[#allocation0]]
  $region209: #{tpu_custom_call.1} parent=0
    _
  %s28 = ssub.s32 1, %s26
  %s29 = scalar_select 0, %s28, %s26
  $region1: #{tpu_custom_call.1} parent=0
    #allocation2 [shape = 'u8[262144]{0}', space=vmem, size = 0x40000, scoped, tag = 'input window, operand 0']
    #allocation3 [shape = 's32[2]{0}', space=sflag, size = 0x8, scoped, tag = 'scoped memory for tpu_custom_call.1']
    #allocation4 [shape = 's32[2]{0}', space=sflag, size = 0x8, scoped, tag = 'scoped memory for tpu_custom_call.1']
    #allocation5 [shape = 'u8[7168]{0}', space=vmem, size = 0x1c00, scoped, tag = 'input window, operand 1']
    #allocation6 [shape = 's32[2]{0}', space=sflag, size = 0x8, scoped, tag = 'scoped memory for tpu_custom_call.1']
    #allocation7 [shape = 'u8[131072]{0}', space=vmem, size = 0x20000, scoped, tag = 'input window, operand 2, single buffered']
    #allocation8 [shape = 'u8[512]{0}', space=vmem, size = 0x400, scoped, tag = 'input window, operand 3, single buffered']
    #allocation9 [shape = 's32[1]{0}', space=sflag, size = 0x4, scoped, tag = 'scoped memory for tpu_custom_call.1']
    #allocation10 [shape = 'u8[8192]{0}', space=vmem, size = 0x2000, scoped, tag = 'input window, operand 4, single buffered']
    #allocation11 [shape = 'u8[4096]{0}', space=vmem, size = 0x1000, scoped, tag = 'input window, operand 5, single buffered']
    #allocation12 [shape = 's32[1]{0}', space=sflag, size = 0x4, scoped, tag = 'scoped memory for tpu_custom_call.1']
    #allocation13 [shape = 'u8[786432]{0}', space=vmem, size = 0xc0000, scoped, tag = 'input window, operand 6, single buffered']
    #allocation14 [shape = 'u8[6144]{0}', space=vmem, size = 0x1800, scoped, tag = 'input window, operand 7, single buffered']
    #allocation15 [shape = 's32[1]{0}', space=sflag, size = 0x4, scoped, tag = 'scoped memory for tpu_custom_call.1']
    #allocation16 [shape = 'u8[262144]{0}', space=vmem, size = 0x40000, scoped, tag = 'input window, operand 8, single buffered']
    #allocation17 [shape = 'u8[2048]{0}', space=vmem, size = 0x800, scoped, tag = 'input window, operand 9, single buffered']
    #allocation18 [shape = 's32[1]{0}', space=sflag, size = 0x4, scoped, tag = 'scoped memory for tpu_custom_call.1']
    #allocation19 [shape = 'u8[2048]{0}', space=vmem, size = 0x800, scoped, tag = 'input window, operand 10, single buffered']
    #allocation20 [shape = 'u8[2048]{0}', space=vmem, size = 0x800, scoped, tag = 'input window, operand 11, single buffered']
    #allocation21 [shape = 's32[1]{0}', space=sflag, size = 0x4, scoped, tag = 'scoped memory for tpu_custom_call.1']
    #allocation22 [shape = 'u8[1048576]{0}', space=vmem, size = 0x100000, scoped, tag = 'input window, operand 12, single buffered']
    #allocation23 [shape = 'u8[1048576]{0}', space=vmem, size = 0x100000, scoped, tag = 'input window, operand 14, single buffered']
    #allocation24 [shape = 's32[1]{0}', space=sflag, size = 0x4, scoped, tag = 'scoped memory for tpu_custom_call.1']
    #allocation25 [shape = 'u8[2048]{0}', space=vmem, size = 0x800, scoped, tag = 'input window, operand 16, single buffered']
    #allocation26 [shape = 'u8[458752]{0}', space=vmem, size = 0x70000, scoped, tag = 'input window, operand 18, single buffered']
    #allocation27 [shape = 's32[1]{0}', space=sflag, size = 0x4, scoped, tag = 'scoped memory for tpu_custom_call.1']
    #allocation28 [shape = 'u8[131072]{0}', space=vmem, size = 0x20000, scoped, tag = 'output window, operand 0']
    #allocation29 [shape = 'u8[1024]{0}', space=vmem, size = 0x400, scoped, tag = 'output window, operand 3']
    #allocation30 [shape = 's32[2]{0}', space=sflag, size = 0x8, scoped, tag = 'scoped memory for tpu_custom_call.1']
    #allocation31 [shape = 'u8[7168]{0}', space=vmem, size = 0x1c00, scoped, tag = 'output window, operand 4']
    %30 = vsyncpa [#allocation3], 0
    %s31 = scalar_lea.sflag [#allocation3], 1
    %32 = vsyncpa %s31, 0
    %33 = vsyncpa [#allocation6], 0
    %s34 = scalar_lea.sflag [#allocation6], 1
    %35 = vsyncpa %s34, 0
    %36 = vsyncpa [#allocation9], 0
    %37 = vsyncpa [#allocation12], 0
    %38 = vsyncpa [#allocation15], 0
    %39 = vsyncpa [#allocation18], 0
    %40 = vsyncpa [#allocation21], 0
    %41 = vsyncpa [#allocation24], 0
    %42 = vsyncpa [#allocation27], 0
    %43 = vsyncpa [#allocation4], 0
    %s44 = scalar_lea.sflag [#allocation4], 1
    %45 = vsyncpa %s44, 0
    %46 = vsyncpa [#allocation30], 0
    %s47 = scalar_lea.sflag [#allocation30], 1
    %48 = vsyncpa %s47, 0
    loop: start=0, step=1, limit=4
    $region2: #{tpu_custom_call.1} parent=1 // loop_pre_header
      _
    $region3: #{tpu_custom_call.1} parent=1 // loop_header
      %s50 = sphi 0, %s54
      %p51 = scmp.ge.s32.totalorder %s50, 4
      %s60 = sphi 0, %s62
      %s63 = sphi 0, %s60
      %s64 = sphi 0, %s63
      %s80 = sphi 0, %s64
      %s86 = sphi 0, %s88
      %s89 = sphi 0, %s86
      %s90 = sphi 0, %s89
      %s106 = sphi 0, %s90
      %s110 = sphi 0, %s110
      %s112 = sphi 0, %s110
      %s113 = sphi 0, %s112
      %s127 = sphi 0, %s113
      %s131 = sphi 0, %s131
      %s133 = sphi 0, %s131
      %s134 = sphi 0, %s133
      %s148 = sphi 0, %s134
      %s152 = sphi 0, %s152
      %s154 = sphi 0, %s152
      %s155 = sphi 0, %s154
      %s169 = sphi 0, %s155
      %s173 = sphi 0, %s173
      %s175 = sphi 0, %s173
      %s176 = sphi 0, %s175
      %s190 = sphi 0, %s176
      %s194 = sphi 0, %s194
      %s196 = sphi 0, %s194
      %s197 = sphi 0, %s196
      %s211 = sphi 0, %s197
      %s215 = sphi 0, %s215
      %s217 = sphi 0, %s215
      %s218 = sphi 0, %s217
      %s232 = sphi 0, %s218
      %s236 = sphi 0, %s236
      %s238 = sphi 0, %s236
      %s239 = sphi 0, %s238
      %s253 = sphi 0, %s239
      %s257 = sphi 0, %s257
      %s259 = sphi 0, %s257
      %s260 = sphi 0, %s259
      %s274 = sphi 0, %s260
      %s278 = sphi 0, %s278
      %s280 = sphi 0, %s278
      %s281 = sphi 0, %s280
      %s295 = sphi 0, %s281
      %s299 = sphi 0, %s299
      %s301 = sphi 0, %s299
      %s302 = sphi 0, %s301
      %s316 = sphi 0, %s302
      %s320 = sphi 0, %s320
      %s322 = sphi 0, %s320
      %s323 = sphi 0, %s322
      %s337 = sphi 0, %s323
      %s341 = sphi 0, %s341
      %s343 = sphi 0, %s341
      %s344 = sphi 0, %s343
      %s358 = sphi 0, %s344
      %s362 = sphi 0, %s362
      %s364 = sphi 0, %s362
      %s365 = sphi 0, %s364
      %s379 = sphi 0, %s365
      %s383 = sphi 0, %s383
      %s385 = sphi 0, %s383
      %s386 = sphi 0, %s385
      %s400 = sphi 0, %s386
      %s404 = sphi 0, %s404
      %s406 = sphi 0, %s404
      %s407 = sphi 0, %s406
      %s421 = sphi 0, %s407
      %s425 = sphi 0, %s425
      %s427 = sphi 0, %s425
      %s428 = sphi 0, %s427
      %s442 = sphi 0, %s428
      %s446 = sphi 0, %s446
      %s448 = sphi 0, %s446
      %s449 = sphi 0, %s448
      %s463 = sphi 0, %s449
      %s467 = sphi 0, %s467
      %s469 = sphi 0, %s467
      %s470 = sphi 0, %s469
      %s484 = sphi 0, %s470
      %s490 = sphi 0, %s492
      %s493 = sphi 0, %s490
      %s494 = sphi 0, %s493
      %s510 = sphi 0, %s494
      %s516 = sphi 0, %s518
      %s519 = sphi 0, %s516
      %s520 = sphi 0, %s519
      %s536 = sphi 0, %s520
      %s542 = sphi 0, %s544
      %s545 = sphi 0, %s542
      %s546 = sphi 0, %s545
      %s562 = sphi 0, %s546
      %s568 = sphi 0, %s570
      %s571 = sphi 0, %s568
      %s572 = sphi 0, %s571
      %s588 = sphi 0, %s572
      %s594 = sphi 0, %s596
      %s597 = sphi 0, %s594
      %s598 = sphi 0, %s597
      %s614 = sphi 0, %s598
    $region4: #{tpu_custom_call.1} parent=1 // loop_header_branch
      %53 = sbr.rel (%p51) target = $region8
    $region5: #{tpu_custom_call.1} parent=1 // loop_body
      %s55 = ssub.s32 %s50, 1
      %s56 = ssub.s32 %s50, 2
      %s57 = sadd.s32 %s50, 1
      %s58 = ssub.s32 %s50, %s57
      %p59 = scmp.eq.s32.totalorder %s58, 0
      %s61 = sadd.s32 %s60, 1
      %s62 = scalar_select %p59, %s60, %s61
      %p65 = pneg %p59
      %p66 = scmp.eq.s32.totalorder %s50, 1
      %p67 = por %p65, %p66
      %p68 = scmp.ne.s32.totalorder %s60, %s63
      %p69 = scmp.eq.s32.totalorder %s50, 0
      %p70 = por %p68, %p69
      %p71 = scmp.ne.s32.totalorder %s60, %s63
      %p72 = scmp.eq.s32.totalorder %s55, 1
      %p73 = por %p71, %p72
      %p74 = scmp.ne.s32.totalorder %s63, %s64
      %p75 = scmp.eq.s32.totalorder %s55, 0
      %p76 = por %p74, %p75
      %p77 = scmp.ne.s32.totalorder %s63, %s64
      %p78 = scmp.eq.s32.totalorder %s56, 1
      %p79 = por %p77, %p78
      %p81 = scmp.ne.s32.totalorder %s64, %s80
      %p82 = scmp.eq.s32.totalorder %s56, 0
      %p83 = por %p81, %p82
      %s84 = ssub.s32 %s50, %s57
      %p85 = scmp.eq.s32.totalorder %s84, 0
      %s87 = sadd.s32 %s86, 1
      %s88 = scalar_select %p85, %s86, %s87
      %p91 = pneg %p85
      %p92 = scmp.eq.s32.totalorder %s50, 1
      %p93 = por %p91, %p92
      %p94 = scmp.ne.s32.totalorder %s86, %s89
      %p95 = scmp.eq.s32.totalorder %s50, 0
      %p96 = por %p94, %p95
      %p97 = scmp.ne.s32.totalorder %s86, %s89
      %p98 = scmp.eq.s32.totalorder %s55, 1
      %p99 = por %p97, %p98
      %p100 = scmp.ne.s32.totalorder %s89, %s90
      %p101 = scmp.eq.s32.totalorder %s55, 0
      %p102 = por %p100, %p101
      %p103 = scmp.ne.s32.totalorder %s89, %s90
      %p104 = scmp.eq.s32.totalorder %s56, 1
      %p105 = por %p103, %p104
      %p107 = scmp.ne.s32.totalorder %s90, %s106
      %p108 = scmp.eq.s32.totalorder %s56, 0
      %p109 = por %p107, %p108
      %s111 = sadd.s32 %s110, 1
      %p114 = scmp.eq.s32.totalorder %s50, 1
      %p115 = scmp.ne.s32.totalorder %s110, %s112
      %p116 = scmp.eq.s32.totalorder %s50, 0
      %p117 = por %p115, %p116
      %p118 = scmp.ne.s32.totalorder %s110, %s112
      %p119 = scmp.eq.s32.totalorder %s55, 1
      %p120 = por %p118, %p119
      %p121 = scmp.ne.s32.totalorder %s112, %s113
      %p122 = scmp.eq.s32.totalorder %s55, 0
      %p123 = por %p121, %p122
      %p124 = scmp.ne.s32.totalorder %s112, %s113
      %p125 = scmp.eq.s32.totalorder %s56, 1
      %p126 = por %p124, %p125
      %p128 = scmp.ne.s32.totalorder %s113, %s127
      %p129 = scmp.eq.s32.totalorder %s56, 0
      %p130 = por %p128, %p129
      %s132 = sadd.s32 %s131, 1
      %p135 = scmp.eq.s32.totalorder %s50, 1
      %p136 = scmp.ne.s32.totalorder %s131, %s133
      %p137 = scmp.eq.s32.totalorder %s50, 0
      %p138 = por %p136, %p137
      %p139 = scmp.ne.s32.totalorder %s131, %s133
      %p140 = scmp.eq.s32.totalorder %s55, 1
      %p141 = por %p139, %p140
      %p142 = scmp.ne.s32.totalorder %s133, %s134
      %p143 = scmp.eq.s32.totalorder %s55, 0
      %p144 = por %p142, %p143
      %p145 = scmp.ne.s32.totalorder %s133, %s134
      %p146 = scmp.eq.s32.totalorder %s56, 1
      %p147 = por %p145, %p146
      %p149 = scmp.ne.s32.totalorder %s134, %s148
      %p150 = scmp.eq.s32.totalorder %s56, 0
      %p151 = por %p149, %p150
      %s153 = sadd.s32 %s152, 1
      %p156 = scmp.eq.s32.totalorder %s50, 1
      %p157 = scmp.ne.s32.totalorder %s152, %s154
      %p158 = scmp.eq.s32.totalorder %s50, 0
      %p159 = por %p157, %p158
      %p160 = scmp.ne.s32.totalorder %s152, %s154
      %p161 = scmp.eq.s32.totalorder %s55, 1
      %p162 = por %p160, %p161
      %p163 = scmp.ne.s32.totalorder %s154, %s155
      %p164 = scmp.eq.s32.totalorder %s55, 0
      %p165 = por %p163, %p164
      %p166 = scmp.ne.s32.totalorder %s154, %s155
      %p167 = scmp.eq.s32.totalorder %s56, 1
      %p168 = por %p166, %p167
      %p170 = scmp.ne.s32.totalorder %s155, %s169
      %p171 = scmp.eq.s32.totalorder %s56, 0
      %p172 = por %p170, %p171
      %s174 = sadd.s32 %s173, 1
      %p177 = scmp.eq.s32.totalorder %s50, 1
      %p178 = scmp.ne.s32.totalorder %s173, %s175
      %p179 = scmp.eq.s32.totalorder %s50, 0
      %p180 = por %p178, %p179
      %p181 = scmp.ne.s32.totalorder %s173, %s175
      %p182 = scmp.eq.s32.totalorder %s55, 1
      %p183 = por %p181, %p182
      %p184 = scmp.ne.s32.totalorder %s175, %s176
      %p185 = scmp.eq.s32.totalorder %s55, 0
      %p186 = por %p184, %p185
      %p187 = scmp.ne.s32.totalorder %s175, %s176
      %p188 = scmp.eq.s32.totalorder %s56, 1
      %p189 = por %p187, %p188
      %p191 = scmp.ne.s32.totalorder %s176, %s190
      %p192 = scmp.eq.s32.totalorder %s56, 0
      %p193 = por %p191, %p192
      %s195 = sadd.s32 %s194, 1
      %p198 = scmp.eq.s32.totalorder %s50, 1
      %p199 = scmp.ne.s32.totalorder %s194, %s196
      %p200 = scmp.eq.s32.totalorder %s50, 0
      %p201 = por %p199, %p200
      %p202 = scmp.ne.s32.totalorder %s194, %s196
      %p203 = scmp.eq.s32.totalorder %s55, 1
      %p204 = por %p202, %p203
      %p205 = scmp.ne.s32.totalorder %s196, %s197
      %p206 = scmp.eq.s32.totalorder %s55, 0
      %p207 = por %p205, %p206
      %p208 = scmp.ne.s32.totalorder %s196, %s197
      %p209 = scmp.eq.s32.totalorder %s56, 1
      %p210 = por %p208, %p209
      %p212 = scmp.ne.s32.totalorder %s197, %s211
      %p213 = scmp.eq.s32.totalorder %s56, 0
      %p214 = por %p212, %p213
      %s216 = sadd.s32 %s215, 1
      %p219 = scmp.eq.s32.totalorder %s50, 1
      %p220 = scmp.ne.s32.totalorder %s215, %s217
      %p221 = scmp.eq.s32.totalorder %s50, 0
      %p222 = por %p220, %p221
      %p223 = scmp.ne.s32.totalorder %s215, %s217
      %p224 = scmp.eq.s32.totalorder %s55, 1
      %p225 = por %p223, %p224
      %p226 = scmp.ne.s32.totalorder %s217, %s218
      %p227 = scmp.eq.s32.totalorder %s55, 0
      %p228 = por %p226, %p227
      %p229 = scmp.ne.s32.totalorder %s217, %s218
      %p230 = scmp.eq.s32.totalorder %s56, 1
      %p231 = por %p229, %p230
      %p233 = scmp.ne.s32.totalorder %s218, %s232
      %p234 = scmp.eq.s32.totalorder %s56, 0
      %p235 = por %p233, %p234
      %s237 = sadd.s32 %s236, 1
      %p240 = scmp.eq.s32.totalorder %s50, 1
      %p241 = scmp.ne.s32.totalorder %s236, %s238
      %p242 = scmp.eq.s32.totalorder %s50, 0
      %p243 = por %p241, %p242
      %p244 = scmp.ne.s32.totalorder %s236, %s238
      %p245 = scmp.eq.s32.totalorder %s55, 1
      %p246 = por %p244, %p245
      %p247 = scmp.ne.s32.totalorder %s238, %s239
      %p248 = scmp.eq.s32.totalorder %s55, 0
      %p249 = por %p247, %p248
      %p250 = scmp.ne.s32.totalorder %s238, %s239
      %p251 = scmp.eq.s32.totalorder %s56, 1
      %p252 = por %p250, %p251
      %p254 = scmp.ne.s32.totalorder %s239, %s253
      %p255 = scmp.eq.s32.totalorder %s56, 0
      %p256 = por %p254, %p255
      %s258 = sadd.s32 %s257, 1
      %p261 = scmp.eq.s32.totalorder %s50, 1
      %p262 = scmp.ne.s32.totalorder %s257, %s259
      %p263 = scmp.eq.s32.totalorder %s50, 0
      %p264 = por %p262, %p263
      %p265 = scmp.ne.s32.totalorder %s257, %s259
      %p266 = scmp.eq.s32.totalorder %s55, 1
      %p267 = por %p265, %p266
      %p268 = scmp.ne.s32.totalorder %s259, %s260
      %p269 = scmp.eq.s32.totalorder %s55, 0
      %p270 = por %p268, %p269
      %p271 = scmp.ne.s32.totalorder %s259, %s260
      %p272 = scmp.eq.s32.totalorder %s56, 1
      %p273 = por %p271, %p272
      %p275 = scmp.ne.s32.totalorder %s260, %s274
      %p276 = scmp.eq.s32.totalorder %s56, 0
      %p277 = por %p275, %p276
      %s279 = sadd.s32 %s278, 1
      %p282 = scmp.eq.s32.totalorder %s50, 1
      %p283 = scmp.ne.s32.totalorder %s278, %s280
      %p284 = scmp.eq.s32.totalorder %s50, 0
      %p285 = por %p283, %p284
      %p286 = scmp.ne.s32.totalorder %s278, %s280
      %p287 = scmp.eq.s32.totalorder %s55, 1
      %p288 = por %p286, %p287
      %p289 = scmp.ne.s32.totalorder %s280, %s281
      %p290 = scmp.eq.s32.totalorder %s55, 0
      %p291 = por %p289, %p290
      %p292 = scmp.ne.s32.totalorder %s280, %s281
      %p293 = scmp.eq.s32.totalorder %s56, 1
      %p294 = por %p292, %p293
      %p296 = scmp.ne.s32.totalorder %s281, %s295
      %p297 = scmp.eq.s32.totalorder %s56, 0
      %p298 = por %p296, %p297
      %s300 = sadd.s32 %s299, 1
      %p303 = scmp.eq.s32.totalorder %s50, 1
      %p304 = scmp.ne.s32.totalorder %s299, %s301
      %p305 = scmp.eq.s32.totalorder %s50, 0
      %p306 = por %p304, %p305
      %p307 = scmp.ne.s32.totalorder %s299, %s301
      %p308 = scmp.eq.s32.totalorder %s55, 1
      %p309 = por %p307, %p308
      %p310 = scmp.ne.s32.totalorder %s301, %s302
      %p311 = scmp.eq.s32.totalorder %s55, 0
      %p312 = por %p310, %p311
      %p313 = scmp.ne.s32.totalorder %s301, %s302
      %p314 = scmp.eq.s32.totalorder %s56, 1
      %p315 = por %p313, %p314
      %p317 = scmp.ne.s32.totalorder %s302, %s316
      %p318 = scmp.eq.s32.totalorder %s56, 0
      %p319 = por %p317, %p318
      %s321 = sadd.s32 %s320, 1
      %p324 = scmp.eq.s32.totalorder %s50, 1
      %p325 = scmp.ne.s32.totalorder %s320, %s322
      %p326 = scmp.eq.s32.totalorder %s50, 0
      %p327 = por %p325, %p326
      %p328 = scmp.ne.s32.totalorder %s320, %s322
      %p329 = scmp.eq.s32.totalorder %s55, 1
      %p330 = por %p328, %p329
      %p331 = scmp.ne.s32.totalorder %s322, %s323
      %p332 = scmp.eq.s32.totalorder %s55, 0
      %p333 = por %p331, %p332
      %p334 = scmp.ne.s32.totalorder %s322, %s323
      %p335 = scmp.eq.s32.totalorder %s56, 1
      %p336 = por %p334, %p335
      %p338 = scmp.ne.s32.totalorder %s323, %s337
      %p339 = scmp.eq.s32.totalorder %s56, 0
      %p340 = por %p338, %p339
      %s342 = sadd.s32 %s341, 1
      %p345 = scmp.eq.s32.totalorder %s50, 1
      %p346 = scmp.ne.s32.totalorder %s341, %s343
      %p347 = scmp.eq.s32.totalorder %s50, 0
      %p348 = por %p346, %p347
      %p349 = scmp.ne.s32.totalorder %s341, %s343
      %p350 = scmp.eq.s32.totalorder %s55, 1
      %p351 = por %p349, %p350
      %p352 = scmp.ne.s32.totalorder %s343, %s344
      %p353 = scmp.eq.s32.totalorder %s55, 0
      %p354 = por %p352, %p353
      %p355 = scmp.ne.s32.totalorder %s343, %s344
      %p356 = scmp.eq.s32.totalorder %s56, 1
      %p357 = por %p355, %p356
      %p359 = scmp.ne.s32.totalorder %s344, %s358
      %p360 = scmp.eq.s32.totalorder %s56, 0
      %p361 = por %p359, %p360
      %s363 = sadd.s32 %s362, 1
      %p366 = scmp.eq.s32.totalorder %s50, 1
      %p367 = scmp.ne.s32.totalorder %s362, %s364
      %p368 = scmp.eq.s32.totalorder %s50, 0
      %p369 = por %p367, %p368
      %p370 = scmp.ne.s32.totalorder %s362, %s364
      %p371 = scmp.eq.s32.totalorder %s55, 1
      %p372 = por %p370, %p371
      %p373 = scmp.ne.s32.totalorder %s364, %s365
      %p374 = scmp.eq.s32.totalorder %s55, 0
      %p375 = por %p373, %p374
      %p376 = scmp.ne.s32.totalorder %s364, %s365
      %p377 = scmp.eq.s32.totalorder %s56, 1
      %p378 = por %p376, %p377
      %p380 = scmp.ne.s32.totalorder %s365, %s379
      %p381 = scmp.eq.s32.totalorder %s56, 0
      %p382 = por %p380, %p381
      %s384 = sadd.s32 %s383, 1
      %p387 = scmp.eq.s32.totalorder %s50, 1
      %p388 = scmp.ne.s32.totalorder %s383, %s385
      %p389 = scmp.eq.s32.totalorder %s50, 0
      %p390 = por %p388, %p389
      %p391 = scmp.ne.s32.totalorder %s383, %s385
      %p392 = scmp.eq.s32.totalorder %s55, 1
      %p393 = por %p391, %p392
      %p394 = scmp.ne.s32.totalorder %s385, %s386
      %p395 = scmp.eq.s32.totalorder %s55, 0
      %p396 = por %p394, %p395
      %p397 = scmp.ne.s32.totalorder %s385, %s386
      %p398 = scmp.eq.s32.totalorder %s56, 1
      %p399 = por %p397, %p398
      %p401 = scmp.ne.s32.totalorder %s386, %s400
      %p402 = scmp.eq.s32.totalorder %s56, 0
      %p403 = por %p401, %p402
      %s405 = sadd.s32 %s404, 1
      %p408 = scmp.eq.s32.totalorder %s50, 1
      %p409 = scmp.ne.s32.totalorder %s404, %s406
      %p410 = scmp.eq.s32.totalorder %s50, 0
      %p411 = por %p409, %p410
      %p412 = scmp.ne.s32.totalorder %s404, %s406
      %p413 = scmp.eq.s32.totalorder %s55, 1
      %p414 = por %p412, %p413
      %p415 = scmp.ne.s32.totalorder %s406, %s407
      %p416 = scmp.eq.s32.totalorder %s55, 0
      %p417 = por %p415, %p416
      %p418 = scmp.ne.s32.totalorder %s406, %s407
      %p419 = scmp.eq.s32.totalorder %s56, 1
      %p420 = por %p418, %p419
      %p422 = scmp.ne.s32.totalorder %s407, %s421
      %p423 = scmp.eq.s32.totalorder %s56, 0
      %p424 = por %p422, %p423
      %s426 = sadd.s32 %s425, 1
      %p429 = scmp.eq.s32.totalorder %s50, 1
      %p430 = scmp.ne.s32.totalorder %s425, %s427
      %p431 = scmp.eq.s32.totalorder %s50, 0
      %p432 = por %p430, %p431
      %p433 = scmp.ne.s32.totalorder %s425, %s427
      %p434 = scmp.eq.s32.totalorder %s55, 1
      %p435 = por %p433, %p434
      %p436 = scmp.ne.s32.totalorder %s427, %s428
      %p437 = scmp.eq.s32.totalorder %s55, 0
      %p438 = por %p436, %p437
      %p439 = scmp.ne.s32.totalorder %s427, %s428
      %p440 = scmp.eq.s32.totalorder %s56, 1
      %p441 = por %p439, %p440
      %p443 = scmp.ne.s32.totalorder %s428, %s442
      %p444 = scmp.eq.s32.totalorder %s56, 0
      %p445 = por %p443, %p444
      %s447 = sadd.s32 %s446, 1
      %p450 = scmp.eq.s32.totalorder %s50, 1
      %p451 = scmp.ne.s32.totalorder %s446, %s448
      %p452 = scmp.eq.s32.totalorder %s50, 0
      %p453 = por %p451, %p452
      %p454 = scmp.ne.s32.totalorder %s446, %s448
      %p455 = scmp.eq.s32.totalorder %s55, 1
      %p456 = por %p454, %p455
      %p457 = scmp.ne.s32.totalorder %s448, %s449
      %p458 = scmp.eq.s32.totalorder %s55, 0
      %p459 = por %p457, %p458
      %p460 = scmp.ne.s32.totalorder %s448, %s449
      %p461 = scmp.eq.s32.totalorder %s56, 1
      %p462 = por %p460, %p461
      %p464 = scmp.ne.s32.totalorder %s449, %s463
      %p465 = scmp.eq.s32.totalorder %s56, 0
      %p466 = por %p464, %p465
      %s468 = sadd.s32 %s467, 1
      %p471 = scmp.eq.s32.totalorder %s50, 1
      %p472 = scmp.ne.s32.totalorder %s467, %s469
      %p473 = scmp.eq.s32.totalorder %s50, 0
      %p474 = por %p472, %p473
      %p475 = scmp.ne.s32.totalorder %s467, %s469
      %p476 = scmp.eq.s32.totalorder %s55, 1
      %p477 = por %p475, %p476
      %p478 = scmp.ne.s32.totalorder %s469, %s470
      %p479 = scmp.eq.s32.totalorder %s55, 0
      %p480 = por %p478, %p479
      %p481 = scmp.ne.s32.totalorder %s469, %s470
      %p482 = scmp.eq.s32.totalorder %s56, 1
      %p483 = por %p481, %p482
      %p485 = scmp.ne.s32.totalorder %s470, %s484
      %p486 = scmp.eq.s32.totalorder %s56, 0
      %p487 = por %p485, %p486
      %s488 = ssub.s32 %s50, %s57
      %p489 = scmp.eq.s32.totalorder %s488, 0
      %s491 = sadd.s32 %s490, 1
      %s492 = scalar_select %p489, %s490, %s491
      %p495 = pneg %p489
      %p496 = scmp.eq.s32.totalorder %s50, 1
      %p497 = por %p495, %p496
      %p498 = scmp.ne.s32.totalorder %s490, %s493
      %p499 = scmp.eq.s32.totalorder %s50, 0
      %p500 = por %p498, %p499
      %p501 = scmp.ne.s32.totalorder %s490, %s493
      %p502 = scmp.eq.s32.totalorder %s55, 1
      %p503 = por %p501, %p502
      %p504 = scmp.ne.s32.totalorder %s493, %s494
      %p505 = scmp.eq.s32.totalorder %s55, 0
      %p506 = por %p504, %p505
      %p507 = scmp.ne.s32.totalorder %s493, %s494
      %p508 = scmp.eq.s32.totalorder %s56, 1
      %p509 = por %p507, %p508
      %p511 = scmp.ne.s32.totalorder %s494, %s510
      %p512 = scmp.eq.s32.totalorder %s56, 0
      %p513 = por %p511, %p512
      %s514 = ssub.s32 %s50, %s57
      %p515 = scmp.eq.s32.totalorder %s514, 0
      %s517 = sadd.s32 %s516, 1
      %s518 = scalar_select %p515, %s516, %s517
      %p521 = pneg %p515
      %p522 = scmp.eq.s32.totalorder %s50, 1
      %p523 = por %p521, %p522
      %p524 = scmp.ne.s32.totalorder %s516, %s519
      %p525 = scmp.eq.s32.totalorder %s50, 0
      %p526 = por %p524, %p525
      %p527 = scmp.ne.s32.totalorder %s516, %s519
      %p528 = scmp.eq.s32.totalorder %s55, 1
      %p529 = por %p527, %p528
      %p530 = scmp.ne.s32.totalorder %s519, %s520
      %p531 = scmp.eq.s32.totalorder %s55, 0
      %p532 = por %p530, %p531
      %p533 = scmp.ne.s32.totalorder %s519, %s520
      %p534 = scmp.eq.s32.totalorder %s56, 1
      %p535 = por %p533, %p534
      %p537 = scmp.ne.s32.totalorder %s520, %s536
      %p538 = scmp.eq.s32.totalorder %s56, 0
      %p539 = por %p537, %p538
      %s540 = ssub.s32 %s50, %s57
      %p541 = scmp.eq.s32.totalorder %s540, 0
      %s543 = sadd.s32 %s542, 1
      %s544 = scalar_select %p541, %s542, %s543
      %p547 = pneg %p541
      %p548 = scmp.eq.s32.totalorder %s50, 1
      %p549 = por %p547, %p548
      %p550 = scmp.ne.s32.totalorder %s542, %s545
      %p551 = scmp.eq.s32.totalorder %s50, 0
      %p552 = por %p550, %p551
      %p553 = scmp.ne.s32.totalorder %s542, %s545
      %p554 = scmp.eq.s32.totalorder %s55, 1
      %p555 = por %p553, %p554
      %p556 = scmp.ne.s32.totalorder %s545, %s546
      %p557 = scmp.eq.s32.totalorder %s55, 0
      %p558 = por %p556, %p557
      %p559 = scmp.ne.s32.totalorder %s545, %s546
      %p560 = scmp.eq.s32.totalorder %s56, 1
      %p561 = por %p559, %p560
      %p563 = scmp.ne.s32.totalorder %s546, %s562
      %p564 = scmp.eq.s32.totalorder %s56, 0
      %p565 = por %p563, %p564
      %s566 = ssub.s32 %s50, %s57
      %p567 = scmp.eq.s32.totalorder %s566, 0
      %s569 = sadd.s32 %s568, 1
      %s570 = scalar_select %p567, %s568, %s569
      %p573 = pneg %p567
      %p574 = scmp.eq.s32.totalorder %s50, 1
      %p575 = por %p573, %p574
      %p576 = scmp.ne.s32.totalorder %s568, %s571
      %p577 = scmp.eq.s32.totalorder %s50, 0
      %p578 = por %p576, %p577
      %p579 = scmp.ne.s32.totalorder %s568, %s571
      %p580 = scmp.eq.s32.totalorder %s55, 1
      %p581 = por %p579, %p580
      %p582 = scmp.ne.s32.totalorder %s571, %s572
      %p583 = scmp.eq.s32.totalorder %s55, 0
      %p584 = por %p582, %p583
      %p585 = scmp.ne.s32.totalorder %s571, %s572
      %p586 = scmp.eq.s32.totalorder %s56, 1
      %p587 = por %p585, %p586
      %p589 = scmp.ne.s32.totalorder %s572, %s588
      %p590 = scmp.eq.s32.totalorder %s56, 0
      %p591 = por %p589, %p590
      %s592 = ssub.s32 %s50, %s57
      %p593 = scmp.eq.s32.totalorder %s592, 0
      %s595 = sadd.s32 %s594, 1
      %s596 = scalar_select %p593, %s594, %s595
      %p599 = pneg %p593
      %p600 = scmp.eq.s32.totalorder %s50, 1
      %p601 = por %p599, %p600
      %p602 = scmp.ne.s32.totalorder %s594, %s597
      %p603 = scmp.eq.s32.totalorder %s50, 0
      %p604 = por %p602, %p603
      %p605 = scmp.ne.s32.totalorder %s594, %s597
      %p606 = scmp.eq.s32.totalorder %s55, 1
      %p607 = por %p605, %p606
      %p608 = scmp.ne.s32.totalorder %s597, %s598
      %p609 = scmp.eq.s32.totalorder %s55, 0
      %p610 = por %p608, %p609
      %p611 = scmp.ne.s32.totalorder %s597, %s598
      %p612 = scmp.eq.s32.totalorder %s56, 1
      %p613 = por %p611, %p612
      %p615 = scmp.ne.s32.totalorder %s598, %s614
      %p616 = scmp.eq.s32.totalorder %s56, 0
      %p617 = por %p615, %p616
      %p618 = scmp.le.s32.totalorder 1, %s50
      %p619 = scmp.lt.s32.totalorder %s50, 3
      %p620 = pnand %p618, %p619
      %p621 = pneg %p620
      // Predicated region
      $region9: #{tpu_custom_call.1} parent=5 // pred_check
        _
      $region10: #{tpu_custom_call.1} parent=5 // pred_check_branch
        %623 = sbr.rel (%p620) target = $region12
      $region11: #{tpu_custom_call.1} parent=5 // pred_region
        %s624 = ssub.s32 %s50, 1
        // Predicated region
        $region13: #{tpu_custom_call.1} parent=11 // pred_check
          %p625 = pneg %p123
        $region14: #{tpu_custom_call.1} parent=11 // pred_check_branch
          %627 = sbr.rel (%p625) target = $region16
        $region15: #{tpu_custom_call.1} parent=11 // pred_region
          %s629 = ssub.s32 4096, 4096
          %630 = vsyncadd [#allocation6], %s629
          %s631 = sshll.u32 [#allocation7], 4
          %s632 = int_to_ptr.vmem [resolvable:$true] %s631
          %637 = dma.hbm_to_vmem [thread:$0]  %s2, 4096, %s632, [#allocation6], 128, 128, 8
        $region16: #{tpu_custom_call.1} parent=11 // pred_fallthru
          _
        // Predicated region
        $region17: #{tpu_custom_call.1} parent=11 // pred_check
          %p638 = pneg %p144
        $region18: #{tpu_custom_call.1} parent=11 // pred_check_branch
          %640 = sbr.rel (%p638) target = $region20
        $region19: #{tpu_custom_call.1} parent=11 // pred_region
          %s642 = ssub.s32 16, 16
          %643 = vsyncadd [#allocation9], %s642
          %s645 = sshll.u32 [#allocation8], 4
          %s646 = int_to_ptr.vmem [resolvable:$true] %s645
          %648 = dma.hbm_to_vmem [thread:$0]  %s3, 16, %s646, [#allocation9]
        $region20: #{tpu_custom_call.1} parent=11 // pred_fallthru
          _
        // Predicated region
        $region21: #{tpu_custom_call.1} parent=11 // pred_check
          %p649 = pneg %p165
        $region22: #{tpu_custom_call.1} parent=11 // pred_check_branch
          %651 = sbr.rel (%p649) target = $region24
        $region23: #{tpu_custom_call.1} parent=11 // pred_region
          %s653 = ssub.s32 256, 256
          %654 = vsyncadd [#allocation9], %s653
          %s655 = sshll.u32 [#allocation10], 4
          %s656 = int_to_ptr.vmem [resolvable:$true] %s655
          %661 = dma.hbm_to_vmem [thread:$0]  %s4, 256, %s656, [#allocation9], 128, 128, 8
        $region24: #{tpu_custom_call.1} parent=11 // pred_fallthru
          _
        // Predicated region
        $region25: #{tpu_custom_call.1} parent=11 // pred_check
          %p662 = pneg %p186
        $region26: #{tpu_custom_call.1} parent=11 // pred_check_branch
          %664 = sbr.rel (%p662) target = $region28
        $region27: #{tpu_custom_call.1} parent=11 // pred_region
          %s666 = ssub.s32 128, 128
          %667 = vsyncadd [#allocation12], %s666
          %s669 = sshll.u32 [#allocation11], 4
          %s670 = int_to_ptr.vmem [resolvable:$true] %s669
          %672 = dma.hbm_to_vmem [thread:$0]  %s5, 128, %s670, [#allocation12]
        $region28: #{tpu_custom_call.1} parent=11 // pred_fallthru
          _
        // Predicated region
        $region29: #{tpu_custom_call.1} parent=11 // pred_check
          %p673 = pneg %p207
        $region30: #{tpu_custom_call.1} parent=11 // pred_check_branch
          %675 = sbr.rel (%p673) target = $region32
        $region31: #{tpu_custom_call.1} parent=11 // pred_region
          %s677 = ssub.s32 24576, 24576
          %678 = vsyncadd [#allocation12], %s677
          %s679 = sshll.u32 [#allocation13], 4
          %s680 = int_to_ptr.vmem [resolvable:$true] %s679
          %685 = dma.hbm_to_vmem [thread:$0]  %s6, 24576, %s680, [#allocation12], 384, 384, 24
        $region32: #{tpu_custom_call.1} parent=11 // pred_fallthru
          _
        // Predicated region
        $region33: #{tpu_custom_call.1} parent=11 // pred_check
          %p686 = pneg %p228
        $region34: #{tpu_custom_call.1} parent=11 // pred_check_branch
          %688 = sbr.rel (%p686) target = $region36
        $region35: #{tpu_custom_call.1} parent=11 // pred_region
          %s690 = ssub.s32 192, 192
          %691 = vsyncadd [#allocation15], %s690
          %s692 = sshll.u32 [#allocation14], 4
          %s693 = int_to_ptr.vmem [resolvable:$true] %s692
          %698 = dma.hbm_to_vmem [thread:$0]  %s7, 192, %s693, [#allocation15], 48, 48, 3
        $region36: #{tpu_custom_call.1} parent=11 // pred_fallthru
          _
        // Predicated region
        $region37: #{tpu_custom_call.1} parent=11 // pred_check
          %p699 = pneg %p249
        $region38: #{tpu_custom_call.1} parent=11 // pred_check_branch
          %701 = sbr.rel (%p699) target = $region40
        $region39: #{tpu_custom_call.1} parent=11 // pred_region
          %s703 = ssub.s32 8192, 8192
          %704 = vsyncadd [#allocation15], %s703
          %s705 = sshll.u32 [#allocation16], 4
          %s706 = int_to_ptr.vmem [resolvable:$true] %s705
          %711 = dma.hbm_to_vmem [thread:$0]  %s8, 8192, %s706, [#allocation15], 128, 128, 8
        $region40: #{tpu_custom_call.1} parent=11 // pred_fallthru
          _
        // Predicated region
        $region41: #{tpu_custom_call.1} parent=11 // pred_check
          %p712 = pneg %p270
        $region42: #{tpu_custom_call.1} parent=11 // pred_check_branch
          %714 = sbr.rel (%p712) target = $region44
        $region43: #{tpu_custom_call.1} parent=11 // pred_region
          %s716 = ssub.s32 64, 64
          %717 = vsyncadd [#allocation18], %s716
          %s718 = sshll.u32 [#allocation17], 4
          %s719 = int_to_ptr.vmem [resolvable:$true] %s718
          %724 = dma.hbm_to_vmem [thread:$0]  %s9, 64, %s719, [#allocation18], 16, 16, 1
        $region44: #{tpu_custom_call.1} parent=11 // pred_fallthru
          _
        // Predicated region
        $region45: #{tpu_custom_call.1} parent=11 // pred_check
          %p725 = pneg %p291
        $region46: #{tpu_custom_call.1} parent=11 // pred_check_branch
          %727 = sbr.rel (%p725) target = $region48
        $region47: #{tpu_custom_call.1} parent=11 // pred_region
          %s729 = ssub.s32 64, 64
          %730 = vsyncadd [#allocation18], %s729
          %s731 = sshll.u32 [#allocation19], 4
          %s732 = int_to_ptr.vmem [resolvable:$true] %s731
          %737 = dma.hbm_to_vmem [thread:$0]  %s10, 64, %s732, [#allocation18], 16, 16, 1
        $region48: #{tpu_custom_call.1} parent=11 // pred_fallthru
          _
        // Predicated region
        $region49: #{tpu_custom_call.1} parent=11 // pred_check
          %p738 = pneg %p312
        $region50: #{tpu_custom_call.1} parent=11 // pred_check_branch
          %740 = sbr.rel (%p738) target = $region52
        $region51: #{tpu_custom_call.1} parent=11 // pred_region
          %s742 = ssub.s32 64, 64
          %743 = vsyncadd [#allocation21], %s742
          %s744 = sshll.u32 [#allocation20], 4
          %s745 = int_to_ptr.vmem [resolvable:$true] %s744
          %750 = dma.hbm_to_vmem [thread:$0]  %s11, 64, %s745, [#allocation21], 16, 16, 1
        $region52: #{tpu_custom_call.1} parent=11 // pred_fallthru
          _
        // Predicated region
        $region53: #{tpu_custom_call.1} parent=11 // pred_check
          %p751 = pneg %p333
        $region54: #{tpu_custom_call.1} parent=11 // pred_check_branch
          %753 = sbr.rel (%p751) target = $region56
        $region55: #{tpu_custom_call.1} parent=11 // pred_region
          %s755 = ssub.s32 32768, 32768
          %756 = vsyncadd [#allocation21], %s755
          %s757 = sshll.u32 [#allocation22], 4
          %s758 = int_to_ptr.vmem [resolvable:$true] %s757
          %763 = dma.hbm_to_vmem [thread:$0]  %s12, 32768, %s758, [#allocation21], 512, 512, 32
        $region56: #{tpu_custom_call.1} parent=11 // pred_fallthru
          _
        // Predicated region
        $region57: #{tpu_custom_call.1} parent=11 // pred_check
          %p764 = pneg %p354
        $region58: #{tpu_custom_call.1} parent=11 // pred_check_branch
          %766 = sbr.rel (%p764) target = $region60
        $region59: #{tpu_custom_call.1} parent=11 // pred_region
          _
        $region60: #{tpu_custom_call.1} parent=11 // pred_fallthru
          _
        // Predicated region
        $region61: #{tpu_custom_call.1} parent=11 // pred_check
          %p767 = pneg %p375
        $region62: #{tpu_custom_call.1} parent=11 // pred_check_branch
          %769 = sbr.rel (%p767) target = $region64
        $region63: #{tpu_custom_call.1} parent=11 // pred_region
          %s771 = ssub.s32 32768, 32768
          %772 = vsyncadd [#allocation24], %s771
          %s773 = sshll.u32 [#allocation23], 4
          %s774 = int_to_ptr.vmem [resolvable:$true] %s773
          %779 = dma.hbm_to_vmem [thread:$0]  %s14, 32768, %s774, [#allocation24], 128, 128, 8
        $region64: #{tpu_custom_call.1} parent=11 // pred_fallthru
          _
        // Predicated region
        $region65: #{tpu_custom_call.1} parent=11 // pred_check
          %p780 = pneg %p396
        $region66: #{tpu_custom_call.1} parent=11 // pred_check_branch
          %782 = sbr.rel (%p780) target = $region68
        $region67: #{tpu_custom_call.1} parent=11 // pred_region
          _
        $region68: #{tpu_custom_call.1} parent=11 // pred_fallthru
          _
        // Predicated region
        $region69: #{tpu_custom_call.1} parent=11 // pred_check
          %p783 = pneg %p417
        $region70: #{tpu_custom_call.1} parent=11 // pred_check_branch
          %785 = sbr.rel (%p783) target = $region72
        $region71: #{tpu_custom_call.1} parent=11 // pred_region
          %s787 = ssub.s32 64, 64
          %788 = vsyncadd [#allocation24], %s787
          %s789 = sshll.u32 [#allocation25], 4
          %s790 = int_to_ptr.vmem [resolvable:$true] %s789
          %795 = dma.hbm_to_vmem [thread:$0]  %s16, 64, %s790, [#allocation24], 16, 16, 1
        $region72: #{tpu_custom_call.1} parent=11 // pred_fallthru
          _
        // Predicated region
        $region73: #{tpu_custom_call.1} parent=11 // pred_check
          %p796 = pneg %p438
        $region74: #{tpu_custom_call.1} parent=11 // pred_check_branch
          %798 = sbr.rel (%p796) target = $region76
        $region75: #{tpu_custom_call.1} parent=11 // pred_region
          _
        $region76: #{tpu_custom_call.1} parent=11 // pred_fallthru
          _
        // Predicated region
        $region77: #{tpu_custom_call.1} parent=11 // pred_check
          %p799 = pneg %p459
        $region78: #{tpu_custom_call.1} parent=11 // pred_check_branch
          %801 = sbr.rel (%p799) target = $region80
        $region79: #{tpu_custom_call.1} parent=11 // pred_region
          %s803 = ssub.s32 14336, 14336
          %804 = vsyncadd [#allocation27], %s803
          %s805 = sshll.u32 [#allocation26], 4
          %s806 = int_to_ptr.vmem [resolvable:$true] %s805
          %811 = dma.hbm_to_vmem [thread:$0]  %s18, 14336, %s806, [#allocation27], 896, 896, 56
        $region80: #{tpu_custom_call.1} parent=11 // pred_fallthru
          _
        // Predicated region
        $region81: #{tpu_custom_call.1} parent=11 // pred_check
          %p812 = pneg %p480
        $region82: #{tpu_custom_call.1} parent=11 // pred_check_branch
          %814 = sbr.rel (%p812) target = $region84
        $region83: #{tpu_custom_call.1} parent=11 // pred_region
          _
        $region84: #{tpu_custom_call.1} parent=11 // pred_fallthru
          _
      $region12: #{tpu_custom_call.1} parent=5 // pred_fallthru
        _
      %p815 = scmp.lt.s32.totalorder %s50, 2
      // Predicated region
      $region85: #{tpu_custom_call.1} parent=5 // pred_check
        %p816 = pneg %p815
      $region86: #{tpu_custom_call.1} parent=5 // pred_check_branch
        %818 = sbr.rel (%p816) target = $region88
      $region87: #{tpu_custom_call.1} parent=5 // pred_region
        // Predicated region
        $region89: #{tpu_custom_call.1} parent=87 // pred_check
          %p819 = pneg %p70
        $region90: #{tpu_custom_call.1} parent=87 // pred_check_branch
          %821 = sbr.rel (%p819) target = $region92
        $region91: #{tpu_custom_call.1} parent=87 // pred_region
          %s822 = sand.u32 %s60, 1
          %s823 = scalar_lea.sflag [#allocation3], %s822
          %s824 = sand.u32 %s60, 1
          %s825 = smul.addr %s824, 256
          %s826 = scalar_lea.vmem [#allocation2], %s825
          %s828 = ssub.s32 4096, 4096
          %829 = vsyncadd %s823, %s828
          %s830 = smul.addr %s50, 32
          %s831 = smul.addr %s830, 128
          %s832 = scalar_lea.hbm %s0, %s831
          %s833 = sshll.u32 %s826, 4
          %s834 = int_to_ptr.vmem [resolvable:$true] %s833
          %839 = dma.hbm_to_vmem [thread:$0]  %s832, 4096, %s834, %s823, 256, 256, 16
        $region92: #{tpu_custom_call.1} parent=87 // pred_fallthru
          _
        // Predicated region
        $region93: #{tpu_custom_call.1} parent=87 // pred_check
          %p840 = pneg %p96
        $region94: #{tpu_custom_call.1} parent=87 // pred_check_branch
          %842 = sbr.rel (%p840) target = $region96
        $region95: #{tpu_custom_call.1} parent=87 // pred_region
          %s843 = sand.u32 %s50, 1
          %s844 = scalar_lea.sflag [#allocation6], %s843
          %s845 = sand.u32 %s86, 1
          %s846 = smul.addr %s845, 7
          %s847 = scalar_lea.vmem [#allocation5], %s846
          %s849 = ssub.s32 112, 112
          %850 = vsyncadd %s844, %s849
          %s851 = smul.addr %s50, 7
          %s852 = smul.addr %s851, 16
          %s853 = scalar_lea.hbm %s1, %s852
          %s855 = sshll.u32 %s847, 4
          %s856 = int_to_ptr.vmem [resolvable:$true] %s855
          %858 = dma.hbm_to_vmem [thread:$0]  %s853, 112, %s856, %s844
        $region96: #{tpu_custom_call.1} parent=87 // pred_fallthru
          _
      $region88: #{tpu_custom_call.1} parent=5 // pred_fallthru
        _
      %p859 = scmp.le.s32.totalorder 1, %s50
      %p860 = scmp.lt.s32.totalorder %s50, 3
      %p861 = pnand %p859, %p860
      %p862 = pneg %p861
      // Predicated region
      $region97: #{tpu_custom_call.1} parent=5 // pred_check
        _
      $region98: #{tpu_custom_call.1} parent=5 // pred_check_branch
        %864 = sbr.rel (%p861) target = $region100
      $region99: #{tpu_custom_call.1} parent=5 // pred_region
        %s865 = ssub.s32 %s50, 1
        %s866 = sand.u32 %s63, 1
        %s867 = scalar_lea.sflag [#allocation3], %s866
        %s868 = sand.u32 %s63, 1
        %s869 = smul.addr %s868, 256
        %s870 = scalar_lea.vmem [#allocation2], %s869
        // Predicated region
        $region101: #{tpu_custom_call.1} parent=99 // pred_check
          %p871 = pneg %p76
        $region102: #{tpu_custom_call.1} parent=99 // pred_check_branch
          %873 = sbr.rel (%p871) target = $region104
        $region103: #{tpu_custom_call.1} parent=99 // pred_region
          %874 = dma.done %s867, 4096
        $region104: #{tpu_custom_call.1} parent=99 // pred_fallthru
          _
        %s875 = sand.u32 %s55, 1
        %s876 = scalar_lea.sflag [#allocation6], %s875
        %s877 = sand.u32 %s89, 1
        %s878 = smul.addr %s877, 7
        %s879 = scalar_lea.vmem [#allocation5], %s878
        // Predicated region
        $region105: #{tpu_custom_call.1} parent=99 // pred_check
          %p880 = pneg %p102
        $region106: #{tpu_custom_call.1} parent=99 // pred_check_branch
          %882 = sbr.rel (%p880) target = $region108
        $region107: #{tpu_custom_call.1} parent=99 // pred_region
          %883 = dma.done %s876, 112
        $region108: #{tpu_custom_call.1} parent=99 // pred_fallthru
          _
        // Predicated region
        $region109: #{tpu_custom_call.1} parent=99 // pred_check
          %p884 = pneg %p123
        $region110: #{tpu_custom_call.1} parent=99 // pred_check_branch
          %886 = sbr.rel (%p884) target = $region112
        $region111: #{tpu_custom_call.1} parent=99 // pred_region
          %887 = dma.done [#allocation6], 4096
        $region112: #{tpu_custom_call.1} parent=99 // pred_fallthru
          _
        // Predicated region
        $region113: #{tpu_custom_call.1} parent=99 // pred_check
          %p888 = pneg %p144
        $region114: #{tpu_custom_call.1} parent=99 // pred_check_branch
          %890 = sbr.rel (%p888) target = $region116
        $region115: #{tpu_custom_call.1} parent=99 // pred_region
          %891 = dma.done [#allocation9], 16
        $region116: #{tpu_custom_call.1} parent=99 // pred_fallthru
          _
        // Predicated region
        $region117: #{tpu_custom_call.1} parent=99 // pred_check
          %p892 = pneg %p165
        $region118: #{tpu_custom_call.1} parent=99 // pred_check_branch
          %894 = sbr.rel (%p892) target = $region120
        $region119: #{tpu_custom_call.1} parent=99 // pred_region
          %895 = dma.done [#allocation9], 256
        $region120: #{tpu_custom_call.1} parent=99 // pred_fallthru
          _
        // Predicated region
        $region121: #{tpu_custom_call.1} parent=99 // pred_check
          %p896 = pneg %p186
        $region122: #{tpu_custom_call.1} parent=99 // pred_check_branch
          %898 = sbr.rel (%p896) target = $region124
        $region123: #{tpu_custom_call.1} parent=99 // pred_region
          %899 = dma.done [#allocation12], 128
        $region124: #{tpu_custom_call.1} parent=99 // pred_fallthru
          _
        // Predicated region
        $region125: #{tpu_custom_call.1} parent=99 // pred_check
          %p900 = pneg %p207
        $region126: #{tpu_custom_call.1} parent=99 // pred_check_branch
          %902 = sbr.rel (%p900) target = $region128
        $region127: #{tpu_custom_call.1} parent=99 // pred_region
          %903 = dma.done [#allocation12], 24576
        $region128: #{tpu_custom_call.1} parent=99 // pred_fallthru
          _
        // Predicated region
        $region129: #{tpu_custom_call.1} parent=99 // pred_check
          %p904 = pneg %p228
        $region130: #{tpu_custom_call.1} parent=99 // pred_check_branch
          %906 = sbr.rel (%p904) target = $region132
        $region131: #{tpu_custom_call.1} parent=99 // pred_region
          %907 = dma.done [#allocation15], 192
        $region132: #{tpu_custom_call.1} parent=99 // pred_fallthru
          _
        // Predicated region
        $region133: #{tpu_custom_call.1} parent=99 // pred_check
          %p908 = pneg %p249
        $region134: #{tpu_custom_call.1} parent=99 // pred_check_branch
          %910 = sbr.rel (%p908) target = $region136
        $region135: #{tpu_custom_call.1} parent=99 // pred_region
          %911 = dma.done [#allocation15], 8192
        $region136: #{tpu_custom_call.1} parent=99 // pred_fallthru
          _
        // Predicated region
        $region137: #{tpu_custom_call.1} parent=99 // pred_check
          %p912 = pneg %p270
        $region138: #{tpu_custom_call.1} parent=99 // pred_check_branch
          %914 = sbr.rel (%p912) target = $region140
        $region139: #{tpu_custom_call.1} parent=99 // pred_region
          %915 = dma.done [#allocation18], 64
        $region140: #{tpu_custom_call.1} parent=99 // pred_fallthru
          _
        // Predicated region
        $region141: #{tpu_custom_call.1} parent=99 // pred_check
          %p916 = pneg %p291
        $region142: #{tpu_custom_call.1} parent=99 // pred_check_branch
          %918 = sbr.rel (%p916) target = $region144
        $region143: #{tpu_custom_call.1} parent=99 // pred_region
          %919 = dma.done [#allocation18], 64
        $region144: #{tpu_custom_call.1} parent=99 // pred_fallthru
          _
        // Predicated region
        $region145: #{tpu_custom_call.1} parent=99 // pred_check
          %p920 = pneg %p312
        $region146: #{tpu_custom_call.1} parent=99 // pred_check_branch
          %922 = sbr.rel (%p920) target = $region148
        $region147: #{tpu_custom_call.1} parent=99 // pred_region
          %923 = dma.done [#allocation21], 64
        $region148: #{tpu_custom_call.1} parent=99 // pred_fallthru
          _
        // Predicated region
        $region149: #{tpu_custom_call.1} parent=99 // pred_check
          %p924 = pneg %p333
        $region150: #{tpu_custom_call.1} parent=99 // pred_check_branch
          %926 = sbr.rel (%p924) target = $region152
        $region151: #{tpu_custom_call.1} parent=99 // pred_region
          %927 = dma.done [#allocation21], 32768
        $region152: #{tpu_custom_call.1} parent=99 // pred_fallthru
          _
        // Predicated region
        $region153: #{tpu_custom_call.1} parent=99 // pred_check
          %p928 = pneg %p375
        $region154: #{tpu_custom_call.1} parent=99 // pred_check_branch
          %930 = sbr.rel (%p928) target = $region156
        $region155: #{tpu_custom_call.1} parent=99 // pred_region
          %931 = dma.done [#allocation24], 32768
        $region156: #{tpu_custom_call.1} parent=99 // pred_fallthru
          _
        // Predicated region
        $region157: #{tpu_custom_call.1} parent=99 // pred_check
          %p932 = pneg %p417
        $region158: #{tpu_custom_call.1} parent=99 // pred_check_branch
          %934 = sbr.rel (%p932) target = $region160
        $region159: #{tpu_custom_call.1} parent=99 // pred_region
          %935 = dma.done [#allocation24], 64
        $region160: #{tpu_custom_call.1} parent=99 // pred_fallthru
          _
        // Predicated region
        $region161: #{tpu_custom_call.1} parent=99 // pred_check
          %p936 = pneg %p459
        $region162: #{tpu_custom_call.1} parent=99 // pred_check_branch
          %938 = sbr.rel (%p936) target = $region164
        $region163: #{tpu_custom_call.1} parent=99 // pred_region
          %939 = dma.done [#allocation27], 14336
        $region164: #{tpu_custom_call.1} parent=99 // pred_fallthru
          _
        %s940 = sand.u32 %s63, 1
        %s941 = scalar_lea.sflag [#allocation3], %s940
        %s942 = sand.u32 %s63, 1
        %s943 = smul.addr %s942, 256
        %s944 = scalar_lea.vmem [#allocation2], %s943
        %p945 = pneg %p76
        %p946 = pneg %p73
        %s947 = sand.u32 %s55, 1
        %s948 = scalar_lea.sflag [#allocation6], %s947
        %s949 = sand.u32 %s89, 1
        %s950 = smul.addr %s949, 7
        %s951 = scalar_lea.vmem [#allocation5], %s950
        %p952 = pneg %p102
        %p953 = pneg %p99
        %p954 = pneg %p123
        %p955 = pneg %p120
        %p956 = pneg %p144
        %p957 = pneg %p141
        %p958 = pneg %p165
        %p959 = pneg %p162
        %p960 = pneg %p186
        %p961 = pneg %p183
        %p962 = pneg %p207
        %p963 = pneg %p204
        %p964 = pneg %p228
        %p965 = pneg %p225
        %p966 = pneg %p249
        %p967 = pneg %p246
        %p968 = pneg %p270
        %p969 = pneg %p267
        %p970 = pneg %p291
        %p971 = pneg %p288
        %p972 = pneg %p312
        %p973 = pneg %p309
        %p974 = pneg %p333
        %p975 = pneg %p330
        %p976 = pneg %p354
        %p977 = pneg %p351
        %p978 = pneg %p375
        %p979 = pneg %p372
        %p980 = pneg %p396
        %p981 = pneg %p393
        %p982 = pneg %p417
        %p983 = pneg %p414
        %p984 = pneg %p438
        %p985 = pneg %p435
        %p986 = pneg %p459
        %p987 = pneg %p456
        %p988 = pneg %p480
        %p989 = pneg %p477
        %p990 = pneg %p506
        %p991 = pneg %p503
        %s992 = sand.u32 %s493, 1
        %s993 = scalar_lea.sflag [#allocation4], %s992
        %s994 = sand.u32 %s493, 1
        %s995 = smul.addr %s994, 128
        %s996 = scalar_lea.vmem [#allocation28], %s995
        %p997 = pneg %p532
        %p998 = pneg %p529
        %p999 = scmp.lt.s32.totalorder %s55, 1
        %s1000 = scalar_select %p999, %s55, 1
        %s1001 = smul.addr %s1000, 2
        %s1002 = smul.addr %s1001, 8
        %s1003 = scalar_lea.vmem %s21, %s1002
        %p1004 = pneg %p558
        %p1005 = pneg %p555
        %p1006 = scmp.lt.s32.totalorder %s55, 1
        %s1007 = scalar_select %p1006, %s55, 1
        %s1008 = smul.addr %s1007, 8
        %s1009 = scalar_lea.vmem %s22, %s1008
        %p1010 = pneg %p584
        %p1011 = pneg %p581
        %s1012 = sand.u32 %s55, 1
        %s1013 = scalar_lea.sflag [#allocation30], %s1012
        %s1014 = sand.u32 %s571, 1
        %s1015 = scalar_lea.vmem [#allocation29], %s1014
        %p1016 = pneg %p610
        %p1017 = pneg %p607
        %s1018 = sand.u32 %s55, 1
        %s1019 = scalar_lea.sflag [#allocation30], %s1018
        %s1020 = sand.u32 %s597, 1
        %s1021 = smul.addr %s1020, 7
        %s1022 = scalar_lea.vmem [#allocation31], %s1021
        %p1023 = scmp.lt.s32.totalorder %s55, 1
        %s1024 = scalar_select %p1023, %s55, 1
        %s1025 = smul.addr %s1024, 2
        %s1026 = smul.addr %s1025, 8
        %s1027 = scalar_lea.vmem %s21, %s1026
        %p1028 = scmp.lt.s32.totalorder %s55, 1
        %s1029 = scalar_select %p1028, %s55, 1
        %s1030 = smul.addr %s1029, 8
        %s1031 = scalar_lea.vmem %s22, %s1030
        %v1032 = vld [vmem:[%s870] sm:$0xff]
        %v1033 = vld [vmem:[%s870 + $0x8] sm:$0xff]
        %v1034 = vld [vmem:[%s870 + $0x10] sm:$0xff]
        %v1035 = vld [vmem:[%s870 + $0x18] sm:$0xff]
        %v1036 = vld [vmem:[%s870 + $0x20] sm:$0xff]
        %v1037 = vld [vmem:[%s870 + $0x28] sm:$0xff]
        %v1038 = vld [vmem:[%s870 + $0x30] sm:$0xff]
        %v1039 = vld [vmem:[%s870 + $0x38] sm:$0xff]
        %v1040 = vld [vmem:[%s870 + $0x40] sm:$0xff]
        %v1041 = vld [vmem:[%s870 + $0x48] sm:$0xff]
        %v1042 = vld [vmem:[%s870 + $0x50] sm:$0xff]
        %v1043 = vld [vmem:[%s870 + $0x58] sm:$0xff]
        %v1044 = vld [vmem:[%s870 + $0x60] sm:$0xff]
        %v1045 = vld [vmem:[%s870 + $0x68] sm:$0xff]
        %v1046 = vld [vmem:[%s870 + $0x70] sm:$0xff]
        %v1047 = vld [vmem:[%s870 + $0x78] sm:$0xff]
        %v1048 = vld [vmem:[%s870 + $0x80] sm:$0xff]
        %v1049 = vld [vmem:[%s870 + $0x88] sm:$0xff]
        %v1050 = vld [vmem:[%s870 + $0x90] sm:$0xff]
        %v1051 = vld [vmem:[%s870 + $0x98] sm:$0xff]
        %v1052 = vld [vmem:[%s870 + $0xa0] sm:$0xff]
        %v1053 = vld [vmem:[%s870 + $0xa8] sm:$0xff]
        %v1054 = vld [vmem:[%s870 + $0xb0] sm:$0xff]
        %v1055 = vld [vmem:[%s870 + $0xb8] sm:$0xff]
        %v1056 = vld [vmem:[%s870 + $0xc0] sm:$0xff]
        %v1057 = vld [vmem:[%s870 + $0xc8] sm:$0xff]
        %v1058 = vld [vmem:[%s870 + $0xd0] sm:$0xff]
        %v1059 = vld [vmem:[%s870 + $0xd8] sm:$0xff]
        %v1060 = vld [vmem:[%s870 + $0xe0] sm:$0xff]
        %v1061 = vld [vmem:[%s870 + $0xe8] sm:$0xff]
        %v1062 = vld [vmem:[%s870 + $0xf0] sm:$0xff]
        %v1063 = vld [vmem:[%s870 + $0xf8] sm:$0xff]
        %v1064 = vld [vmem:[#allocation7] sm:$0xff]
        %v1065 = vld [vmem:[#allocation7 + $0x8] sm:$0xff]
        %v1066 = vld [vmem:[#allocation7 + $0x10] sm:$0xff]
        %v1067 = vld [vmem:[#allocation7 + $0x18] sm:$0xff]
        %v1068 = vld [vmem:[#allocation7 + $0x20] sm:$0xff]
        %v1069 = vld [vmem:[#allocation7 + $0x28] sm:$0xff]
        %v1070 = vld [vmem:[#allocation7 + $0x30] sm:$0xff]
        %v1071 = vld [vmem:[#allocation7 + $0x38] sm:$0xff]
        %v1072 = vld [vmem:[#allocation7 + $0x40] sm:$0xff]
        %v1073 = vld [vmem:[#allocation7 + $0x48] sm:$0xff]
        %v1074 = vld [vmem:[#allocation7 + $0x50] sm:$0xff]
        %v1075 = vld [vmem:[#allocation7 + $0x58] sm:$0xff]
        %v1076 = vld [vmem:[#allocation7 + $0x60] sm:$0xff]
        %v1077 = vld [vmem:[#allocation7 + $0x68] sm:$0xff]
        %v1078 = vld [vmem:[#allocation7 + $0x70] sm:$0xff]
        %v1079 = vld [vmem:[#allocation7 + $0x78] sm:$0xff]
        %v1080 = vld [vmem:[#allocation7 + $0x80] sm:$0xff]
        %v1081 = vld [vmem:[#allocation7 + $0x88] sm:$0xff]
        %v1082 = vld [vmem:[#allocation7 + $0x90] sm:$0xff]
        %v1083 = vld [vmem:[#allocation7 + $0x98] sm:$0xff]
        %v1084 = vld [vmem:[#allocation7 + $0xa0] sm:$0xff]
        %v1085 = vld [vmem:[#allocation7 + $0xa8] sm:$0xff]
        %v1086 = vld [vmem:[#allocation7 + $0xb0] sm:$0xff]
        %v1087 = vld [vmem:[#allocation7 + $0xb8] sm:$0xff]
        %v1088 = vld [vmem:[#allocation7 + $0xc0] sm:$0xff]
        %v1089 = vld [vmem:[#allocation7 + $0xc8] sm:$0xff]
        %v1090 = vld [vmem:[#allocation7 + $0xd0] sm:$0xff]
        %v1091 = vld [vmem:[#allocation7 + $0xd8] sm:$0xff]
        %v1092 = vld [vmem:[#allocation7 + $0xe0] sm:$0xff]
        %v1093 = vld [vmem:[#allocation7 + $0xe8] sm:$0xff]
        %v1094 = vld [vmem:[#allocation7 + $0xf0] sm:$0xff]
        %v1095 = vld [vmem:[#allocation7 + $0xf8] sm:$0xff]
        %v1096 = vld [vmem:[#allocation8] sm:$0x1]
        %v1098 = vlaneseq
        %v1099 = vshrl.u32 %v1098, 7
        %v1100 = vsub.s32 0, %v1099
        %v1101 = vrot.slane %v1096, %v1100
        %1103 = vmatprep.subr.mxu0 0.0
        %1104 = vmatpush1.msra.mxu0 %v1079
        %1105 = vmatprep.subr.mxu0 0.0
        %1106 = vmatpush1.msra.mxu0 %v1078
        %1107 = vmatprep.subr.mxu0 0.0
        %1108 = vmatpush1.msra.mxu0 %v1077
        %1109 = vmatprep.subr.mxu0 0.0
        %1110 = vmatpush1.msra.mxu0 %v1076
        %1111 = vmatprep.subr.mxu0 0.0
        %1112 = vmatpush1.msra.mxu0 %v1075
        %1113 = vmatprep.subr.mxu0 0.0
        %1114 = vmatpush1.msra.mxu0 %v1074
        %1115 = vmatprep.subr.mxu0 0.0
        %1116 = vmatpush1.msra.mxu0 %v1073
        %1117 = vmatprep.subr.mxu0 0.0
        %1118 = vmatpush1.msra.mxu0 %v1072
        %1119 = vmatprep.subr.mxu0 0.0
        %1120 = vmatpush1.msra.mxu0 %v1071
        %1121 = vmatprep.subr.mxu0 0.0
        %1122 = vmatpush1.msra.mxu0 %v1070
        %1123 = vmatprep.subr.mxu0 0.0
        %1124 = vmatpush1.msra.mxu0 %v1069
        %1125 = vmatprep.subr.mxu0 0.0
        %1126 = vmatpush1.msra.mxu0 %v1068
        %1127 = vmatprep.subr.mxu0 0.0
        %1128 = vmatpush1.msra.mxu0 %v1067
        %1129 = vmatprep.subr.mxu0 0.0
        %1130 = vmatpush1.msra.mxu0 %v1066
        %1131 = vmatprep.subr.mxu0 0.0
        %1132 = vmatpush1.msra.mxu0 %v1065
        %1133 = vmatprep.subr.mxu0 0.0
        %1134 = vmatpush1.msra.mxu0 %v1064
        %1135 = vmatprep.subr.mxu0 0.0
        %1136 = vmatpush2.msra.mxu0 %v1095
        %1137 = vmatprep.subr.mxu0 0.0
        %1138 = vmatpush2.msra.mxu0 %v1094
        %1139 = vmatprep.subr.mxu0 0.0
        %1140 = vmatpush2.msra.mxu0 %v1093
        %1141 = vmatprep.subr.mxu0 0.0
        %1142 = vmatpush2.msra.mxu0 %v1092
        %1143 = vmatprep.subr.mxu0 0.0
        %1144 = vmatpush2.msra.mxu0 %v1091
        %1145 = vmatprep.subr.mxu0 0.0
        %1146 = vmatpush2.msra.mxu0 %v1090
        %1147 = vmatprep.subr.mxu0 0.0
        %1148 = vmatpush2.msra.mxu0 %v1089
        %1149 = vmatprep.subr.mxu0 0.0
        %1150 = vmatpush2.msra.mxu0 %v1088
        %1151 = vmatprep.subr.mxu0 0.0
        %1152 = vmatpush2.msra.mxu0 %v1087
        %1153 = vmatprep.subr.mxu0 0.0
        %1154 = vmatpush2.msra.mxu0 %v1086
        %1155 = vmatprep.subr.mxu0 0.0
        %1156 = vmatpush2.msra.mxu0 %v1085
        %1157 = vmatprep.subr.mxu0 0.0
        %1158 = vmatpush2.msra.mxu0 %v1084
        %1159 = vmatprep.subr.mxu0 0.0
        %1160 = vmatpush2.msra.mxu0 %v1083
        %1161 = vmatprep.subr.mxu0 0.0
        %1162 = vmatpush2.msra.mxu0 %v1082
        %1163 = vmatprep.subr.mxu0 0.0
        %1164 = vmatpush2.msra.mxu0 %v1081
        %1165 = vmatprep.subr.mxu0 0.0
        %1166 = vmatpush2.msra.mxu0 %v1080
        %1167 = vmatprep.mubr.f32.mxu0 %v1033
        %1168 = vmatmul.mubr.f32.gmra.mxu0 %v1032
        %v1169 = vpop.f32.mrf.mxu0
        %v1170 = vadd.f32 %v1101, %v1169
        %v1171 = vpop.f32.mrf.mxu0
        %1172 = vmatprep.mubr.f32.mxu0 %v1035
        %1173 = vmatmul.mubr.f32.gmra.mxu0 %v1034
        %v1174 = vpop.f32.mrf.mxu0
        %v1175 = vadd.f32 %v1101, %v1174
        %v1176 = vpop.f32.mrf.mxu0
        %1177 = vmatprep.mubr.f32.mxu0 %v1037
        %1178 = vmatmul.mubr.f32.gmra.mxu0 %v1036
        %v1179 = vpop.f32.mrf.mxu0
        %v1180 = vadd.f32 %v1101, %v1179
        %v1181 = vpop.f32.mrf.mxu0
        %1182 = vmatprep.mubr.f32.mxu0 %v1039
        %1183 = vmatmul.mubr.f32.gmra.mxu0 %v1038
        %v1184 = vpop.f32.mrf.mxu0
        %v1185 = vadd.f32 %v1101, %v1184
        %v1186 = vpop.f32.mrf.mxu0
        %1187 = vmatprep.mubr.f32.mxu0 %v1041
        %1188 = vmatmul.mubr.f32.gmra.mxu0 %v1040
        %v1189 = vpop.f32.mrf.mxu0
        %v1190 = vadd.f32 %v1101, %v1189
        %v1191 = vpop.f32.mrf.mxu0
        %1192 = vmatprep.mubr.f32.mxu0 %v1043
        %1193 = vmatmul.mubr.f32.gmra.mxu0 %v1042
        %v1194 = vpop.f32.mrf.mxu0
        %v1195 = vadd.f32 %v1101, %v1194
        %v1196 = vpop.f32.mrf.mxu0
        %1197 = vmatprep.mubr.f32.mxu0 %v1045
        %1198 = vmatmul.mubr.f32.gmra.mxu0 %v1044
        %v1199 = vpop.f32.mrf.mxu0
        %v1200 = vadd.f32 %v1101, %v1199
        %v1201 = vpop.f32.mrf.mxu0
        %1202 = vmatprep.mubr.f32.mxu0 %v1047
        %1203 = vmatmul.mubr.f32.gmra.mxu0 %v1046
        %v1204 = vpop.f32.mrf.mxu0
        %v1205 = vadd.f32 %v1101, %v1204
        %v1206 = vpop.f32.mrf.mxu0
        %1207 = vmatprep.mubr.f32.mxu0 %v1049
        %1208 = vmatmul.mubr.f32.gmra.mxu0 %v1048
        %v1209 = vpop.f32.mrf.mxu0
        %v1210 = vadd.f32 %v1101, %v1209
        %v1211 = vpop.f32.mrf.mxu0
        %1212 = vmatprep.mubr.f32.mxu0 %v1051
        %1213 = vmatmul.mubr.f32.gmra.mxu0 %v1050
        %v1214 = vpop.f32.mrf.mxu0
        %v1215 = vadd.f32 %v1101, %v1214
        %v1216 = vpop.f32.mrf.mxu0
        %1217 = vmatprep.mubr.f32.mxu0 %v1053
        %1218 = vmatmul.mubr.f32.gmra.mxu0 %v1052
        %v1219 = vpop.f32.mrf.mxu0
        %v1220 = vadd.f32 %v1101, %v1219
        %v1221 = vpop.f32.mrf.mxu0
        %1222 = vmatprep.mubr.f32.mxu0 %v1055
        %1223 = vmatmul.mubr.f32.gmra.mxu0 %v1054
        %v1224 = vpop.f32.mrf.mxu0
        %v1225 = vadd.f32 %v1101, %v1224
        %v1226 = vpop.f32.mrf.mxu0
        %1227 = vmatprep.mubr.f32.mxu0 %v1057
        %1228 = vmatmul.mubr.f32.gmra.mxu0 %v1056
        %v1229 = vpop.f32.mrf.mxu0
        %v1230 = vadd.f32 %v1101, %v1229
        %v1231 = vpop.f32.mrf.mxu0
        %1232 = vmatprep.mubr.f32.mxu0 %v1059
        %1233 = vmatmul.mubr.f32.gmra.mxu0 %v1058
        %v1234 = vpop.f32.mrf.mxu0
        %v1235 = vadd.f32 %v1101, %v1234
        %v1236 = vpop.f32.mrf.mxu0
        %1237 = vmatprep.mubr.f32.mxu0 %v1061
        %1238 = vmatmul.mubr.f32.gmra.mxu0 %v1060
        %v1239 = vpop.f32.mrf.mxu0
        %v1240 = vadd.f32 %v1101, %v1239
        %v1241 = vpop.f32.mrf.mxu0
        %1242 = vmatprep.mubr.f32.mxu0 %v1063
        %1243 = vmatmul.mubr.f32.gmra.mxu0 %v1062
        %v1244 = vpop.f32.mrf.mxu0
        %v1245 = vadd.f32 %v1101, %v1244
        %v1246 = vpop.f32.mrf.mxu0
        %1247 = vdwg.mxu0
        %1248 = vst [vmem:[%s996] sm:$0xff] %v1170
        %1249 = vst [vmem:[%s996 + $0x8] sm:$0xff] %v1175
        %1250 = vst [vmem:[%s996 + $0x10] sm:$0xff] %v1180
        %1251 = vst [vmem:[%s996 + $0x18] sm:$0xff] %v1185
        %1252 = vst [vmem:[%s996 + $0x20] sm:$0xff] %v1190
        %1253 = vst [vmem:[%s996 + $0x28] sm:$0xff] %v1195
        %1254 = vst [vmem:[%s996 + $0x30] sm:$0xff] %v1200
        %1255 = vst [vmem:[%s996 + $0x38] sm:$0xff] %v1205
        %1256 = vst [vmem:[%s996 + $0x40] sm:$0xff] %v1210
        %1257 = vst [vmem:[%s996 + $0x48] sm:$0xff] %v1215
        %1258 = vst [vmem:[%s996 + $0x50] sm:$0xff] %v1220
        %1259 = vst [vmem:[%s996 + $0x58] sm:$0xff] %v1225
        %1260 = vst [vmem:[%s996 + $0x60] sm:$0xff] %v1230
        %1261 = vst [vmem:[%s996 + $0x68] sm:$0xff] %v1235
        %1262 = vst [vmem:[%s996 + $0x70] sm:$0xff] %v1240
        %1263 = vst [vmem:[%s996 + $0x78] sm:$0xff] %v1245
        %v1264 = vld [vmem:[#allocation10] sm:$0xff]
        %v1265 = vld [vmem:[#allocation10 + $0x8] sm:$0x3]
        %1266 = vmatprep.subr.mxu0 0.0
        %1267 = vmatpush1.msra.mxu0 %v1245
        %1268 = vmatprep.subr.mxu0 0.0
        %1269 = vmatpush1.msra.mxu0 %v1240
        %1270 = vmatprep.subr.mxu0 0.0
        %1271 = vmatpush1.msra.mxu0 %v1235
        %1272 = vmatprep.subr.mxu0 0.0
        %1273 = vmatpush1.msra.mxu0 %v1230
        %1274 = vmatprep.subr.mxu0 0.0
        %1275 = vmatpush1.msra.mxu0 %v1225
        %1276 = vmatprep.subr.mxu0 0.0
        %1277 = vmatpush1.msra.mxu0 %v1220
        %1278 = vmatprep.subr.mxu0 0.0
        %1279 = vmatpush1.msra.mxu0 %v1215
        %1280 = vmatprep.subr.mxu0 0.0
        %1281 = vmatpush1.msra.mxu0 %v1210
        %1282 = vmatprep.subr.mxu0 0.0
        %1283 = vmatpush1.msra.mxu0 %v1205
        %1284 = vmatprep.subr.mxu0 0.0
        %1285 = vmatpush1.msra.mxu0 %v1200
        %1286 = vmatprep.subr.mxu0 0.0
        %1287 = vmatpush1.msra.mxu0 %v1195
        %1288 = vmatprep.subr.mxu0 0.0
        %1289 = vmatpush1.msra.mxu0 %v1190
        %1290 = vmatprep.subr.mxu0 0.0
        %1291 = vmatpush1.msra.mxu0 %v1185
        %1292 = vmatprep.subr.mxu0 0.0
        %1293 = vmatpush1.msra.mxu0 %v1180
        %1294 = vmatprep.subr.mxu0 0.0
        %1295 = vmatpush1.msra.mxu0 %v1175
        %1296 = vmatprep.subr.mxu0 0.0
        %1297 = vmatpush1.msra.mxu0 %v1170
        %1298 = vmatprep.subr.mxu0 0.0
        %1299 = vmatpush2.msra.mxu0 0.0
        %1300 = vmatprep.subr.mxu0 0.0
        %1301 = vmatpush2.msra.mxu0 0.0
        %1302 = vmatprep.subr.mxu0 0.0
        %1303 = vmatpush2.msra.mxu0 0.0
        %1304 = vmatprep.subr.mxu0 0.0
        %1305 = vmatpush2.msra.mxu0 0.0
        %1306 = vmatprep.subr.mxu0 0.0
        %1307 = vmatpush2.msra.mxu0 0.0
        %1308 = vmatprep.subr.mxu0 0.0
        %1309 = vmatpush2.msra.mxu0 0.0
        %1310 = vmatprep.subr.mxu0 0.0
        %1311 = vmatpush2.msra.mxu0 0.0
        %1312 = vmatprep.subr.mxu0 0.0
        %1313 = vmatpush2.msra.mxu0 0.0
        %1314 = vmatprep.subr.mxu0 0.0
        %1315 = vmatpush2.msra.mxu0 0.0
        %1316 = vmatprep.subr.mxu0 0.0
        %1317 = vmatpush2.msra.mxu0 0.0
        %1318 = vmatprep.subr.mxu0 0.0
        %1319 = vmatpush2.msra.mxu0 0.0
        %1320 = vmatprep.subr.mxu0 0.0
        %1321 = vmatpush2.msra.mxu0 0.0
        %1322 = vmatprep.subr.mxu0 0.0
        %1323 = vmatpush2.msra.mxu0 0.0
        %1324 = vmatprep.subr.mxu0 0.0
        %1325 = vmatpush2.msra.mxu0 0.0
        %1326 = vmatprep.subr.mxu0 0.0
        %1327 = vmatpush2.msra.mxu0 0.0
        %1328 = vmatprep.subr.mxu0 0.0
        %1329 = vmatpush2.msra.mxu0 0.0
        %1330 = vmatprep.mubr.f32.mxu0 0.0
        %1331 = vmatmul.mubr.f32.gmra.mxu0 %v1264
        %v1332 = vpop.f32.mrf.mxu0
        %v1333 = vadd.f32 0.0, %v1332
        %v1334 = vpop.f32.mrf.mxu0
        %1335 = vmatprep.mubr.f32.mxu0 0.0
        %1336 = vmatmul.mubr.f32.gmra.mxu0 %v1265
        %v1337 = vpop.f32.mrf.mxu0
        %v1338 = vadd.f32 0.0, %v1337
        %v1339 = vpop.f32.mrf.mxu0
        %1340 = vdwg.mxu0
        %1341 = vst [vmem:[%s1027] sm:$0xff] %v1333
        %1342 = vst [vmem:[%s1027 + $0x8] sm:$0x3] %v1338
        %v1343 = vld [vmem:[#allocation13] sm:$0xff]
        %v1344 = vld [vmem:[#allocation13 + $0x8] sm:$0xff]
        %v1345 = vld [vmem:[#allocation13 + $0x10] sm:$0xff]
        %v1346 = vld [vmem:[#allocation13 + $0x18] sm:$0xff]
        %v1347 = vld [vmem:[#allocation13 + $0x20] sm:$0xff]
        %v1348 = vld [vmem:[#allocation13 + $0x28] sm:$0xff]
        %v1349 = vld [vmem:[#allocation13 + $0x30] sm:$0xff]
        %v1350 = vld [vmem:[#allocation13 + $0x38] sm:$0xff]
        %v1351 = vld [vmem:[#allocation13 + $0x40] sm:$0xff]
        %v1352 = vld [vmem:[#allocation13 + $0x48] sm:$0xff]
        %v1353 = vld [vmem:[#allocation13 + $0x50] sm:$0xff]
        %v1354 = vld [vmem:[#allocation13 + $0x58] sm:$0xff]
        %v1355 = vld [vmem:[#allocation13 + $0x60] sm:$0xff]
        %v1356 = vld [vmem:[#allocation13 + $0x68] sm:$0xff]
        %v1357 = vld [vmem:[#allocation13 + $0x70] sm:$0xff]
        %v1358 = vld [vmem:[#allocation13 + $0x78] sm:$0xff]
        %v1359 = vld [vmem:[#allocation13 + $0x80] sm:$0xff]
        %v1360 = vld [vmem:[#allocation13 + $0x88] sm:$0xff]
        %v1361 = vld [vmem:[#allocation13 + $0x90] sm:$0xff]
        %v1362 = vld [vmem:[#allocation13 + $0x98] sm:$0xff]
        %v1363 = vld [vmem:[#allocation13 + $0xa0] sm:$0xff]
        %v1364 = vld [vmem:[#allocation13 + $0xa8] sm:$0xff]
        %v1365 = vld [vmem:[#allocation13 + $0xb0] sm:$0xff]
        %v1366 = vld [vmem:[#allocation13 + $0xb8] sm:$0xff]
        %v1367 = vld [vmem:[#allocation13 + $0xc0] sm:$0xff]
        %v1368 = vld [vmem:[#allocation13 + $0xc8] sm:$0xff]
        %v1369 = vld [vmem:[#allocation13 + $0xd0] sm:$0xff]
        %v1370 = vld [vmem:[#allocation13 + $0xd8] sm:$0xff]
        %v1371 = vld [vmem:[#allocation13 + $0xe0] sm:$0xff]
        %v1372 = vld [vmem:[#allocation13 + $0xe8] sm:$0xff]
        %v1373 = vld [vmem:[#allocation13 + $0xf0] sm:$0xff]
        %v1374 = vld [vmem:[#allocation13 + $0xf8] sm:$0xff]
        %v1375 = vld [vmem:[#allocation13 + $0x100] sm:$0xff]
        %v1376 = vld [vmem:[#allocation13 + $0x108] sm:$0xff]
        %v1377 = vld [vmem:[#allocation13 + $0x110] sm:$0xff]
        %v1378 = vld [vmem:[#allocation13 + $0x118] sm:$0xff]
        %v1379 = vld [vmem:[#allocation13 + $0x120] sm:$0xff]
        %v1380 = vld [vmem:[#allocation13 + $0x128] sm:$0xff]
        %v1381 = vld [vmem:[#allocation13 + $0x130] sm:$0xff]
        %v1382 = vld [vmem:[#allocation13 + $0x138] sm:$0xff]
        %v1383 = vld [vmem:[#allocation13 + $0x140] sm:$0xff]
        %v1384 = vld [vmem:[#allocation13 + $0x148] sm:$0xff]
        %v1385 = vld [vmem:[#allocation13 + $0x150] sm:$0xff]
        %v1386 = vld [vmem:[#allocation13 + $0x158] sm:$0xff]
        %v1387 = vld [vmem:[#allocation13 + $0x160] sm:$0xff]
        %v1388 = vld [vmem:[#allocation13 + $0x168] sm:$0xff]
        %v1389 = vld [vmem:[#allocation13 + $0x170] sm:$0xff]
        %v1390 = vld [vmem:[#allocation13 + $0x178] sm:$0xff]
        %v1391 = vld [vmem:[#allocation14] sm:$0x7]
        %v1393 = vlaneseq
        %v1394 = vshrl.u32 %v1393, 7
        %v1395 = vsub.s32 0, %v1394
        %v1396 = vrot.slane %v1391, %v1395
        %v1397 = vlaneseq
        %v1398 = vshrl.u32 %v1397, 7
        %v1399 = vsub.s32 1, %v1398
        %v1400 = vrot.slane %v1391, %v1399
        %v1401 = vlaneseq
        %v1402 = vshrl.u32 %v1401, 7
        %v1403 = vsub.s32 2, %v1402
        %v1404 = vrot.slane %v1391, %v1403
        %1408 = vmatprep.subr.mxu0 %v1389
        %1409 = vmatpush1.msra.mxu0 %v1388
        %1410 = vmatprep.subr.mxu0 %v1386
        %1411 = vmatpush1.msra.mxu0 %v1385
        %1412 = vmatprep.subr.mxu0 %v1383
        %1413 = vmatpush1.msra.mxu0 %v1382
        %1414 = vmatprep.subr.mxu0 %v1380
        %1415 = vmatpush1.msra.mxu0 %v1379
        %1416 = vmatprep.subr.mxu0 %v1377
        %1417 = vmatpush1.msra.mxu0 %v1376
        %1418 = vmatprep.subr.mxu0 %v1374
        %1419 = vmatpush1.msra.mxu0 %v1373
        %1420 = vmatprep.subr.mxu0 %v1371
        %1421 = vmatpush1.msra.mxu0 %v1370
        %1422 = vmatprep.subr.mxu0 %v1368
        %1423 = vmatpush1.msra.mxu0 %v1367
        %1424 = vmatprep.subr.mxu0 %v1365
        %1425 = vmatpush1.msra.mxu0 %v1364
        %1426 = vmatprep.subr.mxu0 %v1362
        %1427 = vmatpush1.msra.mxu0 %v1361
        %1428 = vmatprep.subr.mxu0 %v1359
        %1429 = vmatpush1.msra.mxu0 %v1358
        %1430 = vmatprep.subr.mxu0 %v1356
        %1431 = vmatpush1.msra.mxu0 %v1355
        %1432 = vmatprep.subr.mxu0 %v1353
        %1433 = vmatpush1.msra.mxu0 %v1352
        %1434 = vmatprep.subr.mxu0 %v1350
        %1435 = vmatpush1.msra.mxu0 %v1349
        %1436 = vmatprep.subr.mxu0 %v1347
        %1437 = vmatpush1.msra.mxu0 %v1346
        %1438 = vmatprep.subr.mxu0 %v1344
        %1439 = vmatpush1.msra.mxu0 %v1343
        %1440 = vmatprep.subr.mxu0 0.0
        %1441 = vmatpush2.msra.mxu0 0.0
        %1442 = vmatprep.subr.mxu0 0.0
        %1443 = vmatpush2.msra.mxu0 0.0
        %1444 = vmatprep.subr.mxu0 0.0
        %1445 = vmatpush2.msra.mxu0 0.0
        %1446 = vmatprep.subr.mxu0 0.0
        %1447 = vmatpush2.msra.mxu0 0.0
        %1448 = vmatprep.subr.mxu0 0.0
        %1449 = vmatpush2.msra.mxu0 0.0
        %1450 = vmatprep.subr.mxu0 0.0
        %1451 = vmatpush2.msra.mxu0 0.0
        %1452 = vmatprep.subr.mxu0 0.0
        %1453 = vmatpush2.msra.mxu0 0.0
        %1454 = vmatprep.subr.mxu0 0.0
        %1455 = vmatpush2.msra.mxu0 0.0
        %1456 = vmatprep.subr.mxu0 0.0
        %1457 = vmatpush2.msra.mxu0 0.0
        %1458 = vmatprep.subr.mxu0 0.0
        %1459 = vmatpush2.msra.mxu0 0.0
        %1460 = vmatprep.subr.mxu0 0.0
        %1461 = vmatpush2.msra.mxu0 0.0
        %1462 = vmatprep.subr.mxu0 0.0
        %1463 = vmatpush2.msra.mxu0 0.0
        %1464 = vmatprep.subr.mxu0 0.0
        %1465 = vmatpush2.msra.mxu0 0.0
        %1466 = vmatprep.subr.mxu0 0.0
        %1467 = vmatpush2.msra.mxu0 0.0
        %1468 = vmatprep.subr.mxu0 0.0
        %1469 = vmatpush2.msra.mxu0 0.0
        %1470 = vmatprep.subr.mxu0 0.0
        %1471 = vmatpush2.msra.mxu0 0.0
        %1472 = vmatprep.mubr.f32.mxu0 0.0
        %1473 = vmatmul.mubr.f32.gmra.mxu0 %v1333
        %v1474 = vpop.f32.mrf.mxu0
        %v1475 = vadd.f32 %v1396, %v1474
        %v1476 = vpop.f32.mrf.mxu0
        %v1477 = vadd.f32 %v1400, %v1476
        %1478 = vmatprep.mubr.f32.mxu0 0.0
        %1479 = vmatmul.mubr.f32.gmra.mxu0 %v1338
        %v1480 = vpop.f32.mrf.mxu0
        %v1481 = vadd.f32 %v1396, %v1480
        %v1482 = vpop.f32.mrf.mxu0
        %v1483 = vadd.f32 %v1400, %v1482
        %1484 = vdwg.mxu0
        %1485 = vmatprep.subr.mxu0 0.0
        %1486 = vmatpush1.msra.mxu0 %v1390
        %1487 = vmatprep.subr.mxu0 0.0
        %1488 = vmatpush1.msra.mxu0 %v1387
        %1489 = vmatprep.subr.mxu0 0.0
        %1490 = vmatpush1.msra.mxu0 %v1384
        %1491 = vmatprep.subr.mxu0 0.0
        %1492 = vmatpush1.msra.mxu0 %v1381
        %1493 = vmatprep.subr.mxu0 0.0
        %1494 = vmatpush1.msra.mxu0 %v1378
        %1495 = vmatprep.subr.mxu0 0.0
        %1496 = vmatpush1.msra.mxu0 %v1375
        %1497 = vmatprep.subr.mxu0 0.0
        %1498 = vmatpush1.msra.mxu0 %v1372
        %1499 = vmatprep.subr.mxu0 0.0
        %1500 = vmatpush1.msra.mxu0 %v1369
        %1501 = vmatprep.subr.mxu0 0.0
        %1502 = vmatpush1.msra.mxu0 %v1366
        %1503 = vmatprep.subr.mxu0 0.0
        %1504 = vmatpush1.msra.mxu0 %v1363
        %1505 = vmatprep.subr.mxu0 0.0
        %1506 = vmatpush1.msra.mxu0 %v1360
        %1507 = vmatprep.subr.mxu0 0.0
        %1508 = vmatpush1.msra.mxu0 %v1357
        %1509 = vmatprep.subr.mxu0 0.0
        %1510 = vmatpush1.msra.mxu0 %v1354
        %1511 = vmatprep.subr.mxu0 0.0
        %1512 = vmatpush1.msra.mxu0 %v1351
        %1513 = vmatprep.subr.mxu0 0.0
        %1514 = vmatpush1.msra.mxu0 %v1348
        %1515 = vmatprep.subr.mxu0 0.0
        %1516 = vmatpush1.msra.mxu0 %v1345
        %1517 = vmatprep.subr.mxu0 0.0
        %1518 = vmatpush2.msra.mxu0 0.0
        %1519 = vmatprep.subr.mxu0 0.0
        %1520 = vmatpush2.msra.mxu0 0.0
        %1521 = vmatprep.subr.mxu0 0.0
        %1522 = vmatpush2.msra.mxu0 0.0
        %1523 = vmatprep.subr.mxu0 0.0
        %1524 = vmatpush2.msra.mxu0 0.0
        %1525 = vmatprep.subr.mxu0 0.0
        %1526 = vmatpush2.msra.mxu0 0.0
        %1527 = vmatprep.subr.mxu0 0.0
        %1528 = vmatpush2.msra.mxu0 0.0
        %1529 = vmatprep.subr.mxu0 0.0
        %1530 = vmatpush2.msra.mxu0 0.0
        %1531 = vmatprep.subr.mxu0 0.0
        %1532 = vmatpush2.msra.mxu0 0.0
        %1533 = vmatprep.subr.mxu0 0.0
        %1534 = vmatpush2.msra.mxu0 0.0
        %1535 = vmatprep.subr.mxu0 0.0
        %1536 = vmatpush2.msra.mxu0 0.0
        %1537 = vmatprep.subr.mxu0 0.0
        %1538 = vmatpush2.msra.mxu0 0.0
        %1539 = vmatprep.subr.mxu0 0.0
        %1540 = vmatpush2.msra.mxu0 0.0
        %1541 = vmatprep.subr.mxu0 0.0
        %1542 = vmatpush2.msra.mxu0 0.0
        %1543 = vmatprep.subr.mxu0 0.0
        %1544 = vmatpush2.msra.mxu0 0.0
        %1545 = vmatprep.subr.mxu0 0.0
        %1546 = vmatpush2.msra.mxu0 0.0
        %1547 = vmatprep.subr.mxu0 0.0
        %1548 = vmatpush2.msra.mxu0 0.0
        %1549 = vmatprep.mubr.f32.mxu0 0.0
        %1550 = vmatmul.mubr.f32.gmra.mxu0 %v1333
        %v1551 = vpop.f32.mrf.mxu0
        %v1552 = vadd.f32 %v1404, %v1551
        %v1553 = vpop.f32.mrf.mxu0
        %1554 = vmatprep.mubr.f32.mxu0 0.0
        %1555 = vmatmul.mubr.f32.gmra.mxu0 %v1338
        %v1556 = vpop.f32.mrf.mxu0
        %v1557 = vadd.f32 %v1404, %v1556
        %v1558 = vpop.f32.mrf.mxu0
        %1559 = vdwg.mxu0
        %1562 = vrot.lane.b32.xlu0 %v1475, 96
        %v1563 = vpop.permute.xlu0 %1562
        %1564 = vrot.lane.b32.xlu0 %v1481, 96
        %v1565 = vpop.permute.xlu0 %1564
        %1566 = vrot.lane.b32.xlu0 %v1475, 64
        %v1567 = vpop.permute.xlu0 %1566
        %1568 = vrot.lane.b32.xlu0 %v1481, 64
        %v1569 = vpop.permute.xlu0 %1568
        %1570 = vrot.lane.b32.xlu0 %v1475, 32
        %v1571 = vpop.permute.xlu0 %1570
        %1572 = vrot.lane.b32.xlu0 %v1481, 32
        %v1573 = vpop.permute.xlu0 %1572
        %1576 = vrot.lane.b32.xlu0 %v1477, 96
        %v1577 = vpop.permute.xlu0 %1576
        %1578 = vrot.lane.b32.xlu0 %v1483, 96
        %v1579 = vpop.permute.xlu0 %1578
        %1580 = vrot.lane.b32.xlu0 %v1477, 64
        %v1581 = vpop.permute.xlu0 %1580
        %1582 = vrot.lane.b32.xlu0 %v1483, 64
        %v1583 = vpop.permute.xlu0 %1582
        %1584 = vrot.lane.b32.xlu0 %v1477, 32
        %v1585 = vpop.permute.xlu0 %1584
        %1586 = vrot.lane.b32.xlu0 %v1483, 32
        %v1587 = vpop.permute.xlu0 %1586
        %1590 = vrot.lane.b32.xlu0 %v1552, 96
        %v1591 = vpop.permute.xlu0 %1590
        %1592 = vrot.lane.b32.xlu0 %v1557, 96
        %v1593 = vpop.permute.xlu0 %1592
        %1595 = vrot.lane.b32.xlu0 %v1552, 64
        %v1596 = vpop.permute.xlu0 %1595
        %1597 = vrot.lane.b32.xlu0 %v1557, 64
        %v1598 = vpop.permute.xlu0 %1597
        %1600 = vrot.lane.b32.xlu0 %v1552, 32
        %v1601 = vpop.permute.xlu0 %1600
        %1602 = vrot.lane.b32.xlu0 %v1557, 32
        %v1603 = vpop.permute.xlu0 %1602
        %vm1605 = vcmask 261120
        %v1606 = vsel %vm1605, %v1475, 0
        %v1608 = vsel %vm1605, %v1481, 0
        %v1610 = vsel %vm1605, %v1477, 0
        %v1612 = vsel %vm1605, %v1483, 0
        %1614 = vmatprep.subr.mxu0 0.0
        %1615 = vmatpush1.xpose.msra.mxu0 0.0
        %1616 = vmatprep.subr.mxu0 0.0
        %1617 = vmatpush1.xpose.msra.mxu0 0.0
        %1618 = vmatprep.subr.mxu0 0.0
        %1619 = vmatpush1.xpose.msra.mxu0 0.0
        %1620 = vmatprep.subr.mxu0 0.0
        %1621 = vmatpush1.xpose.msra.mxu0 0.0
        %1622 = vmatprep.subr.mxu0 0.0
        %1623 = vmatpush1.xpose.msra.mxu0 0.0
        %1624 = vmatprep.subr.mxu0 0.0
        %1625 = vmatpush1.xpose.msra.mxu0 0.0
        %1626 = vmatprep.subr.mxu0 0.0
        %1627 = vmatpush1.xpose.msra.mxu0 0.0
        %1628 = vmatprep.subr.mxu0 0.0
        %1629 = vmatpush1.xpose.msra.mxu0 0.0
        %1630 = vmatprep.subr.mxu0 0.0
        %1631 = vmatpush1.xpose.msra.mxu0 0.0
        %1632 = vmatprep.subr.mxu0 0.0
        %1633 = vmatpush1.xpose.msra.mxu0 0.0
        %1634 = vmatprep.subr.mxu0 0.0
        %1635 = vmatpush1.xpose.msra.mxu0 0.0
        %1636 = vmatprep.subr.mxu0 0.0
        %1637 = vmatpush1.xpose.msra.mxu0 0.0
        %1638 = vmatprep.subr.mxu0 0.0
        %1639 = vmatpush1.xpose.msra.mxu0 0.0
        %1640 = vmatprep.subr.mxu0 0.0
        %1641 = vmatpush1.xpose.msra.mxu0 0.0
        %1642 = vmatprep.subr.mxu0 0.0
        %1643 = vmatpush1.xpose.msra.mxu0 %v1612
        %1644 = vmatprep.subr.mxu0 0.0
        %1645 = vmatpush1.xpose.msra.mxu0 %v1610
        %1646 = vmatprep.subr.mxu0 0.0
        %1647 = vmatpush2.xpose.msra.mxu0 0.0
        %1648 = vmatprep.subr.mxu0 0.0
        %1649 = vmatpush2.xpose.msra.mxu0 0.0
        %1650 = vmatprep.subr.mxu0 0.0
        %1651 = vmatpush2.xpose.msra.mxu0 0.0
        %1652 = vmatprep.subr.mxu0 0.0
        %1653 = vmatpush2.xpose.msra.mxu0 0.0
        %1654 = vmatprep.subr.mxu0 0.0
        %1655 = vmatpush2.xpose.msra.mxu0 0.0
        %1656 = vmatprep.subr.mxu0 0.0
        %1657 = vmatpush2.xpose.msra.mxu0 0.0
        %1658 = vmatprep.subr.mxu0 0.0
        %1659 = vmatpush2.xpose.msra.mxu0 0.0
        %1660 = vmatprep.subr.mxu0 0.0
        %1661 = vmatpush2.xpose.msra.mxu0 0.0
        %1662 = vmatprep.subr.mxu0 0.0
        %1663 = vmatpush2.xpose.msra.mxu0 0.0
        %1664 = vmatprep.subr.mxu0 0.0
        %1665 = vmatpush2.xpose.msra.mxu0 0.0
        %1666 = vmatprep.subr.mxu0 0.0
        %1667 = vmatpush2.xpose.msra.mxu0 0.0
        %1668 = vmatprep.subr.mxu0 0.0
        %1669 = vmatpush2.xpose.msra.mxu0 0.0
        %1670 = vmatprep.subr.mxu0 0.0
        %1671 = vmatpush2.xpose.msra.mxu0 0.0
        %1672 = vmatprep.subr.mxu0 0.0
        %1673 = vmatpush2.xpose.msra.mxu0 0.0
        %1674 = vmatprep.subr.mxu0 0.0
        %1675 = vmatpush2.xpose.msra.mxu0 0.0
        %1676 = vmatprep.subr.mxu0 0.0
        %1677 = vmatpush2.xpose.msra.mxu0 0.0
        %1678 = vmatprep.mubr.f32.mxu0 0.0
        %1679 = vmatmul.mubr.f32.gmra.mxu0 %v1606
        %v1680 = vpop.f32.mrf.mxu0
        %v1681 = vadd.f32 0.0, %v1680
        %v1682 = vpop.f32.mrf.mxu0
        %1683 = vmatprep.mubr.f32.mxu0 0.0
        %1684 = vmatmul.mubr.f32.gmra.mxu0 %v1608
        %v1685 = vpop.f32.mrf.mxu0
        %v1686 = vadd.f32 0.0, %v1685
        %v1687 = vpop.f32.mrf.mxu0
        %1688 = vdwg.mxu0
        %v1689 = vsel %vm1605, %v1563, 0
        %v1691 = vsel %vm1605, %v1565, 0
        %v1693 = vsel %vm1605, %v1577, 0
        %v1695 = vsel %vm1605, %v1579, 0
        %1697 = vmatprep.subr.mxu0 0.0
        %1698 = vmatpush1.xpose.msra.mxu0 0.0
        %1699 = vmatprep.subr.mxu0 0.0
        %1700 = vmatpush1.xpose.msra.mxu0 0.0
        %1701 = vmatprep.subr.mxu0 0.0
        %1702 = vmatpush1.xpose.msra.mxu0 0.0
        %1703 = vmatprep.subr.mxu0 0.0
        %1704 = vmatpush1.xpose.msra.mxu0 0.0
        %1705 = vmatprep.subr.mxu0 0.0
        %1706 = vmatpush1.xpose.msra.mxu0 0.0
        %1707 = vmatprep.subr.mxu0 0.0
        %1708 = vmatpush1.xpose.msra.mxu0 0.0
        %1709 = vmatprep.subr.mxu0 0.0
        %1710 = vmatpush1.xpose.msra.mxu0 0.0
        %1711 = vmatprep.subr.mxu0 0.0
        %1712 = vmatpush1.xpose.msra.mxu0 0.0
        %1713 = vmatprep.subr.mxu0 0.0
        %1714 = vmatpush1.xpose.msra.mxu0 0.0
        %1715 = vmatprep.subr.mxu0 0.0
        %1716 = vmatpush1.xpose.msra.mxu0 0.0
        %1717 = vmatprep.subr.mxu0 0.0
        %1718 = vmatpush1.xpose.msra.mxu0 0.0
        %1719 = vmatprep.subr.mxu0 0.0
        %1720 = vmatpush1.xpose.msra.mxu0 0.0
        %1721 = vmatprep.subr.mxu0 0.0
        %1722 = vmatpush1.xpose.msra.mxu0 0.0
        %1723 = vmatprep.subr.mxu0 0.0
        %1724 = vmatpush1.xpose.msra.mxu0 0.0
        %1725 = vmatprep.subr.mxu0 0.0
        %1726 = vmatpush1.xpose.msra.mxu0 %v1695
        %1727 = vmatprep.subr.mxu0 0.0
        %1728 = vmatpush1.xpose.msra.mxu0 %v1693
        %1729 = vmatprep.subr.mxu0 0.0
        %1730 = vmatpush2.xpose.msra.mxu0 0.0
        %1731 = vmatprep.subr.mxu0 0.0
        %1732 = vmatpush2.xpose.msra.mxu0 0.0
        %1733 = vmatprep.subr.mxu0 0.0
        %1734 = vmatpush2.xpose.msra.mxu0 0.0
        %1735 = vmatprep.subr.mxu0 0.0
        %1736 = vmatpush2.xpose.msra.mxu0 0.0
        %1737 = vmatprep.subr.mxu0 0.0
        %1738 = vmatpush2.xpose.msra.mxu0 0.0
        %1739 = vmatprep.subr.mxu0 0.0
        %1740 = vmatpush2.xpose.msra.mxu0 0.0
        %1741 = vmatprep.subr.mxu0 0.0
        %1742 = vmatpush2.xpose.msra.mxu0 0.0
        %1743 = vmatprep.subr.mxu0 0.0
        %1744 = vmatpush2.xpose.msra.mxu0 0.0
        %1745 = vmatprep.subr.mxu0 0.0
        %1746 = vmatpush2.xpose.msra.mxu0 0.0
        %1747 = vmatprep.subr.mxu0 0.0
        %1748 = vmatpush2.xpose.msra.mxu0 0.0
        %1749 = vmatprep.subr.mxu0 0.0
        %1750 = vmatpush2.xpose.msra.mxu0 0.0
        %1751 = vmatprep.subr.mxu0 0.0
        %1752 = vmatpush2.xpose.msra.mxu0 0.0
        %1753 = vmatprep.subr.mxu0 0.0
        %1754 = vmatpush2.xpose.msra.mxu0 0.0
        %1755 = vmatprep.subr.mxu0 0.0
        %1756 = vmatpush2.xpose.msra.mxu0 0.0
        %1757 = vmatprep.subr.mxu0 0.0
        %1758 = vmatpush2.xpose.msra.mxu0 0.0
        %1759 = vmatprep.subr.mxu0 0.0
        %1760 = vmatpush2.xpose.msra.mxu0 0.0
        %1761 = vmatprep.mubr.f32.mxu0 0.0
        %1762 = vmatmul.mubr.f32.gmra.mxu0 %v1689
        %v1763 = vpop.f32.mrf.mxu0
        %v1764 = vadd.f32 0.0, %v1763
        %v1765 = vpop.f32.mrf.mxu0
        %1766 = vmatprep.mubr.f32.mxu0 0.0
        %1767 = vmatmul.mubr.f32.gmra.mxu0 %v1691
        %v1768 = vpop.f32.mrf.mxu0
        %v1769 = vadd.f32 0.0, %v1768
        %v1770 = vpop.f32.mrf.mxu0
        %1771 = vdwg.mxu0
        %v1772 = vsel %vm1605, %v1567, 0
        %v1774 = vsel %vm1605, %v1569, 0
        %v1776 = vsel %vm1605, %v1581, 0
        %v1778 = vsel %vm1605, %v1583, 0
        %1780 = vmatprep.subr.mxu0 0.0
        %1781 = vmatpush1.xpose.msra.mxu0 0.0
        %1782 = vmatprep.subr.mxu0 0.0
        %1783 = vmatpush1.xpose.msra.mxu0 0.0
        %1784 = vmatprep.subr.mxu0 0.0
        %1785 = vmatpush1.xpose.msra.mxu0 0.0
        %1786 = vmatprep.subr.mxu0 0.0
        %1787 = vmatpush1.xpose.msra.mxu0 0.0
        %1788 = vmatprep.subr.mxu0 0.0
        %1789 = vmatpush1.xpose.msra.mxu0 0.0
        %1790 = vmatprep.subr.mxu0 0.0
        %1791 = vmatpush1.xpose.msra.mxu0 0.0
        %1792 = vmatprep.subr.mxu0 0.0
        %1793 = vmatpush1.xpose.msra.mxu0 0.0
        %1794 = vmatprep.subr.mxu0 0.0
        %1795 = vmatpush1.xpose.msra.mxu0 0.0
        %1796 = vmatprep.subr.mxu0 0.0
        %1797 = vmatpush1.xpose.msra.mxu0 0.0
        %1798 = vmatprep.subr.mxu0 0.0
        %1799 = vmatpush1.xpose.msra.mxu0 0.0
        %1800 = vmatprep.subr.mxu0 0.0
        %1801 = vmatpush1.xpose.msra.mxu0 0.0
        %1802 = vmatprep.subr.mxu0 0.0
        %1803 = vmatpush1.xpose.msra.mxu0 0.0
        %1804 = vmatprep.subr.mxu0 0.0
        %1805 = vmatpush1.xpose.msra.mxu0 0.0
        %1806 = vmatprep.subr.mxu0 0.0
        %1807 = vmatpush1.xpose.msra.mxu0 0.0
        %1808 = vmatprep.subr.mxu0 0.0
        %1809 = vmatpush1.xpose.msra.mxu0 %v1778
        %1810 = vmatprep.subr.mxu0 0.0
        %1811 = vmatpush1.xpose.msra.mxu0 %v1776
        %1812 = vmatprep.subr.mxu0 0.0
        %1813 = vmatpush2.xpose.msra.mxu0 0.0
        %1814 = vmatprep.subr.mxu0 0.0
        %1815 = vmatpush2.xpose.msra.mxu0 0.0
        %1816 = vmatprep.subr.mxu0 0.0
        %1817 = vmatpush2.xpose.msra.mxu0 0.0
        %1818 = vmatprep.subr.mxu0 0.0
        %1819 = vmatpush2.xpose.msra.mxu0 0.0
        %1820 = vmatprep.subr.mxu0 0.0
        %1821 = vmatpush2.xpose.msra.mxu0 0.0
        %1822 = vmatprep.subr.mxu0 0.0
        %1823 = vmatpush2.xpose.msra.mxu0 0.0
        %1824 = vmatprep.subr.mxu0 0.0
        %1825 = vmatpush2.xpose.msra.mxu0 0.0
        %1826 = vmatprep.subr.mxu0 0.0
        %1827 = vmatpush2.xpose.msra.mxu0 0.0
        %1828 = vmatprep.subr.mxu0 0.0
        %1829 = vmatpush2.xpose.msra.mxu0 0.0
        %1830 = vmatprep.subr.mxu0 0.0
        %1831 = vmatpush2.xpose.msra.mxu0 0.0
        %1832 = vmatprep.subr.mxu0 0.0
        %1833 = vmatpush2.xpose.msra.mxu0 0.0
        %1834 = vmatprep.subr.mxu0 0.0
        %1835 = vmatpush2.xpose.msra.mxu0 0.0
        %1836 = vmatprep.subr.mxu0 0.0
        %1837 = vmatpush2.xpose.msra.mxu0 0.0
        %1838 = vmatprep.subr.mxu0 0.0
        %1839 = vmatpush2.xpose.msra.mxu0 0.0
        %1840 = vmatprep.subr.mxu0 0.0
        %1841 = vmatpush2.xpose.msra.mxu0 0.0
        %1842 = vmatprep.subr.mxu0 0.0
        %1843 = vmatpush2.xpose.msra.mxu0 0.0
        %1844 = vmatprep.mubr.f32.mxu0 0.0
        %1845 = vmatmul.mubr.f32.gmra.mxu0 %v1772
        %v1846 = vpop.f32.mrf.mxu0
        %v1847 = vadd.f32 0.0, %v1846
        %v1848 = vpop.f32.mrf.mxu0
        %1849 = vmatprep.mubr.f32.mxu0 0.0
        %1850 = vmatmul.mubr.f32.gmra.mxu0 %v1774
        %v1851 = vpop.f32.mrf.mxu0
        %v1852 = vadd.f32 0.0, %v1851
        %v1853 = vpop.f32.mrf.mxu0
        %1854 = vdwg.mxu0
        %v1855 = vsel %vm1605, %v1571, 0
        %v1857 = vsel %vm1605, %v1573, 0
        %v1859 = vsel %vm1605, %v1585, 0
        %v1861 = vsel %vm1605, %v1587, 0
        %1863 = vmatprep.subr.mxu0 0.0
        %1864 = vmatpush1.xpose.msra.mxu0 0.0
        %1865 = vmatprep.subr.mxu0 0.0
        %1866 = vmatpush1.xpose.msra.mxu0 0.0
        %1867 = vmatprep.subr.mxu0 0.0
        %1868 = vmatpush1.xpose.msra.mxu0 0.0
        %1869 = vmatprep.subr.mxu0 0.0
        %1870 = vmatpush1.xpose.msra.mxu0 0.0
        %1871 = vmatprep.subr.mxu0 0.0
        %1872 = vmatpush1.xpose.msra.mxu0 0.0
        %1873 = vmatprep.subr.mxu0 0.0
        %1874 = vmatpush1.xpose.msra.mxu0 0.0
        %1875 = vmatprep.subr.mxu0 0.0
        %1876 = vmatpush1.xpose.msra.mxu0 0.0
        %1877 = vmatprep.subr.mxu0 0.0
        %1878 = vmatpush1.xpose.msra.mxu0 0.0
        %1879 = vmatprep.subr.mxu0 0.0
        %1880 = vmatpush1.xpose.msra.mxu0 0.0
        %1881 = vmatprep.subr.mxu0 0.0
        %1882 = vmatpush1.xpose.msra.mxu0 0.0
        %1883 = vmatprep.subr.mxu0 0.0
        %1884 = vmatpush1.xpose.msra.mxu0 0.0
        %1885 = vmatprep.subr.mxu0 0.0
        %1886 = vmatpush1.xpose.msra.mxu0 0.0
        %1887 = vmatprep.subr.mxu0 0.0
        %1888 = vmatpush1.xpose.msra.mxu0 0.0
        %1889 = vmatprep.subr.mxu0 0.0
        %1890 = vmatpush1.xpose.msra.mxu0 0.0
        %1891 = vmatprep.subr.mxu0 0.0
        %1892 = vmatpush1.xpose.msra.mxu0 %v1861
        %1893 = vmatprep.subr.mxu0 0.0
        %1894 = vmatpush1.xpose.msra.mxu0 %v1859
        %1895 = vmatprep.subr.mxu0 0.0
        %1896 = vmatpush2.xpose.msra.mxu0 0.0
        %1897 = vmatprep.subr.mxu0 0.0
        %1898 = vmatpush2.xpose.msra.mxu0 0.0
        %1899 = vmatprep.subr.mxu0 0.0
        %1900 = vmatpush2.xpose.msra.mxu0 0.0
        %1901 = vmatprep.subr.mxu0 0.0
        %1902 = vmatpush2.xpose.msra.mxu0 0.0
        %1903 = vmatprep.subr.mxu0 0.0
        %1904 = vmatpush2.xpose.msra.mxu0 0.0
        %1905 = vmatprep.subr.mxu0 0.0
        %1906 = vmatpush2.xpose.msra.mxu0 0.0
        %1907 = vmatprep.subr.mxu0 0.0
        %1908 = vmatpush2.xpose.msra.mxu0 0.0
        %1909 = vmatprep.subr.mxu0 0.0
        %1910 = vmatpush2.xpose.msra.mxu0 0.0
        %1911 = vmatprep.subr.mxu0 0.0
        %1912 = vmatpush2.xpose.msra.mxu0 0.0
        %1913 = vmatprep.subr.mxu0 0.0
        %1914 = vmatpush2.xpose.msra.mxu0 0.0
        %1915 = vmatprep.subr.mxu0 0.0
        %1916 = vmatpush2.xpose.msra.mxu0 0.0
        %1917 = vmatprep.subr.mxu0 0.0
        %1918 = vmatpush2.xpose.msra.mxu0 0.0
        %1919 = vmatprep.subr.mxu0 0.0
        %1920 = vmatpush2.xpose.msra.mxu0 0.0
        %1921 = vmatprep.subr.mxu0 0.0
        %1922 = vmatpush2.xpose.msra.mxu0 0.0
        %1923 = vmatprep.subr.mxu0 0.0
        %1924 = vmatpush2.xpose.msra.mxu0 0.0
        %1925 = vmatprep.subr.mxu0 0.0
        %1926 = vmatpush2.xpose.msra.mxu0 0.0
        %1927 = vmatprep.mubr.f32.mxu0 0.0
        %1928 = vmatmul.mubr.f32.gmra.mxu0 %v1855
        %v1929 = vpop.f32.mrf.mxu0
        %v1930 = vadd.f32 0.0, %v1929
        %v1931 = vpop.f32.mrf.mxu0
        %1932 = vmatprep.mubr.f32.mxu0 0.0
        %1933 = vmatmul.mubr.f32.gmra.mxu0 %v1857
        %v1934 = vpop.f32.mrf.mxu0
        %v1935 = vadd.f32 0.0, %v1934
        %v1936 = vpop.f32.mrf.mxu0
        %1937 = vdwg.mxu0
        %v1938 = vmul.f32 %v1681, 0.17677669
        %v1939 = vmul.f32 %v1686, 0.17677669
        %v1940 = vmul.f32 %v1764, 0.17677669
        %v1941 = vmul.f32 %v1769, 0.17677669
        %v1942 = vmul.f32 %v1847, 0.17677669
        %v1943 = vmul.f32 %v1852, 0.17677669
        %v1944 = vmul.f32 %v1930, 0.17677669
        %v1945 = vmul.f32 %v1935, 0.17677669
        %vm1946 = vcmask 80896
        %v1947 = vsel %vm1946, %v1938, -inf
        %1948 = vmax.xlane.f32.xlu0 %v1947
        %v1949 = vpop.xlane.xlu0 %1948
        %vm1950 = vcmask 74752
        %v1951 = vsel %vm1950, %v1939, -inf
        %1952 = vmax.xlane.f32.xlu0 %v1951
        %v1953 = vpop.xlane.xlu0 %1952
        %v1954 = vsel %vm1946, %v1940, -inf
        %1955 = vmax.xlane.f32.xlu0 %v1954
        %v1956 = vpop.xlane.xlu0 %1955
        %v1957 = vsel %vm1950, %v1941, -inf
        %1958 = vmax.xlane.f32.xlu0 %v1957
        %v1959 = vpop.xlane.xlu0 %1958
        %v1960 = vsel %vm1946, %v1942, -inf
        %1961 = vmax.xlane.f32.xlu0 %v1960
        %v1962 = vpop.xlane.xlu0 %1961
        %v1963 = vsel %vm1950, %v1943, -inf
        %1964 = vmax.xlane.f32.xlu0 %v1963
        %v1965 = vpop.xlane.xlu0 %1964
        %v1966 = vsel %vm1946, %v1944, -inf
        %1967 = vmax.xlane.f32.xlu0 %v1966
        %v1968 = vpop.xlane.xlu0 %1967
        %v1969 = vsel %vm1950, %v1945, -inf
        %1970 = vmax.xlane.f32.xlu0 %v1969
        %v1971 = vpop.xlane.xlu0 %1970
        %v1972 = vsub.f32 %v1938, %v1949
        %v1973 = vsub.f32 %v1939, %v1953
        %v1974 = vsub.f32 %v1940, %v1956
        %v1975 = vsub.f32 %v1941, %v1959
        %v1976 = vsub.f32 %v1942, %v1962
        %v1977 = vsub.f32 %v1943, %v1965
        %v1978 = vsub.f32 %v1944, %v1968
        %v1979 = vsub.f32 %v1945, %v1971
        %v1980 = vmul.f32 %v1972, 1.442695
        %v1981 = vpow.pop %v1980
        %v1982 = vmul.f32 %v1973, 1.442695
        %v1983 = vpow.pop %v1982
        %v1984 = vmul.f32 %v1974, 1.442695
        %v1985 = vpow.pop %v1984
        %v1986 = vmul.f32 %v1975, 1.442695
        %v1987 = vpow.pop %v1986
        %v1988 = vmul.f32 %v1976, 1.442695
        %v1989 = vpow.pop %v1988
        %v1990 = vmul.f32 %v1977, 1.442695
        %v1991 = vpow.pop %v1990
        %v1992 = vmul.f32 %v1978, 1.442695
        %v1993 = vpow.pop %v1992
        %v1994 = vmul.f32 %v1979, 1.442695
        %v1995 = vpow.pop %v1994
        %v1996 = vsel %vm1946, %v1981, 0.0
        %1997 = vadd.xlane.f32.xlu0 %v1996
        %v1998 = vpop.xlane.xlu0 %1997
        %v1999 = vsel %vm1950, %v1983, 0.0
        %2000 = vadd.xlane.f32.xlu0 %v1999
        %v2001 = vpop.xlane.xlu0 %2000
        %v2002 = vsel %vm1946, %v1985, 0.0
        %2003 = vadd.xlane.f32.xlu0 %v2002
        %v2004 = vpop.xlane.xlu0 %2003
        %v2005 = vsel %vm1950, %v1987, 0.0
        %2006 = vadd.xlane.f32.xlu0 %v2005
        %v2007 = vpop.xlane.xlu0 %2006
        %v2008 = vsel %vm1946, %v1989, 0.0
        %2009 = vadd.xlane.f32.xlu0 %v2008
        %v2010 = vpop.xlane.xlu0 %2009
        %v2011 = vsel %vm1950, %v1991, 0.0
        %2012 = vadd.xlane.f32.xlu0 %v2011
        %v2013 = vpop.xlane.xlu0 %2012
        %v2014 = vsel %vm1946, %v1993, 0.0
        %2015 = vadd.xlane.f32.xlu0 %v2014
        %v2016 = vpop.xlane.xlu0 %2015
        %v2017 = vsel %vm1950, %v1995, 0.0
        %2018 = vadd.xlane.f32.xlu0 %v2017
        %v2019 = vpop.xlane.xlu0 %2018
        %v2020 = vrcp.pop %v1998
        %v2021 = vmul.f32 %v1981, %v2020
        %v2022 = vrcp.pop %v2001
        %v2023 = vmul.f32 %v1983, %v2022
        %v2024 = vrcp.pop %v2004
        %v2025 = vmul.f32 %v1985, %v2024
        %v2026 = vrcp.pop %v2007
        %v2027 = vmul.f32 %v1987, %v2026
        %v2028 = vrcp.pop %v2010
        %v2029 = vmul.f32 %v1989, %v2028
        %v2030 = vrcp.pop %v2013
        %v2031 = vmul.f32 %v1991, %v2030
        %v2032 = vrcp.pop %v2016
        %v2033 = vmul.f32 %v1993, %v2032
        %v2034 = vrcp.pop %v2019
        %v2035 = vmul.f32 %v1995, %v2034
        %v2037 = vsel %vm1946, %v2021, 0
        %v2040 = vsel %vm1946, %v2023, 0
        %vm2042 = vcmask 1041408
        %v2043 = vsel %vm2042, %v1557, 0
        %2045 = vmatprep.subr.mxu0 0.0
        %2046 = vmatpush1.msra.mxu0 0.0
        %2047 = vmatprep.subr.mxu0 0.0
        %2048 = vmatpush1.msra.mxu0 0.0
        %2049 = vmatprep.subr.mxu0 0.0
        %2050 = vmatpush1.msra.mxu0 0.0
        %2051 = vmatprep.subr.mxu0 0.0
        %2052 = vmatpush1.msra.mxu0 0.0
        %2053 = vmatprep.subr.mxu0 0.0
        %2054 = vmatpush1.msra.mxu0 0.0
        %2055 = vmatprep.subr.mxu0 0.0
        %2056 = vmatpush1.msra.mxu0 0.0
        %2057 = vmatprep.subr.mxu0 0.0
        %2058 = vmatpush1.msra.mxu0 0.0
        %2059 = vmatprep.subr.mxu0 0.0
        %2060 = vmatpush1.msra.mxu0 0.0
        %2061 = vmatprep.subr.mxu0 0.0
        %2062 = vmatpush1.msra.mxu0 0.0
        %2063 = vmatprep.subr.mxu0 0.0
        %2064 = vmatpush1.msra.mxu0 0.0
        %2065 = vmatprep.subr.mxu0 0.0
        %2066 = vmatpush1.msra.mxu0 0.0
        %2067 = vmatprep.subr.mxu0 0.0
        %2068 = vmatpush1.msra.mxu0 0.0
        %2069 = vmatprep.subr.mxu0 0.0
        %2070 = vmatpush1.msra.mxu0 0.0
        %2071 = vmatprep.subr.mxu0 0.0
        %2072 = vmatpush1.msra.mxu0 0.0
        %2073 = vmatprep.subr.mxu0 0.0
        %2074 = vmatpush1.msra.mxu0 %v2043
        %2075 = vmatprep.subr.mxu0 0.0
        %2076 = vmatpush1.msra.mxu0 %v1552
        %2077 = vmatprep.subr.mxu0 0.0
        %2078 = vmatpush2.msra.mxu0 0.0
        %2079 = vmatprep.subr.mxu0 0.0
        %2080 = vmatpush2.msra.mxu0 0.0
        %2081 = vmatprep.subr.mxu0 0.0
        %2082 = vmatpush2.msra.mxu0 0.0
        %2083 = vmatprep.subr.mxu0 0.0
        %2084 = vmatpush2.msra.mxu0 0.0
        %2085 = vmatprep.subr.mxu0 0.0
        %2086 = vmatpush2.msra.mxu0 0.0
        %2087 = vmatprep.subr.mxu0 0.0
        %2088 = vmatpush2.msra.mxu0 0.0
        %2089 = vmatprep.subr.mxu0 0.0
        %2090 = vmatpush2.msra.mxu0 0.0
        %2091 = vmatprep.subr.mxu0 0.0
        %2092 = vmatpush2.msra.mxu0 0.0
        %2093 = vmatprep.subr.mxu0 0.0
        %2094 = vmatpush2.msra.mxu0 0.0
        %2095 = vmatprep.subr.mxu0 0.0
        %2096 = vmatpush2.msra.mxu0 0.0
        %2097 = vmatprep.subr.mxu0 0.0
        %2098 = vmatpush2.msra.mxu0 0.0
        %2099 = vmatprep.subr.mxu0 0.0
        %2100 = vmatpush2.msra.mxu0 0.0
        %2101 = vmatprep.subr.mxu0 0.0
        %2102 = vmatpush2.msra.mxu0 0.0
        %2103 = vmatprep.subr.mxu0 0.0
        %2104 = vmatpush2.msra.mxu0 0.0
        %2105 = vmatprep.subr.mxu0 0.0
        %2106 = vmatpush2.msra.mxu0 0.0
        %2107 = vmatprep.subr.mxu0 0.0
        %2108 = vmatpush2.msra.mxu0 0.0
        %2109 = vmatprep.mubr.f32.mxu0 0.0
        %2110 = vmatmul.mubr.f32.gmra.mxu0 %v2037
        %v2111 = vpop.f32.mrf.mxu0
        %v2112 = vadd.f32 0.0, %v2111
        %v2113 = vpop.f32.mrf.mxu0
        %2114 = vmatprep.mubr.f32.mxu0 0.0
        %2115 = vmatmul.mubr.f32.gmra.mxu0 %v2040
        %v2116 = vpop.f32.mrf.mxu0
        %v2117 = vadd.f32 0.0, %v2116
        %v2118 = vpop.f32.mrf.mxu0
        %2119 = vdwg.mxu0
        %v2121 = vsel %vm1946, %v2025, 0
        %v2124 = vsel %vm1946, %v2027, 0
        %v2126 = vsel %vm2042, %v1593, 0
        %2128 = vmatprep.subr.mxu0 0.0
        %2129 = vmatpush1.msra.mxu0 0.0
        %2130 = vmatprep.subr.mxu0 0.0
        %2131 = vmatpush1.msra.mxu0 0.0
        %2132 = vmatprep.subr.mxu0 0.0
        %2133 = vmatpush1.msra.mxu0 0.0
        %2134 = vmatprep.subr.mxu0 0.0
        %2135 = vmatpush1.msra.mxu0 0.0
        %2136 = vmatprep.subr.mxu0 0.0
        %2137 = vmatpush1.msra.mxu0 0.0
        %2138 = vmatprep.subr.mxu0 0.0
        %2139 = vmatpush1.msra.mxu0 0.0
        %2140 = vmatprep.subr.mxu0 0.0
        %2141 = vmatpush1.msra.mxu0 0.0
        %2142 = vmatprep.subr.mxu0 0.0
        %2143 = vmatpush1.msra.mxu0 0.0
        %2144 = vmatprep.subr.mxu0 0.0
        %2145 = vmatpush1.msra.mxu0 0.0
        %2146 = vmatprep.subr.mxu0 0.0
        %2147 = vmatpush1.msra.mxu0 0.0
        %2148 = vmatprep.subr.mxu0 0.0
        %2149 = vmatpush1.msra.mxu0 0.0
        %2150 = vmatprep.subr.mxu0 0.0
        %2151 = vmatpush1.msra.mxu0 0.0
        %2152 = vmatprep.subr.mxu0 0.0
        %2153 = vmatpush1.msra.mxu0 0.0
        %2154 = vmatprep.subr.mxu0 0.0
        %2155 = vmatpush1.msra.mxu0 0.0
        %2156 = vmatprep.subr.mxu0 0.0
        %2157 = vmatpush1.msra.mxu0 %v2126
        %2158 = vmatprep.subr.mxu0 0.0
        %2159 = vmatpush1.msra.mxu0 %v1591
        %2160 = vmatprep.subr.mxu0 0.0
        %2161 = vmatpush2.msra.mxu0 0.0
        %2162 = vmatprep.subr.mxu0 0.0
        %2163 = vmatpush2.msra.mxu0 0.0
        %2164 = vmatprep.subr.mxu0 0.0
        %2165 = vmatpush2.msra.mxu0 0.0
        %2166 = vmatprep.subr.mxu0 0.0
        %2167 = vmatpush2.msra.mxu0 0.0
        %2168 = vmatprep.subr.mxu0 0.0
        %2169 = vmatpush2.msra.mxu0 0.0
        %2170 = vmatprep.subr.mxu0 0.0
        %2171 = vmatpush2.msra.mxu0 0.0
        %2172 = vmatprep.subr.mxu0 0.0
        %2173 = vmatpush2.msra.mxu0 0.0
        %2174 = vmatprep.subr.mxu0 0.0
        %2175 = vmatpush2.msra.mxu0 0.0
        %2176 = vmatprep.subr.mxu0 0.0
        %2177 = vmatpush2.msra.mxu0 0.0
        %2178 = vmatprep.subr.mxu0 0.0
        %2179 = vmatpush2.msra.mxu0 0.0
        %2180 = vmatprep.subr.mxu0 0.0
        %2181 = vmatpush2.msra.mxu0 0.0
        %2182 = vmatprep.subr.mxu0 0.0
        %2183 = vmatpush2.msra.mxu0 0.0
        %2184 = vmatprep.subr.mxu0 0.0
        %2185 = vmatpush2.msra.mxu0 0.0
        %2186 = vmatprep.subr.mxu0 0.0
        %2187 = vmatpush2.msra.mxu0 0.0
        %2188 = vmatprep.subr.mxu0 0.0
        %2189 = vmatpush2.msra.mxu0 0.0
        %2190 = vmatprep.subr.mxu0 0.0
        %2191 = vmatpush2.msra.mxu0 0.0
        %2192 = vmatprep.mubr.f32.mxu0 0.0
        %2193 = vmatmul.mubr.f32.gmra.mxu0 %v2121
        %v2194 = vpop.f32.mrf.mxu0
        %v2195 = vadd.f32 0.0, %v2194
        %v2196 = vpop.f32.mrf.mxu0
        %2197 = vmatprep.mubr.f32.mxu0 0.0
        %2198 = vmatmul.mubr.f32.gmra.mxu0 %v2124
        %v2199 = vpop.f32.mrf.mxu0
        %v2200 = vadd.f32 0.0, %v2199
        %v2201 = vpop.f32.mrf.mxu0
        %2202 = vdwg.mxu0
        %v2204 = vsel %vm1946, %v2029, 0
        %v2207 = vsel %vm1946, %v2031, 0
        %v2209 = vsel %vm2042, %v1598, 0
        %2211 = vmatprep.subr.mxu0 0.0
        %2212 = vmatpush1.msra.mxu0 0.0
        %2213 = vmatprep.subr.mxu0 0.0
        %2214 = vmatpush1.msra.mxu0 0.0
        %2215 = vmatprep.subr.mxu0 0.0
        %2216 = vmatpush1.msra.mxu0 0.0
        %2217 = vmatprep.subr.mxu0 0.0
        %2218 = vmatpush1.msra.mxu0 0.0
        %2219 = vmatprep.subr.mxu0 0.0
        %2220 = vmatpush1.msra.mxu0 0.0
        %2221 = vmatprep.subr.mxu0 0.0
        %2222 = vmatpush1.msra.mxu0 0.0
        %2223 = vmatprep.subr.mxu0 0.0
        %2224 = vmatpush1.msra.mxu0 0.0
        %2225 = vmatprep.subr.mxu0 0.0
        %2226 = vmatpush1.msra.mxu0 0.0
        %2227 = vmatprep.subr.mxu0 0.0
        %2228 = vmatpush1.msra.mxu0 0.0
        %2229 = vmatprep.subr.mxu0 0.0
        %2230 = vmatpush1.msra.mxu0 0.0
        %2231 = vmatprep.subr.mxu0 0.0
        %2232 = vmatpush1.msra.mxu0 0.0
        %2233 = vmatprep.subr.mxu0 0.0
        %2234 = vmatpush1.msra.mxu0 0.0
        %2235 = vmatprep.subr.mxu0 0.0
        %2236 = vmatpush1.msra.mxu0 0.0
        %2237 = vmatprep.subr.mxu0 0.0
        %2238 = vmatpush1.msra.mxu0 0.0
        %2239 = vmatprep.subr.mxu0 0.0
        %2240 = vmatpush1.msra.mxu0 %v2209
        %2241 = vmatprep.subr.mxu0 0.0
        %2242 = vmatpush1.msra.mxu0 %v1596
        %2243 = vmatprep.subr.mxu0 0.0
        %2244 = vmatpush2.msra.mxu0 0.0
        %2245 = vmatprep.subr.mxu0 0.0
        %2246 = vmatpush2.msra.mxu0 0.0
        %2247 = vmatprep.subr.mxu0 0.0
        %2248 = vmatpush2.msra.mxu0 0.0
        %2249 = vmatprep.subr.mxu0 0.0
        %2250 = vmatpush2.msra.mxu0 0.0
        %2251 = vmatprep.subr.mxu0 0.0
        %2252 = vmatpush2.msra.mxu0 0.0
        %2253 = vmatprep.subr.mxu0 0.0
        %2254 = vmatpush2.msra.mxu0 0.0
        %2255 = vmatprep.subr.mxu0 0.0
        %2256 = vmatpush2.msra.mxu0 0.0
        %2257 = vmatprep.subr.mxu0 0.0
        %2258 = vmatpush2.msra.mxu0 0.0
        %2259 = vmatprep.subr.mxu0 0.0
        %2260 = vmatpush2.msra.mxu0 0.0
        %2261 = vmatprep.subr.mxu0 0.0
        %2262 = vmatpush2.msra.mxu0 0.0
        %2263 = vmatprep.subr.mxu0 0.0
        %2264 = vmatpush2.msra.mxu0 0.0
        %2265 = vmatprep.subr.mxu0 0.0
        %2266 = vmatpush2.msra.mxu0 0.0
        %2267 = vmatprep.subr.mxu0 0.0
        %2268 = vmatpush2.msra.mxu0 0.0
        %2269 = vmatprep.subr.mxu0 0.0
        %2270 = vmatpush2.msra.mxu0 0.0
        %2271 = vmatprep.subr.mxu0 0.0
        %2272 = vmatpush2.msra.mxu0 0.0
        %2273 = vmatprep.subr.mxu0 0.0
        %2274 = vmatpush2.msra.mxu0 0.0
        %2275 = vmatprep.mubr.f32.mxu0 0.0
        %2276 = vmatmul.mubr.f32.gmra.mxu0 %v2204
        %v2277 = vpop.f32.mrf.mxu0
        %v2278 = vadd.f32 0.0, %v2277
        %v2279 = vpop.f32.mrf.mxu0
        %2280 = vmatprep.mubr.f32.mxu0 0.0
        %2281 = vmatmul.mubr.f32.gmra.mxu0 %v2207
        %v2282 = vpop.f32.mrf.mxu0
        %v2283 = vadd.f32 0.0, %v2282
        %v2284 = vpop.f32.mrf.mxu0
        %2285 = vdwg.mxu0
        %v2287 = vsel %vm1946, %v2033, 0
        %v2290 = vsel %vm1946, %v2035, 0
        %v2292 = vsel %vm2042, %v1603, 0
        %2294 = vmatprep.subr.mxu0 0.0
        %2295 = vmatpush1.msra.mxu0 0.0
        %2296 = vmatprep.subr.mxu0 0.0
        %2297 = vmatpush1.msra.mxu0 0.0
        %2298 = vmatprep.subr.mxu0 0.0
        %2299 = vmatpush1.msra.mxu0 0.0
        %2300 = vmatprep.subr.mxu0 0.0
        %2301 = vmatpush1.msra.mxu0 0.0
        %2302 = vmatprep.subr.mxu0 0.0
        %2303 = vmatpush1.msra.mxu0 0.0
        %2304 = vmatprep.subr.mxu0 0.0
        %2305 = vmatpush1.msra.mxu0 0.0
        %2306 = vmatprep.subr.mxu0 0.0
        %2307 = vmatpush1.msra.mxu0 0.0
        %2308 = vmatprep.subr.mxu0 0.0
        %2309 = vmatpush1.msra.mxu0 0.0
        %2310 = vmatprep.subr.mxu0 0.0
        %2311 = vmatpush1.msra.mxu0 0.0
        %2312 = vmatprep.subr.mxu0 0.0
        %2313 = vmatpush1.msra.mxu0 0.0
        %2314 = vmatprep.subr.mxu0 0.0
        %2315 = vmatpush1.msra.mxu0 0.0
        %2316 = vmatprep.subr.mxu0 0.0
        %2317 = vmatpush1.msra.mxu0 0.0
        %2318 = vmatprep.subr.mxu0 0.0
        %2319 = vmatpush1.msra.mxu0 0.0
        %2320 = vmatprep.subr.mxu0 0.0
        %2321 = vmatpush1.msra.mxu0 0.0
        %2322 = vmatprep.subr.mxu0 0.0
        %2323 = vmatpush1.msra.mxu0 %v2292
        %2324 = vmatprep.subr.mxu0 0.0
        %2325 = vmatpush1.msra.mxu0 %v1601
        %2326 = vmatprep.subr.mxu0 0.0
        %2327 = vmatpush2.msra.mxu0 0.0
        %2328 = vmatprep.subr.mxu0 0.0
        %2329 = vmatpush2.msra.mxu0 0.0
        %2330 = vmatprep.subr.mxu0 0.0
        %2331 = vmatpush2.msra.mxu0 0.0
        %2332 = vmatprep.subr.mxu0 0.0
        %2333 = vmatpush2.msra.mxu0 0.0
        %2334 = vmatprep.subr.mxu0 0.0
        %2335 = vmatpush2.msra.mxu0 0.0
        %2336 = vmatprep.subr.mxu0 0.0
        %2337 = vmatpush2.msra.mxu0 0.0
        %2338 = vmatprep.subr.mxu0 0.0
        %2339 = vmatpush2.msra.mxu0 0.0
        %2340 = vmatprep.subr.mxu0 0.0
        %2341 = vmatpush2.msra.mxu0 0.0
        %2342 = vmatprep.subr.mxu0 0.0
        %2343 = vmatpush2.msra.mxu0 0.0
        %2344 = vmatprep.subr.mxu0 0.0
        %2345 = vmatpush2.msra.mxu0 0.0
        %2346 = vmatprep.subr.mxu0 0.0
        %2347 = vmatpush2.msra.mxu0 0.0
        %2348 = vmatprep.subr.mxu0 0.0
        %2349 = vmatpush2.msra.mxu0 0.0
        %2350 = vmatprep.subr.mxu0 0.0
        %2351 = vmatpush2.msra.mxu0 0.0
        %2352 = vmatprep.subr.mxu0 0.0
        %2353 = vmatpush2.msra.mxu0 0.0
        %2354 = vmatprep.subr.mxu0 0.0
        %2355 = vmatpush2.msra.mxu0 0.0
        %2356 = vmatprep.subr.mxu0 0.0
        %2357 = vmatpush2.msra.mxu0 0.0
        %2358 = vmatprep.mubr.f32.mxu0 0.0
        %2359 = vmatmul.mubr.f32.gmra.mxu0 %v2287
        %v2360 = vpop.f32.mrf.mxu0
        %v2361 = vadd.f32 0.0, %v2360
        %v2362 = vpop.f32.mrf.mxu0
        %2363 = vmatprep.mubr.f32.mxu0 0.0
        %2364 = vmatmul.mubr.f32.gmra.mxu0 %v2290
        %v2365 = vpop.f32.mrf.mxu0
        %v2366 = vadd.f32 0.0, %v2365
        %v2367 = vpop.f32.mrf.mxu0
        %2368 = vdwg.mxu0
        %2371 = vrot.lane.b32.xlu0 %v2195, 32
        %v2372 = vpop.permute.xlu0 %2371
        %2373 = vrot.lane.b32.xlu0 %v2200, 32
        %v2374 = vpop.permute.xlu0 %2373
        %2379 = vrot.lane.b32.xlu0 %v2278, 64
        %v2380 = vpop.permute.xlu0 %2379
        %2381 = vrot.lane.b32.xlu0 %v2283, 64
        %v2382 = vpop.permute.xlu0 %2381
        %2387 = vrot.lane.b32.xlu0 %v2361, 96
        %v2388 = vpop.permute.xlu0 %2387
        %2389 = vrot.lane.b32.xlu0 %v2366, 96
        %v2390 = vpop.permute.xlu0 %2389
        %v2393 = vsel %vm1605, %v2112, %v2372
        %v2394 = vsel %vm1605, %v2117, %v2374
        %vm2395 = vcmask 523264
        %v2396 = vsel %vm2395, %v2393, %v2380
        %v2397 = vsel %vm2395, %v2394, %v2382
        %vm2398 = vcmask 785408
        %v2399 = vsel %vm2398, %v2396, %v2388
        %v2400 = vsel %vm2398, %v2397, %v2390
        %v2401 = vld [vmem:[#allocation16] sm:$0xff]
        %v2402 = vld [vmem:[#allocation16 + $0x8] sm:$0xff]
        %v2403 = vld [vmem:[#allocation16 + $0x10] sm:$0xff]
        %v2404 = vld [vmem:[#allocation16 + $0x18] sm:$0xff]
        %v2405 = vld [vmem:[#allocation16 + $0x20] sm:$0xff]
        %v2406 = vld [vmem:[#allocation16 + $0x28] sm:$0xff]
        %v2407 = vld [vmem:[#allocation16 + $0x30] sm:$0xff]
        %v2408 = vld [vmem:[#allocation16 + $0x38] sm:$0xff]
        %v2409 = vld [vmem:[#allocation16 + $0x40] sm:$0xff]
        %v2410 = vld [vmem:[#allocation16 + $0x48] sm:$0xff]
        %v2411 = vld [vmem:[#allocation16 + $0x50] sm:$0xff]
        %v2412 = vld [vmem:[#allocation16 + $0x58] sm:$0xff]
        %v2413 = vld [vmem:[#allocation16 + $0x60] sm:$0xff]
        %v2414 = vld [vmem:[#allocation16 + $0x68] sm:$0xff]
        %v2415 = vld [vmem:[#allocation16 + $0x70] sm:$0xff]
        %v2416 = vld [vmem:[#allocation16 + $0x78] sm:$0xff]
        %v2417 = vld [vmem:[#allocation17] sm:$0x1]
        %v2419 = vlaneseq
        %v2420 = vshrl.u32 %v2419, 7
        %v2421 = vsub.s32 0, %v2420
        %v2422 = vrot.slane %v2417, %v2421
        %2424 = vmatprep.subr.mxu0 0.0
        %2425 = vmatpush1.msra.mxu0 %v2416
        %2426 = vmatprep.subr.mxu0 0.0
        %2427 = vmatpush1.msra.mxu0 %v2415
        %2428 = vmatprep.subr.mxu0 0.0
        %2429 = vmatpush1.msra.mxu0 %v2414
        %2430 = vmatprep.subr.mxu0 0.0
        %2431 = vmatpush1.msra.mxu0 %v2413
        %2432 = vmatprep.subr.mxu0 0.0
        %2433 = vmatpush1.msra.mxu0 %v2412
        %2434 = vmatprep.subr.mxu0 0.0
        %2435 = vmatpush1.msra.mxu0 %v2411
        %2436 = vmatprep.subr.mxu0 0.0
        %2437 = vmatpush1.msra.mxu0 %v2410
        %2438 = vmatprep.subr.mxu0 0.0
        %2439 = vmatpush1.msra.mxu0 %v2409
        %2440 = vmatprep.subr.mxu0 0.0
        %2441 = vmatpush1.msra.mxu0 %v2408
        %2442 = vmatprep.subr.mxu0 0.0
        %2443 = vmatpush1.msra.mxu0 %v2407
        %2444 = vmatprep.subr.mxu0 0.0
        %2445 = vmatpush1.msra.mxu0 %v2406
        %2446 = vmatprep.subr.mxu0 0.0
        %2447 = vmatpush1.msra.mxu0 %v2405
        %2448 = vmatprep.subr.mxu0 0.0
        %2449 = vmatpush1.msra.mxu0 %v2404
        %2450 = vmatprep.subr.mxu0 0.0
        %2451 = vmatpush1.msra.mxu0 %v2403
        %2452 = vmatprep.subr.mxu0 0.0
        %2453 = vmatpush1.msra.mxu0 %v2402
        %2454 = vmatprep.subr.mxu0 0.0
        %2455 = vmatpush1.msra.mxu0 %v2401
        %2456 = vmatprep.subr.mxu0 0.0
        %2457 = vmatpush2.msra.mxu0 0.0
        %2458 = vmatprep.subr.mxu0 0.0
        %2459 = vmatpush2.msra.mxu0 0.0
        %2460 = vmatprep.subr.mxu0 0.0
        %2461 = vmatpush2.msra.mxu0 0.0
        %2462 = vmatprep.subr.mxu0 0.0
        %2463 = vmatpush2.msra.mxu0 0.0
        %2464 = vmatprep.subr.mxu0 0.0
        %2465 = vmatpush2.msra.mxu0 0.0
        %2466 = vmatprep.subr.mxu0 0.0
        %2467 = vmatpush2.msra.mxu0 0.0
        %2468 = vmatprep.subr.mxu0 0.0
        %2469 = vmatpush2.msra.mxu0 0.0
        %2470 = vmatprep.subr.mxu0 0.0
        %2471 = vmatpush2.msra.mxu0 0.0
        %2472 = vmatprep.subr.mxu0 0.0
        %2473 = vmatpush2.msra.mxu0 0.0
        %2474 = vmatprep.subr.mxu0 0.0
        %2475 = vmatpush2.msra.mxu0 0.0
        %2476 = vmatprep.subr.mxu0 0.0
        %2477 = vmatpush2.msra.mxu0 0.0
        %2478 = vmatprep.subr.mxu0 0.0
        %2479 = vmatpush2.msra.mxu0 0.0
        %2480 = vmatprep.subr.mxu0 0.0
        %2481 = vmatpush2.msra.mxu0 0.0
        %2482 = vmatprep.subr.mxu0 0.0
        %2483 = vmatpush2.msra.mxu0 0.0
        %2484 = vmatprep.subr.mxu0 0.0
        %2485 = vmatpush2.msra.mxu0 0.0
        %2486 = vmatprep.subr.mxu0 0.0
        %2487 = vmatpush2.msra.mxu0 0.0
        %2488 = vmatprep.mubr.f32.mxu0 0.0
        %2489 = vmatmul.mubr.f32.gmra.mxu0 %v2399
        %v2490 = vpop.f32.mrf.mxu0
        %v2491 = vadd.f32 %v2422, %v2490
        %v2492 = vpop.f32.mrf.mxu0
        %2493 = vmatprep.mubr.f32.mxu0 0.0
        %2494 = vmatmul.mubr.f32.gmra.mxu0 %v2400
        %v2495 = vpop.f32.mrf.mxu0
        %v2496 = vadd.f32 %v2422, %v2495
        %v2497 = vpop.f32.mrf.mxu0
        %2498 = vdwg.mxu0
        %v2499 = vadd.f32 %v1333, %v2491
        %v2500 = vadd.f32 %v1338, %v2496
        %v2501 = vld [vmem:[#allocation19] sm:$0x1]
        %v2502 = vld [vmem:[#allocation20] sm:$0x1]
        %2503 = vadd.xlane.f32.xlu0 %v2499
        %v2504 = vpop.xlane.xlu0 %2503
        %v2505 = vsel %vm2042, %v2500, 0.0
        %2506 = vadd.xlane.f32.xlu0 %v2505
        %v2507 = vpop.xlane.xlu0 %2506
        %v2508 = vrcp.pop 128.0
        %v2509 = vmul.f32 %v2504, %v2508
        %v2510 = vmul.f32 %v2507, %v2508
        %v2511 = vsub.f32 %v2499, %v2509
        %v2512 = vsub.f32 %v2500, %v2510
        %v2513 = vmul.f32 %v2511, %v2511
        %v2514 = vmul.f32 %v2512, %v2512
        %2515 = vadd.xlane.f32.xlu0 %v2513
        %v2516 = vpop.xlane.xlu0 %2515
        %v2517 = vsel %vm2042, %v2514, 0.0
        %2518 = vadd.xlane.f32.xlu0 %v2517
        %v2519 = vpop.xlane.xlu0 %2518
        %v2520 = vmul.f32 %v2516, %v2508
        %v2521 = vmul.f32 %v2519, %v2508
        %v2522 = vadd.f32 %v2520, 1e-05
        %v2523 = vadd.f32 %v2521, 1e-05
        %v2524 = vrsqrt.pop %v2522
        %v2525 = vrsqrt.pop %v2523
        %v2526 = vmul.f32 %v2511, %v2524
        %v2527 = vmul.f32 %v2512, %v2525
        %v2529 = vlaneseq
        %v2530 = vshrl.u32 %v2529, 7
        %v2531 = vsub.s32 0, %v2530
        %v2532 = vrot.slane %v2501, %v2531
        %v2534 = vmul.f32 %v2526, %v2532
        %v2535 = vmul.f32 %v2527, %v2532
        %v2537 = vlaneseq
        %v2538 = vshrl.u32 %v2537, 7
        %v2539 = vsub.s32 0, %v2538
        %v2540 = vrot.slane %v2502, %v2539
        %v2542 = vadd.f32 %v2534, %v2540
        %v2543 = vadd.f32 %v2535, %v2540
        %v2544 = vld [vmem:[#allocation22] sm:$0xff]
        %v2545 = vld [vmem:[#allocation22 + $0x8] sm:$0xff]
        %v2546 = vld [vmem:[#allocation22 + $0x10] sm:$0xff]
        %v2547 = vld [vmem:[#allocation22 + $0x18] sm:$0xff]
        %v2548 = vld [vmem:[#allocation22 + $0x20] sm:$0xff]
        %v2549 = vld [vmem:[#allocation22 + $0x28] sm:$0xff]
        %v2550 = vld [vmem:[#allocation22 + $0x30] sm:$0xff]
        %v2551 = vld [vmem:[#allocation22 + $0x38] sm:$0xff]
        %v2552 = vld [vmem:[#allocation22 + $0x40] sm:$0xff]
        %v2553 = vld [vmem:[#allocation22 + $0x48] sm:$0xff]
        %v2554 = vld [vmem:[#allocation22 + $0x50] sm:$0xff]
        %v2555 = vld [vmem:[#allocation22 + $0x58] sm:$0xff]
        %v2556 = vld [vmem:[#allocation22 + $0x60] sm:$0xff]
        %v2557 = vld [vmem:[#allocation22 + $0x68] sm:$0xff]
        %v2558 = vld [vmem:[#allocation22 + $0x70] sm:$0xff]
        %v2559 = vld [vmem:[#allocation22 + $0x78] sm:$0xff]
        %v2560 = vld [vmem:[#allocation22 + $0x80] sm:$0xff]
        %v2561 = vld [vmem:[#allocation22 + $0x88] sm:$0xff]
        %v2562 = vld [vmem:[#allocation22 + $0x90] sm:$0xff]
        %v2563 = vld [vmem:[#allocation22 + $0x98] sm:$0xff]
        %v2564 = vld [vmem:[#allocation22 + $0xa0] sm:$0xff]
        %v2565 = vld [vmem:[#allocation22 + $0xa8] sm:$0xff]
        %v2566 = vld [vmem:[#allocation22 + $0xb0] sm:$0xff]
        %v2567 = vld [vmem:[#allocation22 + $0xb8] sm:$0xff]
        %v2568 = vld [vmem:[#allocation22 + $0xc0] sm:$0xff]
        %v2569 = vld [vmem:[#allocation22 + $0xc8] sm:$0xff]
        %v2570 = vld [vmem:[#allocation22 + $0xd0] sm:$0xff]
        %v2571 = vld [vmem:[#allocation22 + $0xd8] sm:$0xff]
        %v2572 = vld [vmem:[#allocation22 + $0xe0] sm:$0xff]
        %v2573 = vld [vmem:[#allocation22 + $0xe8] sm:$0xff]
        %v2574 = vld [vmem:[#allocation22 + $0xf0] sm:$0xff]
        %v2575 = vld [vmem:[#allocation22 + $0xf8] sm:$0xff]
        %v2576 = vld [vmem:[#allocation22 + $0x100] sm:$0xff]
        %v2577 = vld [vmem:[#allocation22 + $0x108] sm:$0xff]
        %v2578 = vld [vmem:[#allocation22 + $0x110] sm:$0xff]
        %v2579 = vld [vmem:[#allocation22 + $0x118] sm:$0xff]
        %v2580 = vld [vmem:[#allocation22 + $0x120] sm:$0xff]
        %v2581 = vld [vmem:[#allocation22 + $0x128] sm:$0xff]
        %v2582 = vld [vmem:[#allocation22 + $0x130] sm:$0xff]
        %v2583 = vld [vmem:[#allocation22 + $0x138] sm:$0xff]
        %v2584 = vld [vmem:[#allocation22 + $0x140] sm:$0xff]
        %v2585 = vld [vmem:[#allocation22 + $0x148] sm:$0xff]
        %v2586 = vld [vmem:[#allocation22 + $0x150] sm:$0xff]
        %v2587 = vld [vmem:[#allocation22 + $0x158] sm:$0xff]
        %v2588 = vld [vmem:[#allocation22 + $0x160] sm:$0xff]
        %v2589 = vld [vmem:[#allocation22 + $0x168] sm:$0xff]
        %v2590 = vld [vmem:[#allocation22 + $0x170] sm:$0xff]
        %v2591 = vld [vmem:[#allocation22 + $0x178] sm:$0xff]
        %v2592 = vld [vmem:[#allocation22 + $0x180] sm:$0xff]
        %v2593 = vld [vmem:[#allocation22 + $0x188] sm:$0xff]
        %v2594 = vld [vmem:[#allocation22 + $0x190] sm:$0xff]
        %v2595 = vld [vmem:[#allocation22 + $0x198] sm:$0xff]
        %v2596 = vld [vmem:[#allocation22 + $0x1a0] sm:$0xff]
        %v2597 = vld [vmem:[#allocation22 + $0x1a8] sm:$0xff]
        %v2598 = vld [vmem:[#allocation22 + $0x1b0] sm:$0xff]
        %v2599 = vld [vmem:[#allocation22 + $0x1b8] sm:$0xff]
        %v2600 = vld [vmem:[#allocation22 + $0x1c0] sm:$0xff]
        %v2601 = vld [vmem:[#allocation22 + $0x1c8] sm:$0xff]
        %v2602 = vld [vmem:[#allocation22 + $0x1d0] sm:$0xff]
        %v2603 = vld [vmem:[#allocation22 + $0x1d8] sm:$0xff]
        %v2604 = vld [vmem:[#allocation22 + $0x1e0] sm:$0xff]
        %v2605 = vld [vmem:[#allocation22 + $0x1e8] sm:$0xff]
        %v2606 = vld [vmem:[#allocation22 + $0x1f0] sm:$0xff]
        %v2607 = vld [vmem:[#allocation22 + $0x1f8] sm:$0xff]
        %v2608 = vld [vmem:[%s13] sm:$0xf]
        %v2610 = vlaneseq
        %v2611 = vshrl.u32 %v2610, 7
        %v2612 = vsub.s32 0, %v2611
        %v2613 = vrot.slane %v2608, %v2612
        %v2614 = vlaneseq
        %v2615 = vshrl.u32 %v2614, 7
        %v2616 = vsub.s32 1, %v2615
        %v2617 = vrot.slane %v2608, %v2616
        %v2618 = vlaneseq
        %v2619 = vshrl.u32 %v2618, 7
        %v2620 = vsub.s32 2, %v2619
        %v2621 = vrot.slane %v2608, %v2620
        %v2622 = vlaneseq
        %v2623 = vshrl.u32 %v2622, 7
        %v2624 = vsub.s32 3, %v2623
        %v2625 = vrot.slane %v2608, %v2624
        %2630 = vmatprep.subr.mxu0 %v2605
        %2631 = vmatpush1.msra.mxu0 %v2604
        %2632 = vmatprep.subr.mxu0 %v2601
        %2633 = vmatpush1.msra.mxu0 %v2600
        %2634 = vmatprep.subr.mxu0 %v2597
        %2635 = vmatpush1.msra.mxu0 %v2596
        %2636 = vmatprep.subr.mxu0 %v2593
        %2637 = vmatpush1.msra.mxu0 %v2592
        %2638 = vmatprep.subr.mxu0 %v2589
        %2639 = vmatpush1.msra.mxu0 %v2588
        %2640 = vmatprep.subr.mxu0 %v2585
        %2641 = vmatpush1.msra.mxu0 %v2584
        %2642 = vmatprep.subr.mxu0 %v2581
        %2643 = vmatpush1.msra.mxu0 %v2580
        %2644 = vmatprep.subr.mxu0 %v2577
        %2645 = vmatpush1.msra.mxu0 %v2576
        %2646 = vmatprep.subr.mxu0 %v2573
        %2647 = vmatpush1.msra.mxu0 %v2572
        %2648 = vmatprep.subr.mxu0 %v2569
        %2649 = vmatpush1.msra.mxu0 %v2568
        %2650 = vmatprep.subr.mxu0 %v2565
        %2651 = vmatpush1.msra.mxu0 %v2564
        %2652 = vmatprep.subr.mxu0 %v2561
        %2653 = vmatpush1.msra.mxu0 %v2560
        %2654 = vmatprep.subr.mxu0 %v2557
        %2655 = vmatpush1.msra.mxu0 %v2556
        %2656 = vmatprep.subr.mxu0 %v2553
        %2657 = vmatpush1.msra.mxu0 %v2552
        %2658 = vmatprep.subr.mxu0 %v2549
        %2659 = vmatpush1.msra.mxu0 %v2548
        %2660 = vmatprep.subr.mxu0 %v2545
        %2661 = vmatpush1.msra.mxu0 %v2544
        %2662 = vmatprep.subr.mxu0 0.0
        %2663 = vmatpush2.msra.mxu0 0.0
        %2664 = vmatprep.subr.mxu0 0.0
        %2665 = vmatpush2.msra.mxu0 0.0
        %2666 = vmatprep.subr.mxu0 0.0
        %2667 = vmatpush2.msra.mxu0 0.0
        %2668 = vmatprep.subr.mxu0 0.0
        %2669 = vmatpush2.msra.mxu0 0.0
        %2670 = vmatprep.subr.mxu0 0.0
        %2671 = vmatpush2.msra.mxu0 0.0
        %2672 = vmatprep.subr.mxu0 0.0
        %2673 = vmatpush2.msra.mxu0 0.0
        %2674 = vmatprep.subr.mxu0 0.0
        %2675 = vmatpush2.msra.mxu0 0.0
        %2676 = vmatprep.subr.mxu0 0.0
        %2677 = vmatpush2.msra.mxu0 0.0
        %2678 = vmatprep.subr.mxu0 0.0
        %2679 = vmatpush2.msra.mxu0 0.0
        %2680 = vmatprep.subr.mxu0 0.0
        %2681 = vmatpush2.msra.mxu0 0.0
        %2682 = vmatprep.subr.mxu0 0.0
        %2683 = vmatpush2.msra.mxu0 0.0
        %2684 = vmatprep.subr.mxu0 0.0
        %2685 = vmatpush2.msra.mxu0 0.0
        %2686 = vmatprep.subr.mxu0 0.0
        %2687 = vmatpush2.msra.mxu0 0.0
        %2688 = vmatprep.subr.mxu0 0.0
        %2689 = vmatpush2.msra.mxu0 0.0
        %2690 = vmatprep.subr.mxu0 0.0
        %2691 = vmatpush2.msra.mxu0 0.0
        %2692 = vmatprep.subr.mxu0 0.0
        %2693 = vmatpush2.msra.mxu0 0.0
        %2694 = vmatprep.mubr.f32.mxu0 0.0
        %2695 = vmatmul.mubr.f32.gmra.mxu0 %v2542
        %v2696 = vpop.f32.mrf.mxu0
        %v2697 = vadd.f32 %v2613, %v2696
        %v2698 = vpop.f32.mrf.mxu0
        %v2699 = vadd.f32 %v2617, %v2698
        %2700 = vmatprep.mubr.f32.mxu0 0.0
        %2701 = vmatmul.mubr.f32.gmra.mxu0 %v2543
        %v2702 = vpop.f32.mrf.mxu0
        %v2703 = vadd.f32 %v2613, %v2702
        %v2704 = vpop.f32.mrf.mxu0
        %v2705 = vadd.f32 %v2617, %v2704
        %2706 = vdwg.mxu0
        %2707 = vmatprep.subr.mxu0 %v2607
        %2708 = vmatpush1.msra.mxu0 %v2606
        %2709 = vmatprep.subr.mxu0 %v2603
        %2710 = vmatpush1.msra.mxu0 %v2602
        %2711 = vmatprep.subr.mxu0 %v2599
        %2712 = vmatpush1.msra.mxu0 %v2598
        %2713 = vmatprep.subr.mxu0 %v2595
        %2714 = vmatpush1.msra.mxu0 %v2594
        %2715 = vmatprep.subr.mxu0 %v2591
        %2716 = vmatpush1.msra.mxu0 %v2590
        %2717 = vmatprep.subr.mxu0 %v2587
        %2718 = vmatpush1.msra.mxu0 %v2586
        %2719 = vmatprep.subr.mxu0 %v2583
        %2720 = vmatpush1.msra.mxu0 %v2582
        %2721 = vmatprep.subr.mxu0 %v2579
        %2722 = vmatpush1.msra.mxu0 %v2578
        %2723 = vmatprep.subr.mxu0 %v2575
        %2724 = vmatpush1.msra.mxu0 %v2574
        %2725 = vmatprep.subr.mxu0 %v2571
        %2726 = vmatpush1.msra.mxu0 %v2570
        %2727 = vmatprep.subr.mxu0 %v2567
        %2728 = vmatpush1.msra.mxu0 %v2566
        %2729 = vmatprep.subr.mxu0 %v2563
        %2730 = vmatpush1.msra.mxu0 %v2562
        %2731 = vmatprep.subr.mxu0 %v2559
        %2732 = vmatpush1.msra.mxu0 %v2558
        %2733 = vmatprep.subr.mxu0 %v2555
        %2734 = vmatpush1.msra.mxu0 %v2554
        %2735 = vmatprep.subr.mxu0 %v2551
        %2736 = vmatpush1.msra.mxu0 %v2550
        %2737 = vmatprep.subr.mxu0 %v2547
        %2738 = vmatpush1.msra.mxu0 %v2546
        %2739 = vmatprep.subr.mxu0 0.0
        %2740 = vmatpush2.msra.mxu0 0.0
        %2741 = vmatprep.subr.mxu0 0.0
        %2742 = vmatpush2.msra.mxu0 0.0
        %2743 = vmatprep.subr.mxu0 0.0
        %2744 = vmatpush2.msra.mxu0 0.0
        %2745 = vmatprep.subr.mxu0 0.0
        %2746 = vmatpush2.msra.mxu0 0.0
        %2747 = vmatprep.subr.mxu0 0.0
        %2748 = vmatpush2.msra.mxu0 0.0
        %2749 = vmatprep.subr.mxu0 0.0
        %2750 = vmatpush2.msra.mxu0 0.0
        %2751 = vmatprep.subr.mxu0 0.0
        %2752 = vmatpush2.msra.mxu0 0.0
        %2753 = vmatprep.subr.mxu0 0.0
        %2754 = vmatpush2.msra.mxu0 0.0
        %2755 = vmatprep.subr.mxu0 0.0
        %2756 = vmatpush2.msra.mxu0 0.0
        %2757 = vmatprep.subr.mxu0 0.0
        %2758 = vmatpush2.msra.mxu0 0.0
        %2759 = vmatprep.subr.mxu0 0.0
        %2760 = vmatpush2.msra.mxu0 0.0
        %2761 = vmatprep.subr.mxu0 0.0
        %2762 = vmatpush2.msra.mxu0 0.0
        %2763 = vmatprep.subr.mxu0 0.0
        %2764 = vmatpush2.msra.mxu0 0.0
        %2765 = vmatprep.subr.mxu0 0.0
        %2766 = vmatpush2.msra.mxu0 0.0
        %2767 = vmatprep.subr.mxu0 0.0
        %2768 = vmatpush2.msra.mxu0 0.0
        %2769 = vmatprep.subr.mxu0 0.0
        %2770 = vmatpush2.msra.mxu0 0.0
        %2771 = vmatprep.mubr.f32.mxu0 0.0
        %2772 = vmatmul.mubr.f32.gmra.mxu0 %v2542
        %v2773 = vpop.f32.mrf.mxu0
        %v2774 = vadd.f32 %v2621, %v2773
        %v2775 = vpop.f32.mrf.mxu0
        %v2776 = vadd.f32 %v2625, %v2775
        %2777 = vmatprep.mubr.f32.mxu0 0.0
        %2778 = vmatmul.mubr.f32.gmra.mxu0 %v2543
        %v2779 = vpop.f32.mrf.mxu0
        %v2780 = vadd.f32 %v2621, %v2779
        %v2781 = vpop.f32.mrf.mxu0
        %v2782 = vadd.f32 %v2625, %v2781
        %2783 = vdwg.mxu0
        %v2784 = vmax.f32 %v2697, 0.0
        %v2785 = vmax.f32 %v2699, 0.0
        %v2786 = vmax.f32 %v2774, 0.0
        %v2787 = vmax.f32 %v2776, 0.0
        %v2788 = vmax.f32 %v2703, 0.0
        %v2789 = vmax.f32 %v2705, 0.0
        %v2790 = vmax.f32 %v2780, 0.0
        %v2791 = vmax.f32 %v2782, 0.0
        %v2792 = vld [vmem:[#allocation23] sm:$0xff]
        %v2793 = vld [vmem:[#allocation23 + $0x8] sm:$0xff]
        %v2794 = vld [vmem:[#allocation23 + $0x10] sm:$0xff]
        %v2795 = vld [vmem:[#allocation23 + $0x18] sm:$0xff]
        %v2796 = vld [vmem:[#allocation23 + $0x20] sm:$0xff]
        %v2797 = vld [vmem:[#allocation23 + $0x28] sm:$0xff]
        %v2798 = vld [vmem:[#allocation23 + $0x30] sm:$0xff]
        %v2799 = vld [vmem:[#allocation23 + $0x38] sm:$0xff]
        %v2800 = vld [vmem:[#allocation23 + $0x40] sm:$0xff]
        %v2801 = vld [vmem:[#allocation23 + $0x48] sm:$0xff]
        %v2802 = vld [vmem:[#allocation23 + $0x50] sm:$0xff]
        %v2803 = vld [vmem:[#allocation23 + $0x58] sm:$0xff]
        %v2804 = vld [vmem:[#allocation23 + $0x60] sm:$0xff]
        %v2805 = vld [vmem:[#allocation23 + $0x68] sm:$0xff]
        %v2806 = vld [vmem:[#allocation23 + $0x70] sm:$0xff]
        %v2807 = vld [vmem:[#allocation23 + $0x78] sm:$0xff]
        %v2808 = vld [vmem:[#allocation23 + $0x80] sm:$0xff]
        %v2809 = vld [vmem:[#allocation23 + $0x88] sm:$0xff]
        %v2810 = vld [vmem:[#allocation23 + $0x90] sm:$0xff]
        %v2811 = vld [vmem:[#allocation23 + $0x98] sm:$0xff]
        %v2812 = vld [vmem:[#allocation23 + $0xa0] sm:$0xff]
        %v2813 = vld [vmem:[#allocation23 + $0xa8] sm:$0xff]
        %v2814 = vld [vmem:[#allocation23 + $0xb0] sm:$0xff]
        %v2815 = vld [vmem:[#allocation23 + $0xb8] sm:$0xff]
        %v2816 = vld [vmem:[#allocation23 + $0xc0] sm:$0xff]
        %v2817 = vld [vmem:[#allocation23 + $0xc8] sm:$0xff]
        %v2818 = vld [vmem:[#allocation23 + $0xd0] sm:$0xff]
        %v2819 = vld [vmem:[#allocation23 + $0xd8] sm:$0xff]
        %v2820 = vld [vmem:[#allocation23 + $0xe0] sm:$0xff]
        %v2821 = vld [vmem:[#allocation23 + $0xe8] sm:$0xff]
        %v2822 = vld [vmem:[#allocation23 + $0xf0] sm:$0xff]
        %v2823 = vld [vmem:[#allocation23 + $0xf8] sm:$0xff]
        %v2824 = vld [vmem:[#allocation23 + $0x100] sm:$0xff]
        %v2825 = vld [vmem:[#allocation23 + $0x108] sm:$0xff]
        %v2826 = vld [vmem:[#allocation23 + $0x110] sm:$0xff]
        %v2827 = vld [vmem:[#allocation23 + $0x118] sm:$0xff]
        %v2828 = vld [vmem:[#allocation23 + $0x120] sm:$0xff]
        %v2829 = vld [vmem:[#allocation23 + $0x128] sm:$0xff]
        %v2830 = vld [vmem:[#allocation23 + $0x130] sm:$0xff]
        %v2831 = vld [vmem:[#allocation23 + $0x138] sm:$0xff]
        %v2832 = vld [vmem:[#allocation23 + $0x140] sm:$0xff]
        %v2833 = vld [vmem:[#allocation23 + $0x148] sm:$0xff]
        %v2834 = vld [vmem:[#allocation23 + $0x150] sm:$0xff]
        %v2835 = vld [vmem:[#allocation23 + $0x158] sm:$0xff]
        %v2836 = vld [vmem:[#allocation23 + $0x160] sm:$0xff]
        %v2837 = vld [vmem:[#allocation23 + $0x168] sm:$0xff]
        %v2838 = vld [vmem:[#allocation23 + $0x170] sm:$0xff]
        %v2839 = vld [vmem:[#allocation23 + $0x178] sm:$0xff]
        %v2840 = vld [vmem:[#allocation23 + $0x180] sm:$0xff]
        %v2841 = vld [vmem:[#allocation23 + $0x188] sm:$0xff]
        %v2842 = vld [vmem:[#allocation23 + $0x190] sm:$0xff]
        %v2843 = vld [vmem:[#allocation23 + $0x198] sm:$0xff]
        %v2844 = vld [vmem:[#allocation23 + $0x1a0] sm:$0xff]
        %v2845 = vld [vmem:[#allocation23 + $0x1a8] sm:$0xff]
        %v2846 = vld [vmem:[#allocation23 + $0x1b0] sm:$0xff]
        %v2847 = vld [vmem:[#allocation23 + $0x1b8] sm:$0xff]
        %v2848 = vld [vmem:[#allocation23 + $0x1c0] sm:$0xff]
        %v2849 = vld [vmem:[#allocation23 + $0x1c8] sm:$0xff]
        %v2850 = vld [vmem:[#allocation23 + $0x1d0] sm:$0xff]
        %v2851 = vld [vmem:[#allocation23 + $0x1d8] sm:$0xff]
        %v2852 = vld [vmem:[#allocation23 + $0x1e0] sm:$0xff]
        %v2853 = vld [vmem:[#allocation23 + $0x1e8] sm:$0xff]
        %v2854 = vld [vmem:[#allocation23 + $0x1f0] sm:$0xff]
        %v2855 = vld [vmem:[#allocation23 + $0x1f8] sm:$0xff]
        %v2856 = vld [vmem:[%s15] sm:$0x1]
        %v2858 = vlaneseq
        %v2859 = vshrl.u32 %v2858, 7
        %v2860 = vsub.s32 0, %v2859
        %v2861 = vrot.slane %v2856, %v2860
        %2863 = vmatprep.subr.mxu0 0.0
        %2864 = vmatpush1.msra.mxu0 %v2807
        %2865 = vmatprep.subr.mxu0 0.0
        %2866 = vmatpush1.msra.mxu0 %v2806
        %2867 = vmatprep.subr.mxu0 0.0
        %2868 = vmatpush1.msra.mxu0 %v2805
        %2869 = vmatprep.subr.mxu0 0.0
        %2870 = vmatpush1.msra.mxu0 %v2804
        %2871 = vmatprep.subr.mxu0 0.0
        %2872 = vmatpush1.msra.mxu0 %v2803
        %2873 = vmatprep.subr.mxu0 0.0
        %2874 = vmatpush1.msra.mxu0 %v2802
        %2875 = vmatprep.subr.mxu0 0.0
        %2876 = vmatpush1.msra.mxu0 %v2801
        %2877 = vmatprep.subr.mxu0 0.0
        %2878 = vmatpush1.msra.mxu0 %v2800
        %2879 = vmatprep.subr.mxu0 0.0
        %2880 = vmatpush1.msra.mxu0 %v2799
        %2881 = vmatprep.subr.mxu0 0.0
        %2882 = vmatpush1.msra.mxu0 %v2798
        %2883 = vmatprep.subr.mxu0 0.0
        %2884 = vmatpush1.msra.mxu0 %v2797
        %2885 = vmatprep.subr.mxu0 0.0
        %2886 = vmatpush1.msra.mxu0 %v2796
        %2887 = vmatprep.subr.mxu0 0.0
        %2888 = vmatpush1.msra.mxu0 %v2795
        %2889 = vmatprep.subr.mxu0 0.0
        %2890 = vmatpush1.msra.mxu0 %v2794
        %2891 = vmatprep.subr.mxu0 0.0
        %2892 = vmatpush1.msra.mxu0 %v2793
        %2893 = vmatprep.subr.mxu0 0.0
        %2894 = vmatpush1.msra.mxu0 %v2792
        %2895 = vmatprep.subr.mxu0 0.0
        %2896 = vmatpush2.msra.mxu0 %v2823
        %2897 = vmatprep.subr.mxu0 0.0
        %2898 = vmatpush2.msra.mxu0 %v2822
        %2899 = vmatprep.subr.mxu0 0.0
        %2900 = vmatpush2.msra.mxu0 %v2821
        %2901 = vmatprep.subr.mxu0 0.0
        %2902 = vmatpush2.msra.mxu0 %v2820
        %2903 = vmatprep.subr.mxu0 0.0
        %2904 = vmatpush2.msra.mxu0 %v2819
        %2905 = vmatprep.subr.mxu0 0.0
        %2906 = vmatpush2.msra.mxu0 %v2818
        %2907 = vmatprep.subr.mxu0 0.0
        %2908 = vmatpush2.msra.mxu0 %v2817
        %2909 = vmatprep.subr.mxu0 0.0
        %2910 = vmatpush2.msra.mxu0 %v2816
        %2911 = vmatprep.subr.mxu0 0.0
        %2912 = vmatpush2.msra.mxu0 %v2815
        %2913 = vmatprep.subr.mxu0 0.0
        %2914 = vmatpush2.msra.mxu0 %v2814
        %2915 = vmatprep.subr.mxu0 0.0
        %2916 = vmatpush2.msra.mxu0 %v2813
        %2917 = vmatprep.subr.mxu0 0.0
        %2918 = vmatpush2.msra.mxu0 %v2812
        %2919 = vmatprep.subr.mxu0 0.0
        %2920 = vmatpush2.msra.mxu0 %v2811
        %2921 = vmatprep.subr.mxu0 0.0
        %2922 = vmatpush2.msra.mxu0 %v2810
        %2923 = vmatprep.subr.mxu0 0.0
        %2924 = vmatpush2.msra.mxu0 %v2809
        %2925 = vmatprep.subr.mxu0 0.0
        %2926 = vmatpush2.msra.mxu0 %v2808
        %2927 = vmatprep.mubr.f32.mxu0 %v2785
        %2928 = vmatmul.mubr.f32.gmra.mxu0 %v2784
        %v2929 = vpop.f32.mrf.mxu0
        %v2930 = vadd.f32 %v2861, %v2929
        %v2931 = vpop.f32.mrf.mxu0
        %2932 = vmatprep.mubr.f32.mxu0 %v2789
        %2933 = vmatmul.mubr.f32.gmra.mxu0 %v2788
        %v2934 = vpop.f32.mrf.mxu0
        %v2935 = vadd.f32 %v2861, %v2934
        %v2936 = vpop.f32.mrf.mxu0
        %2937 = vdwg.mxu0
        %2938 = vmatprep.subr.mxu0 0.0
        %2939 = vmatpush1.msra.mxu0 %v2839
        %2940 = vmatprep.subr.mxu0 0.0
        %2941 = vmatpush1.msra.mxu0 %v2838
        %2942 = vmatprep.subr.mxu0 0.0
        %2943 = vmatpush1.msra.mxu0 %v2837
        %2944 = vmatprep.subr.mxu0 0.0
        %2945 = vmatpush1.msra.mxu0 %v2836
        %2946 = vmatprep.subr.mxu0 0.0
        %2947 = vmatpush1.msra.mxu0 %v2835
        %2948 = vmatprep.subr.mxu0 0.0
        %2949 = vmatpush1.msra.mxu0 %v2834
        %2950 = vmatprep.subr.mxu0 0.0
        %2951 = vmatpush1.msra.mxu0 %v2833
        %2952 = vmatprep.subr.mxu0 0.0
        %2953 = vmatpush1.msra.mxu0 %v2832
        %2954 = vmatprep.subr.mxu0 0.0
        %2955 = vmatpush1.msra.mxu0 %v2831
        %2956 = vmatprep.subr.mxu0 0.0
        %2957 = vmatpush1.msra.mxu0 %v2830
        %2958 = vmatprep.subr.mxu0 0.0
        %2959 = vmatpush1.msra.mxu0 %v2829
        %2960 = vmatprep.subr.mxu0 0.0
        %2961 = vmatpush1.msra.mxu0 %v2828
        %2962 = vmatprep.subr.mxu0 0.0
        %2963 = vmatpush1.msra.mxu0 %v2827
        %2964 = vmatprep.subr.mxu0 0.0
        %2965 = vmatpush1.msra.mxu0 %v2826
        %2966 = vmatprep.subr.mxu0 0.0
        %2967 = vmatpush1.msra.mxu0 %v2825
        %2968 = vmatprep.subr.mxu0 0.0
        %2969 = vmatpush1.msra.mxu0 %v2824
        %2970 = vmatprep.subr.mxu0 0.0
        %2971 = vmatpush2.msra.mxu0 %v2855
        %2972 = vmatprep.subr.mxu0 0.0
        %2973 = vmatpush2.msra.mxu0 %v2854
        %2974 = vmatprep.subr.mxu0 0.0
        %2975 = vmatpush2.msra.mxu0 %v2853
        %2976 = vmatprep.subr.mxu0 0.0
        %2977 = vmatpush2.msra.mxu0 %v2852
        %2978 = vmatprep.subr.mxu0 0.0
        %2979 = vmatpush2.msra.mxu0 %v2851
        %2980 = vmatprep.subr.mxu0 0.0
        %2981 = vmatpush2.msra.mxu0 %v2850
        %2982 = vmatprep.subr.mxu0 0.0
        %2983 = vmatpush2.msra.mxu0 %v2849
        %2984 = vmatprep.subr.mxu0 0.0
        %2985 = vmatpush2.msra.mxu0 %v2848
        %2986 = vmatprep.subr.mxu0 0.0
        %2987 = vmatpush2.msra.mxu0 %v2847
        %2988 = vmatprep.subr.mxu0 0.0
        %2989 = vmatpush2.msra.mxu0 %v2846
        %2990 = vmatprep.subr.mxu0 0.0
        %2991 = vmatpush2.msra.mxu0 %v2845
        %2992 = vmatprep.subr.mxu0 0.0
        %2993 = vmatpush2.msra.mxu0 %v2844
        %2994 = vmatprep.subr.mxu0 0.0
        %2995 = vmatpush2.msra.mxu0 %v2843
        %2996 = vmatprep.subr.mxu0 0.0
        %2997 = vmatpush2.msra.mxu0 %v2842
        %2998 = vmatprep.subr.mxu0 0.0
        %2999 = vmatpush2.msra.mxu0 %v2841
        %3000 = vmatprep.subr.mxu0 0.0
        %3001 = vmatpush2.msra.mxu0 %v2840
        %3002 = vmatprep.mubr.f32.mxu0 %v2787
        %3003 = vmatmul.mubr.f32.gmra.mxu0 %v2786
        %v3004 = vpop.f32.mrf.mxu0
        %v3005 = vadd.f32 %v2930, %v3004
        %v3006 = vpop.f32.mrf.mxu0
        %3007 = vmatprep.mubr.f32.mxu0 %v2791
        %3008 = vmatmul.mubr.f32.gmra.mxu0 %v2790
        %v3009 = vpop.f32.mrf.mxu0
        %v3010 = vadd.f32 %v2935, %v3009
        %v3011 = vpop.f32.mrf.mxu0
        %3012 = vdwg.mxu0
        %v3013 = vadd.f32 %v2542, %v3005
        %v3014 = vadd.f32 %v2543, %v3010
        %v3015 = vld [vmem:[#allocation25] sm:$0x1]
        %v3016 = vld [vmem:[%s17] sm:$0x1]
        %3017 = vadd.xlane.f32.xlu0 %v3013
        %v3018 = vpop.xlane.xlu0 %3017
        %v3019 = vsel %vm2042, %v3014, 0.0
        %3020 = vadd.xlane.f32.xlu0 %v3019
        %v3021 = vpop.xlane.xlu0 %3020
        %v3022 = vmul.f32 %v3018, %v2508
        %v3023 = vmul.f32 %v3021, %v2508
        %v3024 = vsub.f32 %v3013, %v3022
        %v3025 = vsub.f32 %v3014, %v3023
        %v3026 = vmul.f32 %v3024, %v3024
        %v3027 = vmul.f32 %v3025, %v3025
        %3028 = vadd.xlane.f32.xlu0 %v3026
        %v3029 = vpop.xlane.xlu0 %3028
        %v3030 = vsel %vm2042, %v3027, 0.0
        %3031 = vadd.xlane.f32.xlu0 %v3030
        %v3032 = vpop.xlane.xlu0 %3031
        %v3033 = vmul.f32 %v3029, %v2508
        %v3034 = vmul.f32 %v3032, %v2508
        %v3035 = vadd.f32 %v3033, 1e-05
        %v3036 = vadd.f32 %v3034, 1e-05
        %v3037 = vrsqrt.pop %v3035
        %v3038 = vrsqrt.pop %v3036
        %v3039 = vmul.f32 %v3024, %v3037
        %v3040 = vmul.f32 %v3025, %v3038
        %v3042 = vlaneseq
        %v3043 = vshrl.u32 %v3042, 7
        %v3044 = vsub.s32 0, %v3043
        %v3045 = vrot.slane %v3015, %v3044
        %v3047 = vmul.f32 %v3039, %v3045
        %v3048 = vmul.f32 %v3040, %v3045
        %v3050 = vlaneseq
        %v3051 = vshrl.u32 %v3050, 7
        %v3052 = vsub.s32 0, %v3051
        %v3053 = vrot.slane %v3016, %v3052
        %v3055 = vadd.f32 %v3047, %v3053
        %v3056 = vadd.f32 %v3048, %v3053
        %s3057 = scalar_lea.vmem [#allocation13], 384
        %v3058 = vld [vmem:[%s3057] sm:$0xff]
        %v3059 = vld [vmem:[%s3057 + $0x8] sm:$0xff]
        %v3060 = vld [vmem:[%s3057 + $0x10] sm:$0xff]
        %v3061 = vld [vmem:[%s3057 + $0x18] sm:$0xff]
        %v3062 = vld [vmem:[%s3057 + $0x20] sm:$0xff]
        %v3063 = vld [vmem:[%s3057 + $0x28] sm:$0xff]
        %v3064 = vld [vmem:[%s3057 + $0x30] sm:$0xff]
        %v3065 = vld [vmem:[%s3057 + $0x38] sm:$0xff]
        %v3066 = vld [vmem:[%s3057 + $0x40] sm:$0xff]
        %v3067 = vld [vmem:[%s3057 + $0x48] sm:$0xff]
        %v3068 = vld [vmem:[%s3057 + $0x50] sm:$0xff]
        %v3069 = vld [vmem:[%s3057 + $0x58] sm:$0xff]
        %v3070 = vld [vmem:[%s3057 + $0x60] sm:$0xff]
        %v3071 = vld [vmem:[%s3057 + $0x68] sm:$0xff]
        %v3072 = vld [vmem:[%s3057 + $0x70] sm:$0xff]
        %v3073 = vld [vmem:[%s3057 + $0x78] sm:$0xff]
        %v3074 = vld [vmem:[%s3057 + $0x80] sm:$0xff]
        %v3075 = vld [vmem:[%s3057 + $0x88] sm:$0xff]
        %v3076 = vld [vmem:[%s3057 + $0x90] sm:$0xff]
        %v3077 = vld [vmem:[%s3057 + $0x98] sm:$0xff]
        %v3078 = vld [vmem:[%s3057 + $0xa0] sm:$0xff]
        %v3079 = vld [vmem:[%s3057 + $0xa8] sm:$0xff]
        %v3080 = vld [vmem:[%s3057 + $0xb0] sm:$0xff]
        %v3081 = vld [vmem:[%s3057 + $0xb8] sm:$0xff]
        %v3082 = vld [vmem:[%s3057 + $0xc0] sm:$0xff]
        %v3083 = vld [vmem:[%s3057 + $0xc8] sm:$0xff]
        %v3084 = vld [vmem:[%s3057 + $0xd0] sm:$0xff]
        %v3085 = vld [vmem:[%s3057 + $0xd8] sm:$0xff]
        %v3086 = vld [vmem:[%s3057 + $0xe0] sm:$0xff]
        %v3087 = vld [vmem:[%s3057 + $0xe8] sm:$0xff]
        %v3088 = vld [vmem:[%s3057 + $0xf0] sm:$0xff]
        %v3089 = vld [vmem:[%s3057 + $0xf8] sm:$0xff]
        %v3090 = vld [vmem:[%s3057 + $0x100] sm:$0xff]
        %v3091 = vld [vmem:[%s3057 + $0x108] sm:$0xff]
        %v3092 = vld [vmem:[%s3057 + $0x110] sm:$0xff]
        %v3093 = vld [vmem:[%s3057 + $0x118] sm:$0xff]
        %v3094 = vld [vmem:[%s3057 + $0x120] sm:$0xff]
        %v3095 = vld [vmem:[%s3057 + $0x128] sm:$0xff]
        %v3096 = vld [vmem:[%s3057 + $0x130] sm:$0xff]
        %v3097 = vld [vmem:[%s3057 + $0x138] sm:$0xff]
        %v3098 = vld [vmem:[%s3057 + $0x140] sm:$0xff]
        %v3099 = vld [vmem:[%s3057 + $0x148] sm:$0xff]
        %v3100 = vld [vmem:[%s3057 + $0x150] sm:$0xff]
        %v3101 = vld [vmem:[%s3057 + $0x158] sm:$0xff]
        %v3102 = vld [vmem:[%s3057 + $0x160] sm:$0xff]
        %v3103 = vld [vmem:[%s3057 + $0x168] sm:$0xff]
        %v3104 = vld [vmem:[%s3057 + $0x170] sm:$0xff]
        %v3105 = vld [vmem:[%s3057 + $0x178] sm:$0xff]
        %s3106 = scalar_lea.vmem [#allocation14], 3
        %v3107 = vld [vmem:[%s3106] sm:$0x7]
        %v3109 = vlaneseq
        %v3110 = vshrl.u32 %v3109, 7
        %v3111 = vsub.s32 0, %v3110
        %v3112 = vrot.slane %v3107, %v3111
        %v3113 = vlaneseq
        %v3114 = vshrl.u32 %v3113, 7
        %v3115 = vsub.s32 1, %v3114
        %v3116 = vrot.slane %v3107, %v3115
        %v3117 = vlaneseq
        %v3118 = vshrl.u32 %v3117, 7
        %v3119 = vsub.s32 2, %v3118
        %v3120 = vrot.slane %v3107, %v3119
        %3124 = vmatprep.subr.mxu0 %v3104
        %3125 = vmatpush1.msra.mxu0 %v3103
        %3126 = vmatprep.subr.mxu0 %v3101
        %3127 = vmatpush1.msra.mxu0 %v3100
        %3128 = vmatprep.subr.mxu0 %v3098
        %3129 = vmatpush1.msra.mxu0 %v3097
        %3130 = vmatprep.subr.mxu0 %v3095
        %3131 = vmatpush1.msra.mxu0 %v3094
        %3132 = vmatprep.subr.mxu0 %v3092
        %3133 = vmatpush1.msra.mxu0 %v3091
        %3134 = vmatprep.subr.mxu0 %v3089
        %3135 = vmatpush1.msra.mxu0 %v3088
        %3136 = vmatprep.subr.mxu0 %v3086
        %3137 = vmatpush1.msra.mxu0 %v3085
        %3138 = vmatprep.subr.mxu0 %v3083
        %3139 = vmatpush1.msra.mxu0 %v3082
        %3140 = vmatprep.subr.mxu0 %v3080
        %3141 = vmatpush1.msra.mxu0 %v3079
        %3142 = vmatprep.subr.mxu0 %v3077
        %3143 = vmatpush1.msra.mxu0 %v3076
        %3144 = vmatprep.subr.mxu0 %v3074
        %3145 = vmatpush1.msra.mxu0 %v3073
        %3146 = vmatprep.subr.mxu0 %v3071
        %3147 = vmatpush1.msra.mxu0 %v3070
        %3148 = vmatprep.subr.mxu0 %v3068
        %3149 = vmatpush1.msra.mxu0 %v3067
        %3150 = vmatprep.subr.mxu0 %v3065
        %3151 = vmatpush1.msra.mxu0 %v3064
        %3152 = vmatprep.subr.mxu0 %v3062
        %3153 = vmatpush1.msra.mxu0 %v3061
        %3154 = vmatprep.subr.mxu0 %v3059
        %3155 = vmatpush1.msra.mxu0 %v3058
        %3156 = vmatprep.subr.mxu0 0.0
        %3157 = vmatpush2.msra.mxu0 0.0
        %3158 = vmatprep.subr.mxu0 0.0
        %3159 = vmatpush2.msra.mxu0 0.0
        %3160 = vmatprep.subr.mxu0 0.0
        %3161 = vmatpush2.msra.mxu0 0.0
        %3162 = vmatprep.subr.mxu0 0.0
        %3163 = vmatpush2.msra.mxu0 0.0
        %3164 = vmatprep.subr.mxu0 0.0
        %3165 = vmatpush2.msra.mxu0 0.0
        %3166 = vmatprep.subr.mxu0 0.0
        %3167 = vmatpush2.msra.mxu0 0.0
        %3168 = vmatprep.subr.mxu0 0.0
        %3169 = vmatpush2.msra.mxu0 0.0
        %3170 = vmatprep.subr.mxu0 0.0
        %3171 = vmatpush2.msra.mxu0 0.0
        %3172 = vmatprep.subr.mxu0 0.0
        %3173 = vmatpush2.msra.mxu0 0.0
        %3174 = vmatprep.subr.mxu0 0.0
        %3175 = vmatpush2.msra.mxu0 0.0
        %3176 = vmatprep.subr.mxu0 0.0
        %3177 = vmatpush2.msra.mxu0 0.0
        %3178 = vmatprep.subr.mxu0 0.0
        %3179 = vmatpush2.msra.mxu0 0.0
        %3180 = vmatprep.subr.mxu0 0.0
        %3181 = vmatpush2.msra.mxu0 0.0
        %3182 = vmatprep.subr.mxu0 0.0
        %3183 = vmatpush2.msra.mxu0 0.0
        %3184 = vmatprep.subr.mxu0 0.0
        %3185 = vmatpush2.msra.mxu0 0.0
        %3186 = vmatprep.subr.mxu0 0.0
        %3187 = vmatpush2.msra.mxu0 0.0
        %3188 = vmatprep.mubr.f32.mxu0 0.0
        %3189 = vmatmul.mubr.f32.gmra.mxu0 %v3055
        %v3190 = vpop.f32.mrf.mxu0
        %v3191 = vadd.f32 %v3112, %v3190
        %v3192 = vpop.f32.mrf.mxu0
        %v3193 = vadd.f32 %v3116, %v3192
        %3194 = vmatprep.mubr.f32.mxu0 0.0
        %3195 = vmatmul.mubr.f32.gmra.mxu0 %v3056
        %v3196 = vpop.f32.mrf.mxu0
        %v3197 = vadd.f32 %v3112, %v3196
        %v3198 = vpop.f32.mrf.mxu0
        %v3199 = vadd.f32 %v3116, %v3198
        %3200 = vdwg.mxu0
        %3201 = vmatprep.subr.mxu0 0.0
        %3202 = vmatpush1.msra.mxu0 %v3105
        %3203 = vmatprep.subr.mxu0 0.0
        %3204 = vmatpush1.msra.mxu0 %v3102
        %3205 = vmatprep.subr.mxu0 0.0
        %3206 = vmatpush1.msra.mxu0 %v3099
        %3207 = vmatprep.subr.mxu0 0.0
        %3208 = vmatpush1.msra.mxu0 %v3096
        %3209 = vmatprep.subr.mxu0 0.0
        %3210 = vmatpush1.msra.mxu0 %v3093
        %3211 = vmatprep.subr.mxu0 0.0
        %3212 = vmatpush1.msra.mxu0 %v3090
        %3213 = vmatprep.subr.mxu0 0.0
        %3214 = vmatpush1.msra.mxu0 %v3087
        %3215 = vmatprep.subr.mxu0 0.0
        %3216 = vmatpush1.msra.mxu0 %v3084
        %3217 = vmatprep.subr.mxu0 0.0
        %3218 = vmatpush1.msra.mxu0 %v3081
        %3219 = vmatprep.subr.mxu0 0.0
        %3220 = vmatpush1.msra.mxu0 %v3078
        %3221 = vmatprep.subr.mxu0 0.0
        %3222 = vmatpush1.msra.mxu0 %v3075
        %3223 = vmatprep.subr.mxu0 0.0
        %3224 = vmatpush1.msra.mxu0 %v3072
        %3225 = vmatprep.subr.mxu0 0.0
        %3226 = vmatpush1.msra.mxu0 %v3069
        %3227 = vmatprep.subr.mxu0 0.0
        %3228 = vmatpush1.msra.mxu0 %v3066
        %3229 = vmatprep.subr.mxu0 0.0
        %3230 = vmatpush1.msra.mxu0 %v3063
        %3231 = vmatprep.subr.mxu0 0.0
        %3232 = vmatpush1.msra.mxu0 %v3060
        %3233 = vmatprep.subr.mxu0 0.0
        %3234 = vmatpush2.msra.mxu0 0.0
        %3235 = vmatprep.subr.mxu0 0.0
        %3236 = vmatpush2.msra.mxu0 0.0
        %3237 = vmatprep.subr.mxu0 0.0
        %3238 = vmatpush2.msra.mxu0 0.0
        %3239 = vmatprep.subr.mxu0 0.0
        %3240 = vmatpush2.msra.mxu0 0.0
        %3241 = vmatprep.subr.mxu0 0.0
        %3242 = vmatpush2.msra.mxu0 0.0
        %3243 = vmatprep.subr.mxu0 0.0
        %3244 = vmatpush2.msra.mxu0 0.0
        %3245 = vmatprep.subr.mxu0 0.0
        %3246 = vmatpush2.msra.mxu0 0.0
        %3247 = vmatprep.subr.mxu0 0.0
        %3248 = vmatpush2.msra.mxu0 0.0
        %3249 = vmatprep.subr.mxu0 0.0
        %3250 = vmatpush2.msra.mxu0 0.0
        %3251 = vmatprep.subr.mxu0 0.0
        %3252 = vmatpush2.msra.mxu0 0.0
        %3253 = vmatprep.subr.mxu0 0.0
        %3254 = vmatpush2.msra.mxu0 0.0
        %3255 = vmatprep.subr.mxu0 0.0
        %3256 = vmatpush2.msra.mxu0 0.0
        %3257 = vmatprep.subr.mxu0 0.0
        %3258 = vmatpush2.msra.mxu0 0.0
        %3259 = vmatprep.subr.mxu0 0.0
        %3260 = vmatpush2.msra.mxu0 0.0
        %3261 = vmatprep.subr.mxu0 0.0
        %3262 = vmatpush2.msra.mxu0 0.0
        %3263 = vmatprep.subr.mxu0 0.0
        %3264 = vmatpush2.msra.mxu0 0.0
        %3265 = vmatprep.mubr.f32.mxu0 0.0
        %3266 = vmatmul.mubr.f32.gmra.mxu0 %v3055
        %v3267 = vpop.f32.mrf.mxu0
        %v3268 = vadd.f32 %v3120, %v3267
        %v3269 = vpop.f32.mrf.mxu0
        %3270 = vmatprep.mubr.f32.mxu0 0.0
        %3271 = vmatmul.mubr.f32.gmra.mxu0 %v3056
        %v3272 = vpop.f32.mrf.mxu0
        %v3273 = vadd.f32 %v3120, %v3272
        %v3274 = vpop.f32.mrf.mxu0
        %3275 = vdwg.mxu0
        %3278 = vrot.lane.b32.xlu0 %v3191, 96
        %v3279 = vpop.permute.xlu0 %3278
        %3280 = vrot.lane.b32.xlu0 %v3197, 96
        %v3281 = vpop.permute.xlu0 %3280
        %3282 = vrot.lane.b32.xlu0 %v3191, 64
        %v3283 = vpop.permute.xlu0 %3282
        %3284 = vrot.lane.b32.xlu0 %v3197, 64
        %v3285 = vpop.permute.xlu0 %3284
        %3286 = vrot.lane.b32.xlu0 %v3191, 32
        %v3287 = vpop.permute.xlu0 %3286
        %3288 = vrot.lane.b32.xlu0 %v3197, 32
        %v3289 = vpop.permute.xlu0 %3288
        %3292 = vrot.lane.b32.xlu0 %v3193, 96
        %v3293 = vpop.permute.xlu0 %3292
        %3294 = vrot.lane.b32.xlu0 %v3199, 96
        %v3295 = vpop.permute.xlu0 %3294
        %3296 = vrot.lane.b32.xlu0 %v3193, 64
        %v3297 = vpop.permute.xlu0 %3296
        %3298 = vrot.lane.b32.xlu0 %v3199, 64
        %v3299 = vpop.permute.xlu0 %3298
        %3300 = vrot.lane.b32.xlu0 %v3193, 32
        %v3301 = vpop.permute.xlu0 %3300
        %3302 = vrot.lane.b32.xlu0 %v3199, 32
        %v3303 = vpop.permute.xlu0 %3302
        %3306 = vrot.lane.b32.xlu0 %v3268, 96
        %v3307 = vpop.permute.xlu0 %3306
        %3308 = vrot.lane.b32.xlu0 %v3273, 96
        %v3309 = vpop.permute.xlu0 %3308
        %3311 = vrot.lane.b32.xlu0 %v3268, 64
        %v3312 = vpop.permute.xlu0 %3311
        %3313 = vrot.lane.b32.xlu0 %v3273, 64
        %v3314 = vpop.permute.xlu0 %3313
        %3316 = vrot.lane.b32.xlu0 %v3268, 32
        %v3317 = vpop.permute.xlu0 %3316
        %3318 = vrot.lane.b32.xlu0 %v3273, 32
        %v3319 = vpop.permute.xlu0 %3318
        %v3321 = vsel %vm1605, %v3191, 0
        %v3323 = vsel %vm1605, %v3197, 0
        %v3325 = vsel %vm1605, %v3193, 0
        %v3327 = vsel %vm1605, %v3199, 0
        %3329 = vmatprep.subr.mxu0 0.0
        %3330 = vmatpush1.xpose.msra.mxu0 0.0
        %3331 = vmatprep.subr.mxu0 0.0
        %3332 = vmatpush1.xpose.msra.mxu0 0.0
        %3333 = vmatprep.subr.mxu0 0.0
        %3334 = vmatpush1.xpose.msra.mxu0 0.0
        %3335 = vmatprep.subr.mxu0 0.0
        %3336 = vmatpush1.xpose.msra.mxu0 0.0
        %3337 = vmatprep.subr.mxu0 0.0
        %3338 = vmatpush1.xpose.msra.mxu0 0.0
        %3339 = vmatprep.subr.mxu0 0.0
        %3340 = vmatpush1.xpose.msra.mxu0 0.0
        %3341 = vmatprep.subr.mxu0 0.0
        %3342 = vmatpush1.xpose.msra.mxu0 0.0
        %3343 = vmatprep.subr.mxu0 0.0
        %3344 = vmatpush1.xpose.msra.mxu0 0.0
        %3345 = vmatprep.subr.mxu0 0.0
        %3346 = vmatpush1.xpose.msra.mxu0 0.0
        %3347 = vmatprep.subr.mxu0 0.0
        %3348 = vmatpush1.xpose.msra.mxu0 0.0
        %3349 = vmatprep.subr.mxu0 0.0
        %3350 = vmatpush1.xpose.msra.mxu0 0.0
        %3351 = vmatprep.subr.mxu0 0.0
        %3352 = vmatpush1.xpose.msra.mxu0 0.0
        %3353 = vmatprep.subr.mxu0 0.0
        %3354 = vmatpush1.xpose.msra.mxu0 0.0
        %3355 = vmatprep.subr.mxu0 0.0
        %3356 = vmatpush1.xpose.msra.mxu0 0.0
        %3357 = vmatprep.subr.mxu0 0.0
        %3358 = vmatpush1.xpose.msra.mxu0 %v3327
        %3359 = vmatprep.subr.mxu0 0.0
        %3360 = vmatpush1.xpose.msra.mxu0 %v3325
        %3361 = vmatprep.subr.mxu0 0.0
        %3362 = vmatpush2.xpose.msra.mxu0 0.0
        %3363 = vmatprep.subr.mxu0 0.0
        %3364 = vmatpush2.xpose.msra.mxu0 0.0
        %3365 = vmatprep.subr.mxu0 0.0
        %3366 = vmatpush2.xpose.msra.mxu0 0.0
        %3367 = vmatprep.subr.mxu0 0.0
        %3368 = vmatpush2.xpose.msra.mxu0 0.0
        %3369 = vmatprep.subr.mxu0 0.0
        %3370 = vmatpush2.xpose.msra.mxu0 0.0
        %3371 = vmatprep.subr.mxu0 0.0
        %3372 = vmatpush2.xpose.msra.mxu0 0.0
        %3373 = vmatprep.subr.mxu0 0.0
        %3374 = vmatpush2.xpose.msra.mxu0 0.0
        %3375 = vmatprep.subr.mxu0 0.0
        %3376 = vmatpush2.xpose.msra.mxu0 0.0
        %3377 = vmatprep.subr.mxu0 0.0
        %3378 = vmatpush2.xpose.msra.mxu0 0.0
        %3379 = vmatprep.subr.mxu0 0.0
        %3380 = vmatpush2.xpose.msra.mxu0 0.0
        %3381 = vmatprep.subr.mxu0 0.0
        %3382 = vmatpush2.xpose.msra.mxu0 0.0
        %3383 = vmatprep.subr.mxu0 0.0
        %3384 = vmatpush2.xpose.msra.mxu0 0.0
        %3385 = vmatprep.subr.mxu0 0.0
        %3386 = vmatpush2.xpose.msra.mxu0 0.0
        %3387 = vmatprep.subr.mxu0 0.0
        %3388 = vmatpush2.xpose.msra.mxu0 0.0
        %3389 = vmatprep.subr.mxu0 0.0
        %3390 = vmatpush2.xpose.msra.mxu0 0.0
        %3391 = vmatprep.subr.mxu0 0.0
        %3392 = vmatpush2.xpose.msra.mxu0 0.0
        %3393 = vmatprep.mubr.f32.mxu0 0.0
        %3394 = vmatmul.mubr.f32.gmra.mxu0 %v3321
        %v3395 = vpop.f32.mrf.mxu0
        %v3396 = vadd.f32 0.0, %v3395
        %v3397 = vpop.f32.mrf.mxu0
        %3398 = vmatprep.mubr.f32.mxu0 0.0
        %3399 = vmatmul.mubr.f32.gmra.mxu0 %v3323
        %v3400 = vpop.f32.mrf.mxu0
        %v3401 = vadd.f32 0.0, %v3400
        %v3402 = vpop.f32.mrf.mxu0
        %3403 = vdwg.mxu0
        %v3404 = vsel %vm1605, %v3279, 0
        %v3406 = vsel %vm1605, %v3281, 0
        %v3408 = vsel %vm1605, %v3293, 0
        %v3410 = vsel %vm1605, %v3295, 0
        %3412 = vmatprep.subr.mxu0 0.0
        %3413 = vmatpush1.xpose.msra.mxu0 0.0
        %3414 = vmatprep.subr.mxu0 0.0
        %3415 = vmatpush1.xpose.msra.mxu0 0.0
        %3416 = vmatprep.subr.mxu0 0.0
        %3417 = vmatpush1.xpose.msra.mxu0 0.0
        %3418 = vmatprep.subr.mxu0 0.0
        %3419 = vmatpush1.xpose.msra.mxu0 0.0
        %3420 = vmatprep.subr.mxu0 0.0
        %3421 = vmatpush1.xpose.msra.mxu0 0.0
        %3422 = vmatprep.subr.mxu0 0.0
        %3423 = vmatpush1.xpose.msra.mxu0 0.0
        %3424 = vmatprep.subr.mxu0 0.0
        %3425 = vmatpush1.xpose.msra.mxu0 0.0
        %3426 = vmatprep.subr.mxu0 0.0
        %3427 = vmatpush1.xpose.msra.mxu0 0.0
        %3428 = vmatprep.subr.mxu0 0.0
        %3429 = vmatpush1.xpose.msra.mxu0 0.0
        %3430 = vmatprep.subr.mxu0 0.0
        %3431 = vmatpush1.xpose.msra.mxu0 0.0
        %3432 = vmatprep.subr.mxu0 0.0
        %3433 = vmatpush1.xpose.msra.mxu0 0.0
        %3434 = vmatprep.subr.mxu0 0.0
        %3435 = vmatpush1.xpose.msra.mxu0 0.0
        %3436 = vmatprep.subr.mxu0 0.0
        %3437 = vmatpush1.xpose.msra.mxu0 0.0
        %3438 = vmatprep.subr.mxu0 0.0
        %3439 = vmatpush1.xpose.msra.mxu0 0.0
        %3440 = vmatprep.subr.mxu0 0.0
        %3441 = vmatpush1.xpose.msra.mxu0 %v3410
        %3442 = vmatprep.subr.mxu0 0.0
        %3443 = vmatpush1.xpose.msra.mxu0 %v3408
        %3444 = vmatprep.subr.mxu0 0.0
        %3445 = vmatpush2.xpose.msra.mxu0 0.0
        %3446 = vmatprep.subr.mxu0 0.0
        %3447 = vmatpush2.xpose.msra.mxu0 0.0
        %3448 = vmatprep.subr.mxu0 0.0
        %3449 = vmatpush2.xpose.msra.mxu0 0.0
        %3450 = vmatprep.subr.mxu0 0.0
        %3451 = vmatpush2.xpose.msra.mxu0 0.0
        %3452 = vmatprep.subr.mxu0 0.0
        %3453 = vmatpush2.xpose.msra.mxu0 0.0
        %3454 = vmatprep.subr.mxu0 0.0
        %3455 = vmatpush2.xpose.msra.mxu0 0.0
        %3456 = vmatprep.subr.mxu0 0.0
        %3457 = vmatpush2.xpose.msra.mxu0 0.0
        %3458 = vmatprep.subr.mxu0 0.0
        %3459 = vmatpush2.xpose.msra.mxu0 0.0
        %3460 = vmatprep.subr.mxu0 0.0
        %3461 = vmatpush2.xpose.msra.mxu0 0.0
        %3462 = vmatprep.subr.mxu0 0.0
        %3463 = vmatpush2.xpose.msra.mxu0 0.0
        %3464 = vmatprep.subr.mxu0 0.0
        %3465 = vmatpush2.xpose.msra.mxu0 0.0
        %3466 = vmatprep.subr.mxu0 0.0
        %3467 = vmatpush2.xpose.msra.mxu0 0.0
        %3468 = vmatprep.subr.mxu0 0.0
        %3469 = vmatpush2.xpose.msra.mxu0 0.0
        %3470 = vmatprep.subr.mxu0 0.0
        %3471 = vmatpush2.xpose.msra.mxu0 0.0
        %3472 = vmatprep.subr.mxu0 0.0
        %3473 = vmatpush2.xpose.msra.mxu0 0.0
        %3474 = vmatprep.subr.mxu0 0.0
        %3475 = vmatpush2.xpose.msra.mxu0 0.0
        %3476 = vmatprep.mubr.f32.mxu0 0.0
        %3477 = vmatmul.mubr.f32.gmra.mxu0 %v3404
        %v3478 = vpop.f32.mrf.mxu0
        %v3479 = vadd.f32 0.0, %v3478
        %v3480 = vpop.f32.mrf.mxu0
        %3481 = vmatprep.mubr.f32.mxu0 0.0
        %3482 = vmatmul.mubr.f32.gmra.mxu0 %v3406
        %v3483 = vpop.f32.mrf.mxu0
        %v3484 = vadd.f32 0.0, %v3483
        %v3485 = vpop.f32.mrf.mxu0
        %3486 = vdwg.mxu0
        %v3487 = vsel %vm1605, %v3283, 0
        %v3489 = vsel %vm1605, %v3285, 0
        %v3491 = vsel %vm1605, %v3297, 0
        %v3493 = vsel %vm1605, %v3299, 0
        %3495 = vmatprep.subr.mxu0 0.0
        %3496 = vmatpush1.xpose.msra.mxu0 0.0
        %3497 = vmatprep.subr.mxu0 0.0
        %3498 = vmatpush1.xpose.msra.mxu0 0.0
        %3499 = vmatprep.subr.mxu0 0.0
        %3500 = vmatpush1.xpose.msra.mxu0 0.0
        %3501 = vmatprep.subr.mxu0 0.0
        %3502 = vmatpush1.xpose.msra.mxu0 0.0
        %3503 = vmatprep.subr.mxu0 0.0
        %3504 = vmatpush1.xpose.msra.mxu0 0.0
        %3505 = vmatprep.subr.mxu0 0.0
        %3506 = vmatpush1.xpose.msra.mxu0 0.0
        %3507 = vmatprep.subr.mxu0 0.0
        %3508 = vmatpush1.xpose.msra.mxu0 0.0
        %3509 = vmatprep.subr.mxu0 0.0
        %3510 = vmatpush1.xpose.msra.mxu0 0.0
        %3511 = vmatprep.subr.mxu0 0.0
        %3512 = vmatpush1.xpose.msra.mxu0 0.0
        %3513 = vmatprep.subr.mxu0 0.0
        %3514 = vmatpush1.xpose.msra.mxu0 0.0
        %3515 = vmatprep.subr.mxu0 0.0
        %3516 = vmatpush1.xpose.msra.mxu0 0.0
        %3517 = vmatprep.subr.mxu0 0.0
        %3518 = vmatpush1.xpose.msra.mxu0 0.0
        %3519 = vmatprep.subr.mxu0 0.0
        %3520 = vmatpush1.xpose.msra.mxu0 0.0
        %3521 = vmatprep.subr.mxu0 0.0
        %3522 = vmatpush1.xpose.msra.mxu0 0.0
        %3523 = vmatprep.subr.mxu0 0.0
        %3524 = vmatpush1.xpose.msra.mxu0 %v3493
        %3525 = vmatprep.subr.mxu0 0.0
        %3526 = vmatpush1.xpose.msra.mxu0 %v3491
        %3527 = vmatprep.subr.mxu0 0.0
        %3528 = vmatpush2.xpose.msra.mxu0 0.0
        %3529 = vmatprep.subr.mxu0 0.0
        %3530 = vmatpush2.xpose.msra.mxu0 0.0
        %3531 = vmatprep.subr.mxu0 0.0
        %3532 = vmatpush2.xpose.msra.mxu0 0.0
        %3533 = vmatprep.subr.mxu0 0.0
        %3534 = vmatpush2.xpose.msra.mxu0 0.0
        %3535 = vmatprep.subr.mxu0 0.0
        %3536 = vmatpush2.xpose.msra.mxu0 0.0
        %3537 = vmatprep.subr.mxu0 0.0
        %3538 = vmatpush2.xpose.msra.mxu0 0.0
        %3539 = vmatprep.subr.mxu0 0.0
        %3540 = vmatpush2.xpose.msra.mxu0 0.0
        %3541 = vmatprep.subr.mxu0 0.0
        %3542 = vmatpush2.xpose.msra.mxu0 0.0
        %3543 = vmatprep.subr.mxu0 0.0
        %3544 = vmatpush2.xpose.msra.mxu0 0.0
        %3545 = vmatprep.subr.mxu0 0.0
        %3546 = vmatpush2.xpose.msra.mxu0 0.0
        %3547 = vmatprep.subr.mxu0 0.0
        %3548 = vmatpush2.xpose.msra.mxu0 0.0
        %3549 = vmatprep.subr.mxu0 0.0
        %3550 = vmatpush2.xpose.msra.mxu0 0.0
        %3551 = vmatprep.subr.mxu0 0.0
        %3552 = vmatpush2.xpose.msra.mxu0 0.0
        %3553 = vmatprep.subr.mxu0 0.0
        %3554 = vmatpush2.xpose.msra.mxu0 0.0
        %3555 = vmatprep.subr.mxu0 0.0
        %3556 = vmatpush2.xpose.msra.mxu0 0.0
        %3557 = vmatprep.subr.mxu0 0.0
        %3558 = vmatpush2.xpose.msra.mxu0 0.0
        %3559 = vmatprep.mubr.f32.mxu0 0.0
        %3560 = vmatmul.mubr.f32.gmra.mxu0 %v3487
        %v3561 = vpop.f32.mrf.mxu0
        %v3562 = vadd.f32 0.0, %v3561
        %v3563 = vpop.f32.mrf.mxu0
        %3564 = vmatprep.mubr.f32.mxu0 0.0
        %3565 = vmatmul.mubr.f32.gmra.mxu0 %v3489
        %v3566 = vpop.f32.mrf.mxu0
        %v3567 = vadd.f32 0.0, %v3566
        %v3568 = vpop.f32.mrf.mxu0
        %3569 = vdwg.mxu0
        %v3570 = vsel %vm1605, %v3287, 0
        %v3572 = vsel %vm1605, %v3289, 0
        %v3574 = vsel %vm1605, %v3301, 0
        %v3576 = vsel %vm1605, %v3303, 0
        %3578 = vmatprep.subr.mxu0 0.0
        %3579 = vmatpush1.xpose.msra.mxu0 0.0
        %3580 = vmatprep.subr.mxu0 0.0
        %3581 = vmatpush1.xpose.msra.mxu0 0.0
        %3582 = vmatprep.subr.mxu0 0.0
        %3583 = vmatpush1.xpose.msra.mxu0 0.0
        %3584 = vmatprep.subr.mxu0 0.0
        %3585 = vmatpush1.xpose.msra.mxu0 0.0
        %3586 = vmatprep.subr.mxu0 0.0
        %3587 = vmatpush1.xpose.msra.mxu0 0.0
        %3588 = vmatprep.subr.mxu0 0.0
        %3589 = vmatpush1.xpose.msra.mxu0 0.0
        %3590 = vmatprep.subr.mxu0 0.0
        %3591 = vmatpush1.xpose.msra.mxu0 0.0
        %3592 = vmatprep.subr.mxu0 0.0
        %3593 = vmatpush1.xpose.msra.mxu0 0.0
        %3594 = vmatprep.subr.mxu0 0.0
        %3595 = vmatpush1.xpose.msra.mxu0 0.0
        %3596 = vmatprep.subr.mxu0 0.0
        %3597 = vmatpush1.xpose.msra.mxu0 0.0
        %3598 = vmatprep.subr.mxu0 0.0
        %3599 = vmatpush1.xpose.msra.mxu0 0.0
        %3600 = vmatprep.subr.mxu0 0.0
        %3601 = vmatpush1.xpose.msra.mxu0 0.0
        %3602 = vmatprep.subr.mxu0 0.0
        %3603 = vmatpush1.xpose.msra.mxu0 0.0
        %3604 = vmatprep.subr.mxu0 0.0
        %3605 = vmatpush1.xpose.msra.mxu0 0.0
        %3606 = vmatprep.subr.mxu0 0.0
        %3607 = vmatpush1.xpose.msra.mxu0 %v3576
        %3608 = vmatprep.subr.mxu0 0.0
        %3609 = vmatpush1.xpose.msra.mxu0 %v3574
        %3610 = vmatprep.subr.mxu0 0.0
        %3611 = vmatpush2.xpose.msra.mxu0 0.0
        %3612 = vmatprep.subr.mxu0 0.0
        %3613 = vmatpush2.xpose.msra.mxu0 0.0
        %3614 = vmatprep.subr.mxu0 0.0
        %3615 = vmatpush2.xpose.msra.mxu0 0.0
        %3616 = vmatprep.subr.mxu0 0.0
        %3617 = vmatpush2.xpose.msra.mxu0 0.0
        %3618 = vmatprep.subr.mxu0 0.0
        %3619 = vmatpush2.xpose.msra.mxu0 0.0
        %3620 = vmatprep.subr.mxu0 0.0
        %3621 = vmatpush2.xpose.msra.mxu0 0.0
        %3622 = vmatprep.subr.mxu0 0.0
        %3623 = vmatpush2.xpose.msra.mxu0 0.0
        %3624 = vmatprep.subr.mxu0 0.0
        %3625 = vmatpush2.xpose.msra.mxu0 0.0
        %3626 = vmatprep.subr.mxu0 0.0
        %3627 = vmatpush2.xpose.msra.mxu0 0.0
        %3628 = vmatprep.subr.mxu0 0.0
        %3629 = vmatpush2.xpose.msra.mxu0 0.0
        %3630 = vmatprep.subr.mxu0 0.0
        %3631 = vmatpush2.xpose.msra.mxu0 0.0
        %3632 = vmatprep.subr.mxu0 0.0
        %3633 = vmatpush2.xpose.msra.mxu0 0.0
        %3634 = vmatprep.subr.mxu0 0.0
        %3635 = vmatpush2.xpose.msra.mxu0 0.0
        %3636 = vmatprep.subr.mxu0 0.0
        %3637 = vmatpush2.xpose.msra.mxu0 0.0
        %3638 = vmatprep.subr.mxu0 0.0
        %3639 = vmatpush2.xpose.msra.mxu0 0.0
        %3640 = vmatprep.subr.mxu0 0.0
        %3641 = vmatpush2.xpose.msra.mxu0 0.0
        %3642 = vmatprep.mubr.f32.mxu0 0.0
        %3643 = vmatmul.mubr.f32.gmra.mxu0 %v3570
        %v3644 = vpop.f32.mrf.mxu0
        %v3645 = vadd.f32 0.0, %v3644
        %v3646 = vpop.f32.mrf.mxu0
        %3647 = vmatprep.mubr.f32.mxu0 0.0
        %3648 = vmatmul.mubr.f32.gmra.mxu0 %v3572
        %v3649 = vpop.f32.mrf.mxu0
        %v3650 = vadd.f32 0.0, %v3649
        %v3651 = vpop.f32.mrf.mxu0
        %3652 = vdwg.mxu0
        %v3653 = vmul.f32 %v3396, 0.17677669
        %v3654 = vmul.f32 %v3401, 0.17677669
        %v3655 = vmul.f32 %v3479, 0.17677669
        %v3656 = vmul.f32 %v3484, 0.17677669
        %v3657 = vmul.f32 %v3562, 0.17677669
        %v3658 = vmul.f32 %v3567, 0.17677669
        %v3659 = vmul.f32 %v3645, 0.17677669
        %v3660 = vmul.f32 %v3650, 0.17677669
        %v3661 = vsel %vm1946, %v3653, -inf
        %3662 = vmax.xlane.f32.xlu0 %v3661
        %v3663 = vpop.xlane.xlu0 %3662
        %v3664 = vsel %vm1950, %v3654, -inf
        %3665 = vmax.xlane.f32.xlu0 %v3664
        %v3666 = vpop.xlane.xlu0 %3665
        %v3667 = vsel %vm1946, %v3655, -inf
        %3668 = vmax.xlane.f32.xlu0 %v3667
        %v3669 = vpop.xlane.xlu0 %3668
        %v3670 = vsel %vm1950, %v3656, -inf
        %3671 = vmax.xlane.f32.xlu0 %v3670
        %v3672 = vpop.xlane.xlu0 %3671
        %v3673 = vsel %vm1946, %v3657, -inf
        %3674 = vmax.xlane.f32.xlu0 %v3673
        %v3675 = vpop.xlane.xlu0 %3674
        %v3676 = vsel %vm1950, %v3658, -inf
        %3677 = vmax.xlane.f32.xlu0 %v3676
        %v3678 = vpop.xlane.xlu0 %3677
        %v3679 = vsel %vm1946, %v3659, -inf
        %3680 = vmax.xlane.f32.xlu0 %v3679
        %v3681 = vpop.xlane.xlu0 %3680
        %v3682 = vsel %vm1950, %v3660, -inf
        %3683 = vmax.xlane.f32.xlu0 %v3682
        %v3684 = vpop.xlane.xlu0 %3683
        %v3685 = vsub.f32 %v3653, %v3663
        %v3686 = vsub.f32 %v3654, %v3666
        %v3687 = vsub.f32 %v3655, %v3669
        %v3688 = vsub.f32 %v3656, %v3672
        %v3689 = vsub.f32 %v3657, %v3675
        %v3690 = vsub.f32 %v3658, %v3678
        %v3691 = vsub.f32 %v3659, %v3681
        %v3692 = vsub.f32 %v3660, %v3684
        %v3693 = vmul.f32 %v3685, 1.442695
        %v3694 = vpow.pop %v3693
        %v3695 = vmul.f32 %v3686, 1.442695
        %v3696 = vpow.pop %v3695
        %v3697 = vmul.f32 %v3687, 1.442695
        %v3698 = vpow.pop %v3697
        %v3699 = vmul.f32 %v3688, 1.442695
        %v3700 = vpow.pop %v3699
        %v3701 = vmul.f32 %v3689, 1.442695
        %v3702 = vpow.pop %v3701
        %v3703 = vmul.f32 %v3690, 1.442695
        %v3704 = vpow.pop %v3703
        %v3705 = vmul.f32 %v3691, 1.442695
        %v3706 = vpow.pop %v3705
        %v3707 = vmul.f32 %v3692, 1.442695
        %v3708 = vpow.pop %v3707
        %v3709 = vsel %vm1946, %v3694, 0.0
        %3710 = vadd.xlane.f32.xlu0 %v3709
        %v3711 = vpop.xlane.xlu0 %3710
        %v3712 = vsel %vm1950, %v3696, 0.0
        %3713 = vadd.xlane.f32.xlu0 %v3712
        %v3714 = vpop.xlane.xlu0 %3713
        %v3715 = vsel %vm1946, %v3698, 0.0
        %3716 = vadd.xlane.f32.xlu0 %v3715
        %v3717 = vpop.xlane.xlu0 %3716
        %v3718 = vsel %vm1950, %v3700, 0.0
        %3719 = vadd.xlane.f32.xlu0 %v3718
        %v3720 = vpop.xlane.xlu0 %3719
        %v3721 = vsel %vm1946, %v3702, 0.0
        %3722 = vadd.xlane.f32.xlu0 %v3721
        %v3723 = vpop.xlane.xlu0 %3722
        %v3724 = vsel %vm1950, %v3704, 0.0
        %3725 = vadd.xlane.f32.xlu0 %v3724
        %v3726 = vpop.xlane.xlu0 %3725
        %v3727 = vsel %vm1946, %v3706, 0.0
        %3728 = vadd.xlane.f32.xlu0 %v3727
        %v3729 = vpop.xlane.xlu0 %3728
        %v3730 = vsel %vm1950, %v3708, 0.0
        %3731 = vadd.xlane.f32.xlu0 %v3730
        %v3732 = vpop.xlane.xlu0 %3731
        %v3733 = vrcp.pop %v3711
        %v3734 = vmul.f32 %v3694, %v3733
        %v3735 = vrcp.pop %v3714
        %v3736 = vmul.f32 %v3696, %v3735
        %v3737 = vrcp.pop %v3717
        %v3738 = vmul.f32 %v3698, %v3737
        %v3739 = vrcp.pop %v3720
        %v3740 = vmul.f32 %v3700, %v3739
        %v3741 = vrcp.pop %v3723
        %v3742 = vmul.f32 %v3702, %v3741
        %v3743 = vrcp.pop %v3726
        %v3744 = vmul.f32 %v3704, %v3743
        %v3745 = vrcp.pop %v3729
        %v3746 = vmul.f32 %v3706, %v3745
        %v3747 = vrcp.pop %v3732
        %v3748 = vmul.f32 %v3708, %v3747
        %v3750 = vsel %vm1946, %v3734, 0
        %v3753 = vsel %vm1946, %v3736, 0
        %v3755 = vsel %vm2042, %v3273, 0
        %3757 = vmatprep.subr.mxu0 0.0
        %3758 = vmatpush1.msra.mxu0 0.0
        %3759 = vmatprep.subr.mxu0 0.0
        %3760 = vmatpush1.msra.mxu0 0.0
        %3761 = vmatprep.subr.mxu0 0.0
        %3762 = vmatpush1.msra.mxu0 0.0
        %3763 = vmatprep.subr.mxu0 0.0
        %3764 = vmatpush1.msra.mxu0 0.0
        %3765 = vmatprep.subr.mxu0 0.0
        %3766 = vmatpush1.msra.mxu0 0.0
        %3767 = vmatprep.subr.mxu0 0.0
        %3768 = vmatpush1.msra.mxu0 0.0
        %3769 = vmatprep.subr.mxu0 0.0
        %3770 = vmatpush1.msra.mxu0 0.0
        %3771 = vmatprep.subr.mxu0 0.0
        %3772 = vmatpush1.msra.mxu0 0.0
        %3773 = vmatprep.subr.mxu0 0.0
        %3774 = vmatpush1.msra.mxu0 0.0
        %3775 = vmatprep.subr.mxu0 0.0
        %3776 = vmatpush1.msra.mxu0 0.0
        %3777 = vmatprep.subr.mxu0 0.0
        %3778 = vmatpush1.msra.mxu0 0.0
        %3779 = vmatprep.subr.mxu0 0.0
        %3780 = vmatpush1.msra.mxu0 0.0
        %3781 = vmatprep.subr.mxu0 0.0
        %3782 = vmatpush1.msra.mxu0 0.0
        %3783 = vmatprep.subr.mxu0 0.0
        %3784 = vmatpush1.msra.mxu0 0.0
        %3785 = vmatprep.subr.mxu0 0.0
        %3786 = vmatpush1.msra.mxu0 %v3755
        %3787 = vmatprep.subr.mxu0 0.0
        %3788 = vmatpush1.msra.mxu0 %v3268
        %3789 = vmatprep.subr.mxu0 0.0
        %3790 = vmatpush2.msra.mxu0 0.0
        %3791 = vmatprep.subr.mxu0 0.0
        %3792 = vmatpush2.msra.mxu0 0.0
        %3793 = vmatprep.subr.mxu0 0.0
        %3794 = vmatpush2.msra.mxu0 0.0
        %3795 = vmatprep.subr.mxu0 0.0
        %3796 = vmatpush2.msra.mxu0 0.0
        %3797 = vmatprep.subr.mxu0 0.0
        %3798 = vmatpush2.msra.mxu0 0.0
        %3799 = vmatprep.subr.mxu0 0.0
        %3800 = vmatpush2.msra.mxu0 0.0
        %3801 = vmatprep.subr.mxu0 0.0
        %3802 = vmatpush2.msra.mxu0 0.0
        %3803 = vmatprep.subr.mxu0 0.0
        %3804 = vmatpush2.msra.mxu0 0.0
        %3805 = vmatprep.subr.mxu0 0.0
        %3806 = vmatpush2.msra.mxu0 0.0
        %3807 = vmatprep.subr.mxu0 0.0
        %3808 = vmatpush2.msra.mxu0 0.0
        %3809 = vmatprep.subr.mxu0 0.0
        %3810 = vmatpush2.msra.mxu0 0.0
        %3811 = vmatprep.subr.mxu0 0.0
        %3812 = vmatpush2.msra.mxu0 0.0
        %3813 = vmatprep.subr.mxu0 0.0
        %3814 = vmatpush2.msra.mxu0 0.0
        %3815 = vmatprep.subr.mxu0 0.0
        %3816 = vmatpush2.msra.mxu0 0.0
        %3817 = vmatprep.subr.mxu0 0.0
        %3818 = vmatpush2.msra.mxu0 0.0
        %3819 = vmatprep.subr.mxu0 0.0
        %3820 = vmatpush2.msra.mxu0 0.0
        %3821 = vmatprep.mubr.f32.mxu0 0.0
        %3822 = vmatmul.mubr.f32.gmra.mxu0 %v3750
        %v3823 = vpop.f32.mrf.mxu0
        %v3824 = vadd.f32 0.0, %v3823
        %v3825 = vpop.f32.mrf.mxu0
        %3826 = vmatprep.mubr.f32.mxu0 0.0
        %3827 = vmatmul.mubr.f32.gmra.mxu0 %v3753
        %v3828 = vpop.f32.mrf.mxu0
        %v3829 = vadd.f32 0.0, %v3828
        %v3830 = vpop.f32.mrf.mxu0
        %3831 = vdwg.mxu0
        %v3833 = vsel %vm1946, %v3738, 0
        %v3836 = vsel %vm1946, %v3740, 0
        %v3838 = vsel %vm2042, %v3309, 0
        %3840 = vmatprep.subr.mxu0 0.0
        %3841 = vmatpush1.msra.mxu0 0.0
        %3842 = vmatprep.subr.mxu0 0.0
        %3843 = vmatpush1.msra.mxu0 0.0
        %3844 = vmatprep.subr.mxu0 0.0
        %3845 = vmatpush1.msra.mxu0 0.0
        %3846 = vmatprep.subr.mxu0 0.0
        %3847 = vmatpush1.msra.mxu0 0.0
        %3848 = vmatprep.subr.mxu0 0.0
        %3849 = vmatpush1.msra.mxu0 0.0
        %3850 = vmatprep.subr.mxu0 0.0
        %3851 = vmatpush1.msra.mxu0 0.0
        %3852 = vmatprep.subr.mxu0 0.0
        %3853 = vmatpush1.msra.mxu0 0.0
        %3854 = vmatprep.subr.mxu0 0.0
        %3855 = vmatpush1.msra.mxu0 0.0
        %3856 = vmatprep.subr.mxu0 0.0
        %3857 = vmatpush1.msra.mxu0 0.0
        %3858 = vmatprep.subr.mxu0 0.0
        %3859 = vmatpush1.msra.mxu0 0.0
        %3860 = vmatprep.subr.mxu0 0.0
        %3861 = vmatpush1.msra.mxu0 0.0
        %3862 = vmatprep.subr.mxu0 0.0
        %3863 = vmatpush1.msra.mxu0 0.0
        %3864 = vmatprep.subr.mxu0 0.0
        %3865 = vmatpush1.msra.mxu0 0.0
        %3866 = vmatprep.subr.mxu0 0.0
        %3867 = vmatpush1.msra.mxu0 0.0
        %3868 = vmatprep.subr.mxu0 0.0
        %3869 = vmatpush1.msra.mxu0 %v3838
        %3870 = vmatprep.subr.mxu0 0.0
        %3871 = vmatpush1.msra.mxu0 %v3307
        %3872 = vmatprep.subr.mxu0 0.0
        %3873 = vmatpush2.msra.mxu0 0.0
        %3874 = vmatprep.subr.mxu0 0.0
        %3875 = vmatpush2.msra.mxu0 0.0
        %3876 = vmatprep.subr.mxu0 0.0
        %3877 = vmatpush2.msra.mxu0 0.0
        %3878 = vmatprep.subr.mxu0 0.0
        %3879 = vmatpush2.msra.mxu0 0.0
        %3880 = vmatprep.subr.mxu0 0.0
        %3881 = vmatpush2.msra.mxu0 0.0
        %3882 = vmatprep.subr.mxu0 0.0
        %3883 = vmatpush2.msra.mxu0 0.0
        %3884 = vmatprep.subr.mxu0 0.0
        %3885 = vmatpush2.msra.mxu0 0.0
        %3886 = vmatprep.subr.mxu0 0.0
        %3887 = vmatpush2.msra.mxu0 0.0
        %3888 = vmatprep.subr.mxu0 0.0
        %3889 = vmatpush2.msra.mxu0 0.0
        %3890 = vmatprep.subr.mxu0 0.0
        %3891 = vmatpush2.msra.mxu0 0.0
        %3892 = vmatprep.subr.mxu0 0.0
        %3893 = vmatpush2.msra.mxu0 0.0
        %3894 = vmatprep.subr.mxu0 0.0
        %3895 = vmatpush2.msra.mxu0 0.0
        %3896 = vmatprep.subr.mxu0 0.0
        %3897 = vmatpush2.msra.mxu0 0.0
        %3898 = vmatprep.subr.mxu0 0.0
        %3899 = vmatpush2.msra.mxu0 0.0
        %3900 = vmatprep.subr.mxu0 0.0
        %3901 = vmatpush2.msra.mxu0 0.0
        %3902 = vmatprep.subr.mxu0 0.0
        %3903 = vmatpush2.msra.mxu0 0.0
        %3904 = vmatprep.mubr.f32.mxu0 0.0
        %3905 = vmatmul.mubr.f32.gmra.mxu0 %v3833
        %v3906 = vpop.f32.mrf.mxu0
        %v3907 = vadd.f32 0.0, %v3906
        %v3908 = vpop.f32.mrf.mxu0
        %3909 = vmatprep.mubr.f32.mxu0 0.0
        %3910 = vmatmul.mubr.f32.gmra.mxu0 %v3836
        %v3911 = vpop.f32.mrf.mxu0
        %v3912 = vadd.f32 0.0, %v3911
        %v3913 = vpop.f32.mrf.mxu0
        %3914 = vdwg.mxu0
        %v3916 = vsel %vm1946, %v3742, 0
        %v3919 = vsel %vm1946, %v3744, 0
        %v3921 = vsel %vm2042, %v3314, 0
        %3923 = vmatprep.subr.mxu0 0.0
        %3924 = vmatpush1.msra.mxu0 0.0
        %3925 = vmatprep.subr.mxu0 0.0
        %3926 = vmatpush1.msra.mxu0 0.0
        %3927 = vmatprep.subr.mxu0 0.0
        %3928 = vmatpush1.msra.mxu0 0.0
        %3929 = vmatprep.subr.mxu0 0.0
        %3930 = vmatpush1.msra.mxu0 0.0
        %3931 = vmatprep.subr.mxu0 0.0
        %3932 = vmatpush1.msra.mxu0 0.0
        %3933 = vmatprep.subr.mxu0 0.0
        %3934 = vmatpush1.msra.mxu0 0.0
        %3935 = vmatprep.subr.mxu0 0.0
        %3936 = vmatpush1.msra.mxu0 0.0
        %3937 = vmatprep.subr.mxu0 0.0
        %3938 = vmatpush1.msra.mxu0 0.0
        %3939 = vmatprep.subr.mxu0 0.0
        %3940 = vmatpush1.msra.mxu0 0.0
        %3941 = vmatprep.subr.mxu0 0.0
        %3942 = vmatpush1.msra.mxu0 0.0
        %3943 = vmatprep.subr.mxu0 0.0
        %3944 = vmatpush1.msra.mxu0 0.0
        %3945 = vmatprep.subr.mxu0 0.0
        %3946 = vmatpush1.msra.mxu0 0.0
        %3947 = vmatprep.subr.mxu0 0.0
        %3948 = vmatpush1.msra.mxu0 0.0
        %3949 = vmatprep.subr.mxu0 0.0
        %3950 = vmatpush1.msra.mxu0 0.0
        %3951 = vmatprep.subr.mxu0 0.0
        %3952 = vmatpush1.msra.mxu0 %v3921
        %3953 = vmatprep.subr.mxu0 0.0
        %3954 = vmatpush1.msra.mxu0 %v3312
        %3955 = vmatprep.subr.mxu0 0.0
        %3956 = vmatpush2.msra.mxu0 0.0
        %3957 = vmatprep.subr.mxu0 0.0
        %3958 = vmatpush2.msra.mxu0 0.0
        %3959 = vmatprep.subr.mxu0 0.0
        %3960 = vmatpush2.msra.mxu0 0.0
        %3961 = vmatprep.subr.mxu0 0.0
        %3962 = vmatpush2.msra.mxu0 0.0
        %3963 = vmatprep.subr.mxu0 0.0
        %3964 = vmatpush2.msra.mxu0 0.0
        %3965 = vmatprep.subr.mxu0 0.0
        %3966 = vmatpush2.msra.mxu0 0.0
        %3967 = vmatprep.subr.mxu0 0.0
        %3968 = vmatpush2.msra.mxu0 0.0
        %3969 = vmatprep.subr.mxu0 0.0
        %3970 = vmatpush2.msra.mxu0 0.0
        %3971 = vmatprep.subr.mxu0 0.0
        %3972 = vmatpush2.msra.mxu0 0.0
        %3973 = vmatprep.subr.mxu0 0.0
        %3974 = vmatpush2.msra.mxu0 0.0
        %3975 = vmatprep.subr.mxu0 0.0
        %3976 = vmatpush2.msra.mxu0 0.0
        %3977 = vmatprep.subr.mxu0 0.0
        %3978 = vmatpush2.msra.mxu0 0.0
        %3979 = vmatprep.subr.mxu0 0.0
        %3980 = vmatpush2.msra.mxu0 0.0
        %3981 = vmatprep.subr.mxu0 0.0
        %3982 = vmatpush2.msra.mxu0 0.0
        %3983 = vmatprep.subr.mxu0 0.0
        %3984 = vmatpush2.msra.mxu0 0.0
        %3985 = vmatprep.subr.mxu0 0.0
        %3986 = vmatpush2.msra.mxu0 0.0
        %3987 = vmatprep.mubr.f32.mxu0 0.0
        %3988 = vmatmul.mubr.f32.gmra.mxu0 %v3916
        %v3989 = vpop.f32.mrf.mxu0
        %v3990 = vadd.f32 0.0, %v3989
        %v3991 = vpop.f32.mrf.mxu0
        %3992 = vmatprep.mubr.f32.mxu0 0.0
        %3993 = vmatmul.mubr.f32.gmra.mxu0 %v3919
        %v3994 = vpop.f32.mrf.mxu0
        %v3995 = vadd.f32 0.0, %v3994
        %v3996 = vpop.f32.mrf.mxu0
        %3997 = vdwg.mxu0
        %v3999 = vsel %vm1946, %v3746, 0
        %v4002 = vsel %vm1946, %v3748, 0
        %v4004 = vsel %vm2042, %v3319, 0
        %4006 = vmatprep.subr.mxu0 0.0
        %4007 = vmatpush1.msra.mxu0 0.0
        %4008 = vmatprep.subr.mxu0 0.0
        %4009 = vmatpush1.msra.mxu0 0.0
        %4010 = vmatprep.subr.mxu0 0.0
        %4011 = vmatpush1.msra.mxu0 0.0
        %4012 = vmatprep.subr.mxu0 0.0
        %4013 = vmatpush1.msra.mxu0 0.0
        %4014 = vmatprep.subr.mxu0 0.0
        %4015 = vmatpush1.msra.mxu0 0.0
        %4016 = vmatprep.subr.mxu0 0.0
        %4017 = vmatpush1.msra.mxu0 0.0
        %4018 = vmatprep.subr.mxu0 0.0
        %4019 = vmatpush1.msra.mxu0 0.0
        %4020 = vmatprep.subr.mxu0 0.0
        %4021 = vmatpush1.msra.mxu0 0.0
        %4022 = vmatprep.subr.mxu0 0.0
        %4023 = vmatpush1.msra.mxu0 0.0
        %4024 = vmatprep.subr.mxu0 0.0
        %4025 = vmatpush1.msra.mxu0 0.0
        %4026 = vmatprep.subr.mxu0 0.0
        %4027 = vmatpush1.msra.mxu0 0.0
        %4028 = vmatprep.subr.mxu0 0.0
        %4029 = vmatpush1.msra.mxu0 0.0
        %4030 = vmatprep.subr.mxu0 0.0
        %4031 = vmatpush1.msra.mxu0 0.0
        %4032 = vmatprep.subr.mxu0 0.0
        %4033 = vmatpush1.msra.mxu0 0.0
        %4034 = vmatprep.subr.mxu0 0.0
        %4035 = vmatpush1.msra.mxu0 %v4004
        %4036 = vmatprep.subr.mxu0 0.0
        %4037 = vmatpush1.msra.mxu0 %v3317
        %4038 = vmatprep.subr.mxu0 0.0
        %4039 = vmatpush2.msra.mxu0 0.0
        %4040 = vmatprep.subr.mxu0 0.0
        %4041 = vmatpush2.msra.mxu0 0.0
        %4042 = vmatprep.subr.mxu0 0.0
        %4043 = vmatpush2.msra.mxu0 0.0
        %4044 = vmatprep.subr.mxu0 0.0
        %4045 = vmatpush2.msra.mxu0 0.0
        %4046 = vmatprep.subr.mxu0 0.0
        %4047 = vmatpush2.msra.mxu0 0.0
        %4048 = vmatprep.subr.mxu0 0.0
        %4049 = vmatpush2.msra.mxu0 0.0
        %4050 = vmatprep.subr.mxu0 0.0
        %4051 = vmatpush2.msra.mxu0 0.0
        %4052 = vmatprep.subr.mxu0 0.0
        %4053 = vmatpush2.msra.mxu0 0.0
        %4054 = vmatprep.subr.mxu0 0.0
        %4055 = vmatpush2.msra.mxu0 0.0
        %4056 = vmatprep.subr.mxu0 0.0
        %4057 = vmatpush2.msra.mxu0 0.0
        %4058 = vmatprep.subr.mxu0 0.0
        %4059 = vmatpush2.msra.mxu0 0.0
        %4060 = vmatprep.subr.mxu0 0.0
        %4061 = vmatpush2.msra.mxu0 0.0
        %4062 = vmatprep.subr.mxu0 0.0
        %4063 = vmatpush2.msra.mxu0 0.0
        %4064 = vmatprep.subr.mxu0 0.0
        %4065 = vmatpush2.msra.mxu0 0.0
        %4066 = vmatprep.subr.mxu0 0.0
        %4067 = vmatpush2.msra.mxu0 0.0
        %4068 = vmatprep.subr.mxu0 0.0
        %4069 = vmatpush2.msra.mxu0 0.0
        %4070 = vmatprep.mubr.f32.mxu0 0.0
        %4071 = vmatmul.mubr.f32.gmra.mxu0 %v3999
        %v4072 = vpop.f32.mrf.mxu0
        %v4073 = vadd.f32 0.0, %v4072
        %v4074 = vpop.f32.mrf.mxu0
        %4075 = vmatprep.mubr.f32.mxu0 0.0
        %4076 = vmatmul.mubr.f32.gmra.mxu0 %v4002
        %v4077 = vpop.f32.mrf.mxu0
        %v4078 = vadd.f32 0.0, %v4077
        %v4079 = vpop.f32.mrf.mxu0
        %4080 = vdwg.mxu0
        %4083 = vrot.lane.b32.xlu0 %v3907, 32
        %v4084 = vpop.permute.xlu0 %4083
        %4085 = vrot.lane.b32.xlu0 %v3912, 32
        %v4086 = vpop.permute.xlu0 %4085
        %4091 = vrot.lane.b32.xlu0 %v3990, 64
        %v4092 = vpop.permute.xlu0 %4091
        %4093 = vrot.lane.b32.xlu0 %v3995, 64
        %v4094 = vpop.permute.xlu0 %4093
        %4099 = vrot.lane.b32.xlu0 %v4073, 96
        %v4100 = vpop.permute.xlu0 %4099
        %4101 = vrot.lane.b32.xlu0 %v4078, 96
        %v4102 = vpop.permute.xlu0 %4101
        %v4105 = vsel %vm1605, %v3824, %v4084
        %v4106 = vsel %vm1605, %v3829, %v4086
        %v4107 = vsel %vm2395, %v4105, %v4092
        %v4108 = vsel %vm2395, %v4106, %v4094
        %v4109 = vsel %vm2398, %v4107, %v4100
        %v4110 = vsel %vm2398, %v4108, %v4102
        %s4111 = scalar_lea.vmem [#allocation16], 128
        %v4112 = vld [vmem:[%s4111] sm:$0xff]
        %v4113 = vld [vmem:[%s4111 + $0x8] sm:$0xff]
        %v4114 = vld [vmem:[%s4111 + $0x10] sm:$0xff]
        %v4115 = vld [vmem:[%s4111 + $0x18] sm:$0xff]
        %v4116 = vld [vmem:[%s4111 + $0x20] sm:$0xff]
        %v4117 = vld [vmem:[%s4111 + $0x28] sm:$0xff]
        %v4118 = vld [vmem:[%s4111 + $0x30] sm:$0xff]
        %v4119 = vld [vmem:[%s4111 + $0x38] sm:$0xff]
        %v4120 = vld [vmem:[%s4111 + $0x40] sm:$0xff]
        %v4121 = vld [vmem:[%s4111 + $0x48] sm:$0xff]
        %v4122 = vld [vmem:[%s4111 + $0x50] sm:$0xff]
        %v4123 = vld [vmem:[%s4111 + $0x58] sm:$0xff]
        %v4124 = vld [vmem:[%s4111 + $0x60] sm:$0xff]
        %v4125 = vld [vmem:[%s4111 + $0x68] sm:$0xff]
        %v4126 = vld [vmem:[%s4111 + $0x70] sm:$0xff]
        %v4127 = vld [vmem:[%s4111 + $0x78] sm:$0xff]
        %s4128 = scalar_lea.vmem [#allocation17], 1
        %v4129 = vld [vmem:[%s4128] sm:$0x1]
        %v4131 = vlaneseq
        %v4132 = vshrl.u32 %v4131, 7
        %v4133 = vsub.s32 0, %v4132
        %v4134 = vrot.slane %v4129, %v4133
        %4136 = vmatprep.subr.mxu0 0.0
        %4137 = vmatpush1.msra.mxu0 %v4127
        %4138 = vmatprep.subr.mxu0 0.0
        %4139 = vmatpush1.msra.mxu0 %v4126
        %4140 = vmatprep.subr.mxu0 0.0
        %4141 = vmatpush1.msra.mxu0 %v4125
        %4142 = vmatprep.subr.mxu0 0.0
        %4143 = vmatpush1.msra.mxu0 %v4124
        %4144 = vmatprep.subr.mxu0 0.0
        %4145 = vmatpush1.msra.mxu0 %v4123
        %4146 = vmatprep.subr.mxu0 0.0
        %4147 = vmatpush1.msra.mxu0 %v4122
        %4148 = vmatprep.subr.mxu0 0.0
        %4149 = vmatpush1.msra.mxu0 %v4121
        %4150 = vmatprep.subr.mxu0 0.0
        %4151 = vmatpush1.msra.mxu0 %v4120
        %4152 = vmatprep.subr.mxu0 0.0
        %4153 = vmatpush1.msra.mxu0 %v4119
        %4154 = vmatprep.subr.mxu0 0.0
        %4155 = vmatpush1.msra.mxu0 %v4118
        %4156 = vmatprep.subr.mxu0 0.0
        %4157 = vmatpush1.msra.mxu0 %v4117
        %4158 = vmatprep.subr.mxu0 0.0
        %4159 = vmatpush1.msra.mxu0 %v4116
        %4160 = vmatprep.subr.mxu0 0.0
        %4161 = vmatpush1.msra.mxu0 %v4115
        %4162 = vmatprep.subr.mxu0 0.0
        %4163 = vmatpush1.msra.mxu0 %v4114
        %4164 = vmatprep.subr.mxu0 0.0
        %4165 = vmatpush1.msra.mxu0 %v4113
        %4166 = vmatprep.subr.mxu0 0.0
        %4167 = vmatpush1.msra.mxu0 %v4112
        %4168 = vmatprep.subr.mxu0 0.0
        %4169 = vmatpush2.msra.mxu0 0.0
        %4170 = vmatprep.subr.mxu0 0.0
        %4171 = vmatpush2.msra.mxu0 0.0
        %4172 = vmatprep.subr.mxu0 0.0
        %4173 = vmatpush2.msra.mxu0 0.0
        %4174 = vmatprep.subr.mxu0 0.0
        %4175 = vmatpush2.msra.mxu0 0.0
        %4176 = vmatprep.subr.mxu0 0.0
        %4177 = vmatpush2.msra.mxu0 0.0
        %4178 = vmatprep.subr.mxu0 0.0
        %4179 = vmatpush2.msra.mxu0 0.0
        %4180 = vmatprep.subr.mxu0 0.0
        %4181 = vmatpush2.msra.mxu0 0.0
        %4182 = vmatprep.subr.mxu0 0.0
        %4183 = vmatpush2.msra.mxu0 0.0
        %4184 = vmatprep.subr.mxu0 0.0
        %4185 = vmatpush2.msra.mxu0 0.0
        %4186 = vmatprep.subr.mxu0 0.0
        %4187 = vmatpush2.msra.mxu0 0.0
        %4188 = vmatprep.subr.mxu0 0.0
        %4189 = vmatpush2.msra.mxu0 0.0
        %4190 = vmatprep.subr.mxu0 0.0
        %4191 = vmatpush2.msra.mxu0 0.0
        %4192 = vmatprep.subr.mxu0 0.0
        %4193 = vmatpush2.msra.mxu0 0.0
        %4194 = vmatprep.subr.mxu0 0.0
        %4195 = vmatpush2.msra.mxu0 0.0
        %4196 = vmatprep.subr.mxu0 0.0
        %4197 = vmatpush2.msra.mxu0 0.0
        %4198 = vmatprep.subr.mxu0 0.0
        %4199 = vmatpush2.msra.mxu0 0.0
        %4200 = vmatprep.mubr.f32.mxu0 0.0
        %4201 = vmatmul.mubr.f32.gmra.mxu0 %v4109
        %v4202 = vpop.f32.mrf.mxu0
        %v4203 = vadd.f32 %v4134, %v4202
        %v4204 = vpop.f32.mrf.mxu0
        %4205 = vmatprep.mubr.f32.mxu0 0.0
        %4206 = vmatmul.mubr.f32.gmra.mxu0 %v4110
        %v4207 = vpop.f32.mrf.mxu0
        %v4208 = vadd.f32 %v4134, %v4207
        %v4209 = vpop.f32.mrf.mxu0
        %4210 = vdwg.mxu0
        %v4211 = vadd.f32 %v3055, %v4203
        %v4212 = vadd.f32 %v3056, %v4208
        %s4213 = scalar_lea.vmem [#allocation19], 1
        %v4214 = vld [vmem:[%s4213] sm:$0x1]
        %s4215 = scalar_lea.vmem [#allocation20], 1
        %v4216 = vld [vmem:[%s4215] sm:$0x1]
        %4217 = vadd.xlane.f32.xlu0 %v4211
        %v4218 = vpop.xlane.xlu0 %4217
        %v4219 = vsel %vm2042, %v4212, 0.0
        %4220 = vadd.xlane.f32.xlu0 %v4219
        %v4221 = vpop.xlane.xlu0 %4220
        %v4222 = vmul.f32 %v4218, %v2508
        %v4223 = vmul.f32 %v4221, %v2508
        %v4224 = vsub.f32 %v4211, %v4222
        %v4225 = vsub.f32 %v4212, %v4223
        %v4226 = vmul.f32 %v4224, %v4224
        %v4227 = vmul.f32 %v4225, %v4225
        %4228 = vadd.xlane.f32.xlu0 %v4226
        %v4229 = vpop.xlane.xlu0 %4228
        %v4230 = vsel %vm2042, %v4227, 0.0
        %4231 = vadd.xlane.f32.xlu0 %v4230
        %v4232 = vpop.xlane.xlu0 %4231
        %v4233 = vmul.f32 %v4229, %v2508
        %v4234 = vmul.f32 %v4232, %v2508
        %v4235 = vadd.f32 %v4233, 1e-05
        %v4236 = vadd.f32 %v4234, 1e-05
        %v4237 = vrsqrt.pop %v4235
        %v4238 = vrsqrt.pop %v4236
        %v4239 = vmul.f32 %v4224, %v4237
        %v4240 = vmul.f32 %v4225, %v4238
        %v4242 = vlaneseq
        %v4243 = vshrl.u32 %v4242, 7
        %v4244 = vsub.s32 0, %v4243
        %v4245 = vrot.slane %v4214, %v4244
        %v4247 = vmul.f32 %v4239, %v4245
        %v4248 = vmul.f32 %v4240, %v4245
        %v4250 = vlaneseq
        %v4251 = vshrl.u32 %v4250, 7
        %v4252 = vsub.s32 0, %v4251
        %v4253 = vrot.slane %v4216, %v4252
        %v4255 = vadd.f32 %v4247, %v4253
        %v4256 = vadd.f32 %v4248, %v4253
        %s4257 = scalar_lea.vmem [#allocation22], 512
        %v4258 = vld [vmem:[%s4257] sm:$0xff]
        %v4259 = vld [vmem:[%s4257 + $0x8] sm:$0xff]
        %v4260 = vld [vmem:[%s4257 + $0x10] sm:$0xff]
        %v4261 = vld [vmem:[%s4257 + $0x18] sm:$0xff]
        %v4262 = vld [vmem:[%s4257 + $0x20] sm:$0xff]
        %v4263 = vld [vmem:[%s4257 + $0x28] sm:$0xff]
        %v4264 = vld [vmem:[%s4257 + $0x30] sm:$0xff]
        %v4265 = vld [vmem:[%s4257 + $0x38] sm:$0xff]
        %v4266 = vld [vmem:[%s4257 + $0x40] sm:$0xff]
        %v4267 = vld [vmem:[%s4257 + $0x48] sm:$0xff]
        %v4268 = vld [vmem:[%s4257 + $0x50] sm:$0xff]
        %v4269 = vld [vmem:[%s4257 + $0x58] sm:$0xff]
        %v4270 = vld [vmem:[%s4257 + $0x60] sm:$0xff]
        %v4271 = vld [vmem:[%s4257 + $0x68] sm:$0xff]
        %v4272 = vld [vmem:[%s4257 + $0x70] sm:$0xff]
        %v4273 = vld [vmem:[%s4257 + $0x78] sm:$0xff]
        %v4274 = vld [vmem:[%s4257 + $0x80] sm:$0xff]
        %v4275 = vld [vmem:[%s4257 + $0x88] sm:$0xff]
        %v4276 = vld [vmem:[%s4257 + $0x90] sm:$0xff]
        %v4277 = vld [vmem:[%s4257 + $0x98] sm:$0xff]
        %v4278 = vld [vmem:[%s4257 + $0xa0] sm:$0xff]
        %v4279 = vld [vmem:[%s4257 + $0xa8] sm:$0xff]
        %v4280 = vld [vmem:[%s4257 + $0xb0] sm:$0xff]
        %v4281 = vld [vmem:[%s4257 + $0xb8] sm:$0xff]
        %v4282 = vld [vmem:[%s4257 + $0xc0] sm:$0xff]
        %v4283 = vld [vmem:[%s4257 + $0xc8] sm:$0xff]
        %v4284 = vld [vmem:[%s4257 + $0xd0] sm:$0xff]
        %v4285 = vld [vmem:[%s4257 + $0xd8] sm:$0xff]
        %v4286 = vld [vmem:[%s4257 + $0xe0] sm:$0xff]
        %v4287 = vld [vmem:[%s4257 + $0xe8] sm:$0xff]
        %v4288 = vld [vmem:[%s4257 + $0xf0] sm:$0xff]
        %v4289 = vld [vmem:[%s4257 + $0xf8] sm:$0xff]
        %v4290 = vld [vmem:[%s4257 + $0x100] sm:$0xff]
        %v4291 = vld [vmem:[%s4257 + $0x108] sm:$0xff]
        %v4292 = vld [vmem:[%s4257 + $0x110] sm:$0xff]
        %v4293 = vld [vmem:[%s4257 + $0x118] sm:$0xff]
        %v4294 = vld [vmem:[%s4257 + $0x120] sm:$0xff]
        %v4295 = vld [vmem:[%s4257 + $0x128] sm:$0xff]
        %v4296 = vld [vmem:[%s4257 + $0x130] sm:$0xff]
        %v4297 = vld [vmem:[%s4257 + $0x138] sm:$0xff]
        %v4298 = vld [vmem:[%s4257 + $0x140] sm:$0xff]
        %v4299 = vld [vmem:[%s4257 + $0x148] sm:$0xff]
        %v4300 = vld [vmem:[%s4257 + $0x150] sm:$0xff]
        %v4301 = vld [vmem:[%s4257 + $0x158] sm:$0xff]
        %v4302 = vld [vmem:[%s4257 + $0x160] sm:$0xff]
        %v4303 = vld [vmem:[%s4257 + $0x168] sm:$0xff]
        %v4304 = vld [vmem:[%s4257 + $0x170] sm:$0xff]
        %v4305 = vld [vmem:[%s4257 + $0x178] sm:$0xff]
        %v4306 = vld [vmem:[%s4257 + $0x180] sm:$0xff]
        %v4307 = vld [vmem:[%s4257 + $0x188] sm:$0xff]
        %v4308 = vld [vmem:[%s4257 + $0x190] sm:$0xff]
        %v4309 = vld [vmem:[%s4257 + $0x198] sm:$0xff]
        %v4310 = vld [vmem:[%s4257 + $0x1a0] sm:$0xff]
        %v4311 = vld [vmem:[%s4257 + $0x1a8] sm:$0xff]
        %v4312 = vld [vmem:[%s4257 + $0x1b0] sm:$0xff]
        %v4313 = vld [vmem:[%s4257 + $0x1b8] sm:$0xff]
        %v4314 = vld [vmem:[%s4257 + $0x1c0] sm:$0xff]
        %v4315 = vld [vmem:[%s4257 + $0x1c8] sm:$0xff]
        %v4316 = vld [vmem:[%s4257 + $0x1d0] sm:$0xff]
        %v4317 = vld [vmem:[%s4257 + $0x1d8] sm:$0xff]
        %v4318 = vld [vmem:[%s4257 + $0x1e0] sm:$0xff]
        %v4319 = vld [vmem:[%s4257 + $0x1e8] sm:$0xff]
        %v4320 = vld [vmem:[%s4257 + $0x1f0] sm:$0xff]
        %v4321 = vld [vmem:[%s4257 + $0x1f8] sm:$0xff]
        %s4322 = scalar_lea.vmem %s13, 4
        %v4323 = vld [vmem:[%s4322] sm:$0xf]
        %v4325 = vlaneseq
        %v4326 = vshrl.u32 %v4325, 7
        %v4327 = vsub.s32 0, %v4326
        %v4328 = vrot.slane %v4323, %v4327
        %v4329 = vlaneseq
        %v4330 = vshrl.u32 %v4329, 7
        %v4331 = vsub.s32 1, %v4330
        %v4332 = vrot.slane %v4323, %v4331
        %v4333 = vlaneseq
        %v4334 = vshrl.u32 %v4333, 7
        %v4335 = vsub.s32 2, %v4334
        %v4336 = vrot.slane %v4323, %v4335
        %v4337 = vlaneseq
        %v4338 = vshrl.u32 %v4337, 7
        %v4339 = vsub.s32 3, %v4338
        %v4340 = vrot.slane %v4323, %v4339
        %4345 = vmatprep.subr.mxu0 %v4319
        %4346 = vmatpush1.msra.mxu0 %v4318
        %4347 = vmatprep.subr.mxu0 %v4315
        %4348 = vmatpush1.msra.mxu0 %v4314
        %4349 = vmatprep.subr.mxu0 %v4311
        %4350 = vmatpush1.msra.mxu0 %v4310
        %4351 = vmatprep.subr.mxu0 %v4307
        %4352 = vmatpush1.msra.mxu0 %v4306
        %4353 = vmatprep.subr.mxu0 %v4303
        %4354 = vmatpush1.msra.mxu0 %v4302
        %4355 = vmatprep.subr.mxu0 %v4299
        %4356 = vmatpush1.msra.mxu0 %v4298
        %4357 = vmatprep.subr.mxu0 %v4295
        %4358 = vmatpush1.msra.mxu0 %v4294
        %4359 = vmatprep.subr.mxu0 %v4291
        %4360 = vmatpush1.msra.mxu0 %v4290
        %4361 = vmatprep.subr.mxu0 %v4287
        %4362 = vmatpush1.msra.mxu0 %v4286
        %4363 = vmatprep.subr.mxu0 %v4283
        %4364 = vmatpush1.msra.mxu0 %v4282
        %4365 = vmatprep.subr.mxu0 %v4279
        %4366 = vmatpush1.msra.mxu0 %v4278
        %4367 = vmatprep.subr.mxu0 %v4275
        %4368 = vmatpush1.msra.mxu0 %v4274
        %4369 = vmatprep.subr.mxu0 %v4271
        %4370 = vmatpush1.msra.mxu0 %v4270
        %4371 = vmatprep.subr.mxu0 %v4267
        %4372 = vmatpush1.msra.mxu0 %v4266
        %4373 = vmatprep.subr.mxu0 %v4263
        %4374 = vmatpush1.msra.mxu0 %v4262
        %4375 = vmatprep.subr.mxu0 %v4259
        %4376 = vmatpush1.msra.mxu0 %v4258
        %4377 = vmatprep.subr.mxu0 0.0
        %4378 = vmatpush2.msra.mxu0 0.0
        %4379 = vmatprep.subr.mxu0 0.0
        %4380 = vmatpush2.msra.mxu0 0.0
        %4381 = vmatprep.subr.mxu0 0.0
        %4382 = vmatpush2.msra.mxu0 0.0
        %4383 = vmatprep.subr.mxu0 0.0
        %4384 = vmatpush2.msra.mxu0 0.0
        %4385 = vmatprep.subr.mxu0 0.0
        %4386 = vmatpush2.msra.mxu0 0.0
        %4387 = vmatprep.subr.mxu0 0.0
        %4388 = vmatpush2.msra.mxu0 0.0
        %4389 = vmatprep.subr.mxu0 0.0
        %4390 = vmatpush2.msra.mxu0 0.0
        %4391 = vmatprep.subr.mxu0 0.0
        %4392 = vmatpush2.msra.mxu0 0.0
        %4393 = vmatprep.subr.mxu0 0.0
        %4394 = vmatpush2.msra.mxu0 0.0
        %4395 = vmatprep.subr.mxu0 0.0
        %4396 = vmatpush2.msra.mxu0 0.0
        %4397 = vmatprep.subr.mxu0 0.0
        %4398 = vmatpush2.msra.mxu0 0.0
        %4399 = vmatprep.subr.mxu0 0.0
        %4400 = vmatpush2.msra.mxu0 0.0
        %4401 = vmatprep.subr.mxu0 0.0
        %4402 = vmatpush2.msra.mxu0 0.0
        %4403 = vmatprep.subr.mxu0 0.0
        %4404 = vmatpush2.msra.mxu0 0.0
        %4405 = vmatprep.subr.mxu0 0.0
        %4406 = vmatpush2.msra.mxu0 0.0
        %4407 = vmatprep.subr.mxu0 0.0
        %4408 = vmatpush2.msra.mxu0 0.0
        %4409 = vmatprep.mubr.f32.mxu0 0.0
        %4410 = vmatmul.mubr.f32.gmra.mxu0 %v4255
        %v4411 = vpop.f32.mrf.mxu0
        %v4412 = vadd.f32 %v4328, %v4411
        %v4413 = vpop.f32.mrf.mxu0
        %v4414 = vadd.f32 %v4332, %v4413
        %4415 = vmatprep.mubr.f32.mxu0 0.0
        %4416 = vmatmul.mubr.f32.gmra.mxu0 %v4256
        %v4417 = vpop.f32.mrf.mxu0
        %v4418 = vadd.f32 %v4328, %v4417
        %v4419 = vpop.f32.mrf.mxu0
        %v4420 = vadd.f32 %v4332, %v4419
        %4421 = vdwg.mxu0
        %4422 = vmatprep.subr.mxu0 %v4321
        %4423 = vmatpush1.msra.mxu0 %v4320
        %4424 = vmatprep.subr.mxu0 %v4317
        %4425 = vmatpush1.msra.mxu0 %v4316
        %4426 = vmatprep.subr.mxu0 %v4313
        %4427 = vmatpush1.msra.mxu0 %v4312
        %4428 = vmatprep.subr.mxu0 %v4309
        %4429 = vmatpush1.msra.mxu0 %v4308
        %4430 = vmatprep.subr.mxu0 %v4305
        %4431 = vmatpush1.msra.mxu0 %v4304
        %4432 = vmatprep.subr.mxu0 %v4301
        %4433 = vmatpush1.msra.mxu0 %v4300
        %4434 = vmatprep.subr.mxu0 %v4297
        %4435 = vmatpush1.msra.mxu0 %v4296
        %4436 = vmatprep.subr.mxu0 %v4293
        %4437 = vmatpush1.msra.mxu0 %v4292
        %4438 = vmatprep.subr.mxu0 %v4289
        %4439 = vmatpush1.msra.mxu0 %v4288
        %4440 = vmatprep.subr.mxu0 %v4285
        %4441 = vmatpush1.msra.mxu0 %v4284
        %4442 = vmatprep.subr.mxu0 %v4281
        %4443 = vmatpush1.msra.mxu0 %v4280
        %4444 = vmatprep.subr.mxu0 %v4277
        %4445 = vmatpush1.msra.mxu0 %v4276
        %4446 = vmatprep.subr.mxu0 %v4273
        %4447 = vmatpush1.msra.mxu0 %v4272
        %4448 = vmatprep.subr.mxu0 %v4269
        %4449 = vmatpush1.msra.mxu0 %v4268
        %4450 = vmatprep.subr.mxu0 %v4265
        %4451 = vmatpush1.msra.mxu0 %v4264
        %4452 = vmatprep.subr.mxu0 %v4261
        %4453 = vmatpush1.msra.mxu0 %v4260
        %4454 = vmatprep.subr.mxu0 0.0
        %4455 = vmatpush2.msra.mxu0 0.0
        %4456 = vmatprep.subr.mxu0 0.0
        %4457 = vmatpush2.msra.mxu0 0.0
        %4458 = vmatprep.subr.mxu0 0.0
        %4459 = vmatpush2.msra.mxu0 0.0
        %4460 = vmatprep.subr.mxu0 0.0
        %4461 = vmatpush2.msra.mxu0 0.0
        %4462 = vmatprep.subr.mxu0 0.0
        %4463 = vmatpush2.msra.mxu0 0.0
        %4464 = vmatprep.subr.mxu0 0.0
        %4465 = vmatpush2.msra.mxu0 0.0
        %4466 = vmatprep.subr.mxu0 0.0
        %4467 = vmatpush2.msra.mxu0 0.0
        %4468 = vmatprep.subr.mxu0 0.0
        %4469 = vmatpush2.msra.mxu0 0.0
        %4470 = vmatprep.subr.mxu0 0.0
        %4471 = vmatpush2.msra.mxu0 0.0
        %4472 = vmatprep.subr.mxu0 0.0
        %4473 = vmatpush2.msra.mxu0 0.0
        %4474 = vmatprep.subr.mxu0 0.0
        %4475 = vmatpush2.msra.mxu0 0.0
        %4476 = vmatprep.subr.mxu0 0.0
        %4477 = vmatpush2.msra.mxu0 0.0
        %4478 = vmatprep.subr.mxu0 0.0
        %4479 = vmatpush2.msra.mxu0 0.0
        %4480 = vmatprep.subr.mxu0 0.0
        %4481 = vmatpush2.msra.mxu0 0.0
        %4482 = vmatprep.subr.mxu0 0.0
        %4483 = vmatpush2.msra.mxu0 0.0
        %4484 = vmatprep.subr.mxu0 0.0
        %4485 = vmatpush2.msra.mxu0 0.0
        %4486 = vmatprep.mubr.f32.mxu0 0.0
        %4487 = vmatmul.mubr.f32.gmra.mxu0 %v4255
        %v4488 = vpop.f32.mrf.mxu0
        %v4489 = vadd.f32 %v4336, %v4488
        %v4490 = vpop.f32.mrf.mxu0
        %v4491 = vadd.f32 %v4340, %v4490
        %4492 = vmatprep.mubr.f32.mxu0 0.0
        %4493 = vmatmul.mubr.f32.gmra.mxu0 %v4256
        %v4494 = vpop.f32.mrf.mxu0
        %v4495 = vadd.f32 %v4336, %v4494
        %v4496 = vpop.f32.mrf.mxu0
        %v4497 = vadd.f32 %v4340, %v4496
        %4498 = vdwg.mxu0
        %v4499 = vmax.f32 %v4412, 0.0
        %v4500 = vmax.f32 %v4414, 0.0
        %v4501 = vmax.f32 %v4489, 0.0
        %v4502 = vmax.f32 %v4491, 0.0
        %v4503 = vmax.f32 %v4418, 0.0
        %v4504 = vmax.f32 %v4420, 0.0
        %v4505 = vmax.f32 %v4495, 0.0
        %v4506 = vmax.f32 %v4497, 0.0
        %s4507 = scalar_lea.vmem [#allocation23], 512
        %v4508 = vld [vmem:[%s4507] sm:$0xff]
        %v4509 = vld [vmem:[%s4507 + $0x8] sm:$0xff]
        %v4510 = vld [vmem:[%s4507 + $0x10] sm:$0xff]
        %v4511 = vld [vmem:[%s4507 + $0x18] sm:$0xff]
        %v4512 = vld [vmem:[%s4507 + $0x20] sm:$0xff]
        %v4513 = vld [vmem:[%s4507 + $0x28] sm:$0xff]
        %v4514 = vld [vmem:[%s4507 + $0x30] sm:$0xff]
        %v4515 = vld [vmem:[%s4507 + $0x38] sm:$0xff]
        %v4516 = vld [vmem:[%s4507 + $0x40] sm:$0xff]
        %v4517 = vld [vmem:[%s4507 + $0x48] sm:$0xff]
        %v4518 = vld [vmem:[%s4507 + $0x50] sm:$0xff]
        %v4519 = vld [vmem:[%s4507 + $0x58] sm:$0xff]
        %v4520 = vld [vmem:[%s4507 + $0x60] sm:$0xff]
        %v4521 = vld [vmem:[%s4507 + $0x68] sm:$0xff]
        %v4522 = vld [vmem:[%s4507 + $0x70] sm:$0xff]
        %v4523 = vld [vmem:[%s4507 + $0x78] sm:$0xff]
        %v4524 = vld [vmem:[%s4507 + $0x80] sm:$0xff]
        %v4525 = vld [vmem:[%s4507 + $0x88] sm:$0xff]
        %v4526 = vld [vmem:[%s4507 + $0x90] sm:$0xff]
        %v4527 = vld [vmem:[%s4507 + $0x98] sm:$0xff]
        %v4528 = vld [vmem:[%s4507 + $0xa0] sm:$0xff]
        %v4529 = vld [vmem:[%s4507 + $0xa8] sm:$0xff]
        %v4530 = vld [vmem:[%s4507 + $0xb0] sm:$0xff]
        %v4531 = vld [vmem:[%s4507 + $0xb8] sm:$0xff]
        %v4532 = vld [vmem:[%s4507 + $0xc0] sm:$0xff]
        %v4533 = vld [vmem:[%s4507 + $0xc8] sm:$0xff]
        %v4534 = vld [vmem:[%s4507 + $0xd0] sm:$0xff]
        %v4535 = vld [vmem:[%s4507 + $0xd8] sm:$0xff]
        %v4536 = vld [vmem:[%s4507 + $0xe0] sm:$0xff]
        %v4537 = vld [vmem:[%s4507 + $0xe8] sm:$0xff]
        %v4538 = vld [vmem:[%s4507 + $0xf0] sm:$0xff]
        %v4539 = vld [vmem:[%s4507 + $0xf8] sm:$0xff]
        %v4540 = vld [vmem:[%s4507 + $0x100] sm:$0xff]
        %v4541 = vld [vmem:[%s4507 + $0x108] sm:$0xff]
        %v4542 = vld [vmem:[%s4507 + $0x110] sm:$0xff]
        %v4543 = vld [vmem:[%s4507 + $0x118] sm:$0xff]
        %v4544 = vld [vmem:[%s4507 + $0x120] sm:$0xff]
        %v4545 = vld [vmem:[%s4507 + $0x128] sm:$0xff]
        %v4546 = vld [vmem:[%s4507 + $0x130] sm:$0xff]
        %v4547 = vld [vmem:[%s4507 + $0x138] sm:$0xff]
        %v4548 = vld [vmem:[%s4507 + $0x140] sm:$0xff]
        %v4549 = vld [vmem:[%s4507 + $0x148] sm:$0xff]
        %v4550 = vld [vmem:[%s4507 + $0x150] sm:$0xff]
        %v4551 = vld [vmem:[%s4507 + $0x158] sm:$0xff]
        %v4552 = vld [vmem:[%s4507 + $0x160] sm:$0xff]
        %v4553 = vld [vmem:[%s4507 + $0x168] sm:$0xff]
        %v4554 = vld [vmem:[%s4507 + $0x170] sm:$0xff]
        %v4555 = vld [vmem:[%s4507 + $0x178] sm:$0xff]
        %v4556 = vld [vmem:[%s4507 + $0x180] sm:$0xff]
        %v4557 = vld [vmem:[%s4507 + $0x188] sm:$0xff]
        %v4558 = vld [vmem:[%s4507 + $0x190] sm:$0xff]
        %v4559 = vld [vmem:[%s4507 + $0x198] sm:$0xff]
        %v4560 = vld [vmem:[%s4507 + $0x1a0] sm:$0xff]
        %v4561 = vld [vmem:[%s4507 + $0x1a8] sm:$0xff]
        %v4562 = vld [vmem:[%s4507 + $0x1b0] sm:$0xff]
        %v4563 = vld [vmem:[%s4507 + $0x1b8] sm:$0xff]
        %v4564 = vld [vmem:[%s4507 + $0x1c0] sm:$0xff]
        %v4565 = vld [vmem:[%s4507 + $0x1c8] sm:$0xff]
        %v4566 = vld [vmem:[%s4507 + $0x1d0] sm:$0xff]
        %v4567 = vld [vmem:[%s4507 + $0x1d8] sm:$0xff]
        %v4568 = vld [vmem:[%s4507 + $0x1e0] sm:$0xff]
        %v4569 = vld [vmem:[%s4507 + $0x1e8] sm:$0xff]
        %v4570 = vld [vmem:[%s4507 + $0x1f0] sm:$0xff]
        %v4571 = vld [vmem:[%s4507 + $0x1f8] sm:$0xff]
        %s4572 = scalar_lea.vmem %s15, 1
        %v4573 = vld [vmem:[%s4572] sm:$0x1]
        %v4575 = vlaneseq
        %v4576 = vshrl.u32 %v4575, 7
        %v4577 = vsub.s32 0, %v4576
        %v4578 = vrot.slane %v4573, %v4577
        %4580 = vmatprep.subr.mxu0 0.0
        %4581 = vmatpush1.msra.mxu0 %v4523
        %4582 = vmatprep.subr.mxu0 0.0
        %4583 = vmatpush1.msra.mxu0 %v4522
        %4584 = vmatprep.subr.mxu0 0.0
        %4585 = vmatpush1.msra.mxu0 %v4521
        %4586 = vmatprep.subr.mxu0 0.0
        %4587 = vmatpush1.msra.mxu0 %v4520
        %4588 = vmatprep.subr.mxu0 0.0
        %4589 = vmatpush1.msra.mxu0 %v4519
        %4590 = vmatprep.subr.mxu0 0.0
        %4591 = vmatpush1.msra.mxu0 %v4518
        %4592 = vmatprep.subr.mxu0 0.0
        %4593 = vmatpush1.msra.mxu0 %v4517
        %4594 = vmatprep.subr.mxu0 0.0
        %4595 = vmatpush1.msra.mxu0 %v4516
        %4596 = vmatprep.subr.mxu0 0.0
        %4597 = vmatpush1.msra.mxu0 %v4515
        %4598 = vmatprep.subr.mxu0 0.0
        %4599 = vmatpush1.msra.mxu0 %v4514
        %4600 = vmatprep.subr.mxu0 0.0
        %4601 = vmatpush1.msra.mxu0 %v4513
        %4602 = vmatprep.subr.mxu0 0.0
        %4603 = vmatpush1.msra.mxu0 %v4512
        %4604 = vmatprep.subr.mxu0 0.0
        %4605 = vmatpush1.msra.mxu0 %v4511
        %4606 = vmatprep.subr.mxu0 0.0
        %4607 = vmatpush1.msra.mxu0 %v4510
        %4608 = vmatprep.subr.mxu0 0.0
        %4609 = vmatpush1.msra.mxu0 %v4509
        %4610 = vmatprep.subr.mxu0 0.0
        %4611 = vmatpush1.msra.mxu0 %v4508
        %4612 = vmatprep.subr.mxu0 0.0
        %4613 = vmatpush2.msra.mxu0 %v4539
        %4614 = vmatprep.subr.mxu0 0.0
        %4615 = vmatpush2.msra.mxu0 %v4538
        %4616 = vmatprep.subr.mxu0 0.0
        %4617 = vmatpush2.msra.mxu0 %v4537
        %4618 = vmatprep.subr.mxu0 0.0
        %4619 = vmatpush2.msra.mxu0 %v4536
        %4620 = vmatprep.subr.mxu0 0.0
        %4621 = vmatpush2.msra.mxu0 %v4535
        %4622 = vmatprep.subr.mxu0 0.0
        %4623 = vmatpush2.msra.mxu0 %v4534
        %4624 = vmatprep.subr.mxu0 0.0
        %4625 = vmatpush2.msra.mxu0 %v4533
        %4626 = vmatprep.subr.mxu0 0.0
        %4627 = vmatpush2.msra.mxu0 %v4532
        %4628 = vmatprep.subr.mxu0 0.0
        %4629 = vmatpush2.msra.mxu0 %v4531
        %4630 = vmatprep.subr.mxu0 0.0
        %4631 = vmatpush2.msra.mxu0 %v4530
        %4632 = vmatprep.subr.mxu0 0.0
        %4633 = vmatpush2.msra.mxu0 %v4529
        %4634 = vmatprep.subr.mxu0 0.0
        %4635 = vmatpush2.msra.mxu0 %v4528
        %4636 = vmatprep.subr.mxu0 0.0
        %4637 = vmatpush2.msra.mxu0 %v4527
        %4638 = vmatprep.subr.mxu0 0.0
        %4639 = vmatpush2.msra.mxu0 %v4526
        %4640 = vmatprep.subr.mxu0 0.0
        %4641 = vmatpush2.msra.mxu0 %v4525
        %4642 = vmatprep.subr.mxu0 0.0
        %4643 = vmatpush2.msra.mxu0 %v4524
        %4644 = vmatprep.mubr.f32.mxu0 %v4500
        %4645 = vmatmul.mubr.f32.gmra.mxu0 %v4499
        %v4646 = vpop.f32.mrf.mxu0
        %v4647 = vadd.f32 %v4578, %v4646
        %v4648 = vpop.f32.mrf.mxu0
        %4649 = vmatprep.mubr.f32.mxu0 %v4504
        %4650 = vmatmul.mubr.f32.gmra.mxu0 %v4503
        %v4651 = vpop.f32.mrf.mxu0
        %v4652 = vadd.f32 %v4578, %v4651
        %v4653 = vpop.f32.mrf.mxu0
        %4654 = vdwg.mxu0
        %4655 = vmatprep.subr.mxu0 0.0
        %4656 = vmatpush1.msra.mxu0 %v4555
        %4657 = vmatprep.subr.mxu0 0.0
        %4658 = vmatpush1.msra.mxu0 %v4554
        %4659 = vmatprep.subr.mxu0 0.0
        %4660 = vmatpush1.msra.mxu0 %v4553
        %4661 = vmatprep.subr.mxu0 0.0
        %4662 = vmatpush1.msra.mxu0 %v4552
        %4663 = vmatprep.subr.mxu0 0.0
        %4664 = vmatpush1.msra.mxu0 %v4551
        %4665 = vmatprep.subr.mxu0 0.0
        %4666 = vmatpush1.msra.mxu0 %v4550
        %4667 = vmatprep.subr.mxu0 0.0
        %4668 = vmatpush1.msra.mxu0 %v4549
        %4669 = vmatprep.subr.mxu0 0.0
        %4670 = vmatpush1.msra.mxu0 %v4548
        %4671 = vmatprep.subr.mxu0 0.0
        %4672 = vmatpush1.msra.mxu0 %v4547
        %4673 = vmatprep.subr.mxu0 0.0
        %4674 = vmatpush1.msra.mxu0 %v4546
        %4675 = vmatprep.subr.mxu0 0.0
        %4676 = vmatpush1.msra.mxu0 %v4545
        %4677 = vmatprep.subr.mxu0 0.0
        %4678 = vmatpush1.msra.mxu0 %v4544
        %4679 = vmatprep.subr.mxu0 0.0
        %4680 = vmatpush1.msra.mxu0 %v4543
        %4681 = vmatprep.subr.mxu0 0.0
        %4682 = vmatpush1.msra.mxu0 %v4542
        %4683 = vmatprep.subr.mxu0 0.0
        %4684 = vmatpush1.msra.mxu0 %v4541
        %4685 = vmatprep.subr.mxu0 0.0
        %4686 = vmatpush1.msra.mxu0 %v4540
        %4687 = vmatprep.subr.mxu0 0.0
        %4688 = vmatpush2.msra.mxu0 %v4571
        %4689 = vmatprep.subr.mxu0 0.0
        %4690 = vmatpush2.msra.mxu0 %v4570
        %4691 = vmatprep.subr.mxu0 0.0
        %4692 = vmatpush2.msra.mxu0 %v4569
        %4693 = vmatprep.subr.mxu0 0.0
        %4694 = vmatpush2.msra.mxu0 %v4568
        %4695 = vmatprep.subr.mxu0 0.0
        %4696 = vmatpush2.msra.mxu0 %v4567
        %4697 = vmatprep.subr.mxu0 0.0
        %4698 = vmatpush2.msra.mxu0 %v4566
        %4699 = vmatprep.subr.mxu0 0.0
        %4700 = vmatpush2.msra.mxu0 %v4565
        %4701 = vmatprep.subr.mxu0 0.0
        %4702 = vmatpush2.msra.mxu0 %v4564
        %4703 = vmatprep.subr.mxu0 0.0
        %4704 = vmatpush2.msra.mxu0 %v4563
        %4705 = vmatprep.subr.mxu0 0.0
        %4706 = vmatpush2.msra.mxu0 %v4562
        %4707 = vmatprep.subr.mxu0 0.0
        %4708 = vmatpush2.msra.mxu0 %v4561
        %4709 = vmatprep.subr.mxu0 0.0
        %4710 = vmatpush2.msra.mxu0 %v4560
        %4711 = vmatprep.subr.mxu0 0.0
        %4712 = vmatpush2.msra.mxu0 %v4559
        %4713 = vmatprep.subr.mxu0 0.0
        %4714 = vmatpush2.msra.mxu0 %v4558
        %4715 = vmatprep.subr.mxu0 0.0
        %4716 = vmatpush2.msra.mxu0 %v4557
        %4717 = vmatprep.subr.mxu0 0.0
        %4718 = vmatpush2.msra.mxu0 %v4556
        %4719 = vmatprep.mubr.f32.mxu0 %v4502
        %4720 = vmatmul.mubr.f32.gmra.mxu0 %v4501
        %v4721 = vpop.f32.mrf.mxu0
        %v4722 = vadd.f32 %v4647, %v4721
        %v4723 = vpop.f32.mrf.mxu0
        %4724 = vmatprep.mubr.f32.mxu0 %v4506
        %4725 = vmatmul.mubr.f32.gmra.mxu0 %v4505
        %v4726 = vpop.f32.mrf.mxu0
        %v4727 = vadd.f32 %v4652, %v4726
        %v4728 = vpop.f32.mrf.mxu0
        %4729 = vdwg.mxu0
        %v4730 = vadd.f32 %v4255, %v4722
        %v4731 = vadd.f32 %v4256, %v4727
        %s4732 = scalar_lea.vmem [#allocation25], 1
        %v4733 = vld [vmem:[%s4732] sm:$0x1]
        %s4734 = scalar_lea.vmem %s17, 1
        %v4735 = vld [vmem:[%s4734] sm:$0x1]
        %4736 = vadd.xlane.f32.xlu0 %v4730
        %v4737 = vpop.xlane.xlu0 %4736
        %v4738 = vsel %vm2042, %v4731, 0.0
        %4739 = vadd.xlane.f32.xlu0 %v4738
        %v4740 = vpop.xlane.xlu0 %4739
        %v4741 = vmul.f32 %v4737, %v2508
        %v4742 = vmul.f32 %v4740, %v2508
        %v4743 = vsub.f32 %v4730, %v4741
        %v4744 = vsub.f32 %v4731, %v4742
        %v4745 = vmul.f32 %v4743, %v4743
        %v4746 = vmul.f32 %v4744, %v4744
        %4747 = vadd.xlane.f32.xlu0 %v4745
        %v4748 = vpop.xlane.xlu0 %4747
        %v4749 = vsel %vm2042, %v4746, 0.0
        %4750 = vadd.xlane.f32.xlu0 %v4749
        %v4751 = vpop.xlane.xlu0 %4750
        %v4752 = vmul.f32 %v4748, %v2508
        %v4753 = vmul.f32 %v4751, %v2508
        %v4754 = vadd.f32 %v4752, 1e-05
        %v4755 = vadd.f32 %v4753, 1e-05
        %v4756 = vrsqrt.pop %v4754
        %v4757 = vrsqrt.pop %v4755
        %v4758 = vmul.f32 %v4743, %v4756
        %v4759 = vmul.f32 %v4744, %v4757
        %v4761 = vlaneseq
        %v4762 = vshrl.u32 %v4761, 7
        %v4763 = vsub.s32 0, %v4762
        %v4764 = vrot.slane %v4733, %v4763
        %v4766 = vmul.f32 %v4758, %v4764
        %v4767 = vmul.f32 %v4759, %v4764
        %v4769 = vlaneseq
        %v4770 = vshrl.u32 %v4769, 7
        %v4771 = vsub.s32 0, %v4770
        %v4772 = vrot.slane %v4735, %v4771
        %v4774 = vadd.f32 %v4766, %v4772
        %v4775 = vadd.f32 %v4767, %v4772
        %v4776 = vld [vmem:[#allocation11] sm:$0x1f]
        %v4778 = vsel %vm1946, %v4776, 0
        %v4781 = vsel %vm2042, %v4775, 0
        %4783 = vmatprep.subr.mxu0 0.0
        %4784 = vmatpush1.msra.mxu0 0.0
        %4785 = vmatprep.subr.mxu0 0.0
        %4786 = vmatpush1.msra.mxu0 0.0
        %4787 = vmatprep.subr.mxu0 0.0
        %4788 = vmatpush1.msra.mxu0 0.0
        %4789 = vmatprep.subr.mxu0 0.0
        %4790 = vmatpush1.msra.mxu0 0.0
        %4791 = vmatprep.subr.mxu0 0.0
        %4792 = vmatpush1.msra.mxu0 0.0
        %4793 = vmatprep.subr.mxu0 0.0
        %4794 = vmatpush1.msra.mxu0 0.0
        %4795 = vmatprep.subr.mxu0 0.0
        %4796 = vmatpush1.msra.mxu0 0.0
        %4797 = vmatprep.subr.mxu0 0.0
        %4798 = vmatpush1.msra.mxu0 0.0
        %4799 = vmatprep.subr.mxu0 0.0
        %4800 = vmatpush1.msra.mxu0 0.0
        %4801 = vmatprep.subr.mxu0 0.0
        %4802 = vmatpush1.msra.mxu0 0.0
        %4803 = vmatprep.subr.mxu0 0.0
        %4804 = vmatpush1.msra.mxu0 0.0
        %4805 = vmatprep.subr.mxu0 0.0
        %4806 = vmatpush1.msra.mxu0 0.0
        %4807 = vmatprep.subr.mxu0 0.0
        %4808 = vmatpush1.msra.mxu0 0.0
        %4809 = vmatprep.subr.mxu0 0.0
        %4810 = vmatpush1.msra.mxu0 0.0
        %4811 = vmatprep.subr.mxu0 0.0
        %4812 = vmatpush1.msra.mxu0 %v4781
        %4813 = vmatprep.subr.mxu0 0.0
        %4814 = vmatpush1.msra.mxu0 %v4774
        %4815 = vmatprep.subr.mxu0 0.0
        %4816 = vmatpush2.msra.mxu0 0.0
        %4817 = vmatprep.subr.mxu0 0.0
        %4818 = vmatpush2.msra.mxu0 0.0
        %4819 = vmatprep.subr.mxu0 0.0
        %4820 = vmatpush2.msra.mxu0 0.0
        %4821 = vmatprep.subr.mxu0 0.0
        %4822 = vmatpush2.msra.mxu0 0.0
        %4823 = vmatprep.subr.mxu0 0.0
        %4824 = vmatpush2.msra.mxu0 0.0
        %4825 = vmatprep.subr.mxu0 0.0
        %4826 = vmatpush2.msra.mxu0 0.0
        %4827 = vmatprep.subr.mxu0 0.0
        %4828 = vmatpush2.msra.mxu0 0.0
        %4829 = vmatprep.subr.mxu0 0.0
        %4830 = vmatpush2.msra.mxu0 0.0
        %4831 = vmatprep.subr.mxu0 0.0
        %4832 = vmatpush2.msra.mxu0 0.0
        %4833 = vmatprep.subr.mxu0 0.0
        %4834 = vmatpush2.msra.mxu0 0.0
        %4835 = vmatprep.subr.mxu0 0.0
        %4836 = vmatpush2.msra.mxu0 0.0
        %4837 = vmatprep.subr.mxu0 0.0
        %4838 = vmatpush2.msra.mxu0 0.0
        %4839 = vmatprep.subr.mxu0 0.0
        %4840 = vmatpush2.msra.mxu0 0.0
        %4841 = vmatprep.subr.mxu0 0.0
        %4842 = vmatpush2.msra.mxu0 0.0
        %4843 = vmatprep.subr.mxu0 0.0
        %4844 = vmatpush2.msra.mxu0 0.0
        %4845 = vmatprep.subr.mxu0 0.0
        %4846 = vmatpush2.msra.mxu0 0.0
        %4847 = vmatprep.mubr.f32.mxu0 0.0
        %4848 = vmatmul.mubr.f32.gmra.mxu0 %v4778
        %v4849 = vpop.f32.mrf.mxu0
        %v4850 = vadd.f32 0.0, %v4849
        %v4851 = vpop.f32.mrf.mxu0
        %4852 = vdwg.mxu0
        %4853 = vst [vmem:[%s1031] sm:$0x1f] %v4850
        %s4854 = scalar_lea.vmem [#allocation13], 768
        %v4855 = vld [vmem:[%s4854] sm:$0xff]
        %v4856 = vld [vmem:[%s4854 + $0x8] sm:$0xff]
        %v4857 = vld [vmem:[%s4854 + $0x10] sm:$0xff]
        %v4858 = vld [vmem:[%s4854 + $0x18] sm:$0xff]
        %v4859 = vld [vmem:[%s4854 + $0x20] sm:$0xff]
        %v4860 = vld [vmem:[%s4854 + $0x28] sm:$0xff]
        %v4861 = vld [vmem:[%s4854 + $0x30] sm:$0xff]
        %v4862 = vld [vmem:[%s4854 + $0x38] sm:$0xff]
        %v4863 = vld [vmem:[%s4854 + $0x40] sm:$0xff]
        %v4864 = vld [vmem:[%s4854 + $0x48] sm:$0xff]
        %v4865 = vld [vmem:[%s4854 + $0x50] sm:$0xff]
        %v4866 = vld [vmem:[%s4854 + $0x58] sm:$0xff]
        %v4867 = vld [vmem:[%s4854 + $0x60] sm:$0xff]
        %v4868 = vld [vmem:[%s4854 + $0x68] sm:$0xff]
        %v4869 = vld [vmem:[%s4854 + $0x70] sm:$0xff]
        %v4870 = vld [vmem:[%s4854 + $0x78] sm:$0xff]
        %v4871 = vld [vmem:[%s4854 + $0x80] sm:$0xff]
        %v4872 = vld [vmem:[%s4854 + $0x88] sm:$0xff]
        %v4873 = vld [vmem:[%s4854 + $0x90] sm:$0xff]
        %v4874 = vld [vmem:[%s4854 + $0x98] sm:$0xff]
        %v4875 = vld [vmem:[%s4854 + $0xa0] sm:$0xff]
        %v4876 = vld [vmem:[%s4854 + $0xa8] sm:$0xff]
        %v4877 = vld [vmem:[%s4854 + $0xb0] sm:$0xff]
        %v4878 = vld [vmem:[%s4854 + $0xb8] sm:$0xff]
        %v4879 = vld [vmem:[%s4854 + $0xc0] sm:$0xff]
        %v4880 = vld [vmem:[%s4854 + $0xc8] sm:$0xff]
        %v4881 = vld [vmem:[%s4854 + $0xd0] sm:$0xff]
        %v4882 = vld [vmem:[%s4854 + $0xd8] sm:$0xff]
        %v4883 = vld [vmem:[%s4854 + $0xe0] sm:$0xff]
        %v4884 = vld [vmem:[%s4854 + $0xe8] sm:$0xff]
        %v4885 = vld [vmem:[%s4854 + $0xf0] sm:$0xff]
        %v4886 = vld [vmem:[%s4854 + $0xf8] sm:$0xff]
        %v4887 = vld [vmem:[%s4854 + $0x100] sm:$0xff]
        %v4888 = vld [vmem:[%s4854 + $0x108] sm:$0xff]
        %v4889 = vld [vmem:[%s4854 + $0x110] sm:$0xff]
        %v4890 = vld [vmem:[%s4854 + $0x118] sm:$0xff]
        %v4891 = vld [vmem:[%s4854 + $0x120] sm:$0xff]
        %v4892 = vld [vmem:[%s4854 + $0x128] sm:$0xff]
        %v4893 = vld [vmem:[%s4854 + $0x130] sm:$0xff]
        %v4894 = vld [vmem:[%s4854 + $0x138] sm:$0xff]
        %v4895 = vld [vmem:[%s4854 + $0x140] sm:$0xff]
        %v4896 = vld [vmem:[%s4854 + $0x148] sm:$0xff]
        %v4897 = vld [vmem:[%s4854 + $0x150] sm:$0xff]
        %v4898 = vld [vmem:[%s4854 + $0x158] sm:$0xff]
        %v4899 = vld [vmem:[%s4854 + $0x160] sm:$0xff]
        %v4900 = vld [vmem:[%s4854 + $0x168] sm:$0xff]
        %v4901 = vld [vmem:[%s4854 + $0x170] sm:$0xff]
        %v4902 = vld [vmem:[%s4854 + $0x178] sm:$0xff]
        %s4903 = scalar_lea.vmem [#allocation14], 6
        %v4904 = vld [vmem:[%s4903] sm:$0x7]
        %v4906 = vlaneseq
        %v4907 = vshrl.u32 %v4906, 7
        %v4908 = vsub.s32 0, %v4907
        %v4909 = vrot.slane %v4904, %v4908
        %v4910 = vlaneseq
        %v4911 = vshrl.u32 %v4910, 7
        %v4912 = vsub.s32 1, %v4911
        %v4913 = vrot.slane %v4904, %v4912
        %v4914 = vlaneseq
        %v4915 = vshrl.u32 %v4914, 7
        %v4916 = vsub.s32 2, %v4915
        %v4917 = vrot.slane %v4904, %v4916
        %4921 = vmatprep.subr.mxu0 %v4901
        %4922 = vmatpush1.msra.mxu0 %v4900
        %4923 = vmatprep.subr.mxu0 %v4898
        %4924 = vmatpush1.msra.mxu0 %v4897
        %4925 = vmatprep.subr.mxu0 %v4895
        %4926 = vmatpush1.msra.mxu0 %v4894
        %4927 = vmatprep.subr.mxu0 %v4892
        %4928 = vmatpush1.msra.mxu0 %v4891
        %4929 = vmatprep.subr.mxu0 %v4889
        %4930 = vmatpush1.msra.mxu0 %v4888
        %4931 = vmatprep.subr.mxu0 %v4886
        %4932 = vmatpush1.msra.mxu0 %v4885
        %4933 = vmatprep.subr.mxu0 %v4883
        %4934 = vmatpush1.msra.mxu0 %v4882
        %4935 = vmatprep.subr.mxu0 %v4880
        %4936 = vmatpush1.msra.mxu0 %v4879
        %4937 = vmatprep.subr.mxu0 %v4877
        %4938 = vmatpush1.msra.mxu0 %v4876
        %4939 = vmatprep.subr.mxu0 %v4874
        %4940 = vmatpush1.msra.mxu0 %v4873
        %4941 = vmatprep.subr.mxu0 %v4871
        %4942 = vmatpush1.msra.mxu0 %v4870
        %4943 = vmatprep.subr.mxu0 %v4868
        %4944 = vmatpush1.msra.mxu0 %v4867
        %4945 = vmatprep.subr.mxu0 %v4865
        %4946 = vmatpush1.msra.mxu0 %v4864
        %4947 = vmatprep.subr.mxu0 %v4862
        %4948 = vmatpush1.msra.mxu0 %v4861
        %4949 = vmatprep.subr.mxu0 %v4859
        %4950 = vmatpush1.msra.mxu0 %v4858
        %4951 = vmatprep.subr.mxu0 %v4856
        %4952 = vmatpush1.msra.mxu0 %v4855
        %4953 = vmatprep.subr.mxu0 0.0
        %4954 = vmatpush2.msra.mxu0 0.0
        %4955 = vmatprep.subr.mxu0 0.0
        %4956 = vmatpush2.msra.mxu0 0.0
        %4957 = vmatprep.subr.mxu0 0.0
        %4958 = vmatpush2.msra.mxu0 0.0
        %4959 = vmatprep.subr.mxu0 0.0
        %4960 = vmatpush2.msra.mxu0 0.0
        %4961 = vmatprep.subr.mxu0 0.0
        %4962 = vmatpush2.msra.mxu0 0.0
        %4963 = vmatprep.subr.mxu0 0.0
        %4964 = vmatpush2.msra.mxu0 0.0
        %4965 = vmatprep.subr.mxu0 0.0
        %4966 = vmatpush2.msra.mxu0 0.0
        %4967 = vmatprep.subr.mxu0 0.0
        %4968 = vmatpush2.msra.mxu0 0.0
        %4969 = vmatprep.subr.mxu0 0.0
        %4970 = vmatpush2.msra.mxu0 0.0
        %4971 = vmatprep.subr.mxu0 0.0
        %4972 = vmatpush2.msra.mxu0 0.0
        %4973 = vmatprep.subr.mxu0 0.0
        %4974 = vmatpush2.msra.mxu0 0.0
        %4975 = vmatprep.subr.mxu0 0.0
        %4976 = vmatpush2.msra.mxu0 0.0
        %4977 = vmatprep.subr.mxu0 0.0
        %4978 = vmatpush2.msra.mxu0 0.0
        %4979 = vmatprep.subr.mxu0 0.0
        %4980 = vmatpush2.msra.mxu0 0.0
        %4981 = vmatprep.subr.mxu0 0.0
        %4982 = vmatpush2.msra.mxu0 0.0
        %4983 = vmatprep.subr.mxu0 0.0
        %4984 = vmatpush2.msra.mxu0 0.0
        %4985 = vmatprep.mubr.f32.mxu0 0.0
        %4986 = vmatmul.mubr.f32.gmra.mxu0 %v4850
        %v4987 = vpop.f32.mrf.mxu0
        %v4988 = vadd.f32 %v4909, %v4987
        %v4989 = vpop.f32.mrf.mxu0
        %v4990 = vadd.f32 %v4913, %v4989
        %4991 = vdwg.mxu0
        %4992 = vmatprep.subr.mxu0 0.0
        %4993 = vmatpush1.msra.mxu0 %v4902
        %4994 = vmatprep.subr.mxu0 0.0
        %4995 = vmatpush1.msra.mxu0 %v4899
        %4996 = vmatprep.subr.mxu0 0.0
        %4997 = vmatpush1.msra.mxu0 %v4896
        %4998 = vmatprep.subr.mxu0 0.0
        %4999 = vmatpush1.msra.mxu0 %v4893
        %5000 = vmatprep.subr.mxu0 0.0
        %5001 = vmatpush1.msra.mxu0 %v4890
        %5002 = vmatprep.subr.mxu0 0.0
        %5003 = vmatpush1.msra.mxu0 %v4887
        %5004 = vmatprep.subr.mxu0 0.0
        %5005 = vmatpush1.msra.mxu0 %v4884
        %5006 = vmatprep.subr.mxu0 0.0
        %5007 = vmatpush1.msra.mxu0 %v4881
        %5008 = vmatprep.subr.mxu0 0.0
        %5009 = vmatpush1.msra.mxu0 %v4878
        %5010 = vmatprep.subr.mxu0 0.0
        %5011 = vmatpush1.msra.mxu0 %v4875
        %5012 = vmatprep.subr.mxu0 0.0
        %5013 = vmatpush1.msra.mxu0 %v4872
        %5014 = vmatprep.subr.mxu0 0.0
        %5015 = vmatpush1.msra.mxu0 %v4869
        %5016 = vmatprep.subr.mxu0 0.0
        %5017 = vmatpush1.msra.mxu0 %v4866
        %5018 = vmatprep.subr.mxu0 0.0
        %5019 = vmatpush1.msra.mxu0 %v4863
        %5020 = vmatprep.subr.mxu0 0.0
        %5021 = vmatpush1.msra.mxu0 %v4860
        %5022 = vmatprep.subr.mxu0 0.0
        %5023 = vmatpush1.msra.mxu0 %v4857
        %5024 = vmatprep.subr.mxu0 0.0
        %5025 = vmatpush2.msra.mxu0 0.0
        %5026 = vmatprep.subr.mxu0 0.0
        %5027 = vmatpush2.msra.mxu0 0.0
        %5028 = vmatprep.subr.mxu0 0.0
        %5029 = vmatpush2.msra.mxu0 0.0
        %5030 = vmatprep.subr.mxu0 0.0
        %5031 = vmatpush2.msra.mxu0 0.0
        %5032 = vmatprep.subr.mxu0 0.0
        %5033 = vmatpush2.msra.mxu0 0.0
        %5034 = vmatprep.subr.mxu0 0.0
        %5035 = vmatpush2.msra.mxu0 0.0
        %5036 = vmatprep.subr.mxu0 0.0
        %5037 = vmatpush2.msra.mxu0 0.0
        %5038 = vmatprep.subr.mxu0 0.0
        %5039 = vmatpush2.msra.mxu0 0.0
        %5040 = vmatprep.subr.mxu0 0.0
        %5041 = vmatpush2.msra.mxu0 0.0
        %5042 = vmatprep.subr.mxu0 0.0
        %5043 = vmatpush2.msra.mxu0 0.0
        %5044 = vmatprep.subr.mxu0 0.0
        %5045 = vmatpush2.msra.mxu0 0.0
        %5046 = vmatprep.subr.mxu0 0.0
        %5047 = vmatpush2.msra.mxu0 0.0
        %5048 = vmatprep.subr.mxu0 0.0
        %5049 = vmatpush2.msra.mxu0 0.0
        %5050 = vmatprep.subr.mxu0 0.0
        %5051 = vmatpush2.msra.mxu0 0.0
        %5052 = vmatprep.subr.mxu0 0.0
        %5053 = vmatpush2.msra.mxu0 0.0
        %5054 = vmatprep.subr.mxu0 0.0
        %5055 = vmatpush2.msra.mxu0 0.0
        %5056 = vmatprep.mubr.f32.mxu0 0.0
        %5057 = vmatmul.mubr.f32.gmra.mxu0 %v4850
        %v5058 = vpop.f32.mrf.mxu0
        %v5059 = vadd.f32 %v4917, %v5058
        %v5060 = vpop.f32.mrf.mxu0
        %5061 = vdwg.mxu0
        %5063 = vrot.lane.b32.xlu0 %v4988, 96
        %v5064 = vpop.permute.xlu0 %5063
        %5065 = vrot.lane.b32.xlu0 %v4988, 64
        %v5066 = vpop.permute.xlu0 %5065
        %5067 = vrot.lane.b32.xlu0 %v4988, 32
        %v5068 = vpop.permute.xlu0 %5067
        %5070 = vrot.lane.b32.xlu0 %v4990, 96
        %v5071 = vpop.permute.xlu0 %5070
        %5072 = vrot.lane.b32.xlu0 %v4990, 64
        %v5073 = vpop.permute.xlu0 %5072
        %5074 = vrot.lane.b32.xlu0 %v4990, 32
        %v5075 = vpop.permute.xlu0 %5074
        %5077 = vrot.lane.b32.xlu0 %v5059, 96
        %v5078 = vpop.permute.xlu0 %5077
        %5079 = vrot.lane.b32.xlu0 %v5059, 64
        %v5080 = vpop.permute.xlu0 %5079
        %5081 = vrot.lane.b32.xlu0 %v5059, 32
        %v5082 = vpop.permute.xlu0 %5081
        %v5083 = vsel %vm1605, %v4988, 0
        %v5085 = vsel %vm1605, %v4990, 0
        %5087 = vmatprep.subr.mxu0 0.0
        %5088 = vmatpush1.xpose.msra.mxu0 0.0
        %5089 = vmatprep.subr.mxu0 0.0
        %5090 = vmatpush1.xpose.msra.mxu0 0.0
        %5091 = vmatprep.subr.mxu0 0.0
        %5092 = vmatpush1.xpose.msra.mxu0 0.0
        %5093 = vmatprep.subr.mxu0 0.0
        %5094 = vmatpush1.xpose.msra.mxu0 0.0
        %5095 = vmatprep.subr.mxu0 0.0
        %5096 = vmatpush1.xpose.msra.mxu0 0.0
        %5097 = vmatprep.subr.mxu0 0.0
        %5098 = vmatpush1.xpose.msra.mxu0 0.0
        %5099 = vmatprep.subr.mxu0 0.0
        %5100 = vmatpush1.xpose.msra.mxu0 0.0
        %5101 = vmatprep.subr.mxu0 0.0
        %5102 = vmatpush1.xpose.msra.mxu0 0.0
        %5103 = vmatprep.subr.mxu0 0.0
        %5104 = vmatpush1.xpose.msra.mxu0 0.0
        %5105 = vmatprep.subr.mxu0 0.0
        %5106 = vmatpush1.xpose.msra.mxu0 0.0
        %5107 = vmatprep.subr.mxu0 0.0
        %5108 = vmatpush1.xpose.msra.mxu0 0.0
        %5109 = vmatprep.subr.mxu0 0.0
        %5110 = vmatpush1.xpose.msra.mxu0 0.0
        %5111 = vmatprep.subr.mxu0 0.0
        %5112 = vmatpush1.xpose.msra.mxu0 0.0
        %5113 = vmatprep.subr.mxu0 0.0
        %5114 = vmatpush1.xpose.msra.mxu0 0.0
        %5115 = vmatprep.subr.mxu0 0.0
        %5116 = vmatpush1.xpose.msra.mxu0 0.0
        %5117 = vmatprep.subr.mxu0 0.0
        %5118 = vmatpush1.xpose.msra.mxu0 %v5085
        %5119 = vmatprep.subr.mxu0 0.0
        %5120 = vmatpush2.xpose.msra.mxu0 0.0
        %5121 = vmatprep.subr.mxu0 0.0
        %5122 = vmatpush2.xpose.msra.mxu0 0.0
        %5123 = vmatprep.subr.mxu0 0.0
        %5124 = vmatpush2.xpose.msra.mxu0 0.0
        %5125 = vmatprep.subr.mxu0 0.0
        %5126 = vmatpush2.xpose.msra.mxu0 0.0
        %5127 = vmatprep.subr.mxu0 0.0
        %5128 = vmatpush2.xpose.msra.mxu0 0.0
        %5129 = vmatprep.subr.mxu0 0.0
        %5130 = vmatpush2.xpose.msra.mxu0 0.0
        %5131 = vmatprep.subr.mxu0 0.0
        %5132 = vmatpush2.xpose.msra.mxu0 0.0
        %5133 = vmatprep.subr.mxu0 0.0
        %5134 = vmatpush2.xpose.msra.mxu0 0.0
        %5135 = vmatprep.subr.mxu0 0.0
        %5136 = vmatpush2.xpose.msra.mxu0 0.0
        %5137 = vmatprep.subr.mxu0 0.0
        %5138 = vmatpush2.xpose.msra.mxu0 0.0
        %5139 = vmatprep.subr.mxu0 0.0
        %5140 = vmatpush2.xpose.msra.mxu0 0.0
        %5141 = vmatprep.subr.mxu0 0.0
        %5142 = vmatpush2.xpose.msra.mxu0 0.0
        %5143 = vmatprep.subr.mxu0 0.0
        %5144 = vmatpush2.xpose.msra.mxu0 0.0
        %5145 = vmatprep.subr.mxu0 0.0
        %5146 = vmatpush2.xpose.msra.mxu0 0.0
        %5147 = vmatprep.subr.mxu0 0.0
        %5148 = vmatpush2.xpose.msra.mxu0 0.0
        %5149 = vmatprep.subr.mxu0 0.0
        %5150 = vmatpush2.xpose.msra.mxu0 0.0
        %5151 = vmatprep.mubr.f32.mxu0 0.0
        %5152 = vmatmul.mubr.f32.gmra.mxu0 %v5083
        %v5153 = vpop.f32.mrf.mxu0
        %v5154 = vadd.f32 0.0, %v5153
        %v5155 = vpop.f32.mrf.mxu0
        %5156 = vdwg.mxu0
        %v5157 = vsel %vm1605, %v5064, 0
        %v5159 = vsel %vm1605, %v5071, 0
        %5161 = vmatprep.subr.mxu0 0.0
        %5162 = vmatpush1.xpose.msra.mxu0 0.0
        %5163 = vmatprep.subr.mxu0 0.0
        %5164 = vmatpush1.xpose.msra.mxu0 0.0
        %5165 = vmatprep.subr.mxu0 0.0
        %5166 = vmatpush1.xpose.msra.mxu0 0.0
        %5167 = vmatprep.subr.mxu0 0.0
        %5168 = vmatpush1.xpose.msra.mxu0 0.0
        %5169 = vmatprep.subr.mxu0 0.0
        %5170 = vmatpush1.xpose.msra.mxu0 0.0
        %5171 = vmatprep.subr.mxu0 0.0
        %5172 = vmatpush1.xpose.msra.mxu0 0.0
        %5173 = vmatprep.subr.mxu0 0.0
        %5174 = vmatpush1.xpose.msra.mxu0 0.0
        %5175 = vmatprep.subr.mxu0 0.0
        %5176 = vmatpush1.xpose.msra.mxu0 0.0
        %5177 = vmatprep.subr.mxu0 0.0
        %5178 = vmatpush1.xpose.msra.mxu0 0.0
        %5179 = vmatprep.subr.mxu0 0.0
        %5180 = vmatpush1.xpose.msra.mxu0 0.0
        %5181 = vmatprep.subr.mxu0 0.0
        %5182 = vmatpush1.xpose.msra.mxu0 0.0
        %5183 = vmatprep.subr.mxu0 0.0
        %5184 = vmatpush1.xpose.msra.mxu0 0.0
        %5185 = vmatprep.subr.mxu0 0.0
        %5186 = vmatpush1.xpose.msra.mxu0 0.0
        %5187 = vmatprep.subr.mxu0 0.0
        %5188 = vmatpush1.xpose.msra.mxu0 0.0
        %5189 = vmatprep.subr.mxu0 0.0
        %5190 = vmatpush1.xpose.msra.mxu0 0.0
        %5191 = vmatprep.subr.mxu0 0.0
        %5192 = vmatpush1.xpose.msra.mxu0 %v5159
        %5193 = vmatprep.subr.mxu0 0.0
        %5194 = vmatpush2.xpose.msra.mxu0 0.0
        %5195 = vmatprep.subr.mxu0 0.0
        %5196 = vmatpush2.xpose.msra.mxu0 0.0
        %5197 = vmatprep.subr.mxu0 0.0
        %5198 = vmatpush2.xpose.msra.mxu0 0.0
        %5199 = vmatprep.subr.mxu0 0.0
        %5200 = vmatpush2.xpose.msra.mxu0 0.0
        %5201 = vmatprep.subr.mxu0 0.0
        %5202 = vmatpush2.xpose.msra.mxu0 0.0
        %5203 = vmatprep.subr.mxu0 0.0
        %5204 = vmatpush2.xpose.msra.mxu0 0.0
        %5205 = vmatprep.subr.mxu0 0.0
        %5206 = vmatpush2.xpose.msra.mxu0 0.0
        %5207 = vmatprep.subr.mxu0 0.0
        %5208 = vmatpush2.xpose.msra.mxu0 0.0
        %5209 = vmatprep.subr.mxu0 0.0
        %5210 = vmatpush2.xpose.msra.mxu0 0.0
        %5211 = vmatprep.subr.mxu0 0.0
        %5212 = vmatpush2.xpose.msra.mxu0 0.0
        %5213 = vmatprep.subr.mxu0 0.0
        %5214 = vmatpush2.xpose.msra.mxu0 0.0
        %5215 = vmatprep.subr.mxu0 0.0
        %5216 = vmatpush2.xpose.msra.mxu0 0.0
        %5217 = vmatprep.subr.mxu0 0.0
        %5218 = vmatpush2.xpose.msra.mxu0 0.0
        %5219 = vmatprep.subr.mxu0 0.0
        %5220 = vmatpush2.xpose.msra.mxu0 0.0
        %5221 = vmatprep.subr.mxu0 0.0
        %5222 = vmatpush2.xpose.msra.mxu0 0.0
        %5223 = vmatprep.subr.mxu0 0.0
        %5224 = vmatpush2.xpose.msra.mxu0 0.0
        %5225 = vmatprep.mubr.f32.mxu0 0.0
        %5226 = vmatmul.mubr.f32.gmra.mxu0 %v5157
        %v5227 = vpop.f32.mrf.mxu0
        %v5228 = vadd.f32 0.0, %v5227
        %v5229 = vpop.f32.mrf.mxu0
        %5230 = vdwg.mxu0
        %v5231 = vsel %vm1605, %v5066, 0
        %v5233 = vsel %vm1605, %v5073, 0
        %5235 = vmatprep.subr.mxu0 0.0
        %5236 = vmatpush1.xpose.msra.mxu0 0.0
        %5237 = vmatprep.subr.mxu0 0.0
        %5238 = vmatpush1.xpose.msra.mxu0 0.0
        %5239 = vmatprep.subr.mxu0 0.0
        %5240 = vmatpush1.xpose.msra.mxu0 0.0
        %5241 = vmatprep.subr.mxu0 0.0
        %5242 = vmatpush1.xpose.msra.mxu0 0.0
        %5243 = vmatprep.subr.mxu0 0.0
        %5244 = vmatpush1.xpose.msra.mxu0 0.0
        %5245 = vmatprep.subr.mxu0 0.0
        %5246 = vmatpush1.xpose.msra.mxu0 0.0
        %5247 = vmatprep.subr.mxu0 0.0
        %5248 = vmatpush1.xpose.msra.mxu0 0.0
        %5249 = vmatprep.subr.mxu0 0.0
        %5250 = vmatpush1.xpose.msra.mxu0 0.0
        %5251 = vmatprep.subr.mxu0 0.0
        %5252 = vmatpush1.xpose.msra.mxu0 0.0
        %5253 = vmatprep.subr.mxu0 0.0
        %5254 = vmatpush1.xpose.msra.mxu0 0.0
        %5255 = vmatprep.subr.mxu0 0.0
        %5256 = vmatpush1.xpose.msra.mxu0 0.0
        %5257 = vmatprep.subr.mxu0 0.0
        %5258 = vmatpush1.xpose.msra.mxu0 0.0
        %5259 = vmatprep.subr.mxu0 0.0
        %5260 = vmatpush1.xpose.msra.mxu0 0.0
        %5261 = vmatprep.subr.mxu0 0.0
        %5262 = vmatpush1.xpose.msra.mxu0 0.0
        %5263 = vmatprep.subr.mxu0 0.0
        %5264 = vmatpush1.xpose.msra.mxu0 0.0
        %5265 = vmatprep.subr.mxu0 0.0
        %5266 = vmatpush1.xpose.msra.mxu0 %v5233
        %5267 = vmatprep.subr.mxu0 0.0
        %5268 = vmatpush2.xpose.msra.mxu0 0.0
        %5269 = vmatprep.subr.mxu0 0.0
        %5270 = vmatpush2.xpose.msra.mxu0 0.0
        %5271 = vmatprep.subr.mxu0 0.0
        %5272 = vmatpush2.xpose.msra.mxu0 0.0
        %5273 = vmatprep.subr.mxu0 0.0
        %5274 = vmatpush2.xpose.msra.mxu0 0.0
        %5275 = vmatprep.subr.mxu0 0.0
        %5276 = vmatpush2.xpose.msra.mxu0 0.0
        %5277 = vmatprep.subr.mxu0 0.0
        %5278 = vmatpush2.xpose.msra.mxu0 0.0
        %5279 = vmatprep.subr.mxu0 0.0
        %5280 = vmatpush2.xpose.msra.mxu0 0.0
        %5281 = vmatprep.subr.mxu0 0.0
        %5282 = vmatpush2.xpose.msra.mxu0 0.0
        %5283 = vmatprep.subr.mxu0 0.0
        %5284 = vmatpush2.xpose.msra.mxu0 0.0
        %5285 = vmatprep.subr.mxu0 0.0
        %5286 = vmatpush2.xpose.msra.mxu0 0.0
        %5287 = vmatprep.subr.mxu0 0.0
        %5288 = vmatpush2.xpose.msra.mxu0 0.0
        %5289 = vmatprep.subr.mxu0 0.0
        %5290 = vmatpush2.xpose.msra.mxu0 0.0
        %5291 = vmatprep.subr.mxu0 0.0
        %5292 = vmatpush2.xpose.msra.mxu0 0.0
        %5293 = vmatprep.subr.mxu0 0.0
        %5294 = vmatpush2.xpose.msra.mxu0 0.0
        %5295 = vmatprep.subr.mxu0 0.0
        %5296 = vmatpush2.xpose.msra.mxu0 0.0
        %5297 = vmatprep.subr.mxu0 0.0
        %5298 = vmatpush2.xpose.msra.mxu0 0.0
        %5299 = vmatprep.mubr.f32.mxu0 0.0
        %5300 = vmatmul.mubr.f32.gmra.mxu0 %v5231
        %v5301 = vpop.f32.mrf.mxu0
        %v5302 = vadd.f32 0.0, %v5301
        %v5303 = vpop.f32.mrf.mxu0
        %5304 = vdwg.mxu0
        %v5305 = vsel %vm1605, %v5068, 0
        %v5307 = vsel %vm1605, %v5075, 0
        %5309 = vmatprep.subr.mxu0 0.0
        %5310 = vmatpush1.xpose.msra.mxu0 0.0
        %5311 = vmatprep.subr.mxu0 0.0
        %5312 = vmatpush1.xpose.msra.mxu0 0.0
        %5313 = vmatprep.subr.mxu0 0.0
        %5314 = vmatpush1.xpose.msra.mxu0 0.0
        %5315 = vmatprep.subr.mxu0 0.0
        %5316 = vmatpush1.xpose.msra.mxu0 0.0
        %5317 = vmatprep.subr.mxu0 0.0
        %5318 = vmatpush1.xpose.msra.mxu0 0.0
        %5319 = vmatprep.subr.mxu0 0.0
        %5320 = vmatpush1.xpose.msra.mxu0 0.0
        %5321 = vmatprep.subr.mxu0 0.0
        %5322 = vmatpush1.xpose.msra.mxu0 0.0
        %5323 = vmatprep.subr.mxu0 0.0
        %5324 = vmatpush1.xpose.msra.mxu0 0.0
        %5325 = vmatprep.subr.mxu0 0.0
        %5326 = vmatpush1.xpose.msra.mxu0 0.0
        %5327 = vmatprep.subr.mxu0 0.0
        %5328 = vmatpush1.xpose.msra.mxu0 0.0
        %5329 = vmatprep.subr.mxu0 0.0
        %5330 = vmatpush1.xpose.msra.mxu0 0.0
        %5331 = vmatprep.subr.mxu0 0.0
        %5332 = vmatpush1.xpose.msra.mxu0 0.0
        %5333 = vmatprep.subr.mxu0 0.0
        %5334 = vmatpush1.xpose.msra.mxu0 0.0
        %5335 = vmatprep.subr.mxu0 0.0
        %5336 = vmatpush1.xpose.msra.mxu0 0.0
        %5337 = vmatprep.subr.mxu0 0.0
        %5338 = vmatpush1.xpose.msra.mxu0 0.0
        %5339 = vmatprep.subr.mxu0 0.0
        %5340 = vmatpush1.xpose.msra.mxu0 %v5307
        %5341 = vmatprep.subr.mxu0 0.0
        %5342 = vmatpush2.xpose.msra.mxu0 0.0
        %5343 = vmatprep.subr.mxu0 0.0
        %5344 = vmatpush2.xpose.msra.mxu0 0.0
        %5345 = vmatprep.subr.mxu0 0.0
        %5346 = vmatpush2.xpose.msra.mxu0 0.0
        %5347 = vmatprep.subr.mxu0 0.0
        %5348 = vmatpush2.xpose.msra.mxu0 0.0
        %5349 = vmatprep.subr.mxu0 0.0
        %5350 = vmatpush2.xpose.msra.mxu0 0.0
        %5351 = vmatprep.subr.mxu0 0.0
        %5352 = vmatpush2.xpose.msra.mxu0 0.0
        %5353 = vmatprep.subr.mxu0 0.0
        %5354 = vmatpush2.xpose.msra.mxu0 0.0
        %5355 = vmatprep.subr.mxu0 0.0
        %5356 = vmatpush2.xpose.msra.mxu0 0.0
        %5357 = vmatprep.subr.mxu0 0.0
        %5358 = vmatpush2.xpose.msra.mxu0 0.0
        %5359 = vmatprep.subr.mxu0 0.0
        %5360 = vmatpush2.xpose.msra.mxu0 0.0
        %5361 = vmatprep.subr.mxu0 0.0
        %5362 = vmatpush2.xpose.msra.mxu0 0.0
        %5363 = vmatprep.subr.mxu0 0.0
        %5364 = vmatpush2.xpose.msra.mxu0 0.0
        %5365 = vmatprep.subr.mxu0 0.0
        %5366 = vmatpush2.xpose.msra.mxu0 0.0
        %5367 = vmatprep.subr.mxu0 0.0
        %5368 = vmatpush2.xpose.msra.mxu0 0.0
        %5369 = vmatprep.subr.mxu0 0.0
        %5370 = vmatpush2.xpose.msra.mxu0 0.0
        %5371 = vmatprep.subr.mxu0 0.0
        %5372 = vmatpush2.xpose.msra.mxu0 0.0
        %5373 = vmatprep.mubr.f32.mxu0 0.0
        %5374 = vmatmul.mubr.f32.gmra.mxu0 %v5305
        %v5375 = vpop.f32.mrf.mxu0
        %v5376 = vadd.f32 0.0, %v5375
        %v5377 = vpop.f32.mrf.mxu0
        %5378 = vdwg.mxu0
        %v5379 = vmul.f32 %v5154, 0.17677669
        %v5380 = vmul.f32 %v5228, 0.17677669
        %v5381 = vmul.f32 %v5302, 0.17677669
        %v5382 = vmul.f32 %v5376, 0.17677669
        %vm5383 = vcmask 36864
        %v5384 = vsel %vm5383, %v5379, -inf
        %5385 = vmax.xlane.f32.xlu0 %v5384
        %v5386 = vpop.xlane.xlu0 %5385
        %v5387 = vsel %vm5383, %v5380, -inf
        %5388 = vmax.xlane.f32.xlu0 %v5387
        %v5389 = vpop.xlane.xlu0 %5388
        %v5390 = vsel %vm5383, %v5381, -inf
        %5391 = vmax.xlane.f32.xlu0 %v5390
        %v5392 = vpop.xlane.xlu0 %5391
        %v5393 = vsel %vm5383, %v5382, -inf
        %5394 = vmax.xlane.f32.xlu0 %v5393
        %v5395 = vpop.xlane.xlu0 %5394
        %v5396 = vsub.f32 %v5379, %v5386
        %v5397 = vsub.f32 %v5380, %v5389
        %v5398 = vsub.f32 %v5381, %v5392
        %v5399 = vsub.f32 %v5382, %v5395
        %v5400 = vmul.f32 %v5396, 1.442695
        %v5401 = vpow.pop %v5400
        %v5402 = vmul.f32 %v5397, 1.442695
        %v5403 = vpow.pop %v5402
        %v5404 = vmul.f32 %v5398, 1.442695
        %v5405 = vpow.pop %v5404
        %v5406 = vmul.f32 %v5399, 1.442695
        %v5407 = vpow.pop %v5406
        %v5408 = vsel %vm5383, %v5401, 0.0
        %5409 = vadd.xlane.f32.xlu0 %v5408
        %v5410 = vpop.xlane.xlu0 %5409
        %v5411 = vsel %vm5383, %v5403, 0.0
        %5412 = vadd.xlane.f32.xlu0 %v5411
        %v5413 = vpop.xlane.xlu0 %5412
        %v5414 = vsel %vm5383, %v5405, 0.0
        %5415 = vadd.xlane.f32.xlu0 %v5414
        %v5416 = vpop.xlane.xlu0 %5415
        %v5417 = vsel %vm5383, %v5407, 0.0
        %5418 = vadd.xlane.f32.xlu0 %v5417
        %v5419 = vpop.xlane.xlu0 %5418
        %v5420 = vrcp.pop %v5410
        %v5421 = vmul.f32 %v5401, %v5420
        %v5422 = vrcp.pop %v5413
        %v5423 = vmul.f32 %v5403, %v5422
        %v5424 = vrcp.pop %v5416
        %v5425 = vmul.f32 %v5405, %v5424
        %v5426 = vrcp.pop %v5419
        %v5427 = vmul.f32 %v5407, %v5426
        %vm5428 = vcmask 39936
        %v5430 = vsel %vm5428, %v5421, 0
        %vm5432 = vcmask 1044480
        %v5433 = vsel %vm5432, %v5059, 0
        %5435 = vmatprep.subr.mxu0 0.0
        %5436 = vmatpush1.msra.mxu0 0.0
        %5437 = vmatprep.subr.mxu0 0.0
        %5438 = vmatpush1.msra.mxu0 0.0
        %5439 = vmatprep.subr.mxu0 0.0
        %5440 = vmatpush1.msra.mxu0 0.0
        %5441 = vmatprep.subr.mxu0 0.0
        %5442 = vmatpush1.msra.mxu0 0.0
        %5443 = vmatprep.subr.mxu0 0.0
        %5444 = vmatpush1.msra.mxu0 0.0
        %5445 = vmatprep.subr.mxu0 0.0
        %5446 = vmatpush1.msra.mxu0 0.0
        %5447 = vmatprep.subr.mxu0 0.0
        %5448 = vmatpush1.msra.mxu0 0.0
        %5449 = vmatprep.subr.mxu0 0.0
        %5450 = vmatpush1.msra.mxu0 0.0
        %5451 = vmatprep.subr.mxu0 0.0
        %5452 = vmatpush1.msra.mxu0 0.0
        %5453 = vmatprep.subr.mxu0 0.0
        %5454 = vmatpush1.msra.mxu0 0.0
        %5455 = vmatprep.subr.mxu0 0.0
        %5456 = vmatpush1.msra.mxu0 0.0
        %5457 = vmatprep.subr.mxu0 0.0
        %5458 = vmatpush1.msra.mxu0 0.0
        %5459 = vmatprep.subr.mxu0 0.0
        %5460 = vmatpush1.msra.mxu0 0.0
        %5461 = vmatprep.subr.mxu0 0.0
        %5462 = vmatpush1.msra.mxu0 0.0
        %5463 = vmatprep.subr.mxu0 0.0
        %5464 = vmatpush1.msra.mxu0 0.0
        %5465 = vmatprep.subr.mxu0 0.0
        %5466 = vmatpush1.msra.mxu0 %v5433
        %5467 = vmatprep.subr.mxu0 0.0
        %5468 = vmatpush2.msra.mxu0 0.0
        %5469 = vmatprep.subr.mxu0 0.0
        %5470 = vmatpush2.msra.mxu0 0.0
        %5471 = vmatprep.subr.mxu0 0.0
        %5472 = vmatpush2.msra.mxu0 0.0
        %5473 = vmatprep.subr.mxu0 0.0
        %5474 = vmatpush2.msra.mxu0 0.0
        %5475 = vmatprep.subr.mxu0 0.0
        %5476 = vmatpush2.msra.mxu0 0.0
        %5477 = vmatprep.subr.mxu0 0.0
        %5478 = vmatpush2.msra.mxu0 0.0
        %5479 = vmatprep.subr.mxu0 0.0
        %5480 = vmatpush2.msra.mxu0 0.0
        %5481 = vmatprep.subr.mxu0 0.0
        %5482 = vmatpush2.msra.mxu0 0.0
        %5483 = vmatprep.subr.mxu0 0.0
        %5484 = vmatpush2.msra.mxu0 0.0
        %5485 = vmatprep.subr.mxu0 0.0
        %5486 = vmatpush2.msra.mxu0 0.0
        %5487 = vmatprep.subr.mxu0 0.0
        %5488 = vmatpush2.msra.mxu0 0.0
        %5489 = vmatprep.subr.mxu0 0.0
        %5490 = vmatpush2.msra.mxu0 0.0
        %5491 = vmatprep.subr.mxu0 0.0
        %5492 = vmatpush2.msra.mxu0 0.0
        %5493 = vmatprep.subr.mxu0 0.0
        %5494 = vmatpush2.msra.mxu0 0.0
        %5495 = vmatprep.subr.mxu0 0.0
        %5496 = vmatpush2.msra.mxu0 0.0
        %5497 = vmatprep.subr.mxu0 0.0
        %5498 = vmatpush2.msra.mxu0 0.0
        %5499 = vmatprep.mubr.f32.mxu0 0.0
        %5500 = vmatmul.mubr.f32.gmra.mxu0 %v5430
        %v5501 = vpop.f32.mrf.mxu0
        %v5502 = vadd.f32 0.0, %v5501
        %v5503 = vpop.f32.mrf.mxu0
        %5504 = vdwg.mxu0
        %v5506 = vsel %vm5428, %v5423, 0
        %v5508 = vsel %vm5432, %v5078, 0
        %5510 = vmatprep.subr.mxu0 0.0
        %5511 = vmatpush1.msra.mxu0 0.0
        %5512 = vmatprep.subr.mxu0 0.0
        %5513 = vmatpush1.msra.mxu0 0.0
        %5514 = vmatprep.subr.mxu0 0.0
        %5515 = vmatpush1.msra.mxu0 0.0
        %5516 = vmatprep.subr.mxu0 0.0
        %5517 = vmatpush1.msra.mxu0 0.0
        %5518 = vmatprep.subr.mxu0 0.0
        %5519 = vmatpush1.msra.mxu0 0.0
        %5520 = vmatprep.subr.mxu0 0.0
        %5521 = vmatpush1.msra.mxu0 0.0
        %5522 = vmatprep.subr.mxu0 0.0
        %5523 = vmatpush1.msra.mxu0 0.0
        %5524 = vmatprep.subr.mxu0 0.0
        %5525 = vmatpush1.msra.mxu0 0.0
        %5526 = vmatprep.subr.mxu0 0.0
        %5527 = vmatpush1.msra.mxu0 0.0
        %5528 = vmatprep.subr.mxu0 0.0
        %5529 = vmatpush1.msra.mxu0 0.0
        %5530 = vmatprep.subr.mxu0 0.0
        %5531 = vmatpush1.msra.mxu0 0.0
        %5532 = vmatprep.subr.mxu0 0.0
        %5533 = vmatpush1.msra.mxu0 0.0
        %5534 = vmatprep.subr.mxu0 0.0
        %5535 = vmatpush1.msra.mxu0 0.0
        %5536 = vmatprep.subr.mxu0 0.0
        %5537 = vmatpush1.msra.mxu0 0.0
        %5538 = vmatprep.subr.mxu0 0.0
        %5539 = vmatpush1.msra.mxu0 0.0
        %5540 = vmatprep.subr.mxu0 0.0
        %5541 = vmatpush1.msra.mxu0 %v5508
        %5542 = vmatprep.subr.mxu0 0.0
        %5543 = vmatpush2.msra.mxu0 0.0
        %5544 = vmatprep.subr.mxu0 0.0
        %5545 = vmatpush2.msra.mxu0 0.0
        %5546 = vmatprep.subr.mxu0 0.0
        %5547 = vmatpush2.msra.mxu0 0.0
        %5548 = vmatprep.subr.mxu0 0.0
        %5549 = vmatpush2.msra.mxu0 0.0
        %5550 = vmatprep.subr.mxu0 0.0
        %5551 = vmatpush2.msra.mxu0 0.0
        %5552 = vmatprep.subr.mxu0 0.0
        %5553 = vmatpush2.msra.mxu0 0.0
        %5554 = vmatprep.subr.mxu0 0.0
        %5555 = vmatpush2.msra.mxu0 0.0
        %5556 = vmatprep.subr.mxu0 0.0
        %5557 = vmatpush2.msra.mxu0 0.0
        %5558 = vmatprep.subr.mxu0 0.0
        %5559 = vmatpush2.msra.mxu0 0.0
        %5560 = vmatprep.subr.mxu0 0.0
        %5561 = vmatpush2.msra.mxu0 0.0
        %5562 = vmatprep.subr.mxu0 0.0
        %5563 = vmatpush2.msra.mxu0 0.0
        %5564 = vmatprep.subr.mxu0 0.0
        %5565 = vmatpush2.msra.mxu0 0.0
        %5566 = vmatprep.subr.mxu0 0.0
        %5567 = vmatpush2.msra.mxu0 0.0
        %5568 = vmatprep.subr.mxu0 0.0
        %5569 = vmatpush2.msra.mxu0 0.0
        %5570 = vmatprep.subr.mxu0 0.0
        %5571 = vmatpush2.msra.mxu0 0.0
        %5572 = vmatprep.subr.mxu0 0.0
        %5573 = vmatpush2.msra.mxu0 0.0
        %5574 = vmatprep.mubr.f32.mxu0 0.0
        %5575 = vmatmul.mubr.f32.gmra.mxu0 %v5506
        %v5576 = vpop.f32.mrf.mxu0
        %v5577 = vadd.f32 0.0, %v5576
        %v5578 = vpop.f32.mrf.mxu0
        %5579 = vdwg.mxu0
        %v5581 = vsel %vm5428, %v5425, 0
        %v5583 = vsel %vm5432, %v5080, 0
        %5585 = vmatprep.subr.mxu0 0.0
        %5586 = vmatpush1.msra.mxu0 0.0
        %5587 = vmatprep.subr.mxu0 0.0
        %5588 = vmatpush1.msra.mxu0 0.0
        %5589 = vmatprep.subr.mxu0 0.0
        %5590 = vmatpush1.msra.mxu0 0.0
        %5591 = vmatprep.subr.mxu0 0.0
        %5592 = vmatpush1.msra.mxu0 0.0
        %5593 = vmatprep.subr.mxu0 0.0
        %5594 = vmatpush1.msra.mxu0 0.0
        %5595 = vmatprep.subr.mxu0 0.0
        %5596 = vmatpush1.msra.mxu0 0.0
        %5597 = vmatprep.subr.mxu0 0.0
        %5598 = vmatpush1.msra.mxu0 0.0
        %5599 = vmatprep.subr.mxu0 0.0
        %5600 = vmatpush1.msra.mxu0 0.0
        %5601 = vmatprep.subr.mxu0 0.0
        %5602 = vmatpush1.msra.mxu0 0.0
        %5603 = vmatprep.subr.mxu0 0.0
        %5604 = vmatpush1.msra.mxu0 0.0
        %5605 = vmatprep.subr.mxu0 0.0
        %5606 = vmatpush1.msra.mxu0 0.0
        %5607 = vmatprep.subr.mxu0 0.0
        %5608 = vmatpush1.msra.mxu0 0.0
        %5609 = vmatprep.subr.mxu0 0.0
        %5610 = vmatpush1.msra.mxu0 0.0
        %5611 = vmatprep.subr.mxu0 0.0
        %5612 = vmatpush1.msra.mxu0 0.0
        %5613 = vmatprep.subr.mxu0 0.0
        %5614 = vmatpush1.msra.mxu0 0.0
        %5615 = vmatprep.subr.mxu0 0.0
        %5616 = vmatpush1.msra.mxu0 %v5583
        %5617 = vmatprep.subr.mxu0 0.0
        %5618 = vmatpush2.msra.mxu0 0.0
        %5619 = vmatprep.subr.mxu0 0.0
        %5620 = vmatpush2.msra.mxu0 0.0
        %5621 = vmatprep.subr.mxu0 0.0
        %5622 = vmatpush2.msra.mxu0 0.0
        %5623 = vmatprep.subr.mxu0 0.0
        %5624 = vmatpush2.msra.mxu0 0.0
        %5625 = vmatprep.subr.mxu0 0.0
        %5626 = vmatpush2.msra.mxu0 0.0
        %5627 = vmatprep.subr.mxu0 0.0
        %5628 = vmatpush2.msra.mxu0 0.0
        %5629 = vmatprep.subr.mxu0 0.0
        %5630 = vmatpush2.msra.mxu0 0.0
        %5631 = vmatprep.subr.mxu0 0.0
        %5632 = vmatpush2.msra.mxu0 0.0
        %5633 = vmatprep.subr.mxu0 0.0
        %5634 = vmatpush2.msra.mxu0 0.0
        %5635 = vmatprep.subr.mxu0 0.0
        %5636 = vmatpush2.msra.mxu0 0.0
        %5637 = vmatprep.subr.mxu0 0.0
        %5638 = vmatpush2.msra.mxu0 0.0
        %5639 = vmatprep.subr.mxu0 0.0
        %5640 = vmatpush2.msra.mxu0 0.0
        %5641 = vmatprep.subr.mxu0 0.0
        %5642 = vmatpush2.msra.mxu0 0.0
        %5643 = vmatprep.subr.mxu0 0.0
        %5644 = vmatpush2.msra.mxu0 0.0
        %5645 = vmatprep.subr.mxu0 0.0
        %5646 = vmatpush2.msra.mxu0 0.0
        %5647 = vmatprep.subr.mxu0 0.0
        %5648 = vmatpush2.msra.mxu0 0.0
        %5649 = vmatprep.mubr.f32.mxu0 0.0
        %5650 = vmatmul.mubr.f32.gmra.mxu0 %v5581
        %v5651 = vpop.f32.mrf.mxu0
        %v5652 = vadd.f32 0.0, %v5651
        %v5653 = vpop.f32.mrf.mxu0
        %5654 = vdwg.mxu0
        %v5656 = vsel %vm5428, %v5427, 0
        %v5658 = vsel %vm5432, %v5082, 0
        %5660 = vmatprep.subr.mxu0 0.0
        %5661 = vmatpush1.msra.mxu0 0.0
        %5662 = vmatprep.subr.mxu0 0.0
        %5663 = vmatpush1.msra.mxu0 0.0
        %5664 = vmatprep.subr.mxu0 0.0
        %5665 = vmatpush1.msra.mxu0 0.0
        %5666 = vmatprep.subr.mxu0 0.0
        %5667 = vmatpush1.msra.mxu0 0.0
        %5668 = vmatprep.subr.mxu0 0.0
        %5669 = vmatpush1.msra.mxu0 0.0
        %5670 = vmatprep.subr.mxu0 0.0
        %5671 = vmatpush1.msra.mxu0 0.0
        %5672 = vmatprep.subr.mxu0 0.0
        %5673 = vmatpush1.msra.mxu0 0.0
        %5674 = vmatprep.subr.mxu0 0.0
        %5675 = vmatpush1.msra.mxu0 0.0
        %5676 = vmatprep.subr.mxu0 0.0
        %5677 = vmatpush1.msra.mxu0 0.0
        %5678 = vmatprep.subr.mxu0 0.0
        %5679 = vmatpush1.msra.mxu0 0.0
        %5680 = vmatprep.subr.mxu0 0.0
        %5681 = vmatpush1.msra.mxu0 0.0
        %5682 = vmatprep.subr.mxu0 0.0
        %5683 = vmatpush1.msra.mxu0 0.0
        %5684 = vmatprep.subr.mxu0 0.0
        %5685 = vmatpush1.msra.mxu0 0.0
        %5686 = vmatprep.subr.mxu0 0.0
        %5687 = vmatpush1.msra.mxu0 0.0
        %5688 = vmatprep.subr.mxu0 0.0
        %5689 = vmatpush1.msra.mxu0 0.0
        %5690 = vmatprep.subr.mxu0 0.0
        %5691 = vmatpush1.msra.mxu0 %v5658
        %5692 = vmatprep.subr.mxu0 0.0
        %5693 = vmatpush2.msra.mxu0 0.0
        %5694 = vmatprep.subr.mxu0 0.0
        %5695 = vmatpush2.msra.mxu0 0.0
        %5696 = vmatprep.subr.mxu0 0.0
        %5697 = vmatpush2.msra.mxu0 0.0
        %5698 = vmatprep.subr.mxu0 0.0
        %5699 = vmatpush2.msra.mxu0 0.0
        %5700 = vmatprep.subr.mxu0 0.0
        %5701 = vmatpush2.msra.mxu0 0.0
        %5702 = vmatprep.subr.mxu0 0.0
        %5703 = vmatpush2.msra.mxu0 0.0
        %5704 = vmatprep.subr.mxu0 0.0
        %5705 = vmatpush2.msra.mxu0 0.0
        %5706 = vmatprep.subr.mxu0 0.0
        %5707 = vmatpush2.msra.mxu0 0.0
        %5708 = vmatprep.subr.mxu0 0.0
        %5709 = vmatpush2.msra.mxu0 0.0
        %5710 = vmatprep.subr.mxu0 0.0
        %5711 = vmatpush2.msra.mxu0 0.0
        %5712 = vmatprep.subr.mxu0 0.0
        %5713 = vmatpush2.msra.mxu0 0.0
        %5714 = vmatprep.subr.mxu0 0.0
        %5715 = vmatpush2.msra.mxu0 0.0
        %5716 = vmatprep.subr.mxu0 0.0
        %5717 = vmatpush2.msra.mxu0 0.0
        %5718 = vmatprep.subr.mxu0 0.0
        %5719 = vmatpush2.msra.mxu0 0.0
        %5720 = vmatprep.subr.mxu0 0.0
        %5721 = vmatpush2.msra.mxu0 0.0
        %5722 = vmatprep.subr.mxu0 0.0
        %5723 = vmatpush2.msra.mxu0 0.0
        %5724 = vmatprep.mubr.f32.mxu0 0.0
        %5725 = vmatmul.mubr.f32.gmra.mxu0 %v5656
        %v5726 = vpop.f32.mrf.mxu0
        %v5727 = vadd.f32 0.0, %v5726
        %v5728 = vpop.f32.mrf.mxu0
        %5729 = vdwg.mxu0
        %5731 = vrot.lane.b32.xlu0 %v5577, 32
        %v5732 = vpop.permute.xlu0 %5731
        %5735 = vrot.lane.b32.xlu0 %v5652, 64
        %v5736 = vpop.permute.xlu0 %5735
        %5739 = vrot.lane.b32.xlu0 %v5727, 96
        %v5740 = vpop.permute.xlu0 %5739
        %v5742 = vsel %vm1605, %v5502, %v5732
        %v5743 = vsel %vm2395, %v5742, %v5736
        %v5744 = vsel %vm2398, %v5743, %v5740
        %s5745 = scalar_lea.vmem [#allocation16], 256
        %v5746 = vld [vmem:[%s5745] sm:$0xff]
        %v5747 = vld [vmem:[%s5745 + $0x8] sm:$0xff]
        %v5748 = vld [vmem:[%s5745 + $0x10] sm:$0xff]
        %v5749 = vld [vmem:[%s5745 + $0x18] sm:$0xff]
        %v5750 = vld [vmem:[%s5745 + $0x20] sm:$0xff]
        %v5751 = vld [vmem:[%s5745 + $0x28] sm:$0xff]
        %v5752 = vld [vmem:[%s5745 + $0x30] sm:$0xff]
        %v5753 = vld [vmem:[%s5745 + $0x38] sm:$0xff]
        %v5754 = vld [vmem:[%s5745 + $0x40] sm:$0xff]
        %v5755 = vld [vmem:[%s5745 + $0x48] sm:$0xff]
        %v5756 = vld [vmem:[%s5745 + $0x50] sm:$0xff]
        %v5757 = vld [vmem:[%s5745 + $0x58] sm:$0xff]
        %v5758 = vld [vmem:[%s5745 + $0x60] sm:$0xff]
        %v5759 = vld [vmem:[%s5745 + $0x68] sm:$0xff]
        %v5760 = vld [vmem:[%s5745 + $0x70] sm:$0xff]
        %v5761 = vld [vmem:[%s5745 + $0x78] sm:$0xff]
        %s5762 = scalar_lea.vmem [#allocation17], 2
        %v5763 = vld [vmem:[%s5762] sm:$0x1]
        %v5765 = vlaneseq
        %v5766 = vshrl.u32 %v5765, 7
        %v5767 = vsub.s32 0, %v5766
        %v5768 = vrot.slane %v5763, %v5767
        %5770 = vmatprep.subr.mxu0 0.0
        %5771 = vmatpush1.msra.mxu0 %v5761
        %5772 = vmatprep.subr.mxu0 0.0
        %5773 = vmatpush1.msra.mxu0 %v5760
        %5774 = vmatprep.subr.mxu0 0.0
        %5775 = vmatpush1.msra.mxu0 %v5759
        %5776 = vmatprep.subr.mxu0 0.0
        %5777 = vmatpush1.msra.mxu0 %v5758
        %5778 = vmatprep.subr.mxu0 0.0
        %5779 = vmatpush1.msra.mxu0 %v5757
        %5780 = vmatprep.subr.mxu0 0.0
        %5781 = vmatpush1.msra.mxu0 %v5756
        %5782 = vmatprep.subr.mxu0 0.0
        %5783 = vmatpush1.msra.mxu0 %v5755
        %5784 = vmatprep.subr.mxu0 0.0
        %5785 = vmatpush1.msra.mxu0 %v5754
        %5786 = vmatprep.subr.mxu0 0.0
        %5787 = vmatpush1.msra.mxu0 %v5753
        %5788 = vmatprep.subr.mxu0 0.0
        %5789 = vmatpush1.msra.mxu0 %v5752
        %5790 = vmatprep.subr.mxu0 0.0
        %5791 = vmatpush1.msra.mxu0 %v5751
        %5792 = vmatprep.subr.mxu0 0.0
        %5793 = vmatpush1.msra.mxu0 %v5750
        %5794 = vmatprep.subr.mxu0 0.0
        %5795 = vmatpush1.msra.mxu0 %v5749
        %5796 = vmatprep.subr.mxu0 0.0
        %5797 = vmatpush1.msra.mxu0 %v5748
        %5798 = vmatprep.subr.mxu0 0.0
        %5799 = vmatpush1.msra.mxu0 %v5747
        %5800 = vmatprep.subr.mxu0 0.0
        %5801 = vmatpush1.msra.mxu0 %v5746
        %5802 = vmatprep.subr.mxu0 0.0
        %5803 = vmatpush2.msra.mxu0 0.0
        %5804 = vmatprep.subr.mxu0 0.0
        %5805 = vmatpush2.msra.mxu0 0.0
        %5806 = vmatprep.subr.mxu0 0.0
        %5807 = vmatpush2.msra.mxu0 0.0
        %5808 = vmatprep.subr.mxu0 0.0
        %5809 = vmatpush2.msra.mxu0 0.0
        %5810 = vmatprep.subr.mxu0 0.0
        %5811 = vmatpush2.msra.mxu0 0.0
        %5812 = vmatprep.subr.mxu0 0.0
        %5813 = vmatpush2.msra.mxu0 0.0
        %5814 = vmatprep.subr.mxu0 0.0
        %5815 = vmatpush2.msra.mxu0 0.0
        %5816 = vmatprep.subr.mxu0 0.0
        %5817 = vmatpush2.msra.mxu0 0.0
        %5818 = vmatprep.subr.mxu0 0.0
        %5819 = vmatpush2.msra.mxu0 0.0
        %5820 = vmatprep.subr.mxu0 0.0
        %5821 = vmatpush2.msra.mxu0 0.0
        %5822 = vmatprep.subr.mxu0 0.0
        %5823 = vmatpush2.msra.mxu0 0.0
        %5824 = vmatprep.subr.mxu0 0.0
        %5825 = vmatpush2.msra.mxu0 0.0
        %5826 = vmatprep.subr.mxu0 0.0
        %5827 = vmatpush2.msra.mxu0 0.0
        %5828 = vmatprep.subr.mxu0 0.0
        %5829 = vmatpush2.msra.mxu0 0.0
        %5830 = vmatprep.subr.mxu0 0.0
        %5831 = vmatpush2.msra.mxu0 0.0
        %5832 = vmatprep.subr.mxu0 0.0
        %5833 = vmatpush2.msra.mxu0 0.0
        %5834 = vmatprep.mubr.f32.mxu0 0.0
        %5835 = vmatmul.mubr.f32.gmra.mxu0 %v5744
        %v5836 = vpop.f32.mrf.mxu0
        %v5837 = vadd.f32 %v5768, %v5836
        %v5838 = vpop.f32.mrf.mxu0
        %5839 = vdwg.mxu0
        %v5840 = vadd.f32 %v4850, %v5837
        %s5841 = scalar_lea.vmem [#allocation19], 2
        %v5842 = vld [vmem:[%s5841] sm:$0x1]
        %s5843 = scalar_lea.vmem [#allocation20], 2
        %v5844 = vld [vmem:[%s5843] sm:$0x1]
        %v5845 = vsel %vm5432, %v5840, 0.0
        %5846 = vadd.xlane.f32.xlu0 %v5845
        %v5847 = vpop.xlane.xlu0 %5846
        %v5848 = vmul.f32 %v5847, %v2508
        %v5849 = vsub.f32 %v5840, %v5848
        %v5850 = vmul.f32 %v5849, %v5849
        %v5851 = vsel %vm5432, %v5850, 0.0
        %5852 = vadd.xlane.f32.xlu0 %v5851
        %v5853 = vpop.xlane.xlu0 %5852
        %v5854 = vmul.f32 %v5853, %v2508
        %v5855 = vadd.f32 %v5854, 1e-05
        %v5856 = vrsqrt.pop %v5855
        %v5857 = vmul.f32 %v5849, %v5856
        %v5859 = vlaneseq
        %v5860 = vshrl.u32 %v5859, 7
        %v5861 = vsub.s32 0, %v5860
        %v5862 = vrot.slane %v5842, %v5861
        %v5864 = vmul.f32 %v5857, %v5862
        %v5866 = vlaneseq
        %v5867 = vshrl.u32 %v5866, 7
        %v5868 = vsub.s32 0, %v5867
        %v5869 = vrot.slane %v5844, %v5868
        %v5871 = vadd.f32 %v5864, %v5869
        %s5872 = scalar_lea.vmem [#allocation22], 1024
        %v5873 = vld [vmem:[%s5872] sm:$0xff]
        %v5874 = vld [vmem:[%s5872 + $0x8] sm:$0xff]
        %v5875 = vld [vmem:[%s5872 + $0x10] sm:$0xff]
        %v5876 = vld [vmem:[%s5872 + $0x18] sm:$0xff]
        %v5877 = vld [vmem:[%s5872 + $0x20] sm:$0xff]
        %v5878 = vld [vmem:[%s5872 + $0x28] sm:$0xff]
        %v5879 = vld [vmem:[%s5872 + $0x30] sm:$0xff]
        %v5880 = vld [vmem:[%s5872 + $0x38] sm:$0xff]
        %v5881 = vld [vmem:[%s5872 + $0x40] sm:$0xff]
        %v5882 = vld [vmem:[%s5872 + $0x48] sm:$0xff]
        %v5883 = vld [vmem:[%s5872 + $0x50] sm:$0xff]
        %v5884 = vld [vmem:[%s5872 + $0x58] sm:$0xff]
        %v5885 = vld [vmem:[%s5872 + $0x60] sm:$0xff]
        %v5886 = vld [vmem:[%s5872 + $0x68] sm:$0xff]
        %v5887 = vld [vmem:[%s5872 + $0x70] sm:$0xff]
        %v5888 = vld [vmem:[%s5872 + $0x78] sm:$0xff]
        %v5889 = vld [vmem:[%s5872 + $0x80] sm:$0xff]
        %v5890 = vld [vmem:[%s5872 + $0x88] sm:$0xff]
        %v5891 = vld [vmem:[%s5872 + $0x90] sm:$0xff]
        %v5892 = vld [vmem:[%s5872 + $0x98] sm:$0xff]
        %v5893 = vld [vmem:[%s5872 + $0xa0] sm:$0xff]
        %v5894 = vld [vmem:[%s5872 + $0xa8] sm:$0xff]
        %v5895 = vld [vmem:[%s5872 + $0xb0] sm:$0xff]
        %v5896 = vld [vmem:[%s5872 + $0xb8] sm:$0xff]
        %v5897 = vld [vmem:[%s5872 + $0xc0] sm:$0xff]
        %v5898 = vld [vmem:[%s5872 + $0xc8] sm:$0xff]
        %v5899 = vld [vmem:[%s5872 + $0xd0] sm:$0xff]
        %v5900 = vld [vmem:[%s5872 + $0xd8] sm:$0xff]
        %v5901 = vld [vmem:[%s5872 + $0xe0] sm:$0xff]
        %v5902 = vld [vmem:[%s5872 + $0xe8] sm:$0xff]
        %v5903 = vld [vmem:[%s5872 + $0xf0] sm:$0xff]
        %v5904 = vld [vmem:[%s5872 + $0xf8] sm:$0xff]
        %v5905 = vld [vmem:[%s5872 + $0x100] sm:$0xff]
        %v5906 = vld [vmem:[%s5872 + $0x108] sm:$0xff]
        %v5907 = vld [vmem:[%s5872 + $0x110] sm:$0xff]
        %v5908 = vld [vmem:[%s5872 + $0x118] sm:$0xff]
        %v5909 = vld [vmem:[%s5872 + $0x120] sm:$0xff]
        %v5910 = vld [vmem:[%s5872 + $0x128] sm:$0xff]
        %v5911 = vld [vmem:[%s5872 + $0x130] sm:$0xff]
        %v5912 = vld [vmem:[%s5872 + $0x138] sm:$0xff]
        %v5913 = vld [vmem:[%s5872 + $0x140] sm:$0xff]
        %v5914 = vld [vmem:[%s5872 + $0x148] sm:$0xff]
        %v5915 = vld [vmem:[%s5872 + $0x150] sm:$0xff]
        %v5916 = vld [vmem:[%s5872 + $0x158] sm:$0xff]
        %v5917 = vld [vmem:[%s5872 + $0x160] sm:$0xff]
        %v5918 = vld [vmem:[%s5872 + $0x168] sm:$0xff]
        %v5919 = vld [vmem:[%s5872 + $0x170] sm:$0xff]
        %v5920 = vld [vmem:[%s5872 + $0x178] sm:$0xff]
        %v5921 = vld [vmem:[%s5872 + $0x180] sm:$0xff]
        %v5922 = vld [vmem:[%s5872 + $0x188] sm:$0xff]
        %v5923 = vld [vmem:[%s5872 + $0x190] sm:$0xff]
        %v5924 = vld [vmem:[%s5872 + $0x198] sm:$0xff]
        %v5925 = vld [vmem:[%s5872 + $0x1a0] sm:$0xff]
        %v5926 = vld [vmem:[%s5872 + $0x1a8] sm:$0xff]
        %v5927 = vld [vmem:[%s5872 + $0x1b0] sm:$0xff]
        %v5928 = vld [vmem:[%s5872 + $0x1b8] sm:$0xff]
        %v5929 = vld [vmem:[%s5872 + $0x1c0] sm:$0xff]
        %v5930 = vld [vmem:[%s5872 + $0x1c8] sm:$0xff]
        %v5931 = vld [vmem:[%s5872 + $0x1d0] sm:$0xff]
        %v5932 = vld [vmem:[%s5872 + $0x1d8] sm:$0xff]
        %v5933 = vld [vmem:[%s5872 + $0x1e0] sm:$0xff]
        %v5934 = vld [vmem:[%s5872 + $0x1e8] sm:$0xff]
        %v5935 = vld [vmem:[%s5872 + $0x1f0] sm:$0xff]
        %v5936 = vld [vmem:[%s5872 + $0x1f8] sm:$0xff]
        %s5937 = scalar_lea.vmem %s13, 8
        %v5938 = vld [vmem:[%s5937] sm:$0xf]
        %v5940 = vlaneseq
        %v5941 = vshrl.u32 %v5940, 7
        %v5942 = vsub.s32 0, %v5941
        %v5943 = vrot.slane %v5938, %v5942
        %v5944 = vlaneseq
        %v5945 = vshrl.u32 %v5944, 7
        %v5946 = vsub.s32 1, %v5945
        %v5947 = vrot.slane %v5938, %v5946
        %v5948 = vlaneseq
        %v5949 = vshrl.u32 %v5948, 7
        %v5950 = vsub.s32 2, %v5949
        %v5951 = vrot.slane %v5938, %v5950
        %v5952 = vlaneseq
        %v5953 = vshrl.u32 %v5952, 7
        %v5954 = vsub.s32 3, %v5953
        %v5955 = vrot.slane %v5938, %v5954
        %5960 = vmatprep.subr.mxu0 %v5934
        %5961 = vmatpush1.msra.mxu0 %v5933
        %5962 = vmatprep.subr.mxu0 %v5930
        %5963 = vmatpush1.msra.mxu0 %v5929
        %5964 = vmatprep.subr.mxu0 %v5926
        %5965 = vmatpush1.msra.mxu0 %v5925
        %5966 = vmatprep.subr.mxu0 %v5922
        %5967 = vmatpush1.msra.mxu0 %v5921
        %5968 = vmatprep.subr.mxu0 %v5918
        %5969 = vmatpush1.msra.mxu0 %v5917
        %5970 = vmatprep.subr.mxu0 %v5914
        %5971 = vmatpush1.msra.mxu0 %v5913
        %5972 = vmatprep.subr.mxu0 %v5910
        %5973 = vmatpush1.msra.mxu0 %v5909
        %5974 = vmatprep.subr.mxu0 %v5906
        %5975 = vmatpush1.msra.mxu0 %v5905
        %5976 = vmatprep.subr.mxu0 %v5902
        %5977 = vmatpush1.msra.mxu0 %v5901
        %5978 = vmatprep.subr.mxu0 %v5898
        %5979 = vmatpush1.msra.mxu0 %v5897
        %5980 = vmatprep.subr.mxu0 %v5894
        %5981 = vmatpush1.msra.mxu0 %v5893
        %5982 = vmatprep.subr.mxu0 %v5890
        %5983 = vmatpush1.msra.mxu0 %v5889
        %5984 = vmatprep.subr.mxu0 %v5886
        %5985 = vmatpush1.msra.mxu0 %v5885
        %5986 = vmatprep.subr.mxu0 %v5882
        %5987 = vmatpush1.msra.mxu0 %v5881
        %5988 = vmatprep.subr.mxu0 %v5878
        %5989 = vmatpush1.msra.mxu0 %v5877
        %5990 = vmatprep.subr.mxu0 %v5874
        %5991 = vmatpush1.msra.mxu0 %v5873
        %5992 = vmatprep.subr.mxu0 0.0
        %5993 = vmatpush2.msra.mxu0 0.0
        %5994 = vmatprep.subr.mxu0 0.0
        %5995 = vmatpush2.msra.mxu0 0.0
        %5996 = vmatprep.subr.mxu0 0.0
        %5997 = vmatpush2.msra.mxu0 0.0
        %5998 = vmatprep.subr.mxu0 0.0
        %5999 = vmatpush2.msra.mxu0 0.0
        %6000 = vmatprep.subr.mxu0 0.0
        %6001 = vmatpush2.msra.mxu0 0.0
        %6002 = vmatprep.subr.mxu0 0.0
        %6003 = vmatpush2.msra.mxu0 0.0
        %6004 = vmatprep.subr.mxu0 0.0
        %6005 = vmatpush2.msra.mxu0 0.0
        %6006 = vmatprep.subr.mxu0 0.0
        %6007 = vmatpush2.msra.mxu0 0.0
        %6008 = vmatprep.subr.mxu0 0.0
        %6009 = vmatpush2.msra.mxu0 0.0
        %6010 = vmatprep.subr.mxu0 0.0
        %6011 = vmatpush2.msra.mxu0 0.0
        %6012 = vmatprep.subr.mxu0 0.0
        %6013 = vmatpush2.msra.mxu0 0.0
        %6014 = vmatprep.subr.mxu0 0.0
        %6015 = vmatpush2.msra.mxu0 0.0
        %6016 = vmatprep.subr.mxu0 0.0
        %6017 = vmatpush2.msra.mxu0 0.0
        %6018 = vmatprep.subr.mxu0 0.0
        %6019 = vmatpush2.msra.mxu0 0.0
        %6020 = vmatprep.subr.mxu0 0.0
        %6021 = vmatpush2.msra.mxu0 0.0
        %6022 = vmatprep.subr.mxu0 0.0
        %6023 = vmatpush2.msra.mxu0 0.0
        %6024 = vmatprep.mubr.f32.mxu0 0.0
        %6025 = vmatmul.mubr.f32.gmra.mxu0 %v5871
        %v6026 = vpop.f32.mrf.mxu0
        %v6027 = vadd.f32 %v5943, %v6026
        %v6028 = vpop.f32.mrf.mxu0
        %v6029 = vadd.f32 %v5947, %v6028
        %6030 = vdwg.mxu0
        %6031 = vmatprep.subr.mxu0 %v5936
        %6032 = vmatpush1.msra.mxu0 %v5935
        %6033 = vmatprep.subr.mxu0 %v5932
        %6034 = vmatpush1.msra.mxu0 %v5931
        %6035 = vmatprep.subr.mxu0 %v5928
        %6036 = vmatpush1.msra.mxu0 %v5927
        %6037 = vmatprep.subr.mxu0 %v5924
        %6038 = vmatpush1.msra.mxu0 %v5923
        %6039 = vmatprep.subr.mxu0 %v5920
        %6040 = vmatpush1.msra.mxu0 %v5919
        %6041 = vmatprep.subr.mxu0 %v5916
        %6042 = vmatpush1.msra.mxu0 %v5915
        %6043 = vmatprep.subr.mxu0 %v5912
        %6044 = vmatpush1.msra.mxu0 %v5911
        %6045 = vmatprep.subr.mxu0 %v5908
        %6046 = vmatpush1.msra.mxu0 %v5907
        %6047 = vmatprep.subr.mxu0 %v5904
        %6048 = vmatpush1.msra.mxu0 %v5903
        %6049 = vmatprep.subr.mxu0 %v5900
        %6050 = vmatpush1.msra.mxu0 %v5899
        %6051 = vmatprep.subr.mxu0 %v5896
        %6052 = vmatpush1.msra.mxu0 %v5895
        %6053 = vmatprep.subr.mxu0 %v5892
        %6054 = vmatpush1.msra.mxu0 %v5891
        %6055 = vmatprep.subr.mxu0 %v5888
        %6056 = vmatpush1.msra.mxu0 %v5887
        %6057 = vmatprep.subr.mxu0 %v5884
        %6058 = vmatpush1.msra.mxu0 %v5883
        %6059 = vmatprep.subr.mxu0 %v5880
        %6060 = vmatpush1.msra.mxu0 %v5879
        %6061 = vmatprep.subr.mxu0 %v5876
        %6062 = vmatpush1.msra.mxu0 %v5875
        %6063 = vmatprep.subr.mxu0 0.0
        %6064 = vmatpush2.msra.mxu0 0.0
        %6065 = vmatprep.subr.mxu0 0.0
        %6066 = vmatpush2.msra.mxu0 0.0
        %6067 = vmatprep.subr.mxu0 0.0
        %6068 = vmatpush2.msra.mxu0 0.0
        %6069 = vmatprep.subr.mxu0 0.0
        %6070 = vmatpush2.msra.mxu0 0.0
        %6071 = vmatprep.subr.mxu0 0.0
        %6072 = vmatpush2.msra.mxu0 0.0
        %6073 = vmatprep.subr.mxu0 0.0
        %6074 = vmatpush2.msra.mxu0 0.0
        %6075 = vmatprep.subr.mxu0 0.0
        %6076 = vmatpush2.msra.mxu0 0.0
        %6077 = vmatprep.subr.mxu0 0.0
        %6078 = vmatpush2.msra.mxu0 0.0
        %6079 = vmatprep.subr.mxu0 0.0
        %6080 = vmatpush2.msra.mxu0 0.0
        %6081 = vmatprep.subr.mxu0 0.0
        %6082 = vmatpush2.msra.mxu0 0.0
        %6083 = vmatprep.subr.mxu0 0.0
        %6084 = vmatpush2.msra.mxu0 0.0
        %6085 = vmatprep.subr.mxu0 0.0
        %6086 = vmatpush2.msra.mxu0 0.0
        %6087 = vmatprep.subr.mxu0 0.0
        %6088 = vmatpush2.msra.mxu0 0.0
        %6089 = vmatprep.subr.mxu0 0.0
        %6090 = vmatpush2.msra.mxu0 0.0
        %6091 = vmatprep.subr.mxu0 0.0
        %6092 = vmatpush2.msra.mxu0 0.0
        %6093 = vmatprep.subr.mxu0 0.0
        %6094 = vmatpush2.msra.mxu0 0.0
        %6095 = vmatprep.mubr.f32.mxu0 0.0
        %6096 = vmatmul.mubr.f32.gmra.mxu0 %v5871
        %v6097 = vpop.f32.mrf.mxu0
        %v6098 = vadd.f32 %v5951, %v6097
        %v6099 = vpop.f32.mrf.mxu0
        %v6100 = vadd.f32 %v5955, %v6099
        %6101 = vdwg.mxu0
        %v6102 = vmax.f32 %v6027, 0.0
        %v6103 = vmax.f32 %v6029, 0.0
        %v6104 = vmax.f32 %v6098, 0.0
        %v6105 = vmax.f32 %v6100, 0.0
        %s6106 = scalar_lea.vmem [#allocation23], 1024
        %v6107 = vld [vmem:[%s6106] sm:$0xff]
        %v6108 = vld [vmem:[%s6106 + $0x8] sm:$0xff]
        %v6109 = vld [vmem:[%s6106 + $0x10] sm:$0xff]
        %v6110 = vld [vmem:[%s6106 + $0x18] sm:$0xff]
        %v6111 = vld [vmem:[%s6106 + $0x20] sm:$0xff]
        %v6112 = vld [vmem:[%s6106 + $0x28] sm:$0xff]
        %v6113 = vld [vmem:[%s6106 + $0x30] sm:$0xff]
        %v6114 = vld [vmem:[%s6106 + $0x38] sm:$0xff]
        %v6115 = vld [vmem:[%s6106 + $0x40] sm:$0xff]
        %v6116 = vld [vmem:[%s6106 + $0x48] sm:$0xff]
        %v6117 = vld [vmem:[%s6106 + $0x50] sm:$0xff]
        %v6118 = vld [vmem:[%s6106 + $0x58] sm:$0xff]
        %v6119 = vld [vmem:[%s6106 + $0x60] sm:$0xff]
        %v6120 = vld [vmem:[%s6106 + $0x68] sm:$0xff]
        %v6121 = vld [vmem:[%s6106 + $0x70] sm:$0xff]
        %v6122 = vld [vmem:[%s6106 + $0x78] sm:$0xff]
        %v6123 = vld [vmem:[%s6106 + $0x80] sm:$0xff]
        %v6124 = vld [vmem:[%s6106 + $0x88] sm:$0xff]
        %v6125 = vld [vmem:[%s6106 + $0x90] sm:$0xff]
        %v6126 = vld [vmem:[%s6106 + $0x98] sm:$0xff]
        %v6127 = vld [vmem:[%s6106 + $0xa0] sm:$0xff]
        %v6128 = vld [vmem:[%s6106 + $0xa8] sm:$0xff]
        %v6129 = vld [vmem:[%s6106 + $0xb0] sm:$0xff]
        %v6130 = vld [vmem:[%s6106 + $0xb8] sm:$0xff]
        %v6131 = vld [vmem:[%s6106 + $0xc0] sm:$0xff]
        %v6132 = vld [vmem:[%s6106 + $0xc8] sm:$0xff]
        %v6133 = vld [vmem:[%s6106 + $0xd0] sm:$0xff]
        %v6134 = vld [vmem:[%s6106 + $0xd8] sm:$0xff]
        %v6135 = vld [vmem:[%s6106 + $0xe0] sm:$0xff]
        %v6136 = vld [vmem:[%s6106 + $0xe8] sm:$0xff]
        %v6137 = vld [vmem:[%s6106 + $0xf0] sm:$0xff]
        %v6138 = vld [vmem:[%s6106 + $0xf8] sm:$0xff]
        %v6139 = vld [vmem:[%s6106 + $0x100] sm:$0xff]
        %v6140 = vld [vmem:[%s6106 + $0x108] sm:$0xff]
        %v6141 = vld [vmem:[%s6106 + $0x110] sm:$0xff]
        %v6142 = vld [vmem:[%s6106 + $0x118] sm:$0xff]
        %v6143 = vld [vmem:[%s6106 + $0x120] sm:$0xff]
        %v6144 = vld [vmem:[%s6106 + $0x128] sm:$0xff]
        %v6145 = vld [vmem:[%s6106 + $0x130] sm:$0xff]
        %v6146 = vld [vmem:[%s6106 + $0x138] sm:$0xff]
        %v6147 = vld [vmem:[%s6106 + $0x140] sm:$0xff]
        %v6148 = vld [vmem:[%s6106 + $0x148] sm:$0xff]
        %v6149 = vld [vmem:[%s6106 + $0x150] sm:$0xff]
        %v6150 = vld [vmem:[%s6106 + $0x158] sm:$0xff]
        %v6151 = vld [vmem:[%s6106 + $0x160] sm:$0xff]
        %v6152 = vld [vmem:[%s6106 + $0x168] sm:$0xff]
        %v6153 = vld [vmem:[%s6106 + $0x170] sm:$0xff]
        %v6154 = vld [vmem:[%s6106 + $0x178] sm:$0xff]
        %v6155 = vld [vmem:[%s6106 + $0x180] sm:$0xff]
        %v6156 = vld [vmem:[%s6106 + $0x188] sm:$0xff]
        %v6157 = vld [vmem:[%s6106 + $0x190] sm:$0xff]
        %v6158 = vld [vmem:[%s6106 + $0x198] sm:$0xff]
        %v6159 = vld [vmem:[%s6106 + $0x1a0] sm:$0xff]
        %v6160 = vld [vmem:[%s6106 + $0x1a8] sm:$0xff]
        %v6161 = vld [vmem:[%s6106 + $0x1b0] sm:$0xff]
        %v6162 = vld [vmem:[%s6106 + $0x1b8] sm:$0xff]
        %v6163 = vld [vmem:[%s6106 + $0x1c0] sm:$0xff]
        %v6164 = vld [vmem:[%s6106 + $0x1c8] sm:$0xff]
        %v6165 = vld [vmem:[%s6106 + $0x1d0] sm:$0xff]
        %v6166 = vld [vmem:[%s6106 + $0x1d8] sm:$0xff]
        %v6167 = vld [vmem:[%s6106 + $0x1e0] sm:$0xff]
        %v6168 = vld [vmem:[%s6106 + $0x1e8] sm:$0xff]
        %v6169 = vld [vmem:[%s6106 + $0x1f0] sm:$0xff]
        %v6170 = vld [vmem:[%s6106 + $0x1f8] sm:$0xff]
        %s6171 = scalar_lea.vmem %s15, 2
        %v6172 = vld [vmem:[%s6171] sm:$0x1]
        %v6174 = vlaneseq
        %v6175 = vshrl.u32 %v6174, 7
        %v6176 = vsub.s32 0, %v6175
        %v6177 = vrot.slane %v6172, %v6176
        %6179 = vmatprep.subr.mxu0 0.0
        %6180 = vmatpush1.msra.mxu0 %v6122
        %6181 = vmatprep.subr.mxu0 0.0
        %6182 = vmatpush1.msra.mxu0 %v6121
        %6183 = vmatprep.subr.mxu0 0.0
        %6184 = vmatpush1.msra.mxu0 %v6120
        %6185 = vmatprep.subr.mxu0 0.0
        %6186 = vmatpush1.msra.mxu0 %v6119
        %6187 = vmatprep.subr.mxu0 0.0
        %6188 = vmatpush1.msra.mxu0 %v6118
        %6189 = vmatprep.subr.mxu0 0.0
        %6190 = vmatpush1.msra.mxu0 %v6117
        %6191 = vmatprep.subr.mxu0 0.0
        %6192 = vmatpush1.msra.mxu0 %v6116
        %6193 = vmatprep.subr.mxu0 0.0
        %6194 = vmatpush1.msra.mxu0 %v6115
        %6195 = vmatprep.subr.mxu0 0.0
        %6196 = vmatpush1.msra.mxu0 %v6114
        %6197 = vmatprep.subr.mxu0 0.0
        %6198 = vmatpush1.msra.mxu0 %v6113
        %6199 = vmatprep.subr.mxu0 0.0
        %6200 = vmatpush1.msra.mxu0 %v6112
        %6201 = vmatprep.subr.mxu0 0.0
        %6202 = vmatpush1.msra.mxu0 %v6111
        %6203 = vmatprep.subr.mxu0 0.0
        %6204 = vmatpush1.msra.mxu0 %v6110
        %6205 = vmatprep.subr.mxu0 0.0
        %6206 = vmatpush1.msra.mxu0 %v6109
        %6207 = vmatprep.subr.mxu0 0.0
        %6208 = vmatpush1.msra.mxu0 %v6108
        %6209 = vmatprep.subr.mxu0 0.0
        %6210 = vmatpush1.msra.mxu0 %v6107
        %6211 = vmatprep.subr.mxu0 0.0
        %6212 = vmatpush2.msra.mxu0 %v6138
        %6213 = vmatprep.subr.mxu0 0.0
        %6214 = vmatpush2.msra.mxu0 %v6137
        %6215 = vmatprep.subr.mxu0 0.0
        %6216 = vmatpush2.msra.mxu0 %v6136
        %6217 = vmatprep.subr.mxu0 0.0
        %6218 = vmatpush2.msra.mxu0 %v6135
        %6219 = vmatprep.subr.mxu0 0.0
        %6220 = vmatpush2.msra.mxu0 %v6134
        %6221 = vmatprep.subr.mxu0 0.0
        %6222 = vmatpush2.msra.mxu0 %v6133
        %6223 = vmatprep.subr.mxu0 0.0
        %6224 = vmatpush2.msra.mxu0 %v6132
        %6225 = vmatprep.subr.mxu0 0.0
        %6226 = vmatpush2.msra.mxu0 %v6131
        %6227 = vmatprep.subr.mxu0 0.0
        %6228 = vmatpush2.msra.mxu0 %v6130
        %6229 = vmatprep.subr.mxu0 0.0
        %6230 = vmatpush2.msra.mxu0 %v6129
        %6231 = vmatprep.subr.mxu0 0.0
        %6232 = vmatpush2.msra.mxu0 %v6128
        %6233 = vmatprep.subr.mxu0 0.0
        %6234 = vmatpush2.msra.mxu0 %v6127
        %6235 = vmatprep.subr.mxu0 0.0
        %6236 = vmatpush2.msra.mxu0 %v6126
        %6237 = vmatprep.subr.mxu0 0.0
        %6238 = vmatpush2.msra.mxu0 %v6125
        %6239 = vmatprep.subr.mxu0 0.0
        %6240 = vmatpush2.msra.mxu0 %v6124
        %6241 = vmatprep.subr.mxu0 0.0
        %6242 = vmatpush2.msra.mxu0 %v6123
        %6243 = vmatprep.mubr.f32.mxu0 %v6103
        %6244 = vmatmul.mubr.f32.gmra.mxu0 %v6102
        %v6245 = vpop.f32.mrf.mxu0
        %v6246 = vadd.f32 %v6177, %v6245
        %v6247 = vpop.f32.mrf.mxu0
        %6248 = vdwg.mxu0
        %6249 = vmatprep.subr.mxu0 0.0
        %6250 = vmatpush1.msra.mxu0 %v6154
        %6251 = vmatprep.subr.mxu0 0.0
        %6252 = vmatpush1.msra.mxu0 %v6153
        %6253 = vmatprep.subr.mxu0 0.0
        %6254 = vmatpush1.msra.mxu0 %v6152
        %6255 = vmatprep.subr.mxu0 0.0
        %6256 = vmatpush1.msra.mxu0 %v6151
        %6257 = vmatprep.subr.mxu0 0.0
        %6258 = vmatpush1.msra.mxu0 %v6150
        %6259 = vmatprep.subr.mxu0 0.0
        %6260 = vmatpush1.msra.mxu0 %v6149
        %6261 = vmatprep.subr.mxu0 0.0
        %6262 = vmatpush1.msra.mxu0 %v6148
        %6263 = vmatprep.subr.mxu0 0.0
        %6264 = vmatpush1.msra.mxu0 %v6147
        %6265 = vmatprep.subr.mxu0 0.0
        %6266 = vmatpush1.msra.mxu0 %v6146
        %6267 = vmatprep.subr.mxu0 0.0
        %6268 = vmatpush1.msra.mxu0 %v6145
        %6269 = vmatprep.subr.mxu0 0.0
        %6270 = vmatpush1.msra.mxu0 %v6144
        %6271 = vmatprep.subr.mxu0 0.0
        %6272 = vmatpush1.msra.mxu0 %v6143
        %6273 = vmatprep.subr.mxu0 0.0
        %6274 = vmatpush1.msra.mxu0 %v6142
        %6275 = vmatprep.subr.mxu0 0.0
        %6276 = vmatpush1.msra.mxu0 %v6141
        %6277 = vmatprep.subr.mxu0 0.0
        %6278 = vmatpush1.msra.mxu0 %v6140
        %6279 = vmatprep.subr.mxu0 0.0
        %6280 = vmatpush1.msra.mxu0 %v6139
        %6281 = vmatprep.subr.mxu0 0.0
        %6282 = vmatpush2.msra.mxu0 %v6170
        %6283 = vmatprep.subr.mxu0 0.0
        %6284 = vmatpush2.msra.mxu0 %v6169
        %6285 = vmatprep.subr.mxu0 0.0
        %6286 = vmatpush2.msra.mxu0 %v6168
        %6287 = vmatprep.subr.mxu0 0.0
        %6288 = vmatpush2.msra.mxu0 %v6167
        %6289 = vmatprep.subr.mxu0 0.0
        %6290 = vmatpush2.msra.mxu0 %v6166
        %6291 = vmatprep.subr.mxu0 0.0
        %6292 = vmatpush2.msra.mxu0 %v6165
        %6293 = vmatprep.subr.mxu0 0.0
        %6294 = vmatpush2.msra.mxu0 %v6164
        %6295 = vmatprep.subr.mxu0 0.0
        %6296 = vmatpush2.msra.mxu0 %v6163
        %6297 = vmatprep.subr.mxu0 0.0
        %6298 = vmatpush2.msra.mxu0 %v6162
        %6299 = vmatprep.subr.mxu0 0.0
        %6300 = vmatpush2.msra.mxu0 %v6161
        %6301 = vmatprep.subr.mxu0 0.0
        %6302 = vmatpush2.msra.mxu0 %v6160
        %6303 = vmatprep.subr.mxu0 0.0
        %6304 = vmatpush2.msra.mxu0 %v6159
        %6305 = vmatprep.subr.mxu0 0.0
        %6306 = vmatpush2.msra.mxu0 %v6158
        %6307 = vmatprep.subr.mxu0 0.0
        %6308 = vmatpush2.msra.mxu0 %v6157
        %6309 = vmatprep.subr.mxu0 0.0
        %6310 = vmatpush2.msra.mxu0 %v6156
        %6311 = vmatprep.subr.mxu0 0.0
        %6312 = vmatpush2.msra.mxu0 %v6155
        %6313 = vmatprep.mubr.f32.mxu0 %v6105
        %6314 = vmatmul.mubr.f32.gmra.mxu0 %v6104
        %v6315 = vpop.f32.mrf.mxu0
        %v6316 = vadd.f32 %v6246, %v6315
        %v6317 = vpop.f32.mrf.mxu0
        %6318 = vdwg.mxu0
        %v6319 = vadd.f32 %v5871, %v6316
        %s6320 = scalar_lea.vmem [#allocation25], 2
        %v6321 = vld [vmem:[%s6320] sm:$0x1]
        %s6322 = scalar_lea.vmem %s17, 2
        %v6323 = vld [vmem:[%s6322] sm:$0x1]
        %v6324 = vsel %vm5432, %v6319, 0.0
        %6325 = vadd.xlane.f32.xlu0 %v6324
        %v6326 = vpop.xlane.xlu0 %6325
        %v6327 = vmul.f32 %v6326, %v2508
        %v6328 = vsub.f32 %v6319, %v6327
        %v6329 = vmul.f32 %v6328, %v6328
        %v6330 = vsel %vm5432, %v6329, 0.0
        %6331 = vadd.xlane.f32.xlu0 %v6330
        %v6332 = vpop.xlane.xlu0 %6331
        %v6333 = vmul.f32 %v6332, %v2508
        %v6334 = vadd.f32 %v6333, 1e-05
        %v6335 = vrsqrt.pop %v6334
        %v6336 = vmul.f32 %v6328, %v6335
        %v6338 = vlaneseq
        %v6339 = vshrl.u32 %v6338, 7
        %v6340 = vsub.s32 0, %v6339
        %v6341 = vrot.slane %v6321, %v6340
        %v6343 = vmul.f32 %v6336, %v6341
        %v6345 = vlaneseq
        %v6346 = vshrl.u32 %v6345, 7
        %v6347 = vsub.s32 0, %v6346
        %v6348 = vrot.slane %v6323, %v6347
        %v6350 = vadd.f32 %v6343, %v6348
        %s6351 = scalar_lea.vmem [#allocation13], 1152
        %v6352 = vld [vmem:[%s6351] sm:$0xff]
        %v6353 = vld [vmem:[%s6351 + $0x8] sm:$0xff]
        %v6354 = vld [vmem:[%s6351 + $0x10] sm:$0xff]
        %v6355 = vld [vmem:[%s6351 + $0x18] sm:$0xff]
        %v6356 = vld [vmem:[%s6351 + $0x20] sm:$0xff]
        %v6357 = vld [vmem:[%s6351 + $0x28] sm:$0xff]
        %v6358 = vld [vmem:[%s6351 + $0x30] sm:$0xff]
        %v6359 = vld [vmem:[%s6351 + $0x38] sm:$0xff]
        %v6360 = vld [vmem:[%s6351 + $0x40] sm:$0xff]
        %v6361 = vld [vmem:[%s6351 + $0x48] sm:$0xff]
        %v6362 = vld [vmem:[%s6351 + $0x50] sm:$0xff]
        %v6363 = vld [vmem:[%s6351 + $0x58] sm:$0xff]
        %v6364 = vld [vmem:[%s6351 + $0x60] sm:$0xff]
        %v6365 = vld [vmem:[%s6351 + $0x68] sm:$0xff]
        %v6366 = vld [vmem:[%s6351 + $0x70] sm:$0xff]
        %v6367 = vld [vmem:[%s6351 + $0x78] sm:$0xff]
        %v6368 = vld [vmem:[%s6351 + $0x80] sm:$0xff]
        %v6369 = vld [vmem:[%s6351 + $0x88] sm:$0xff]
        %v6370 = vld [vmem:[%s6351 + $0x90] sm:$0xff]
        %v6371 = vld [vmem:[%s6351 + $0x98] sm:$0xff]
        %v6372 = vld [vmem:[%s6351 + $0xa0] sm:$0xff]
        %v6373 = vld [vmem:[%s6351 + $0xa8] sm:$0xff]
        %v6374 = vld [vmem:[%s6351 + $0xb0] sm:$0xff]
        %v6375 = vld [vmem:[%s6351 + $0xb8] sm:$0xff]
        %v6376 = vld [vmem:[%s6351 + $0xc0] sm:$0xff]
        %v6377 = vld [vmem:[%s6351 + $0xc8] sm:$0xff]
        %v6378 = vld [vmem:[%s6351 + $0xd0] sm:$0xff]
        %v6379 = vld [vmem:[%s6351 + $0xd8] sm:$0xff]
        %v6380 = vld [vmem:[%s6351 + $0xe0] sm:$0xff]
        %v6381 = vld [vmem:[%s6351 + $0xe8] sm:$0xff]
        %v6382 = vld [vmem:[%s6351 + $0xf0] sm:$0xff]
        %v6383 = vld [vmem:[%s6351 + $0xf8] sm:$0xff]
        %v6384 = vld [vmem:[%s6351 + $0x100] sm:$0xff]
        %v6385 = vld [vmem:[%s6351 + $0x108] sm:$0xff]
        %v6386 = vld [vmem:[%s6351 + $0x110] sm:$0xff]
        %v6387 = vld [vmem:[%s6351 + $0x118] sm:$0xff]
        %v6388 = vld [vmem:[%s6351 + $0x120] sm:$0xff]
        %v6389 = vld [vmem:[%s6351 + $0x128] sm:$0xff]
        %v6390 = vld [vmem:[%s6351 + $0x130] sm:$0xff]
        %v6391 = vld [vmem:[%s6351 + $0x138] sm:$0xff]
        %v6392 = vld [vmem:[%s6351 + $0x140] sm:$0xff]
        %v6393 = vld [vmem:[%s6351 + $0x148] sm:$0xff]
        %v6394 = vld [vmem:[%s6351 + $0x150] sm:$0xff]
        %v6395 = vld [vmem:[%s6351 + $0x158] sm:$0xff]
        %v6396 = vld [vmem:[%s6351 + $0x160] sm:$0xff]
        %v6397 = vld [vmem:[%s6351 + $0x168] sm:$0xff]
        %v6398 = vld [vmem:[%s6351 + $0x170] sm:$0xff]
        %v6399 = vld [vmem:[%s6351 + $0x178] sm:$0xff]
        %s6400 = scalar_lea.vmem [#allocation14], 9
        %v6401 = vld [vmem:[%s6400] sm:$0x7]
        %v6403 = vlaneseq
        %v6404 = vshrl.u32 %v6403, 7
        %v6405 = vsub.s32 0, %v6404
        %v6406 = vrot.slane %v6401, %v6405
        %v6407 = vlaneseq
        %v6408 = vshrl.u32 %v6407, 7
        %v6409 = vsub.s32 1, %v6408
        %v6410 = vrot.slane %v6401, %v6409
        %v6411 = vlaneseq
        %v6412 = vshrl.u32 %v6411, 7
        %v6413 = vsub.s32 2, %v6412
        %v6414 = vrot.slane %v6401, %v6413
        %6418 = vmatprep.subr.mxu0 %v6398
        %6419 = vmatpush1.msra.mxu0 %v6397
        %6420 = vmatprep.subr.mxu0 %v6395
        %6421 = vmatpush1.msra.mxu0 %v6394
        %6422 = vmatprep.subr.mxu0 %v6392
        %6423 = vmatpush1.msra.mxu0 %v6391
        %6424 = vmatprep.subr.mxu0 %v6389
        %6425 = vmatpush1.msra.mxu0 %v6388
        %6426 = vmatprep.subr.mxu0 %v6386
        %6427 = vmatpush1.msra.mxu0 %v6385
        %6428 = vmatprep.subr.mxu0 %v6383
        %6429 = vmatpush1.msra.mxu0 %v6382
        %6430 = vmatprep.subr.mxu0 %v6380
        %6431 = vmatpush1.msra.mxu0 %v6379
        %6432 = vmatprep.subr.mxu0 %v6377
        %6433 = vmatpush1.msra.mxu0 %v6376
        %6434 = vmatprep.subr.mxu0 %v6374
        %6435 = vmatpush1.msra.mxu0 %v6373
        %6436 = vmatprep.subr.mxu0 %v6371
        %6437 = vmatpush1.msra.mxu0 %v6370
        %6438 = vmatprep.subr.mxu0 %v6368
        %6439 = vmatpush1.msra.mxu0 %v6367
        %6440 = vmatprep.subr.mxu0 %v6365
        %6441 = vmatpush1.msra.mxu0 %v6364
        %6442 = vmatprep.subr.mxu0 %v6362
        %6443 = vmatpush1.msra.mxu0 %v6361
        %6444 = vmatprep.subr.mxu0 %v6359
        %6445 = vmatpush1.msra.mxu0 %v6358
        %6446 = vmatprep.subr.mxu0 %v6356
        %6447 = vmatpush1.msra.mxu0 %v6355
        %6448 = vmatprep.subr.mxu0 %v6353
        %6449 = vmatpush1.msra.mxu0 %v6352
        %6450 = vmatprep.subr.mxu0 0.0
        %6451 = vmatpush2.msra.mxu0 0.0
        %6452 = vmatprep.subr.mxu0 0.0
        %6453 = vmatpush2.msra.mxu0 0.0
        %6454 = vmatprep.subr.mxu0 0.0
        %6455 = vmatpush2.msra.mxu0 0.0
        %6456 = vmatprep.subr.mxu0 0.0
        %6457 = vmatpush2.msra.mxu0 0.0
        %6458 = vmatprep.subr.mxu0 0.0
        %6459 = vmatpush2.msra.mxu0 0.0
        %6460 = vmatprep.subr.mxu0 0.0
        %6461 = vmatpush2.msra.mxu0 0.0
        %6462 = vmatprep.subr.mxu0 0.0
        %6463 = vmatpush2.msra.mxu0 0.0
        %6464 = vmatprep.subr.mxu0 0.0
        %6465 = vmatpush2.msra.mxu0 0.0
        %6466 = vmatprep.subr.mxu0 0.0
        %6467 = vmatpush2.msra.mxu0 0.0
        %6468 = vmatprep.subr.mxu0 0.0
        %6469 = vmatpush2.msra.mxu0 0.0
        %6470 = vmatprep.subr.mxu0 0.0
        %6471 = vmatpush2.msra.mxu0 0.0
        %6472 = vmatprep.subr.mxu0 0.0
        %6473 = vmatpush2.msra.mxu0 0.0
        %6474 = vmatprep.subr.mxu0 0.0
        %6475 = vmatpush2.msra.mxu0 0.0
        %6476 = vmatprep.subr.mxu0 0.0
        %6477 = vmatpush2.msra.mxu0 0.0
        %6478 = vmatprep.subr.mxu0 0.0
        %6479 = vmatpush2.msra.mxu0 0.0
        %6480 = vmatprep.subr.mxu0 0.0
        %6481 = vmatpush2.msra.mxu0 0.0
        %6482 = vmatprep.mubr.f32.mxu0 0.0
        %6483 = vmatmul.mubr.f32.gmra.mxu0 %v6350
        %v6484 = vpop.f32.mrf.mxu0
        %v6485 = vadd.f32 %v6406, %v6484
        %v6486 = vpop.f32.mrf.mxu0
        %v6487 = vadd.f32 %v6410, %v6486
        %6488 = vdwg.mxu0
        %6489 = vmatprep.subr.mxu0 0.0
        %6490 = vmatpush1.msra.mxu0 %v6399
        %6491 = vmatprep.subr.mxu0 0.0
        %6492 = vmatpush1.msra.mxu0 %v6396
        %6493 = vmatprep.subr.mxu0 0.0
        %6494 = vmatpush1.msra.mxu0 %v6393
        %6495 = vmatprep.subr.mxu0 0.0
        %6496 = vmatpush1.msra.mxu0 %v6390
        %6497 = vmatprep.subr.mxu0 0.0
        %6498 = vmatpush1.msra.mxu0 %v6387
        %6499 = vmatprep.subr.mxu0 0.0
        %6500 = vmatpush1.msra.mxu0 %v6384
        %6501 = vmatprep.subr.mxu0 0.0
        %6502 = vmatpush1.msra.mxu0 %v6381
        %6503 = vmatprep.subr.mxu0 0.0
        %6504 = vmatpush1.msra.mxu0 %v6378
        %6505 = vmatprep.subr.mxu0 0.0
        %6506 = vmatpush1.msra.mxu0 %v6375
        %6507 = vmatprep.subr.mxu0 0.0
        %6508 = vmatpush1.msra.mxu0 %v6372
        %6509 = vmatprep.subr.mxu0 0.0
        %6510 = vmatpush1.msra.mxu0 %v6369
        %6511 = vmatprep.subr.mxu0 0.0
        %6512 = vmatpush1.msra.mxu0 %v6366
        %6513 = vmatprep.subr.mxu0 0.0
        %6514 = vmatpush1.msra.mxu0 %v6363
        %6515 = vmatprep.subr.mxu0 0.0
        %6516 = vmatpush1.msra.mxu0 %v6360
        %6517 = vmatprep.subr.mxu0 0.0
        %6518 = vmatpush1.msra.mxu0 %v6357
        %6519 = vmatprep.subr.mxu0 0.0
        %6520 = vmatpush1.msra.mxu0 %v6354
        %6521 = vmatprep.subr.mxu0 0.0
        %6522 = vmatpush2.msra.mxu0 0.0
        %6523 = vmatprep.subr.mxu0 0.0
        %6524 = vmatpush2.msra.mxu0 0.0
        %6525 = vmatprep.subr.mxu0 0.0
        %6526 = vmatpush2.msra.mxu0 0.0
        %6527 = vmatprep.subr.mxu0 0.0
        %6528 = vmatpush2.msra.mxu0 0.0
        %6529 = vmatprep.subr.mxu0 0.0
        %6530 = vmatpush2.msra.mxu0 0.0
        %6531 = vmatprep.subr.mxu0 0.0
        %6532 = vmatpush2.msra.mxu0 0.0
        %6533 = vmatprep.subr.mxu0 0.0
        %6534 = vmatpush2.msra.mxu0 0.0
        %6535 = vmatprep.subr.mxu0 0.0
        %6536 = vmatpush2.msra.mxu0 0.0
        %6537 = vmatprep.subr.mxu0 0.0
        %6538 = vmatpush2.msra.mxu0 0.0
        %6539 = vmatprep.subr.mxu0 0.0
        %6540 = vmatpush2.msra.mxu0 0.0
        %6541 = vmatprep.subr.mxu0 0.0
        %6542 = vmatpush2.msra.mxu0 0.0
        %6543 = vmatprep.subr.mxu0 0.0
        %6544 = vmatpush2.msra.mxu0 0.0
        %6545 = vmatprep.subr.mxu0 0.0
        %6546 = vmatpush2.msra.mxu0 0.0
        %6547 = vmatprep.subr.mxu0 0.0
        %6548 = vmatpush2.msra.mxu0 0.0
        %6549 = vmatprep.subr.mxu0 0.0
        %6550 = vmatpush2.msra.mxu0 0.0
        %6551 = vmatprep.subr.mxu0 0.0
        %6552 = vmatpush2.msra.mxu0 0.0
        %6553 = vmatprep.mubr.f32.mxu0 0.0
        %6554 = vmatmul.mubr.f32.gmra.mxu0 %v6350
        %v6555 = vpop.f32.mrf.mxu0
        %v6556 = vadd.f32 %v6414, %v6555
        %v6557 = vpop.f32.mrf.mxu0
        %6558 = vdwg.mxu0
        %6560 = vrot.lane.b32.xlu0 %v6485, 96
        %v6561 = vpop.permute.xlu0 %6560
        %6562 = vrot.lane.b32.xlu0 %v6485, 64
        %v6563 = vpop.permute.xlu0 %6562
        %6564 = vrot.lane.b32.xlu0 %v6485, 32
        %v6565 = vpop.permute.xlu0 %6564
        %6567 = vrot.lane.b32.xlu0 %v6487, 96
        %v6568 = vpop.permute.xlu0 %6567
        %6569 = vrot.lane.b32.xlu0 %v6487, 64
        %v6570 = vpop.permute.xlu0 %6569
        %6571 = vrot.lane.b32.xlu0 %v6487, 32
        %v6572 = vpop.permute.xlu0 %6571
        %6574 = vrot.lane.b32.xlu0 %v6556, 96
        %v6575 = vpop.permute.xlu0 %6574
        %6576 = vrot.lane.b32.xlu0 %v6556, 64
        %v6577 = vpop.permute.xlu0 %6576
        %6578 = vrot.lane.b32.xlu0 %v6556, 32
        %v6579 = vpop.permute.xlu0 %6578
        %v6580 = vsel %vm1605, %v6485, 0
        %v6582 = vsel %vm1605, %v6487, 0
        %6584 = vmatprep.subr.mxu0 0.0
        %6585 = vmatpush1.xpose.msra.mxu0 0.0
        %6586 = vmatprep.subr.mxu0 0.0
        %6587 = vmatpush1.xpose.msra.mxu0 0.0
        %6588 = vmatprep.subr.mxu0 0.0
        %6589 = vmatpush1.xpose.msra.mxu0 0.0
        %6590 = vmatprep.subr.mxu0 0.0
        %6591 = vmatpush1.xpose.msra.mxu0 0.0
        %6592 = vmatprep.subr.mxu0 0.0
        %6593 = vmatpush1.xpose.msra.mxu0 0.0
        %6594 = vmatprep.subr.mxu0 0.0
        %6595 = vmatpush1.xpose.msra.mxu0 0.0
        %6596 = vmatprep.subr.mxu0 0.0
        %6597 = vmatpush1.xpose.msra.mxu0 0.0
        %6598 = vmatprep.subr.mxu0 0.0
        %6599 = vmatpush1.xpose.msra.mxu0 0.0
        %6600 = vmatprep.subr.mxu0 0.0
        %6601 = vmatpush1.xpose.msra.mxu0 0.0
        %6602 = vmatprep.subr.mxu0 0.0
        %6603 = vmatpush1.xpose.msra.mxu0 0.0
        %6604 = vmatprep.subr.mxu0 0.0
        %6605 = vmatpush1.xpose.msra.mxu0 0.0
        %6606 = vmatprep.subr.mxu0 0.0
        %6607 = vmatpush1.xpose.msra.mxu0 0.0
        %6608 = vmatprep.subr.mxu0 0.0
        %6609 = vmatpush1.xpose.msra.mxu0 0.0
        %6610 = vmatprep.subr.mxu0 0.0
        %6611 = vmatpush1.xpose.msra.mxu0 0.0
        %6612 = vmatprep.subr.mxu0 0.0
        %6613 = vmatpush1.xpose.msra.mxu0 0.0
        %6614 = vmatprep.subr.mxu0 0.0
        %6615 = vmatpush1.xpose.msra.mxu0 %v6582
        %6616 = vmatprep.subr.mxu0 0.0
        %6617 = vmatpush2.xpose.msra.mxu0 0.0
        %6618 = vmatprep.subr.mxu0 0.0
        %6619 = vmatpush2.xpose.msra.mxu0 0.0
        %6620 = vmatprep.subr.mxu0 0.0
        %6621 = vmatpush2.xpose.msra.mxu0 0.0
        %6622 = vmatprep.subr.mxu0 0.0
        %6623 = vmatpush2.xpose.msra.mxu0 0.0
        %6624 = vmatprep.subr.mxu0 0.0
        %6625 = vmatpush2.xpose.msra.mxu0 0.0
        %6626 = vmatprep.subr.mxu0 0.0
        %6627 = vmatpush2.xpose.msra.mxu0 0.0
        %6628 = vmatprep.subr.mxu0 0.0
        %6629 = vmatpush2.xpose.msra.mxu0 0.0
        %6630 = vmatprep.subr.mxu0 0.0
        %6631 = vmatpush2.xpose.msra.mxu0 0.0
        %6632 = vmatprep.subr.mxu0 0.0
        %6633 = vmatpush2.xpose.msra.mxu0 0.0
        %6634 = vmatprep.subr.mxu0 0.0
        %6635 = vmatpush2.xpose.msra.mxu0 0.0
        %6636 = vmatprep.subr.mxu0 0.0
        %6637 = vmatpush2.xpose.msra.mxu0 0.0
        %6638 = vmatprep.subr.mxu0 0.0
        %6639 = vmatpush2.xpose.msra.mxu0 0.0
        %6640 = vmatprep.subr.mxu0 0.0
        %6641 = vmatpush2.xpose.msra.mxu0 0.0
        %6642 = vmatprep.subr.mxu0 0.0
        %6643 = vmatpush2.xpose.msra.mxu0 0.0
        %6644 = vmatprep.subr.mxu0 0.0
        %6645 = vmatpush2.xpose.msra.mxu0 0.0
        %6646 = vmatprep.subr.mxu0 0.0
        %6647 = vmatpush2.xpose.msra.mxu0 0.0
        %6648 = vmatprep.mubr.f32.mxu0 0.0
        %6649 = vmatmul.mubr.f32.gmra.mxu0 %v6580
        %v6650 = vpop.f32.mrf.mxu0
        %v6651 = vadd.f32 0.0, %v6650
        %v6652 = vpop.f32.mrf.mxu0
        %6653 = vdwg.mxu0
        %v6654 = vsel %vm1605, %v6561, 0
        %v6656 = vsel %vm1605, %v6568, 0
        %6658 = vmatprep.subr.mxu0 0.0
        %6659 = vmatpush1.xpose.msra.mxu0 0.0
        %6660 = vmatprep.subr.mxu0 0.0
        %6661 = vmatpush1.xpose.msra.mxu0 0.0
        %6662 = vmatprep.subr.mxu0 0.0
        %6663 = vmatpush1.xpose.msra.mxu0 0.0
        %6664 = vmatprep.subr.mxu0 0.0
        %6665 = vmatpush1.xpose.msra.mxu0 0.0
        %6666 = vmatprep.subr.mxu0 0.0
        %6667 = vmatpush1.xpose.msra.mxu0 0.0
        %6668 = vmatprep.subr.mxu0 0.0
        %6669 = vmatpush1.xpose.msra.mxu0 0.0
        %6670 = vmatprep.subr.mxu0 0.0
        %6671 = vmatpush1.xpose.msra.mxu0 0.0
        %6672 = vmatprep.subr.mxu0 0.0
        %6673 = vmatpush1.xpose.msra.mxu0 0.0
        %6674 = vmatprep.subr.mxu0 0.0
        %6675 = vmatpush1.xpose.msra.mxu0 0.0
        %6676 = vmatprep.subr.mxu0 0.0
        %6677 = vmatpush1.xpose.msra.mxu0 0.0
        %6678 = vmatprep.subr.mxu0 0.0
        %6679 = vmatpush1.xpose.msra.mxu0 0.0
        %6680 = vmatprep.subr.mxu0 0.0
        %6681 = vmatpush1.xpose.msra.mxu0 0.0
        %6682 = vmatprep.subr.mxu0 0.0
        %6683 = vmatpush1.xpose.msra.mxu0 0.0
        %6684 = vmatprep.subr.mxu0 0.0
        %6685 = vmatpush1.xpose.msra.mxu0 0.0
        %6686 = vmatprep.subr.mxu0 0.0
        %6687 = vmatpush1.xpose.msra.mxu0 0.0
        %6688 = vmatprep.subr.mxu0 0.0
        %6689 = vmatpush1.xpose.msra.mxu0 %v6656
        %6690 = vmatprep.subr.mxu0 0.0
        %6691 = vmatpush2.xpose.msra.mxu0 0.0
        %6692 = vmatprep.subr.mxu0 0.0
        %6693 = vmatpush2.xpose.msra.mxu0 0.0
        %6694 = vmatprep.subr.mxu0 0.0
        %6695 = vmatpush2.xpose.msra.mxu0 0.0
        %6696 = vmatprep.subr.mxu0 0.0
        %6697 = vmatpush2.xpose.msra.mxu0 0.0
        %6698 = vmatprep.subr.mxu0 0.0
        %6699 = vmatpush2.xpose.msra.mxu0 0.0
        %6700 = vmatprep.subr.mxu0 0.0
        %6701 = vmatpush2.xpose.msra.mxu0 0.0
        %6702 = vmatprep.subr.mxu0 0.0
        %6703 = vmatpush2.xpose.msra.mxu0 0.0
        %6704 = vmatprep.subr.mxu0 0.0
        %6705 = vmatpush2.xpose.msra.mxu0 0.0
        %6706 = vmatprep.subr.mxu0 0.0
        %6707 = vmatpush2.xpose.msra.mxu0 0.0
        %6708 = vmatprep.subr.mxu0 0.0
        %6709 = vmatpush2.xpose.msra.mxu0 0.0
        %6710 = vmatprep.subr.mxu0 0.0
        %6711 = vmatpush2.xpose.msra.mxu0 0.0
        %6712 = vmatprep.subr.mxu0 0.0
        %6713 = vmatpush2.xpose.msra.mxu0 0.0
        %6714 = vmatprep.subr.mxu0 0.0
        %6715 = vmatpush2.xpose.msra.mxu0 0.0
        %6716 = vmatprep.subr.mxu0 0.0
        %6717 = vmatpush2.xpose.msra.mxu0 0.0
        %6718 = vmatprep.subr.mxu0 0.0
        %6719 = vmatpush2.xpose.msra.mxu0 0.0
        %6720 = vmatprep.subr.mxu0 0.0
        %6721 = vmatpush2.xpose.msra.mxu0 0.0
        %6722 = vmatprep.mubr.f32.mxu0 0.0
        %6723 = vmatmul.mubr.f32.gmra.mxu0 %v6654
        %v6724 = vpop.f32.mrf.mxu0
        %v6725 = vadd.f32 0.0, %v6724
        %v6726 = vpop.f32.mrf.mxu0
        %6727 = vdwg.mxu0
        %v6728 = vsel %vm1605, %v6563, 0
        %v6730 = vsel %vm1605, %v6570, 0
        %6732 = vmatprep.subr.mxu0 0.0
        %6733 = vmatpush1.xpose.msra.mxu0 0.0
        %6734 = vmatprep.subr.mxu0 0.0
        %6735 = vmatpush1.xpose.msra.mxu0 0.0
        %6736 = vmatprep.subr.mxu0 0.0
        %6737 = vmatpush1.xpose.msra.mxu0 0.0
        %6738 = vmatprep.subr.mxu0 0.0
        %6739 = vmatpush1.xpose.msra.mxu0 0.0
        %6740 = vmatprep.subr.mxu0 0.0
        %6741 = vmatpush1.xpose.msra.mxu0 0.0
        %6742 = vmatprep.subr.mxu0 0.0
        %6743 = vmatpush1.xpose.msra.mxu0 0.0
        %6744 = vmatprep.subr.mxu0 0.0
        %6745 = vmatpush1.xpose.msra.mxu0 0.0
        %6746 = vmatprep.subr.mxu0 0.0
        %6747 = vmatpush1.xpose.msra.mxu0 0.0
        %6748 = vmatprep.subr.mxu0 0.0
        %6749 = vmatpush1.xpose.msra.mxu0 0.0
        %6750 = vmatprep.subr.mxu0 0.0
        %6751 = vmatpush1.xpose.msra.mxu0 0.0
        %6752 = vmatprep.subr.mxu0 0.0
        %6753 = vmatpush1.xpose.msra.mxu0 0.0
        %6754 = vmatprep.subr.mxu0 0.0
        %6755 = vmatpush1.xpose.msra.mxu0 0.0
        %6756 = vmatprep.subr.mxu0 0.0
        %6757 = vmatpush1.xpose.msra.mxu0 0.0
        %6758 = vmatprep.subr.mxu0 0.0
        %6759 = vmatpush1.xpose.msra.mxu0 0.0
        %6760 = vmatprep.subr.mxu0 0.0
        %6761 = vmatpush1.xpose.msra.mxu0 0.0
        %6762 = vmatprep.subr.mxu0 0.0
        %6763 = vmatpush1.xpose.msra.mxu0 %v6730
        %6764 = vmatprep.subr.mxu0 0.0
        %6765 = vmatpush2.xpose.msra.mxu0 0.0
        %6766 = vmatprep.subr.mxu0 0.0
        %6767 = vmatpush2.xpose.msra.mxu0 0.0
        %6768 = vmatprep.subr.mxu0 0.0
        %6769 = vmatpush2.xpose.msra.mxu0 0.0
        %6770 = vmatprep.subr.mxu0 0.0
        %6771 = vmatpush2.xpose.msra.mxu0 0.0
        %6772 = vmatprep.subr.mxu0 0.0
        %6773 = vmatpush2.xpose.msra.mxu0 0.0
        %6774 = vmatprep.subr.mxu0 0.0
        %6775 = vmatpush2.xpose.msra.mxu0 0.0
        %6776 = vmatprep.subr.mxu0 0.0
        %6777 = vmatpush2.xpose.msra.mxu0 0.0
        %6778 = vmatprep.subr.mxu0 0.0
        %6779 = vmatpush2.xpose.msra.mxu0 0.0
        %6780 = vmatprep.subr.mxu0 0.0
        %6781 = vmatpush2.xpose.msra.mxu0 0.0
        %6782 = vmatprep.subr.mxu0 0.0
        %6783 = vmatpush2.xpose.msra.mxu0 0.0
        %6784 = vmatprep.subr.mxu0 0.0
        %6785 = vmatpush2.xpose.msra.mxu0 0.0
        %6786 = vmatprep.subr.mxu0 0.0
        %6787 = vmatpush2.xpose.msra.mxu0 0.0
        %6788 = vmatprep.subr.mxu0 0.0
        %6789 = vmatpush2.xpose.msra.mxu0 0.0
        %6790 = vmatprep.subr.mxu0 0.0
        %6791 = vmatpush2.xpose.msra.mxu0 0.0
        %6792 = vmatprep.subr.mxu0 0.0
        %6793 = vmatpush2.xpose.msra.mxu0 0.0
        %6794 = vmatprep.subr.mxu0 0.0
        %6795 = vmatpush2.xpose.msra.mxu0 0.0
        %6796 = vmatprep.mubr.f32.mxu0 0.0
        %6797 = vmatmul.mubr.f32.gmra.mxu0 %v6728
        %v6798 = vpop.f32.mrf.mxu0
        %v6799 = vadd.f32 0.0, %v6798
        %v6800 = vpop.f32.mrf.mxu0
        %6801 = vdwg.mxu0
        %v6802 = vsel %vm1605, %v6565, 0
        %v6804 = vsel %vm1605, %v6572, 0
        %6806 = vmatprep.subr.mxu0 0.0
        %6807 = vmatpush1.xpose.msra.mxu0 0.0
        %6808 = vmatprep.subr.mxu0 0.0
        %6809 = vmatpush1.xpose.msra.mxu0 0.0
        %6810 = vmatprep.subr.mxu0 0.0
        %6811 = vmatpush1.xpose.msra.mxu0 0.0
        %6812 = vmatprep.subr.mxu0 0.0
        %6813 = vmatpush1.xpose.msra.mxu0 0.0
        %6814 = vmatprep.subr.mxu0 0.0
        %6815 = vmatpush1.xpose.msra.mxu0 0.0
        %6816 = vmatprep.subr.mxu0 0.0
        %6817 = vmatpush1.xpose.msra.mxu0 0.0
        %6818 = vmatprep.subr.mxu0 0.0
        %6819 = vmatpush1.xpose.msra.mxu0 0.0
        %6820 = vmatprep.subr.mxu0 0.0
        %6821 = vmatpush1.xpose.msra.mxu0 0.0
        %6822 = vmatprep.subr.mxu0 0.0
        %6823 = vmatpush1.xpose.msra.mxu0 0.0
        %6824 = vmatprep.subr.mxu0 0.0
        %6825 = vmatpush1.xpose.msra.mxu0 0.0
        %6826 = vmatprep.subr.mxu0 0.0
        %6827 = vmatpush1.xpose.msra.mxu0 0.0
        %6828 = vmatprep.subr.mxu0 0.0
        %6829 = vmatpush1.xpose.msra.mxu0 0.0
        %6830 = vmatprep.subr.mxu0 0.0
        %6831 = vmatpush1.xpose.msra.mxu0 0.0
        %6832 = vmatprep.subr.mxu0 0.0
        %6833 = vmatpush1.xpose.msra.mxu0 0.0
        %6834 = vmatprep.subr.mxu0 0.0
        %6835 = vmatpush1.xpose.msra.mxu0 0.0
        %6836 = vmatprep.subr.mxu0 0.0
        %6837 = vmatpush1.xpose.msra.mxu0 %v6804
        %6838 = vmatprep.subr.mxu0 0.0
        %6839 = vmatpush2.xpose.msra.mxu0 0.0
        %6840 = vmatprep.subr.mxu0 0.0
        %6841 = vmatpush2.xpose.msra.mxu0 0.0
        %6842 = vmatprep.subr.mxu0 0.0
        %6843 = vmatpush2.xpose.msra.mxu0 0.0
        %6844 = vmatprep.subr.mxu0 0.0
        %6845 = vmatpush2.xpose.msra.mxu0 0.0
        %6846 = vmatprep.subr.mxu0 0.0
        %6847 = vmatpush2.xpose.msra.mxu0 0.0
        %6848 = vmatprep.subr.mxu0 0.0
        %6849 = vmatpush2.xpose.msra.mxu0 0.0
        %6850 = vmatprep.subr.mxu0 0.0
        %6851 = vmatpush2.xpose.msra.mxu0 0.0
        %6852 = vmatprep.subr.mxu0 0.0
        %6853 = vmatpush2.xpose.msra.mxu0 0.0
        %6854 = vmatprep.subr.mxu0 0.0
        %6855 = vmatpush2.xpose.msra.mxu0 0.0
        %6856 = vmatprep.subr.mxu0 0.0
        %6857 = vmatpush2.xpose.msra.mxu0 0.0
        %6858 = vmatprep.subr.mxu0 0.0
        %6859 = vmatpush2.xpose.msra.mxu0 0.0
        %6860 = vmatprep.subr.mxu0 0.0
        %6861 = vmatpush2.xpose.msra.mxu0 0.0
        %6862 = vmatprep.subr.mxu0 0.0
        %6863 = vmatpush2.xpose.msra.mxu0 0.0
        %6864 = vmatprep.subr.mxu0 0.0
        %6865 = vmatpush2.xpose.msra.mxu0 0.0
        %6866 = vmatprep.subr.mxu0 0.0
        %6867 = vmatpush2.xpose.msra.mxu0 0.0
        %6868 = vmatprep.subr.mxu0 0.0
        %6869 = vmatpush2.xpose.msra.mxu0 0.0
        %6870 = vmatprep.mubr.f32.mxu0 0.0
        %6871 = vmatmul.mubr.f32.gmra.mxu0 %v6802
        %v6872 = vpop.f32.mrf.mxu0
        %v6873 = vadd.f32 0.0, %v6872
        %v6874 = vpop.f32.mrf.mxu0
        %6875 = vdwg.mxu0
        %v6876 = vmul.f32 %v6651, 0.17677669
        %v6877 = vmul.f32 %v6725, 0.17677669
        %v6878 = vmul.f32 %v6799, 0.17677669
        %v6879 = vmul.f32 %v6873, 0.17677669
        %v6880 = vsel %vm5383, %v6876, -inf
        %6881 = vmax.xlane.f32.xlu0 %v6880
        %v6882 = vpop.xlane.xlu0 %6881
        %v6883 = vsel %vm5383, %v6877, -inf
        %6884 = vmax.xlane.f32.xlu0 %v6883
        %v6885 = vpop.xlane.xlu0 %6884
        %v6886 = vsel %vm5383, %v6878, -inf
        %6887 = vmax.xlane.f32.xlu0 %v6886
        %v6888 = vpop.xlane.xlu0 %6887
        %v6889 = vsel %vm5383, %v6879, -inf
        %6890 = vmax.xlane.f32.xlu0 %v6889
        %v6891 = vpop.xlane.xlu0 %6890
        %v6892 = vsub.f32 %v6876, %v6882
        %v6893 = vsub.f32 %v6877, %v6885
        %v6894 = vsub.f32 %v6878, %v6888
        %v6895 = vsub.f32 %v6879, %v6891
        %v6896 = vmul.f32 %v6892, 1.442695
        %v6897 = vpow.pop %v6896
        %v6898 = vmul.f32 %v6893, 1.442695
        %v6899 = vpow.pop %v6898
        %v6900 = vmul.f32 %v6894, 1.442695
        %v6901 = vpow.pop %v6900
        %v6902 = vmul.f32 %v6895, 1.442695
        %v6903 = vpow.pop %v6902
        %v6904 = vsel %vm5383, %v6897, 0.0
        %6905 = vadd.xlane.f32.xlu0 %v6904
        %v6906 = vpop.xlane.xlu0 %6905
        %v6907 = vsel %vm5383, %v6899, 0.0
        %6908 = vadd.xlane.f32.xlu0 %v6907
        %v6909 = vpop.xlane.xlu0 %6908
        %v6910 = vsel %vm5383, %v6901, 0.0
        %6911 = vadd.xlane.f32.xlu0 %v6910
        %v6912 = vpop.xlane.xlu0 %6911
        %v6913 = vsel %vm5383, %v6903, 0.0
        %6914 = vadd.xlane.f32.xlu0 %v6913
        %v6915 = vpop.xlane.xlu0 %6914
        %v6916 = vrcp.pop %v6906
        %v6917 = vmul.f32 %v6897, %v6916
        %v6918 = vrcp.pop %v6909
        %v6919 = vmul.f32 %v6899, %v6918
        %v6920 = vrcp.pop %v6912
        %v6921 = vmul.f32 %v6901, %v6920
        %v6922 = vrcp.pop %v6915
        %v6923 = vmul.f32 %v6903, %v6922
        %v6925 = vsel %vm5428, %v6917, 0
        %v6927 = vsel %vm5432, %v6556, 0
        %6929 = vmatprep.subr.mxu0 0.0
        %6930 = vmatpush1.msra.mxu0 0.0
        %6931 = vmatprep.subr.mxu0 0.0
        %6932 = vmatpush1.msra.mxu0 0.0
        %6933 = vmatprep.subr.mxu0 0.0
        %6934 = vmatpush1.msra.mxu0 0.0
        %6935 = vmatprep.subr.mxu0 0.0
        %6936 = vmatpush1.msra.mxu0 0.0
        %6937 = vmatprep.subr.mxu0 0.0
        %6938 = vmatpush1.msra.mxu0 0.0
        %6939 = vmatprep.subr.mxu0 0.0
        %6940 = vmatpush1.msra.mxu0 0.0
        %6941 = vmatprep.subr.mxu0 0.0
        %6942 = vmatpush1.msra.mxu0 0.0
        %6943 = vmatprep.subr.mxu0 0.0
        %6944 = vmatpush1.msra.mxu0 0.0
        %6945 = vmatprep.subr.mxu0 0.0
        %6946 = vmatpush1.msra.mxu0 0.0
        %6947 = vmatprep.subr.mxu0 0.0
        %6948 = vmatpush1.msra.mxu0 0.0
        %6949 = vmatprep.subr.mxu0 0.0
        %6950 = vmatpush1.msra.mxu0 0.0
        %6951 = vmatprep.subr.mxu0 0.0
        %6952 = vmatpush1.msra.mxu0 0.0
        %6953 = vmatprep.subr.mxu0 0.0
        %6954 = vmatpush1.msra.mxu0 0.0
        %6955 = vmatprep.subr.mxu0 0.0
        %6956 = vmatpush1.msra.mxu0 0.0
        %6957 = vmatprep.subr.mxu0 0.0
        %6958 = vmatpush1.msra.mxu0 0.0
        %6959 = vmatprep.subr.mxu0 0.0
        %6960 = vmatpush1.msra.mxu0 %v6927
        %6961 = vmatprep.subr.mxu0 0.0
        %6962 = vmatpush2.msra.mxu0 0.0
        %6963 = vmatprep.subr.mxu0 0.0
        %6964 = vmatpush2.msra.mxu0 0.0
        %6965 = vmatprep.subr.mxu0 0.0
        %6966 = vmatpush2.msra.mxu0 0.0
        %6967 = vmatprep.subr.mxu0 0.0
        %6968 = vmatpush2.msra.mxu0 0.0
        %6969 = vmatprep.subr.mxu0 0.0
        %6970 = vmatpush2.msra.mxu0 0.0
        %6971 = vmatprep.subr.mxu0 0.0
        %6972 = vmatpush2.msra.mxu0 0.0
        %6973 = vmatprep.subr.mxu0 0.0
        %6974 = vmatpush2.msra.mxu0 0.0
        %6975 = vmatprep.subr.mxu0 0.0
        %6976 = vmatpush2.msra.mxu0 0.0
        %6977 = vmatprep.subr.mxu0 0.0
        %6978 = vmatpush2.msra.mxu0 0.0
        %6979 = vmatprep.subr.mxu0 0.0
        %6980 = vmatpush2.msra.mxu0 0.0
        %6981 = vmatprep.subr.mxu0 0.0
        %6982 = vmatpush2.msra.mxu0 0.0
        %6983 = vmatprep.subr.mxu0 0.0
        %6984 = vmatpush2.msra.mxu0 0.0
        %6985 = vmatprep.subr.mxu0 0.0
        %6986 = vmatpush2.msra.mxu0 0.0
        %6987 = vmatprep.subr.mxu0 0.0
        %6988 = vmatpush2.msra.mxu0 0.0
        %6989 = vmatprep.subr.mxu0 0.0
        %6990 = vmatpush2.msra.mxu0 0.0
        %6991 = vmatprep.subr.mxu0 0.0
        %6992 = vmatpush2.msra.mxu0 0.0
        %6993 = vmatprep.mubr.f32.mxu0 0.0
        %6994 = vmatmul.mubr.f32.gmra.mxu0 %v6925
        %v6995 = vpop.f32.mrf.mxu0
        %v6996 = vadd.f32 0.0, %v6995
        %v6997 = vpop.f32.mrf.mxu0
        %6998 = vdwg.mxu0
        %v7000 = vsel %vm5428, %v6919, 0
        %v7002 = vsel %vm5432, %v6575, 0
        %7004 = vmatprep.subr.mxu0 0.0
        %7005 = vmatpush1.msra.mxu0 0.0
        %7006 = vmatprep.subr.mxu0 0.0
        %7007 = vmatpush1.msra.mxu0 0.0
        %7008 = vmatprep.subr.mxu0 0.0
        %7009 = vmatpush1.msra.mxu0 0.0
        %7010 = vmatprep.subr.mxu0 0.0
        %7011 = vmatpush1.msra.mxu0 0.0
        %7012 = vmatprep.subr.mxu0 0.0
        %7013 = vmatpush1.msra.mxu0 0.0
        %7014 = vmatprep.subr.mxu0 0.0
        %7015 = vmatpush1.msra.mxu0 0.0
        %7016 = vmatprep.subr.mxu0 0.0
        %7017 = vmatpush1.msra.mxu0 0.0
        %7018 = vmatprep.subr.mxu0 0.0
        %7019 = vmatpush1.msra.mxu0 0.0
        %7020 = vmatprep.subr.mxu0 0.0
        %7021 = vmatpush1.msra.mxu0 0.0
        %7022 = vmatprep.subr.mxu0 0.0
        %7023 = vmatpush1.msra.mxu0 0.0
        %7024 = vmatprep.subr.mxu0 0.0
        %7025 = vmatpush1.msra.mxu0 0.0
        %7026 = vmatprep.subr.mxu0 0.0
        %7027 = vmatpush1.msra.mxu0 0.0
        %7028 = vmatprep.subr.mxu0 0.0
        %7029 = vmatpush1.msra.mxu0 0.0
        %7030 = vmatprep.subr.mxu0 0.0
        %7031 = vmatpush1.msra.mxu0 0.0
        %7032 = vmatprep.subr.mxu0 0.0
        %7033 = vmatpush1.msra.mxu0 0.0
        %7034 = vmatprep.subr.mxu0 0.0
        %7035 = vmatpush1.msra.mxu0 %v7002
        %7036 = vmatprep.subr.mxu0 0.0
        %7037 = vmatpush2.msra.mxu0 0.0
        %7038 = vmatprep.subr.mxu0 0.0
        %7039 = vmatpush2.msra.mxu0 0.0
        %7040 = vmatprep.subr.mxu0 0.0
        %7041 = vmatpush2.msra.mxu0 0.0
        %7042 = vmatprep.subr.mxu0 0.0
        %7043 = vmatpush2.msra.mxu0 0.0
        %7044 = vmatprep.subr.mxu0 0.0
        %7045 = vmatpush2.msra.mxu0 0.0
        %7046 = vmatprep.subr.mxu0 0.0
        %7047 = vmatpush2.msra.mxu0 0.0
        %7048 = vmatprep.subr.mxu0 0.0
        %7049 = vmatpush2.msra.mxu0 0.0
        %7050 = vmatprep.subr.mxu0 0.0
        %7051 = vmatpush2.msra.mxu0 0.0
        %7052 = vmatprep.subr.mxu0 0.0
        %7053 = vmatpush2.msra.mxu0 0.0
        %7054 = vmatprep.subr.mxu0 0.0
        %7055 = vmatpush2.msra.mxu0 0.0
        %7056 = vmatprep.subr.mxu0 0.0
        %7057 = vmatpush2.msra.mxu0 0.0
        %7058 = vmatprep.subr.mxu0 0.0
        %7059 = vmatpush2.msra.mxu0 0.0
        %7060 = vmatprep.subr.mxu0 0.0
        %7061 = vmatpush2.msra.mxu0 0.0
        %7062 = vmatprep.subr.mxu0 0.0
        %7063 = vmatpush2.msra.mxu0 0.0
        %7064 = vmatprep.subr.mxu0 0.0
        %7065 = vmatpush2.msra.mxu0 0.0
        %7066 = vmatprep.subr.mxu0 0.0
        %7067 = vmatpush2.msra.mxu0 0.0
        %7068 = vmatprep.mubr.f32.mxu0 0.0
        %7069 = vmatmul.mubr.f32.gmra.mxu0 %v7000
        %v7070 = vpop.f32.mrf.mxu0
        %v7071 = vadd.f32 0.0, %v7070
        %v7072 = vpop.f32.mrf.mxu0
        %7073 = vdwg.mxu0
        %v7075 = vsel %vm5428, %v6921, 0
        %v7077 = vsel %vm5432, %v6577, 0
        %7079 = vmatprep.subr.mxu0 0.0
        %7080 = vmatpush1.msra.mxu0 0.0
        %7081 = vmatprep.subr.mxu0 0.0
        %7082 = vmatpush1.msra.mxu0 0.0
        %7083 = vmatprep.subr.mxu0 0.0
        %7084 = vmatpush1.msra.mxu0 0.0
        %7085 = vmatprep.subr.mxu0 0.0
        %7086 = vmatpush1.msra.mxu0 0.0
        %7087 = vmatprep.subr.mxu0 0.0
        %7088 = vmatpush1.msra.mxu0 0.0
        %7089 = vmatprep.subr.mxu0 0.0
        %7090 = vmatpush1.msra.mxu0 0.0
        %7091 = vmatprep.subr.mxu0 0.0
        %7092 = vmatpush1.msra.mxu0 0.0
        %7093 = vmatprep.subr.mxu0 0.0
        %7094 = vmatpush1.msra.mxu0 0.0
        %7095 = vmatprep.subr.mxu0 0.0
        %7096 = vmatpush1.msra.mxu0 0.0
        %7097 = vmatprep.subr.mxu0 0.0
        %7098 = vmatpush1.msra.mxu0 0.0
        %7099 = vmatprep.subr.mxu0 0.0
        %7100 = vmatpush1.msra.mxu0 0.0
        %7101 = vmatprep.subr.mxu0 0.0
        %7102 = vmatpush1.msra.mxu0 0.0
        %7103 = vmatprep.subr.mxu0 0.0
        %7104 = vmatpush1.msra.mxu0 0.0
        %7105 = vmatprep.subr.mxu0 0.0
        %7106 = vmatpush1.msra.mxu0 0.0
        %7107 = vmatprep.subr.mxu0 0.0
        %7108 = vmatpush1.msra.mxu0 0.0
        %7109 = vmatprep.subr.mxu0 0.0
        %7110 = vmatpush1.msra.mxu0 %v7077
        %7111 = vmatprep.subr.mxu0 0.0
        %7112 = vmatpush2.msra.mxu0 0.0
        %7113 = vmatprep.subr.mxu0 0.0
        %7114 = vmatpush2.msra.mxu0 0.0
        %7115 = vmatprep.subr.mxu0 0.0
        %7116 = vmatpush2.msra.mxu0 0.0
        %7117 = vmatprep.subr.mxu0 0.0
        %7118 = vmatpush2.msra.mxu0 0.0
        %7119 = vmatprep.subr.mxu0 0.0
        %7120 = vmatpush2.msra.mxu0 0.0
        %7121 = vmatprep.subr.mxu0 0.0
        %7122 = vmatpush2.msra.mxu0 0.0
        %7123 = vmatprep.subr.mxu0 0.0
        %7124 = vmatpush2.msra.mxu0 0.0
        %7125 = vmatprep.subr.mxu0 0.0
        %7126 = vmatpush2.msra.mxu0 0.0
        %7127 = vmatprep.subr.mxu0 0.0
        %7128 = vmatpush2.msra.mxu0 0.0
        %7129 = vmatprep.subr.mxu0 0.0
        %7130 = vmatpush2.msra.mxu0 0.0
        %7131 = vmatprep.subr.mxu0 0.0
        %7132 = vmatpush2.msra.mxu0 0.0
        %7133 = vmatprep.subr.mxu0 0.0
        %7134 = vmatpush2.msra.mxu0 0.0
        %7135 = vmatprep.subr.mxu0 0.0
        %7136 = vmatpush2.msra.mxu0 0.0
        %7137 = vmatprep.subr.mxu0 0.0
        %7138 = vmatpush2.msra.mxu0 0.0
        %7139 = vmatprep.subr.mxu0 0.0
        %7140 = vmatpush2.msra.mxu0 0.0
        %7141 = vmatprep.subr.mxu0 0.0
        %7142 = vmatpush2.msra.mxu0 0.0
        %7143 = vmatprep.mubr.f32.mxu0 0.0
        %7144 = vmatmul.mubr.f32.gmra.mxu0 %v7075
        %v7145 = vpop.f32.mrf.mxu0
        %v7146 = vadd.f32 0.0, %v7145
        %v7147 = vpop.f32.mrf.mxu0
        %7148 = vdwg.mxu0
        %v7150 = vsel %vm5428, %v6923, 0
        %v7152 = vsel %vm5432, %v6579, 0
        %7154 = vmatprep.subr.mxu0 0.0
        %7155 = vmatpush1.msra.mxu0 0.0
        %7156 = vmatprep.subr.mxu0 0.0
        %7157 = vmatpush1.msra.mxu0 0.0
        %7158 = vmatprep.subr.mxu0 0.0
        %7159 = vmatpush1.msra.mxu0 0.0
        %7160 = vmatprep.subr.mxu0 0.0
        %7161 = vmatpush1.msra.mxu0 0.0
        %7162 = vmatprep.subr.mxu0 0.0
        %7163 = vmatpush1.msra.mxu0 0.0
        %7164 = vmatprep.subr.mxu0 0.0
        %7165 = vmatpush1.msra.mxu0 0.0
        %7166 = vmatprep.subr.mxu0 0.0
        %7167 = vmatpush1.msra.mxu0 0.0
        %7168 = vmatprep.subr.mxu0 0.0
        %7169 = vmatpush1.msra.mxu0 0.0
        %7170 = vmatprep.subr.mxu0 0.0
        %7171 = vmatpush1.msra.mxu0 0.0
        %7172 = vmatprep.subr.mxu0 0.0
        %7173 = vmatpush1.msra.mxu0 0.0
        %7174 = vmatprep.subr.mxu0 0.0
        %7175 = vmatpush1.msra.mxu0 0.0
        %7176 = vmatprep.subr.mxu0 0.0
        %7177 = vmatpush1.msra.mxu0 0.0
        %7178 = vmatprep.subr.mxu0 0.0
        %7179 = vmatpush1.msra.mxu0 0.0
        %7180 = vmatprep.subr.mxu0 0.0
        %7181 = vmatpush1.msra.mxu0 0.0
        %7182 = vmatprep.subr.mxu0 0.0
        %7183 = vmatpush1.msra.mxu0 0.0
        %7184 = vmatprep.subr.mxu0 0.0
        %7185 = vmatpush1.msra.mxu0 %v7152
        %7186 = vmatprep.subr.mxu0 0.0
        %7187 = vmatpush2.msra.mxu0 0.0
        %7188 = vmatprep.subr.mxu0 0.0
        %7189 = vmatpush2.msra.mxu0 0.0
        %7190 = vmatprep.subr.mxu0 0.0
        %7191 = vmatpush2.msra.mxu0 0.0
        %7192 = vmatprep.subr.mxu0 0.0
        %7193 = vmatpush2.msra.mxu0 0.0
        %7194 = vmatprep.subr.mxu0 0.0
        %7195 = vmatpush2.msra.mxu0 0.0
        %7196 = vmatprep.subr.mxu0 0.0
        %7197 = vmatpush2.msra.mxu0 0.0
        %7198 = vmatprep.subr.mxu0 0.0
        %7199 = vmatpush2.msra.mxu0 0.0
        %7200 = vmatprep.subr.mxu0 0.0
        %7201 = vmatpush2.msra.mxu0 0.0
        %7202 = vmatprep.subr.mxu0 0.0
        %7203 = vmatpush2.msra.mxu0 0.0
        %7204 = vmatprep.subr.mxu0 0.0
        %7205 = vmatpush2.msra.mxu0 0.0
        %7206 = vmatprep.subr.mxu0 0.0
        %7207 = vmatpush2.msra.mxu0 0.0
        %7208 = vmatprep.subr.mxu0 0.0
        %7209 = vmatpush2.msra.mxu0 0.0
        %7210 = vmatprep.subr.mxu0 0.0
        %7211 = vmatpush2.msra.mxu0 0.0
        %7212 = vmatprep.subr.mxu0 0.0
        %7213 = vmatpush2.msra.mxu0 0.0
        %7214 = vmatprep.subr.mxu0 0.0
        %7215 = vmatpush2.msra.mxu0 0.0
        %7216 = vmatprep.subr.mxu0 0.0
        %7217 = vmatpush2.msra.mxu0 0.0
        %7218 = vmatprep.mubr.f32.mxu0 0.0
        %7219 = vmatmul.mubr.f32.gmra.mxu0 %v7150
        %v7220 = vpop.f32.mrf.mxu0
        %v7221 = vadd.f32 0.0, %v7220
        %v7222 = vpop.f32.mrf.mxu0
        %7223 = vdwg.mxu0
        %7225 = vrot.lane.b32.xlu0 %v7071, 32
        %v7226 = vpop.permute.xlu0 %7225
        %7229 = vrot.lane.b32.xlu0 %v7146, 64
        %v7230 = vpop.permute.xlu0 %7229
        %7233 = vrot.lane.b32.xlu0 %v7221, 96
        %v7234 = vpop.permute.xlu0 %7233
        %v7236 = vsel %vm1605, %v6996, %v7226
        %v7237 = vsel %vm2395, %v7236, %v7230
        %v7238 = vsel %vm2398, %v7237, %v7234
        %s7239 = scalar_lea.vmem [#allocation16], 384
        %v7240 = vld [vmem:[%s7239] sm:$0xff]
        %v7241 = vld [vmem:[%s7239 + $0x8] sm:$0xff]
        %v7242 = vld [vmem:[%s7239 + $0x10] sm:$0xff]
        %v7243 = vld [vmem:[%s7239 + $0x18] sm:$0xff]
        %v7244 = vld [vmem:[%s7239 + $0x20] sm:$0xff]
        %v7245 = vld [vmem:[%s7239 + $0x28] sm:$0xff]
        %v7246 = vld [vmem:[%s7239 + $0x30] sm:$0xff]
        %v7247 = vld [vmem:[%s7239 + $0x38] sm:$0xff]
        %v7248 = vld [vmem:[%s7239 + $0x40] sm:$0xff]
        %v7249 = vld [vmem:[%s7239 + $0x48] sm:$0xff]
        %v7250 = vld [vmem:[%s7239 + $0x50] sm:$0xff]
        %v7251 = vld [vmem:[%s7239 + $0x58] sm:$0xff]
        %v7252 = vld [vmem:[%s7239 + $0x60] sm:$0xff]
        %v7253 = vld [vmem:[%s7239 + $0x68] sm:$0xff]
        %v7254 = vld [vmem:[%s7239 + $0x70] sm:$0xff]
        %v7255 = vld [vmem:[%s7239 + $0x78] sm:$0xff]
        %s7256 = scalar_lea.vmem [#allocation17], 3
        %v7257 = vld [vmem:[%s7256] sm:$0x1]
        %v7259 = vlaneseq
        %v7260 = vshrl.u32 %v7259, 7
        %v7261 = vsub.s32 0, %v7260
        %v7262 = vrot.slane %v7257, %v7261
        %7264 = vmatprep.subr.mxu0 0.0
        %7265 = vmatpush1.msra.mxu0 %v7255
        %7266 = vmatprep.subr.mxu0 0.0
        %7267 = vmatpush1.msra.mxu0 %v7254
        %7268 = vmatprep.subr.mxu0 0.0
        %7269 = vmatpush1.msra.mxu0 %v7253
        %7270 = vmatprep.subr.mxu0 0.0
        %7271 = vmatpush1.msra.mxu0 %v7252
        %7272 = vmatprep.subr.mxu0 0.0
        %7273 = vmatpush1.msra.mxu0 %v7251
        %7274 = vmatprep.subr.mxu0 0.0
        %7275 = vmatpush1.msra.mxu0 %v7250
        %7276 = vmatprep.subr.mxu0 0.0
        %7277 = vmatpush1.msra.mxu0 %v7249
        %7278 = vmatprep.subr.mxu0 0.0
        %7279 = vmatpush1.msra.mxu0 %v7248
        %7280 = vmatprep.subr.mxu0 0.0
        %7281 = vmatpush1.msra.mxu0 %v7247
        %7282 = vmatprep.subr.mxu0 0.0
        %7283 = vmatpush1.msra.mxu0 %v7246
        %7284 = vmatprep.subr.mxu0 0.0
        %7285 = vmatpush1.msra.mxu0 %v7245
        %7286 = vmatprep.subr.mxu0 0.0
        %7287 = vmatpush1.msra.mxu0 %v7244
        %7288 = vmatprep.subr.mxu0 0.0
        %7289 = vmatpush1.msra.mxu0 %v7243
        %7290 = vmatprep.subr.mxu0 0.0
        %7291 = vmatpush1.msra.mxu0 %v7242
        %7292 = vmatprep.subr.mxu0 0.0
        %7293 = vmatpush1.msra.mxu0 %v7241
        %7294 = vmatprep.subr.mxu0 0.0
        %7295 = vmatpush1.msra.mxu0 %v7240
        %7296 = vmatprep.subr.mxu0 0.0
        %7297 = vmatpush2.msra.mxu0 0.0
        %7298 = vmatprep.subr.mxu0 0.0
        %7299 = vmatpush2.msra.mxu0 0.0
        %7300 = vmatprep.subr.mxu0 0.0
        %7301 = vmatpush2.msra.mxu0 0.0
        %7302 = vmatprep.subr.mxu0 0.0
        %7303 = vmatpush2.msra.mxu0 0.0
        %7304 = vmatprep.subr.mxu0 0.0
        %7305 = vmatpush2.msra.mxu0 0.0
        %7306 = vmatprep.subr.mxu0 0.0
        %7307 = vmatpush2.msra.mxu0 0.0
        %7308 = vmatprep.subr.mxu0 0.0
        %7309 = vmatpush2.msra.mxu0 0.0
        %7310 = vmatprep.subr.mxu0 0.0
        %7311 = vmatpush2.msra.mxu0 0.0
        %7312 = vmatprep.subr.mxu0 0.0
        %7313 = vmatpush2.msra.mxu0 0.0
        %7314 = vmatprep.subr.mxu0 0.0
        %7315 = vmatpush2.msra.mxu0 0.0
        %7316 = vmatprep.subr.mxu0 0.0
        %7317 = vmatpush2.msra.mxu0 0.0
        %7318 = vmatprep.subr.mxu0 0.0
        %7319 = vmatpush2.msra.mxu0 0.0
        %7320 = vmatprep.subr.mxu0 0.0
        %7321 = vmatpush2.msra.mxu0 0.0
        %7322 = vmatprep.subr.mxu0 0.0
        %7323 = vmatpush2.msra.mxu0 0.0
        %7324 = vmatprep.subr.mxu0 0.0
        %7325 = vmatpush2.msra.mxu0 0.0
        %7326 = vmatprep.subr.mxu0 0.0
        %7327 = vmatpush2.msra.mxu0 0.0
        %7328 = vmatprep.mubr.f32.mxu0 0.0
        %7329 = vmatmul.mubr.f32.gmra.mxu0 %v7238
        %v7330 = vpop.f32.mrf.mxu0
        %v7331 = vadd.f32 %v7262, %v7330
        %v7332 = vpop.f32.mrf.mxu0
        %7333 = vdwg.mxu0
        %v7334 = vadd.f32 %v6350, %v7331
        %s7335 = scalar_lea.vmem [#allocation19], 3
        %v7336 = vld [vmem:[%s7335] sm:$0x1]
        %s7337 = scalar_lea.vmem [#allocation20], 3
        %v7338 = vld [vmem:[%s7337] sm:$0x1]
        %v7339 = vsel %vm5432, %v7334, 0.0
        %7340 = vadd.xlane.f32.xlu0 %v7339
        %v7341 = vpop.xlane.xlu0 %7340
        %v7342 = vmul.f32 %v7341, %v2508
        %v7343 = vsub.f32 %v7334, %v7342
        %v7344 = vmul.f32 %v7343, %v7343
        %v7345 = vsel %vm5432, %v7344, 0.0
        %7346 = vadd.xlane.f32.xlu0 %v7345
        %v7347 = vpop.xlane.xlu0 %7346
        %v7348 = vmul.f32 %v7347, %v2508
        %v7349 = vadd.f32 %v7348, 1e-05
        %v7350 = vrsqrt.pop %v7349
        %v7351 = vmul.f32 %v7343, %v7350
        %v7353 = vlaneseq
        %v7354 = vshrl.u32 %v7353, 7
        %v7355 = vsub.s32 0, %v7354
        %v7356 = vrot.slane %v7336, %v7355
        %v7358 = vmul.f32 %v7351, %v7356
        %v7360 = vlaneseq
        %v7361 = vshrl.u32 %v7360, 7
        %v7362 = vsub.s32 0, %v7361
        %v7363 = vrot.slane %v7338, %v7362
        %v7365 = vadd.f32 %v7358, %v7363
        %s7366 = scalar_lea.vmem [#allocation22], 1536
        %v7367 = vld [vmem:[%s7366] sm:$0xff]
        %v7368 = vld [vmem:[%s7366 + $0x8] sm:$0xff]
        %v7369 = vld [vmem:[%s7366 + $0x10] sm:$0xff]
        %v7370 = vld [vmem:[%s7366 + $0x18] sm:$0xff]
        %v7371 = vld [vmem:[%s7366 + $0x20] sm:$0xff]
        %v7372 = vld [vmem:[%s7366 + $0x28] sm:$0xff]
        %v7373 = vld [vmem:[%s7366 + $0x30] sm:$0xff]
        %v7374 = vld [vmem:[%s7366 + $0x38] sm:$0xff]
        %v7375 = vld [vmem:[%s7366 + $0x40] sm:$0xff]
        %v7376 = vld [vmem:[%s7366 + $0x48] sm:$0xff]
        %v7377 = vld [vmem:[%s7366 + $0x50] sm:$0xff]
        %v7378 = vld [vmem:[%s7366 + $0x58] sm:$0xff]
        %v7379 = vld [vmem:[%s7366 + $0x60] sm:$0xff]
        %v7380 = vld [vmem:[%s7366 + $0x68] sm:$0xff]
        %v7381 = vld [vmem:[%s7366 + $0x70] sm:$0xff]
        %v7382 = vld [vmem:[%s7366 + $0x78] sm:$0xff]
        %v7383 = vld [vmem:[%s7366 + $0x80] sm:$0xff]
        %v7384 = vld [vmem:[%s7366 + $0x88] sm:$0xff]
        %v7385 = vld [vmem:[%s7366 + $0x90] sm:$0xff]
        %v7386 = vld [vmem:[%s7366 + $0x98] sm:$0xff]
        %v7387 = vld [vmem:[%s7366 + $0xa0] sm:$0xff]
        %v7388 = vld [vmem:[%s7366 + $0xa8] sm:$0xff]
        %v7389 = vld [vmem:[%s7366 + $0xb0] sm:$0xff]
        %v7390 = vld [vmem:[%s7366 + $0xb8] sm:$0xff]
        %v7391 = vld [vmem:[%s7366 + $0xc0] sm:$0xff]
        %v7392 = vld [vmem:[%s7366 + $0xc8] sm:$0xff]
        %v7393 = vld [vmem:[%s7366 + $0xd0] sm:$0xff]
        %v7394 = vld [vmem:[%s7366 + $0xd8] sm:$0xff]
        %v7395 = vld [vmem:[%s7366 + $0xe0] sm:$0xff]
        %v7396 = vld [vmem:[%s7366 + $0xe8] sm:$0xff]
        %v7397 = vld [vmem:[%s7366 + $0xf0] sm:$0xff]
        %v7398 = vld [vmem:[%s7366 + $0xf8] sm:$0xff]
        %v7399 = vld [vmem:[%s7366 + $0x100] sm:$0xff]
        %v7400 = vld [vmem:[%s7366 + $0x108] sm:$0xff]
        %v7401 = vld [vmem:[%s7366 + $0x110] sm:$0xff]
        %v7402 = vld [vmem:[%s7366 + $0x118] sm:$0xff]
        %v7403 = vld [vmem:[%s7366 + $0x120] sm:$0xff]
        %v7404 = vld [vmem:[%s7366 + $0x128] sm:$0xff]
        %v7405 = vld [vmem:[%s7366 + $0x130] sm:$0xff]
        %v7406 = vld [vmem:[%s7366 + $0x138] sm:$0xff]
        %v7407 = vld [vmem:[%s7366 + $0x140] sm:$0xff]
        %v7408 = vld [vmem:[%s7366 + $0x148] sm:$0xff]
        %v7409 = vld [vmem:[%s7366 + $0x150] sm:$0xff]
        %v7410 = vld [vmem:[%s7366 + $0x158] sm:$0xff]
        %v7411 = vld [vmem:[%s7366 + $0x160] sm:$0xff]
        %v7412 = vld [vmem:[%s7366 + $0x168] sm:$0xff]
        %v7413 = vld [vmem:[%s7366 + $0x170] sm:$0xff]
        %v7414 = vld [vmem:[%s7366 + $0x178] sm:$0xff]
        %v7415 = vld [vmem:[%s7366 + $0x180] sm:$0xff]
        %v7416 = vld [vmem:[%s7366 + $0x188] sm:$0xff]
        %v7417 = vld [vmem:[%s7366 + $0x190] sm:$0xff]
        %v7418 = vld [vmem:[%s7366 + $0x198] sm:$0xff]
        %v7419 = vld [vmem:[%s7366 + $0x1a0] sm:$0xff]
        %v7420 = vld [vmem:[%s7366 + $0x1a8] sm:$0xff]
        %v7421 = vld [vmem:[%s7366 + $0x1b0] sm:$0xff]
        %v7422 = vld [vmem:[%s7366 + $0x1b8] sm:$0xff]
        %v7423 = vld [vmem:[%s7366 + $0x1c0] sm:$0xff]
        %v7424 = vld [vmem:[%s7366 + $0x1c8] sm:$0xff]
        %v7425 = vld [vmem:[%s7366 + $0x1d0] sm:$0xff]
        %v7426 = vld [vmem:[%s7366 + $0x1d8] sm:$0xff]
        %v7427 = vld [vmem:[%s7366 + $0x1e0] sm:$0xff]
        %v7428 = vld [vmem:[%s7366 + $0x1e8] sm:$0xff]
        %v7429 = vld [vmem:[%s7366 + $0x1f0] sm:$0xff]
        %v7430 = vld [vmem:[%s7366 + $0x1f8] sm:$0xff]
        %s7431 = scalar_lea.vmem %s13, 12
        %v7432 = vld [vmem:[%s7431] sm:$0xf]
        %v7434 = vlaneseq
        %v7435 = vshrl.u32 %v7434, 7
        %v7436 = vsub.s32 0, %v7435
        %v7437 = vrot.slane %v7432, %v7436
        %v7438 = vlaneseq
        %v7439 = vshrl.u32 %v7438, 7
        %v7440 = vsub.s32 1, %v7439
        %v7441 = vrot.slane %v7432, %v7440
        %v7442 = vlaneseq
        %v7443 = vshrl.u32 %v7442, 7
        %v7444 = vsub.s32 2, %v7443
        %v7445 = vrot.slane %v7432, %v7444
        %v7446 = vlaneseq
        %v7447 = vshrl.u32 %v7446, 7
        %v7448 = vsub.s32 3, %v7447
        %v7449 = vrot.slane %v7432, %v7448
        %7454 = vmatprep.subr.mxu0 %v7428
        %7455 = vmatpush1.msra.mxu0 %v7427
        %7456 = vmatprep.subr.mxu0 %v7424
        %7457 = vmatpush1.msra.mxu0 %v7423
        %7458 = vmatprep.subr.mxu0 %v7420
        %7459 = vmatpush1.msra.mxu0 %v7419
        %7460 = vmatprep.subr.mxu0 %v7416
        %7461 = vmatpush1.msra.mxu0 %v7415
        %7462 = vmatprep.subr.mxu0 %v7412
        %7463 = vmatpush1.msra.mxu0 %v7411
        %7464 = vmatprep.subr.mxu0 %v7408
        %7465 = vmatpush1.msra.mxu0 %v7407
        %7466 = vmatprep.subr.mxu0 %v7404
        %7467 = vmatpush1.msra.mxu0 %v7403
        %7468 = vmatprep.subr.mxu0 %v7400
        %7469 = vmatpush1.msra.mxu0 %v7399
        %7470 = vmatprep.subr.mxu0 %v7396
        %7471 = vmatpush1.msra.mxu0 %v7395
        %7472 = vmatprep.subr.mxu0 %v7392
        %7473 = vmatpush1.msra.mxu0 %v7391
        %7474 = vmatprep.subr.mxu0 %v7388
        %7475 = vmatpush1.msra.mxu0 %v7387
        %7476 = vmatprep.subr.mxu0 %v7384
        %7477 = vmatpush1.msra.mxu0 %v7383
        %7478 = vmatprep.subr.mxu0 %v7380
        %7479 = vmatpush1.msra.mxu0 %v7379
        %7480 = vmatprep.subr.mxu0 %v7376
        %7481 = vmatpush1.msra.mxu0 %v7375
        %7482 = vmatprep.subr.mxu0 %v7372
        %7483 = vmatpush1.msra.mxu0 %v7371
        %7484 = vmatprep.subr.mxu0 %v7368
        %7485 = vmatpush1.msra.mxu0 %v7367
        %7486 = vmatprep.subr.mxu0 0.0
        %7487 = vmatpush2.msra.mxu0 0.0
        %7488 = vmatprep.subr.mxu0 0.0
        %7489 = vmatpush2.msra.mxu0 0.0
        %7490 = vmatprep.subr.mxu0 0.0
        %7491 = vmatpush2.msra.mxu0 0.0
        %7492 = vmatprep.subr.mxu0 0.0
        %7493 = vmatpush2.msra.mxu0 0.0
        %7494 = vmatprep.subr.mxu0 0.0
        %7495 = vmatpush2.msra.mxu0 0.0
        %7496 = vmatprep.subr.mxu0 0.0
        %7497 = vmatpush2.msra.mxu0 0.0
        %7498 = vmatprep.subr.mxu0 0.0
        %7499 = vmatpush2.msra.mxu0 0.0
        %7500 = vmatprep.subr.mxu0 0.0
        %7501 = vmatpush2.msra.mxu0 0.0
        %7502 = vmatprep.subr.mxu0 0.0
        %7503 = vmatpush2.msra.mxu0 0.0
        %7504 = vmatprep.subr.mxu0 0.0
        %7505 = vmatpush2.msra.mxu0 0.0
        %7506 = vmatprep.subr.mxu0 0.0
        %7507 = vmatpush2.msra.mxu0 0.0
        %7508 = vmatprep.subr.mxu0 0.0
        %7509 = vmatpush2.msra.mxu0 0.0
        %7510 = vmatprep.subr.mxu0 0.0
        %7511 = vmatpush2.msra.mxu0 0.0
        %7512 = vmatprep.subr.mxu0 0.0
        %7513 = vmatpush2.msra.mxu0 0.0
        %7514 = vmatprep.subr.mxu0 0.0
        %7515 = vmatpush2.msra.mxu0 0.0
        %7516 = vmatprep.subr.mxu0 0.0
        %7517 = vmatpush2.msra.mxu0 0.0
        %7518 = vmatprep.mubr.f32.mxu0 0.0
        %7519 = vmatmul.mubr.f32.gmra.mxu0 %v7365
        %v7520 = vpop.f32.mrf.mxu0
        %v7521 = vadd.f32 %v7437, %v7520
        %v7522 = vpop.f32.mrf.mxu0
        %v7523 = vadd.f32 %v7441, %v7522
        %7524 = vdwg.mxu0
        %7525 = vmatprep.subr.mxu0 %v7430
        %7526 = vmatpush1.msra.mxu0 %v7429
        %7527 = vmatprep.subr.mxu0 %v7426
        %7528 = vmatpush1.msra.mxu0 %v7425
        %7529 = vmatprep.subr.mxu0 %v7422
        %7530 = vmatpush1.msra.mxu0 %v7421
        %7531 = vmatprep.subr.mxu0 %v7418
        %7532 = vmatpush1.msra.mxu0 %v7417
        %7533 = vmatprep.subr.mxu0 %v7414
        %7534 = vmatpush1.msra.mxu0 %v7413
        %7535 = vmatprep.subr.mxu0 %v7410
        %7536 = vmatpush1.msra.mxu0 %v7409
        %7537 = vmatprep.subr.mxu0 %v7406
        %7538 = vmatpush1.msra.mxu0 %v7405
        %7539 = vmatprep.subr.mxu0 %v7402
        %7540 = vmatpush1.msra.mxu0 %v7401
        %7541 = vmatprep.subr.mxu0 %v7398
        %7542 = vmatpush1.msra.mxu0 %v7397
        %7543 = vmatprep.subr.mxu0 %v7394
        %7544 = vmatpush1.msra.mxu0 %v7393
        %7545 = vmatprep.subr.mxu0 %v7390
        %7546 = vmatpush1.msra.mxu0 %v7389
        %7547 = vmatprep.subr.mxu0 %v7386
        %7548 = vmatpush1.msra.mxu0 %v7385
        %7549 = vmatprep.subr.mxu0 %v7382
        %7550 = vmatpush1.msra.mxu0 %v7381
        %7551 = vmatprep.subr.mxu0 %v7378
        %7552 = vmatpush1.msra.mxu0 %v7377
        %7553 = vmatprep.subr.mxu0 %v7374
        %7554 = vmatpush1.msra.mxu0 %v7373
        %7555 = vmatprep.subr.mxu0 %v7370
        %7556 = vmatpush1.msra.mxu0 %v7369
        %7557 = vmatprep.subr.mxu0 0.0
        %7558 = vmatpush2.msra.mxu0 0.0
        %7559 = vmatprep.subr.mxu0 0.0
        %7560 = vmatpush2.msra.mxu0 0.0
        %7561 = vmatprep.subr.mxu0 0.0
        %7562 = vmatpush2.msra.mxu0 0.0
        %7563 = vmatprep.subr.mxu0 0.0
        %7564 = vmatpush2.msra.mxu0 0.0
        %7565 = vmatprep.subr.mxu0 0.0
        %7566 = vmatpush2.msra.mxu0 0.0
        %7567 = vmatprep.subr.mxu0 0.0
        %7568 = vmatpush2.msra.mxu0 0.0
        %7569 = vmatprep.subr.mxu0 0.0
        %7570 = vmatpush2.msra.mxu0 0.0
        %7571 = vmatprep.subr.mxu0 0.0
        %7572 = vmatpush2.msra.mxu0 0.0
        %7573 = vmatprep.subr.mxu0 0.0
        %7574 = vmatpush2.msra.mxu0 0.0
        %7575 = vmatprep.subr.mxu0 0.0
        %7576 = vmatpush2.msra.mxu0 0.0
        %7577 = vmatprep.subr.mxu0 0.0
        %7578 = vmatpush2.msra.mxu0 0.0
        %7579 = vmatprep.subr.mxu0 0.0
        %7580 = vmatpush2.msra.mxu0 0.0
        %7581 = vmatprep.subr.mxu0 0.0
        %7582 = vmatpush2.msra.mxu0 0.0
        %7583 = vmatprep.subr.mxu0 0.0
        %7584 = vmatpush2.msra.mxu0 0.0
        %7585 = vmatprep.subr.mxu0 0.0
        %7586 = vmatpush2.msra.mxu0 0.0
        %7587 = vmatprep.subr.mxu0 0.0
        %7588 = vmatpush2.msra.mxu0 0.0
        %7589 = vmatprep.mubr.f32.mxu0 0.0
        %7590 = vmatmul.mubr.f32.gmra.mxu0 %v7365
        %v7591 = vpop.f32.mrf.mxu0
        %v7592 = vadd.f32 %v7445, %v7591
        %v7593 = vpop.f32.mrf.mxu0
        %v7594 = vadd.f32 %v7449, %v7593
        %7595 = vdwg.mxu0
        %v7596 = vmax.f32 %v7521, 0.0
        %v7597 = vmax.f32 %v7523, 0.0
        %v7598 = vmax.f32 %v7592, 0.0
        %v7599 = vmax.f32 %v7594, 0.0
        %s7600 = scalar_lea.vmem [#allocation23], 1536
        %v7601 = vld [vmem:[%s7600] sm:$0xff]
        %v7602 = vld [vmem:[%s7600 + $0x8] sm:$0xff]
        %v7603 = vld [vmem:[%s7600 + $0x10] sm:$0xff]
        %v7604 = vld [vmem:[%s7600 + $0x18] sm:$0xff]
        %v7605 = vld [vmem:[%s7600 + $0x20] sm:$0xff]
        %v7606 = vld [vmem:[%s7600 + $0x28] sm:$0xff]
        %v7607 = vld [vmem:[%s7600 + $0x30] sm:$0xff]
        %v7608 = vld [vmem:[%s7600 + $0x38] sm:$0xff]
        %v7609 = vld [vmem:[%s7600 + $0x40] sm:$0xff]
        %v7610 = vld [vmem:[%s7600 + $0x48] sm:$0xff]
        %v7611 = vld [vmem:[%s7600 + $0x50] sm:$0xff]
        %v7612 = vld [vmem:[%s7600 + $0x58] sm:$0xff]
        %v7613 = vld [vmem:[%s7600 + $0x60] sm:$0xff]
        %v7614 = vld [vmem:[%s7600 + $0x68] sm:$0xff]
        %v7615 = vld [vmem:[%s7600 + $0x70] sm:$0xff]
        %v7616 = vld [vmem:[%s7600 + $0x78] sm:$0xff]
        %v7617 = vld [vmem:[%s7600 + $0x80] sm:$0xff]
        %v7618 = vld [vmem:[%s7600 + $0x88] sm:$0xff]
        %v7619 = vld [vmem:[%s7600 + $0x90] sm:$0xff]
        %v7620 = vld [vmem:[%s7600 + $0x98] sm:$0xff]
        %v7621 = vld [vmem:[%s7600 + $0xa0] sm:$0xff]
        %v7622 = vld [vmem:[%s7600 + $0xa8] sm:$0xff]
        %v7623 = vld [vmem:[%s7600 + $0xb0] sm:$0xff]
        %v7624 = vld [vmem:[%s7600 + $0xb8] sm:$0xff]
        %v7625 = vld [vmem:[%s7600 + $0xc0] sm:$0xff]
        %v7626 = vld [vmem:[%s7600 + $0xc8] sm:$0xff]
        %v7627 = vld [vmem:[%s7600 + $0xd0] sm:$0xff]
        %v7628 = vld [vmem:[%s7600 + $0xd8] sm:$0xff]
        %v7629 = vld [vmem:[%s7600 + $0xe0] sm:$0xff]
        %v7630 = vld [vmem:[%s7600 + $0xe8] sm:$0xff]
        %v7631 = vld [vmem:[%s7600 + $0xf0] sm:$0xff]
        %v7632 = vld [vmem:[%s7600 + $0xf8] sm:$0xff]
        %v7633 = vld [vmem:[%s7600 + $0x100] sm:$0xff]
        %v7634 = vld [vmem:[%s7600 + $0x108] sm:$0xff]
        %v7635 = vld [vmem:[%s7600 + $0x110] sm:$0xff]
        %v7636 = vld [vmem:[%s7600 + $0x118] sm:$0xff]
        %v7637 = vld [vmem:[%s7600 + $0x120] sm:$0xff]
        %v7638 = vld [vmem:[%s7600 + $0x128] sm:$0xff]
        %v7639 = vld [vmem:[%s7600 + $0x130] sm:$0xff]
        %v7640 = vld [vmem:[%s7600 + $0x138] sm:$0xff]
        %v7641 = vld [vmem:[%s7600 + $0x140] sm:$0xff]
        %v7642 = vld [vmem:[%s7600 + $0x148] sm:$0xff]
        %v7643 = vld [vmem:[%s7600 + $0x150] sm:$0xff]
        %v7644 = vld [vmem:[%s7600 + $0x158] sm:$0xff]
        %v7645 = vld [vmem:[%s7600 + $0x160] sm:$0xff]
        %v7646 = vld [vmem:[%s7600 + $0x168] sm:$0xff]
        %v7647 = vld [vmem:[%s7600 + $0x170] sm:$0xff]
        %v7648 = vld [vmem:[%s7600 + $0x178] sm:$0xff]
        %v7649 = vld [vmem:[%s7600 + $0x180] sm:$0xff]
        %v7650 = vld [vmem:[%s7600 + $0x188] sm:$0xff]
        %v7651 = vld [vmem:[%s7600 + $0x190] sm:$0xff]
        %v7652 = vld [vmem:[%s7600 + $0x198] sm:$0xff]
        %v7653 = vld [vmem:[%s7600 + $0x1a0] sm:$0xff]
        %v7654 = vld [vmem:[%s7600 + $0x1a8] sm:$0xff]
        %v7655 = vld [vmem:[%s7600 + $0x1b0] sm:$0xff]
        %v7656 = vld [vmem:[%s7600 + $0x1b8] sm:$0xff]
        %v7657 = vld [vmem:[%s7600 + $0x1c0] sm:$0xff]
        %v7658 = vld [vmem:[%s7600 + $0x1c8] sm:$0xff]
        %v7659 = vld [vmem:[%s7600 + $0x1d0] sm:$0xff]
        %v7660 = vld [vmem:[%s7600 + $0x1d8] sm:$0xff]
        %v7661 = vld [vmem:[%s7600 + $0x1e0] sm:$0xff]
        %v7662 = vld [vmem:[%s7600 + $0x1e8] sm:$0xff]
        %v7663 = vld [vmem:[%s7600 + $0x1f0] sm:$0xff]
        %v7664 = vld [vmem:[%s7600 + $0x1f8] sm:$0xff]
        %s7665 = scalar_lea.vmem %s15, 3
        %v7666 = vld [vmem:[%s7665] sm:$0x1]
        %v7668 = vlaneseq
        %v7669 = vshrl.u32 %v7668, 7
        %v7670 = vsub.s32 0, %v7669
        %v7671 = vrot.slane %v7666, %v7670
        %7673 = vmatprep.subr.mxu0 0.0
        %7674 = vmatpush1.msra.mxu0 %v7616
        %7675 = vmatprep.subr.mxu0 0.0
        %7676 = vmatpush1.msra.mxu0 %v7615
        %7677 = vmatprep.subr.mxu0 0.0
        %7678 = vmatpush1.msra.mxu0 %v7614
        %7679 = vmatprep.subr.mxu0 0.0
        %7680 = vmatpush1.msra.mxu0 %v7613
        %7681 = vmatprep.subr.mxu0 0.0
        %7682 = vmatpush1.msra.mxu0 %v7612
        %7683 = vmatprep.subr.mxu0 0.0
        %7684 = vmatpush1.msra.mxu0 %v7611
        %7685 = vmatprep.subr.mxu0 0.0
        %7686 = vmatpush1.msra.mxu0 %v7610
        %7687 = vmatprep.subr.mxu0 0.0
        %7688 = vmatpush1.msra.mxu0 %v7609
        %7689 = vmatprep.subr.mxu0 0.0
        %7690 = vmatpush1.msra.mxu0 %v7608
        %7691 = vmatprep.subr.mxu0 0.0
        %7692 = vmatpush1.msra.mxu0 %v7607
        %7693 = vmatprep.subr.mxu0 0.0
        %7694 = vmatpush1.msra.mxu0 %v7606
        %7695 = vmatprep.subr.mxu0 0.0
        %7696 = vmatpush1.msra.mxu0 %v7605
        %7697 = vmatprep.subr.mxu0 0.0
        %7698 = vmatpush1.msra.mxu0 %v7604
        %7699 = vmatprep.subr.mxu0 0.0
        %7700 = vmatpush1.msra.mxu0 %v7603
        %7701 = vmatprep.subr.mxu0 0.0
        %7702 = vmatpush1.msra.mxu0 %v7602
        %7703 = vmatprep.subr.mxu0 0.0
        %7704 = vmatpush1.msra.mxu0 %v7601
        %7705 = vmatprep.subr.mxu0 0.0
        %7706 = vmatpush2.msra.mxu0 %v7632
        %7707 = vmatprep.subr.mxu0 0.0
        %7708 = vmatpush2.msra.mxu0 %v7631
        %7709 = vmatprep.subr.mxu0 0.0
        %7710 = vmatpush2.msra.mxu0 %v7630
        %7711 = vmatprep.subr.mxu0 0.0
        %7712 = vmatpush2.msra.mxu0 %v7629
        %7713 = vmatprep.subr.mxu0 0.0
        %7714 = vmatpush2.msra.mxu0 %v7628
        %7715 = vmatprep.subr.mxu0 0.0
        %7716 = vmatpush2.msra.mxu0 %v7627
        %7717 = vmatprep.subr.mxu0 0.0
        %7718 = vmatpush2.msra.mxu0 %v7626
        %7719 = vmatprep.subr.mxu0 0.0
        %7720 = vmatpush2.msra.mxu0 %v7625
        %7721 = vmatprep.subr.mxu0 0.0
        %7722 = vmatpush2.msra.mxu0 %v7624
        %7723 = vmatprep.subr.mxu0 0.0
        %7724 = vmatpush2.msra.mxu0 %v7623
        %7725 = vmatprep.subr.mxu0 0.0
        %7726 = vmatpush2.msra.mxu0 %v7622
        %7727 = vmatprep.subr.mxu0 0.0
        %7728 = vmatpush2.msra.mxu0 %v7621
        %7729 = vmatprep.subr.mxu0 0.0
        %7730 = vmatpush2.msra.mxu0 %v7620
        %7731 = vmatprep.subr.mxu0 0.0
        %7732 = vmatpush2.msra.mxu0 %v7619
        %7733 = vmatprep.subr.mxu0 0.0
        %7734 = vmatpush2.msra.mxu0 %v7618
        %7735 = vmatprep.subr.mxu0 0.0
        %7736 = vmatpush2.msra.mxu0 %v7617
        %7737 = vmatprep.mubr.f32.mxu0 %v7597
        %7738 = vmatmul.mubr.f32.gmra.mxu0 %v7596
        %v7739 = vpop.f32.mrf.mxu0
        %v7740 = vadd.f32 %v7671, %v7739
        %v7741 = vpop.f32.mrf.mxu0
        %7742 = vdwg.mxu0
        %7743 = vmatprep.subr.mxu0 0.0
        %7744 = vmatpush1.msra.mxu0 %v7648
        %7745 = vmatprep.subr.mxu0 0.0
        %7746 = vmatpush1.msra.mxu0 %v7647
        %7747 = vmatprep.subr.mxu0 0.0
        %7748 = vmatpush1.msra.mxu0 %v7646
        %7749 = vmatprep.subr.mxu0 0.0
        %7750 = vmatpush1.msra.mxu0 %v7645
        %7751 = vmatprep.subr.mxu0 0.0
        %7752 = vmatpush1.msra.mxu0 %v7644
        %7753 = vmatprep.subr.mxu0 0.0
        %7754 = vmatpush1.msra.mxu0 %v7643
        %7755 = vmatprep.subr.mxu0 0.0
        %7756 = vmatpush1.msra.mxu0 %v7642
        %7757 = vmatprep.subr.mxu0 0.0
        %7758 = vmatpush1.msra.mxu0 %v7641
        %7759 = vmatprep.subr.mxu0 0.0
        %7760 = vmatpush1.msra.mxu0 %v7640
        %7761 = vmatprep.subr.mxu0 0.0
        %7762 = vmatpush1.msra.mxu0 %v7639
        %7763 = vmatprep.subr.mxu0 0.0
        %7764 = vmatpush1.msra.mxu0 %v7638
        %7765 = vmatprep.subr.mxu0 0.0
        %7766 = vmatpush1.msra.mxu0 %v7637
        %7767 = vmatprep.subr.mxu0 0.0
        %7768 = vmatpush1.msra.mxu0 %v7636
        %7769 = vmatprep.subr.mxu0 0.0
        %7770 = vmatpush1.msra.mxu0 %v7635
        %7771 = vmatprep.subr.mxu0 0.0
        %7772 = vmatpush1.msra.mxu0 %v7634
        %7773 = vmatprep.subr.mxu0 0.0
        %7774 = vmatpush1.msra.mxu0 %v7633
        %7775 = vmatprep.subr.mxu0 0.0
        %7776 = vmatpush2.msra.mxu0 %v7664
        %7777 = vmatprep.subr.mxu0 0.0
        %7778 = vmatpush2.msra.mxu0 %v7663
        %7779 = vmatprep.subr.mxu0 0.0
        %7780 = vmatpush2.msra.mxu0 %v7662
        %7781 = vmatprep.subr.mxu0 0.0
        %7782 = vmatpush2.msra.mxu0 %v7661
        %7783 = vmatprep.subr.mxu0 0.0
        %7784 = vmatpush2.msra.mxu0 %v7660
        %7785 = vmatprep.subr.mxu0 0.0
        %7786 = vmatpush2.msra.mxu0 %v7659
        %7787 = vmatprep.subr.mxu0 0.0
        %7788 = vmatpush2.msra.mxu0 %v7658
        %7789 = vmatprep.subr.mxu0 0.0
        %7790 = vmatpush2.msra.mxu0 %v7657
        %7791 = vmatprep.subr.mxu0 0.0
        %7792 = vmatpush2.msra.mxu0 %v7656
        %7793 = vmatprep.subr.mxu0 0.0
        %7794 = vmatpush2.msra.mxu0 %v7655
        %7795 = vmatprep.subr.mxu0 0.0
        %7796 = vmatpush2.msra.mxu0 %v7654
        %7797 = vmatprep.subr.mxu0 0.0
        %7798 = vmatpush2.msra.mxu0 %v7653
        %7799 = vmatprep.subr.mxu0 0.0
        %7800 = vmatpush2.msra.mxu0 %v7652
        %7801 = vmatprep.subr.mxu0 0.0
        %7802 = vmatpush2.msra.mxu0 %v7651
        %7803 = vmatprep.subr.mxu0 0.0
        %7804 = vmatpush2.msra.mxu0 %v7650
        %7805 = vmatprep.subr.mxu0 0.0
        %7806 = vmatpush2.msra.mxu0 %v7649
        %7807 = vmatprep.mubr.f32.mxu0 %v7599
        %7808 = vmatmul.mubr.f32.gmra.mxu0 %v7598
        %v7809 = vpop.f32.mrf.mxu0
        %v7810 = vadd.f32 %v7740, %v7809
        %v7811 = vpop.f32.mrf.mxu0
        %7812 = vdwg.mxu0
        %v7813 = vadd.f32 %v7365, %v7810
        %s7814 = scalar_lea.vmem [#allocation25], 3
        %v7815 = vld [vmem:[%s7814] sm:$0x1]
        %s7816 = scalar_lea.vmem %s17, 3
        %v7817 = vld [vmem:[%s7816] sm:$0x1]
        %v7818 = vsel %vm5432, %v7813, 0.0
        %7819 = vadd.xlane.f32.xlu0 %v7818
        %v7820 = vpop.xlane.xlu0 %7819
        %v7821 = vmul.f32 %v7820, %v2508
        %v7822 = vsub.f32 %v7813, %v7821
        %v7823 = vmul.f32 %v7822, %v7822
        %v7824 = vsel %vm5432, %v7823, 0.0
        %7825 = vadd.xlane.f32.xlu0 %v7824
        %v7826 = vpop.xlane.xlu0 %7825
        %v7827 = vmul.f32 %v7826, %v2508
        %v7828 = vadd.f32 %v7827, 1e-05
        %v7829 = vrsqrt.pop %v7828
        %v7830 = vmul.f32 %v7822, %v7829
        %v7832 = vlaneseq
        %v7833 = vshrl.u32 %v7832, 7
        %v7834 = vsub.s32 0, %v7833
        %v7835 = vrot.slane %v7815, %v7834
        %v7837 = vmul.f32 %v7830, %v7835
        %v7839 = vlaneseq
        %v7840 = vshrl.u32 %v7839, 7
        %v7841 = vsub.s32 0, %v7840
        %v7842 = vrot.slane %v7817, %v7841
        %v7844 = vadd.f32 %v7837, %v7842
        %v7845 = vsel %vm5432, %v7844, 0.0
        %v7846 = vrot.slane %v7845, 4
        %v7847 = vadd.f32 %v7845, %v7846
        %v7848 = vrot.slane %v7847, 2
        %v7849 = vadd.f32 %v7847, %v7848
        %v7850 = vrot.slane %v7849, 1
        %v7851 = vadd.f32 %v7849, %v7850
        %v7852 = vrcp.pop 5.0
        %v7853 = vmul.f32 %v7851, %v7852
        %7854 = vst [vmem:[%s1015] sm:$0x1] %v7853
        %v7855 = vld [vmem:[#allocation26] sm:$0xff]
        %v7856 = vld [vmem:[#allocation26 + $0x8] sm:$0xff]
        %v7857 = vld [vmem:[#allocation26 + $0x10] sm:$0xff]
        %v7858 = vld [vmem:[#allocation26 + $0x18] sm:$0xff]
        %v7859 = vld [vmem:[#allocation26 + $0x20] sm:$0xff]
        %v7860 = vld [vmem:[#allocation26 + $0x28] sm:$0xff]
        %v7861 = vld [vmem:[#allocation26 + $0x30] sm:$0xff]
        %v7862 = vld [vmem:[#allocation26 + $0x38] sm:$0xff]
        %v7863 = vld [vmem:[#allocation26 + $0x40] sm:$0xff]
        %v7864 = vld [vmem:[#allocation26 + $0x48] sm:$0xff]
        %v7865 = vld [vmem:[#allocation26 + $0x50] sm:$0xff]
        %v7866 = vld [vmem:[#allocation26 + $0x58] sm:$0xff]
        %v7867 = vld [vmem:[#allocation26 + $0x60] sm:$0xff]
        %v7868 = vld [vmem:[#allocation26 + $0x68] sm:$0xff]
        %v7869 = vld [vmem:[#allocation26 + $0x70] sm:$0xff]
        %v7870 = vld [vmem:[#allocation26 + $0x78] sm:$0xff]
        %v7871 = vld [vmem:[#allocation26 + $0x80] sm:$0xff]
        %v7872 = vld [vmem:[#allocation26 + $0x88] sm:$0xff]
        %v7873 = vld [vmem:[#allocation26 + $0x90] sm:$0xff]
        %v7874 = vld [vmem:[#allocation26 + $0x98] sm:$0xff]
        %v7875 = vld [vmem:[#allocation26 + $0xa0] sm:$0xff]
        %v7876 = vld [vmem:[#allocation26 + $0xa8] sm:$0xff]
        %v7877 = vld [vmem:[#allocation26 + $0xb0] sm:$0xff]
        %v7878 = vld [vmem:[#allocation26 + $0xb8] sm:$0xff]
        %v7879 = vld [vmem:[#allocation26 + $0xc0] sm:$0xff]
        %v7880 = vld [vmem:[#allocation26 + $0xc8] sm:$0xff]
        %v7881 = vld [vmem:[#allocation26 + $0xd0] sm:$0xff]
        %v7882 = vld [vmem:[#allocation26 + $0xd8] sm:$0xff]
        %v7883 = vld [vmem:[#allocation26 + $0xe0] sm:$0xff]
        %v7884 = vld [vmem:[#allocation26 + $0xe8] sm:$0xff]
        %v7885 = vld [vmem:[#allocation26 + $0xf0] sm:$0xff]
        %v7886 = vld [vmem:[#allocation26 + $0xf8] sm:$0xff]
        %v7887 = vld [vmem:[#allocation26 + $0x100] sm:$0xff]
        %v7888 = vld [vmem:[#allocation26 + $0x108] sm:$0xff]
        %v7889 = vld [vmem:[#allocation26 + $0x110] sm:$0xff]
        %v7890 = vld [vmem:[#allocation26 + $0x118] sm:$0xff]
        %v7891 = vld [vmem:[#allocation26 + $0x120] sm:$0xff]
        %v7892 = vld [vmem:[#allocation26 + $0x128] sm:$0xff]
        %v7893 = vld [vmem:[#allocation26 + $0x130] sm:$0xff]
        %v7894 = vld [vmem:[#allocation26 + $0x138] sm:$0xff]
        %v7895 = vld [vmem:[#allocation26 + $0x140] sm:$0xff]
        %v7896 = vld [vmem:[#allocation26 + $0x148] sm:$0xff]
        %v7897 = vld [vmem:[#allocation26 + $0x150] sm:$0xff]
        %v7898 = vld [vmem:[#allocation26 + $0x158] sm:$0xff]
        %v7899 = vld [vmem:[#allocation26 + $0x160] sm:$0xff]
        %v7900 = vld [vmem:[#allocation26 + $0x168] sm:$0xff]
        %v7901 = vld [vmem:[#allocation26 + $0x170] sm:$0xff]
        %v7902 = vld [vmem:[#allocation26 + $0x178] sm:$0xff]
        %v7903 = vld [vmem:[#allocation26 + $0x180] sm:$0xff]
        %v7904 = vld [vmem:[#allocation26 + $0x188] sm:$0xff]
        %v7905 = vld [vmem:[#allocation26 + $0x190] sm:$0xff]
        %v7906 = vld [vmem:[#allocation26 + $0x198] sm:$0xff]
        %v7907 = vld [vmem:[#allocation26 + $0x1a0] sm:$0xff]
        %v7908 = vld [vmem:[#allocation26 + $0x1a8] sm:$0xff]
        %v7909 = vld [vmem:[#allocation26 + $0x1b0] sm:$0xff]
        %v7910 = vld [vmem:[#allocation26 + $0x1b8] sm:$0xff]
        %v7911 = vld [vmem:[#allocation26 + $0x1c0] sm:$0xff]
        %v7912 = vld [vmem:[#allocation26 + $0x1c8] sm:$0xff]
        %v7913 = vld [vmem:[#allocation26 + $0x1d0] sm:$0xff]
        %v7914 = vld [vmem:[#allocation26 + $0x1d8] sm:$0xff]
        %v7915 = vld [vmem:[#allocation26 + $0x1e0] sm:$0xff]
        %v7916 = vld [vmem:[#allocation26 + $0x1e8] sm:$0xff]
        %v7917 = vld [vmem:[#allocation26 + $0x1f0] sm:$0xff]
        %v7918 = vld [vmem:[#allocation26 + $0x1f8] sm:$0xff]
        %v7919 = vld [vmem:[#allocation26 + $0x200] sm:$0xff]
        %v7920 = vld [vmem:[#allocation26 + $0x208] sm:$0xff]
        %v7921 = vld [vmem:[#allocation26 + $0x210] sm:$0xff]
        %v7922 = vld [vmem:[#allocation26 + $0x218] sm:$0xff]
        %v7923 = vld [vmem:[#allocation26 + $0x220] sm:$0xff]
        %v7924 = vld [vmem:[#allocation26 + $0x228] sm:$0xff]
        %v7925 = vld [vmem:[#allocation26 + $0x230] sm:$0xff]
        %v7926 = vld [vmem:[#allocation26 + $0x238] sm:$0xff]
        %v7927 = vld [vmem:[#allocation26 + $0x240] sm:$0xff]
        %v7928 = vld [vmem:[#allocation26 + $0x248] sm:$0xff]
        %v7929 = vld [vmem:[#allocation26 + $0x250] sm:$0xff]
        %v7930 = vld [vmem:[#allocation26 + $0x258] sm:$0xff]
        %v7931 = vld [vmem:[#allocation26 + $0x260] sm:$0xff]
        %v7932 = vld [vmem:[#allocation26 + $0x268] sm:$0xff]
        %v7933 = vld [vmem:[#allocation26 + $0x270] sm:$0xff]
        %v7934 = vld [vmem:[#allocation26 + $0x278] sm:$0xff]
        %v7935 = vld [vmem:[#allocation26 + $0x280] sm:$0xff]
        %v7936 = vld [vmem:[#allocation26 + $0x288] sm:$0xff]
        %v7937 = vld [vmem:[#allocation26 + $0x290] sm:$0xff]
        %v7938 = vld [vmem:[#allocation26 + $0x298] sm:$0xff]
        %v7939 = vld [vmem:[#allocation26 + $0x2a0] sm:$0xff]
        %v7940 = vld [vmem:[#allocation26 + $0x2a8] sm:$0xff]
        %v7941 = vld [vmem:[#allocation26 + $0x2b0] sm:$0xff]
        %v7942 = vld [vmem:[#allocation26 + $0x2b8] sm:$0xff]
        %v7943 = vld [vmem:[#allocation26 + $0x2c0] sm:$0xff]
        %v7944 = vld [vmem:[#allocation26 + $0x2c8] sm:$0xff]
        %v7945 = vld [vmem:[#allocation26 + $0x2d0] sm:$0xff]
        %v7946 = vld [vmem:[#allocation26 + $0x2d8] sm:$0xff]
        %v7947 = vld [vmem:[#allocation26 + $0x2e0] sm:$0xff]
        %v7948 = vld [vmem:[#allocation26 + $0x2e8] sm:$0xff]
        %v7949 = vld [vmem:[#allocation26 + $0x2f0] sm:$0xff]
        %v7950 = vld [vmem:[#allocation26 + $0x2f8] sm:$0xff]
        %v7951 = vld [vmem:[#allocation26 + $0x300] sm:$0xff]
        %v7952 = vld [vmem:[#allocation26 + $0x308] sm:$0xff]
        %v7953 = vld [vmem:[#allocation26 + $0x310] sm:$0xff]
        %v7954 = vld [vmem:[#allocation26 + $0x318] sm:$0xff]
        %v7955 = vld [vmem:[#allocation26 + $0x320] sm:$0xff]
        %v7956 = vld [vmem:[#allocation26 + $0x328] sm:$0xff]
        %v7957 = vld [vmem:[#allocation26 + $0x330] sm:$0xff]
        %v7958 = vld [vmem:[#allocation26 + $0x338] sm:$0xff]
        %v7959 = vld [vmem:[#allocation26 + $0x340] sm:$0xff]
        %v7960 = vld [vmem:[#allocation26 + $0x348] sm:$0xff]
        %v7961 = vld [vmem:[#allocation26 + $0x350] sm:$0xff]
        %v7962 = vld [vmem:[#allocation26 + $0x358] sm:$0xff]
        %v7963 = vld [vmem:[#allocation26 + $0x360] sm:$0xff]
        %v7964 = vld [vmem:[#allocation26 + $0x368] sm:$0xff]
        %v7965 = vld [vmem:[#allocation26 + $0x370] sm:$0xff]
        %v7966 = vld [vmem:[#allocation26 + $0x378] sm:$0xff]
        %v7967 = vld [vmem:[%s19] sm:$0xff]
        %v7969 = vlaneseq
        %v7970 = vshrl.u32 %v7969, 7
        %v7971 = vsub.s32 0, %v7970
        %v7972 = vrot.slane %v7967, %v7971
        %v7973 = vlaneseq
        %v7974 = vshrl.u32 %v7973, 7
        %v7975 = vsub.s32 1, %v7974
        %v7976 = vrot.slane %v7967, %v7975
        %v7977 = vlaneseq
        %v7978 = vshrl.u32 %v7977, 7
        %v7979 = vsub.s32 2, %v7978
        %v7980 = vrot.slane %v7967, %v7979
        %v7981 = vlaneseq
        %v7982 = vshrl.u32 %v7981, 7
        %v7983 = vsub.s32 3, %v7982
        %v7984 = vrot.slane %v7967, %v7983
        %v7985 = vlaneseq
        %v7986 = vshrl.u32 %v7985, 7
        %v7987 = vsub.s32 4, %v7986
        %v7988 = vrot.slane %v7967, %v7987
        %v7989 = vlaneseq
        %v7990 = vshrl.u32 %v7989, 7
        %v7991 = vsub.s32 5, %v7990
        %v7992 = vrot.slane %v7967, %v7991
        %v7993 = vlaneseq
        %v7994 = vshrl.u32 %v7993, 7
        %v7995 = vsub.s32 6, %v7994
        %v7996 = vrot.slane %v7967, %v7995
        %8004 = vmatprep.subr.mxu0 %v7961
        %8005 = vmatpush1.msra.mxu0 %v7960
        %8006 = vmatprep.subr.mxu0 %v7954
        %8007 = vmatpush1.msra.mxu0 %v7953
        %8008 = vmatprep.subr.mxu0 %v7947
        %8009 = vmatpush1.msra.mxu0 %v7946
        %8010 = vmatprep.subr.mxu0 %v7940
        %8011 = vmatpush1.msra.mxu0 %v7939
        %8012 = vmatprep.subr.mxu0 %v7933
        %8013 = vmatpush1.msra.mxu0 %v7932
        %8014 = vmatprep.subr.mxu0 %v7926
        %8015 = vmatpush1.msra.mxu0 %v7925
        %8016 = vmatprep.subr.mxu0 %v7919
        %8017 = vmatpush1.msra.mxu0 %v7918
        %8018 = vmatprep.subr.mxu0 %v7912
        %8019 = vmatpush1.msra.mxu0 %v7911
        %8020 = vmatprep.subr.mxu0 %v7905
        %8021 = vmatpush1.msra.mxu0 %v7904
        %8022 = vmatprep.subr.mxu0 %v7898
        %8023 = vmatpush1.msra.mxu0 %v7897
        %8024 = vmatprep.subr.mxu0 %v7891
        %8025 = vmatpush1.msra.mxu0 %v7890
        %8026 = vmatprep.subr.mxu0 %v7884
        %8027 = vmatpush1.msra.mxu0 %v7883
        %8028 = vmatprep.subr.mxu0 %v7877
        %8029 = vmatpush1.msra.mxu0 %v7876
        %8030 = vmatprep.subr.mxu0 %v7870
        %8031 = vmatpush1.msra.mxu0 %v7869
        %8032 = vmatprep.subr.mxu0 %v7863
        %8033 = vmatpush1.msra.mxu0 %v7862
        %8034 = vmatprep.subr.mxu0 %v7856
        %8035 = vmatpush1.msra.mxu0 %v7855
        %8036 = vmatprep.subr.mxu0 0.0
        %8037 = vmatpush2.msra.mxu0 0.0
        %8038 = vmatprep.subr.mxu0 0.0
        %8039 = vmatpush2.msra.mxu0 0.0
        %8040 = vmatprep.subr.mxu0 0.0
        %8041 = vmatpush2.msra.mxu0 0.0
        %8042 = vmatprep.subr.mxu0 0.0
        %8043 = vmatpush2.msra.mxu0 0.0
        %8044 = vmatprep.subr.mxu0 0.0
        %8045 = vmatpush2.msra.mxu0 0.0
        %8046 = vmatprep.subr.mxu0 0.0
        %8047 = vmatpush2.msra.mxu0 0.0
        %8048 = vmatprep.subr.mxu0 0.0
        %8049 = vmatpush2.msra.mxu0 0.0
        %8050 = vmatprep.subr.mxu0 0.0
        %8051 = vmatpush2.msra.mxu0 0.0
        %8052 = vmatprep.subr.mxu0 0.0
        %8053 = vmatpush2.msra.mxu0 0.0
        %8054 = vmatprep.subr.mxu0 0.0
        %8055 = vmatpush2.msra.mxu0 0.0
        %8056 = vmatprep.subr.mxu0 0.0
        %8057 = vmatpush2.msra.mxu0 0.0
        %8058 = vmatprep.subr.mxu0 0.0
        %8059 = vmatpush2.msra.mxu0 0.0
        %8060 = vmatprep.subr.mxu0 0.0
        %8061 = vmatpush2.msra.mxu0 0.0
        %8062 = vmatprep.subr.mxu0 0.0
        %8063 = vmatpush2.msra.mxu0 0.0
        %8064 = vmatprep.subr.mxu0 0.0
        %8065 = vmatpush2.msra.mxu0 0.0
        %8066 = vmatprep.subr.mxu0 0.0
        %8067 = vmatpush2.msra.mxu0 0.0
        %8068 = vmatprep.mubr.f32.mxu0 0.0
        %8069 = vmatmul.mubr.f32.gmra.mxu0 %v7853
        %v8070 = vpop.f32.mrf.mxu0
        %v8071 = vadd.f32 %v7972, %v8070
        %v8072 = vpop.f32.mrf.mxu0
        %v8073 = vadd.f32 %v7976, %v8072
        %8074 = vdwg.mxu0
        %8075 = vmatprep.subr.mxu0 %v7963
        %8076 = vmatpush1.msra.mxu0 %v7962
        %8077 = vmatprep.subr.mxu0 %v7956
        %8078 = vmatpush1.msra.mxu0 %v7955
        %8079 = vmatprep.subr.mxu0 %v7949
        %8080 = vmatpush1.msra.mxu0 %v7948
        %8081 = vmatprep.subr.mxu0 %v7942
        %8082 = vmatpush1.msra.mxu0 %v7941
        %8083 = vmatprep.subr.mxu0 %v7935
        %8084 = vmatpush1.msra.mxu0 %v7934
        %8085 = vmatprep.subr.mxu0 %v7928
        %8086 = vmatpush1.msra.mxu0 %v7927
        %8087 = vmatprep.subr.mxu0 %v7921
        %8088 = vmatpush1.msra.mxu0 %v7920
        %8089 = vmatprep.subr.mxu0 %v7914
        %8090 = vmatpush1.msra.mxu0 %v7913
        %8091 = vmatprep.subr.mxu0 %v7907
        %8092 = vmatpush1.msra.mxu0 %v7906
        %8093 = vmatprep.subr.mxu0 %v7900
        %8094 = vmatpush1.msra.mxu0 %v7899
        %8095 = vmatprep.subr.mxu0 %v7893
        %8096 = vmatpush1.msra.mxu0 %v7892
        %8097 = vmatprep.subr.mxu0 %v7886
        %8098 = vmatpush1.msra.mxu0 %v7885
        %8099 = vmatprep.subr.mxu0 %v7879
        %8100 = vmatpush1.msra.mxu0 %v7878
        %8101 = vmatprep.subr.mxu0 %v7872
        %8102 = vmatpush1.msra.mxu0 %v7871
        %8103 = vmatprep.subr.mxu0 %v7865
        %8104 = vmatpush1.msra.mxu0 %v7864
        %8105 = vmatprep.subr.mxu0 %v7858
        %8106 = vmatpush1.msra.mxu0 %v7857
        %8107 = vmatprep.subr.mxu0 0.0
        %8108 = vmatpush2.msra.mxu0 0.0
        %8109 = vmatprep.subr.mxu0 0.0
        %8110 = vmatpush2.msra.mxu0 0.0
        %8111 = vmatprep.subr.mxu0 0.0
        %8112 = vmatpush2.msra.mxu0 0.0
        %8113 = vmatprep.subr.mxu0 0.0
        %8114 = vmatpush2.msra.mxu0 0.0
        %8115 = vmatprep.subr.mxu0 0.0
        %8116 = vmatpush2.msra.mxu0 0.0
        %8117 = vmatprep.subr.mxu0 0.0
        %8118 = vmatpush2.msra.mxu0 0.0
        %8119 = vmatprep.subr.mxu0 0.0
        %8120 = vmatpush2.msra.mxu0 0.0
        %8121 = vmatprep.subr.mxu0 0.0
        %8122 = vmatpush2.msra.mxu0 0.0
        %8123 = vmatprep.subr.mxu0 0.0
        %8124 = vmatpush2.msra.mxu0 0.0
        %8125 = vmatprep.subr.mxu0 0.0
        %8126 = vmatpush2.msra.mxu0 0.0
        %8127 = vmatprep.subr.mxu0 0.0
        %8128 = vmatpush2.msra.mxu0 0.0
        %8129 = vmatprep.subr.mxu0 0.0
        %8130 = vmatpush2.msra.mxu0 0.0
        %8131 = vmatprep.subr.mxu0 0.0
        %8132 = vmatpush2.msra.mxu0 0.0
        %8133 = vmatprep.subr.mxu0 0.0
        %8134 = vmatpush2.msra.mxu0 0.0
        %8135 = vmatprep.subr.mxu0 0.0
        %8136 = vmatpush2.msra.mxu0 0.0
        %8137 = vmatprep.subr.mxu0 0.0
        %8138 = vmatpush2.msra.mxu0 0.0
        %8139 = vmatprep.mubr.f32.mxu0 0.0
        %8140 = vmatmul.mubr.f32.gmra.mxu0 %v7853
        %v8141 = vpop.f32.mrf.mxu0
        %v8142 = vadd.f32 %v7980, %v8141
        %v8143 = vpop.f32.mrf.mxu0
        %v8144 = vadd.f32 %v7984, %v8143
        %8145 = vdwg.mxu0
        %8146 = vmatprep.subr.mxu0 %v7965
        %8147 = vmatpush1.msra.mxu0 %v7964
        %8148 = vmatprep.subr.mxu0 %v7958
        %8149 = vmatpush1.msra.mxu0 %v7957
        %8150 = vmatprep.subr.mxu0 %v7951
        %8151 = vmatpush1.msra.mxu0 %v7950
        %8152 = vmatprep.subr.mxu0 %v7944
        %8153 = vmatpush1.msra.mxu0 %v7943
        %8154 = vmatprep.subr.mxu0 %v7937
        %8155 = vmatpush1.msra.mxu0 %v7936
        %8156 = vmatprep.subr.mxu0 %v7930
        %8157 = vmatpush1.msra.mxu0 %v7929
        %8158 = vmatprep.subr.mxu0 %v7923
        %8159 = vmatpush1.msra.mxu0 %v7922
        %8160 = vmatprep.subr.mxu0 %v7916
        %8161 = vmatpush1.msra.mxu0 %v7915
        %8162 = vmatprep.subr.mxu0 %v7909
        %8163 = vmatpush1.msra.mxu0 %v7908
        %8164 = vmatprep.subr.mxu0 %v7902
        %8165 = vmatpush1.msra.mxu0 %v7901
        %8166 = vmatprep.subr.mxu0 %v7895
        %8167 = vmatpush1.msra.mxu0 %v7894
        %8168 = vmatprep.subr.mxu0 %v7888
        %8169 = vmatpush1.msra.mxu0 %v7887
        %8170 = vmatprep.subr.mxu0 %v7881
        %8171 = vmatpush1.msra.mxu0 %v7880
        %8172 = vmatprep.subr.mxu0 %v7874
        %8173 = vmatpush1.msra.mxu0 %v7873
        %8174 = vmatprep.subr.mxu0 %v7867
        %8175 = vmatpush1.msra.mxu0 %v7866
        %8176 = vmatprep.subr.mxu0 %v7860
        %8177 = vmatpush1.msra.mxu0 %v7859
        %8178 = vmatprep.subr.mxu0 0.0
        %8179 = vmatpush2.msra.mxu0 0.0
        %8180 = vmatprep.subr.mxu0 0.0
        %8181 = vmatpush2.msra.mxu0 0.0
        %8182 = vmatprep.subr.mxu0 0.0
        %8183 = vmatpush2.msra.mxu0 0.0
        %8184 = vmatprep.subr.mxu0 0.0
        %8185 = vmatpush2.msra.mxu0 0.0
        %8186 = vmatprep.subr.mxu0 0.0
        %8187 = vmatpush2.msra.mxu0 0.0
        %8188 = vmatprep.subr.mxu0 0.0
        %8189 = vmatpush2.msra.mxu0 0.0
        %8190 = vmatprep.subr.mxu0 0.0
        %8191 = vmatpush2.msra.mxu0 0.0
        %8192 = vmatprep.subr.mxu0 0.0
        %8193 = vmatpush2.msra.mxu0 0.0
        %8194 = vmatprep.subr.mxu0 0.0
        %8195 = vmatpush2.msra.mxu0 0.0
        %8196 = vmatprep.subr.mxu0 0.0
        %8197 = vmatpush2.msra.mxu0 0.0
        %8198 = vmatprep.subr.mxu0 0.0
        %8199 = vmatpush2.msra.mxu0 0.0
        %8200 = vmatprep.subr.mxu0 0.0
        %8201 = vmatpush2.msra.mxu0 0.0
        %8202 = vmatprep.subr.mxu0 0.0
        %8203 = vmatpush2.msra.mxu0 0.0
        %8204 = vmatprep.subr.mxu0 0.0
        %8205 = vmatpush2.msra.mxu0 0.0
        %8206 = vmatprep.subr.mxu0 0.0
        %8207 = vmatpush2.msra.mxu0 0.0
        %8208 = vmatprep.subr.mxu0 0.0
        %8209 = vmatpush2.msra.mxu0 0.0
        %8210 = vmatprep.mubr.f32.mxu0 0.0
        %8211 = vmatmul.mubr.f32.gmra.mxu0 %v7853
        %v8212 = vpop.f32.mrf.mxu0
        %v8213 = vadd.f32 %v7988, %v8212
        %v8214 = vpop.f32.mrf.mxu0
        %v8215 = vadd.f32 %v7992, %v8214
        %8216 = vdwg.mxu0
        %8217 = vmatprep.subr.mxu0 0.0
        %8218 = vmatpush1.msra.mxu0 %v7966
        %8219 = vmatprep.subr.mxu0 0.0
        %8220 = vmatpush1.msra.mxu0 %v7959
        %8221 = vmatprep.subr.mxu0 0.0
        %8222 = vmatpush1.msra.mxu0 %v7952
        %8223 = vmatprep.subr.mxu0 0.0
        %8224 = vmatpush1.msra.mxu0 %v7945
        %8225 = vmatprep.subr.mxu0 0.0
        %8226 = vmatpush1.msra.mxu0 %v7938
        %8227 = vmatprep.subr.mxu0 0.0
        %8228 = vmatpush1.msra.mxu0 %v7931
        %8229 = vmatprep.subr.mxu0 0.0
        %8230 = vmatpush1.msra.mxu0 %v7924
        %8231 = vmatprep.subr.mxu0 0.0
        %8232 = vmatpush1.msra.mxu0 %v7917
        %8233 = vmatprep.subr.mxu0 0.0
        %8234 = vmatpush1.msra.mxu0 %v7910
        %8235 = vmatprep.subr.mxu0 0.0
        %8236 = vmatpush1.msra.mxu0 %v7903
        %8237 = vmatprep.subr.mxu0 0.0
        %8238 = vmatpush1.msra.mxu0 %v7896
        %8239 = vmatprep.subr.mxu0 0.0
        %8240 = vmatpush1.msra.mxu0 %v7889
        %8241 = vmatprep.subr.mxu0 0.0
        %8242 = vmatpush1.msra.mxu0 %v7882
        %8243 = vmatprep.subr.mxu0 0.0
        %8244 = vmatpush1.msra.mxu0 %v7875
        %8245 = vmatprep.subr.mxu0 0.0
        %8246 = vmatpush1.msra.mxu0 %v7868
        %8247 = vmatprep.subr.mxu0 0.0
        %8248 = vmatpush1.msra.mxu0 %v7861
        %8249 = vmatprep.subr.mxu0 0.0
        %8250 = vmatpush2.msra.mxu0 0.0
        %8251 = vmatprep.subr.mxu0 0.0
        %8252 = vmatpush2.msra.mxu0 0.0
        %8253 = vmatprep.subr.mxu0 0.0
        %8254 = vmatpush2.msra.mxu0 0.0
        %8255 = vmatprep.subr.mxu0 0.0
        %8256 = vmatpush2.msra.mxu0 0.0
        %8257 = vmatprep.subr.mxu0 0.0
        %8258 = vmatpush2.msra.mxu0 0.0
        %8259 = vmatprep.subr.mxu0 0.0
        %8260 = vmatpush2.msra.mxu0 0.0
        %8261 = vmatprep.subr.mxu0 0.0
        %8262 = vmatpush2.msra.mxu0 0.0
        %8263 = vmatprep.subr.mxu0 0.0
        %8264 = vmatpush2.msra.mxu0 0.0
        %8265 = vmatprep.subr.mxu0 0.0
        %8266 = vmatpush2.msra.mxu0 0.0
        %8267 = vmatprep.subr.mxu0 0.0
        %8268 = vmatpush2.msra.mxu0 0.0
        %8269 = vmatprep.subr.mxu0 0.0
        %8270 = vmatpush2.msra.mxu0 0.0
        %8271 = vmatprep.subr.mxu0 0.0
        %8272 = vmatpush2.msra.mxu0 0.0
        %8273 = vmatprep.subr.mxu0 0.0
        %8274 = vmatpush2.msra.mxu0 0.0
        %8275 = vmatprep.subr.mxu0 0.0
        %8276 = vmatpush2.msra.mxu0 0.0
        %8277 = vmatprep.subr.mxu0 0.0
        %8278 = vmatpush2.msra.mxu0 0.0
        %8279 = vmatprep.subr.mxu0 0.0
        %8280 = vmatpush2.msra.mxu0 0.0
        %8281 = vmatprep.mubr.f32.mxu0 0.0
        %8282 = vmatmul.mubr.f32.gmra.mxu0 %v7853
        %v8283 = vpop.f32.mrf.mxu0
        %v8284 = vadd.f32 %v7996, %v8283
        %v8285 = vpop.f32.mrf.mxu0
        %8286 = vdwg.mxu0
        %v8287 = vld [vmem:[%s879] sm:$0xff]
        %v8289 = vlaneseq
        %v8290 = vshrl.u32 %v8289, 7
        %v8291 = vsub.s32 0, %v8290
        %v8292 = vrot.slane %v8287, %v8291
        %v8293 = vlaneseq
        %v8294 = vshrl.u32 %v8293, 7
        %v8295 = vsub.s32 1, %v8294
        %v8296 = vrot.slane %v8287, %v8295
        %v8297 = vlaneseq
        %v8298 = vshrl.u32 %v8297, 7
        %v8299 = vsub.s32 2, %v8298
        %v8300 = vrot.slane %v8287, %v8299
        %v8301 = vlaneseq
        %v8302 = vshrl.u32 %v8301, 7
        %v8303 = vsub.s32 3, %v8302
        %v8304 = vrot.slane %v8287, %v8303
        %v8305 = vlaneseq
        %v8306 = vshrl.u32 %v8305, 7
        %v8307 = vsub.s32 4, %v8306
        %v8308 = vrot.slane %v8287, %v8307
        %v8309 = vlaneseq
        %v8310 = vshrl.u32 %v8309, 7
        %v8311 = vsub.s32 5, %v8310
        %v8312 = vrot.slane %v8287, %v8311
        %v8313 = vlaneseq
        %v8314 = vshrl.u32 %v8313, 7
        %v8315 = vsub.s32 6, %v8314
        %v8316 = vrot.slane %v8287, %v8315
        %v8324 = vmul.f32 %v8071, %v8292
        %v8325 = vmul.f32 %v8073, %v8296
        %v8326 = vmul.f32 %v8142, %v8300
        %v8327 = vmul.f32 %v8144, %v8304
        %v8328 = vmul.f32 %v8213, %v8308
        %v8329 = vmul.f32 %v8215, %v8312
        %v8330 = vmul.f32 %v8284, %v8316
        %v8338 = vcombine.low %v8324, %v8325
        %v8339 = vcombine.low %v8326, %v8327
        %v8340 = vcombine.low %v8328, %v8329
        %v8342 = vunpack.c.l.s4 1966171168
        %v8343 = vunpack.c.0.s8 %v8342
        %v8344 = vlaneseq
        %v8345 = vshrl.u32 %v8344, 7
        %v8346 = vsub.s32 %v8343, %v8345
        %v8347 = vrot.slane %v8338, %v8346
        %v8349 = vunpack.c.l.s4 1966171168
        %v8350 = vunpack.c.0.s8 %v8349
        %v8351 = vlaneseq
        %v8352 = vshrl.u32 %v8351, 7
        %v8353 = vsub.s32 %v8350, %v8352
        %v8354 = vrot.slane %v8339, %v8353
        %v8356 = vunpack.c.l.s4 1966171168
        %v8357 = vunpack.c.0.s8 %v8356
        %v8358 = vlaneseq
        %v8359 = vshrl.u32 %v8358, 7
        %v8360 = vsub.s32 %v8357, %v8359
        %v8361 = vrot.slane %v8340, %v8360
        %v8363 = vunpack.c.l.s4 1966171168
        %v8364 = vunpack.c.0.s8 %v8363
        %v8365 = vlaneseq
        %v8366 = vshrl.u32 %v8365, 7
        %v8367 = vsub.s32 %v8364, %v8366
        %v8368 = vrot.slane %v8330, %v8367
        %v8369 = vcombine.low %v8347, %v8354
        %v8370 = vcombine.low %v8361, %v8368
        %v8372 = vunpack.c.l.s4 1966171168
        %v8373 = vunpack.c.0.s8 %v8372
        %v8374 = vlaneseq
        %v8375 = vshrl.u32 %v8374, 7
        %v8376 = vsub.s32 %v8373, %v8375
        %v8377 = vrot.slane %v8369, %v8376
        %v8379 = vunpack.c.l.s4 1966171168
        %v8380 = vunpack.c.0.s8 %v8379
        %v8381 = vlaneseq
        %v8382 = vshrl.u32 %v8381, 7
        %v8383 = vsub.s32 %v8380, %v8382
        %v8384 = vrot.slane %v8370, %v8383
        %v8385 = vcombine.low %v8377, %v8384
        %v8387 = vlaneseq
        %vm8388 = vcmp.ge.s32.totalorder %v8387, 0
        %vm8389 = vcmp.lt.s32.totalorder %v8387, 896
        %vm8390 = vmand %vm8388, %vm8389
        %8391 = vst.msk [vmem:[%s1022] sm:$0x7f] %vm8390, %v8385
        %s8392 = sand.u32 %s493, 1
        %s8393 = scalar_lea.sflag [#allocation4], %s8392
        %s8394 = sand.u32 %s493, 1
        %s8395 = smul.addr %s8394, 128
        %s8396 = scalar_lea.vmem [#allocation28], %s8395
        %p8397 = scmp.lt.s32.totalorder %s55, 1
        %s8398 = scalar_select %p8397, %s55, 1
        %s8399 = smul.addr %s8398, 2
        %s8400 = smul.addr %s8399, 8
        %s8401 = scalar_lea.vmem %s21, %s8400
        %p8402 = scmp.lt.s32.totalorder %s55, 1
        %s8403 = scalar_select %p8402, %s55, 1
        %s8404 = smul.addr %s8403, 8
        %s8405 = scalar_lea.vmem %s22, %s8404
        %s8406 = sand.u32 %s55, 1
        %s8407 = scalar_lea.sflag [#allocation30], %s8406
        %s8408 = sand.u32 %s571, 1
        %s8409 = scalar_lea.vmem [#allocation29], %s8408
        %s8410 = sand.u32 %s55, 1
        %s8411 = scalar_lea.sflag [#allocation30], %s8410
        %s8412 = sand.u32 %s597, 1
        %s8413 = smul.addr %s8412, 7
        %s8414 = scalar_lea.vmem [#allocation31], %s8413
        // Predicated region
        $region165: #{tpu_custom_call.1} parent=99 // pred_check
          %p8415 = pneg %p503
        $region166: #{tpu_custom_call.1} parent=99 // pred_check_branch
          %8417 = sbr.rel (%p8415) target = $region168
        $region167: #{tpu_custom_call.1} parent=99 // pred_region
          %s8419 = ssub.s32 2048, 2048
          %8420 = vsyncadd %s8393, %s8419
          %s8421 = smul.addr %s55, 16
          %s8422 = smul.addr %s8421, 128
          %s8423 = scalar_lea.hbm %s20, %s8422
          %s8424 = sshll.u32 %s8396, 4
          %s8425 = int_to_ptr.vmem [resolvable:$true] %s8424
          %8430 = dma.vmem_to_hbm [thread:$0]  %s8425, 2048, %s8423, %s8393, 128, 128, 8
        $region168: #{tpu_custom_call.1} parent=99 // pred_fallthru
          _
        // Predicated region
        $region169: #{tpu_custom_call.1} parent=99 // pred_check
          %p8431 = pneg %p529
        $region170: #{tpu_custom_call.1} parent=99 // pred_check_branch
          %8433 = sbr.rel (%p8431) target = $region172
        $region171: #{tpu_custom_call.1} parent=99 // pred_region
          _
        $region172: #{tpu_custom_call.1} parent=99 // pred_fallthru
          _
        // Predicated region
        $region173: #{tpu_custom_call.1} parent=99 // pred_check
          %p8434 = pneg %p555
        $region174: #{tpu_custom_call.1} parent=99 // pred_check_branch
          %8436 = sbr.rel (%p8434) target = $region176
        $region175: #{tpu_custom_call.1} parent=99 // pred_region
          _
        $region176: #{tpu_custom_call.1} parent=99 // pred_fallthru
          _
        // Predicated region
        $region177: #{tpu_custom_call.1} parent=99 // pred_check
          %p8437 = pneg %p581
        $region178: #{tpu_custom_call.1} parent=99 // pred_check_branch
          %8439 = sbr.rel (%p8437) target = $region180
        $region179: #{tpu_custom_call.1} parent=99 // pred_region
          %s8441 = ssub.s32 16, 16
          %8442 = vsyncadd %s8407, %s8441
          %s8443 = smul.addr %s55, 16
          %s8444 = scalar_lea.hbm %s23, %s8443
          %s8446 = sshll.u32 %s8409, 4
          %s8447 = int_to_ptr.vmem [resolvable:$true] %s8446
          %8449 = dma.vmem_to_hbm [thread:$0]  %s8447, 16, %s8444, %s8407
        $region180: #{tpu_custom_call.1} parent=99 // pred_fallthru
          _
        // Predicated region
        $region181: #{tpu_custom_call.1} parent=99 // pred_check
          %p8450 = pneg %p607
        $region182: #{tpu_custom_call.1} parent=99 // pred_check_branch
          %8452 = sbr.rel (%p8450) target = $region184
        $region183: #{tpu_custom_call.1} parent=99 // pred_region
          %s8454 = ssub.s32 112, 112
          %8455 = vsyncadd %s8411, %s8454
          %s8456 = smul.addr %s55, 7
          %s8457 = smul.addr %s8456, 16
          %s8458 = scalar_lea.hbm %s24, %s8457
          %s8460 = sshll.u32 %s8414, 4
          %s8461 = int_to_ptr.vmem [resolvable:$true] %s8460
          %8463 = dma.vmem_to_hbm [thread:$0]  %s8461, 112, %s8458, %s8411
        $region184: #{tpu_custom_call.1} parent=99 // pred_fallthru
          _
      $region100: #{tpu_custom_call.1} parent=5 // pred_fallthru
        _
      %p8464 = scmp.le.s32.totalorder 2, %s50
      // Predicated region
      $region185: #{tpu_custom_call.1} parent=5 // pred_check
        %p8465 = pneg %p8464
      $region186: #{tpu_custom_call.1} parent=5 // pred_check_branch
        %8467 = sbr.rel (%p8465) target = $region188
      $region187: #{tpu_custom_call.1} parent=5 // pred_region
        %s8468 = ssub.s32 %s50, 2
        // Predicated region
        $region189: #{tpu_custom_call.1} parent=187 // pred_check
          %p8469 = pneg %p509
        $region190: #{tpu_custom_call.1} parent=187 // pred_check_branch
          %8471 = sbr.rel (%p8469) target = $region192
        $region191: #{tpu_custom_call.1} parent=187 // pred_region
          %s8472 = sand.u32 %s494, 1
          %s8473 = scalar_lea.sflag [#allocation4], %s8472
          %s8474 = sand.u32 %s494, 1
          %s8475 = smul.addr %s8474, 128
          %s8476 = scalar_lea.vmem [#allocation28], %s8475
          %8477 = dma.done %s8473, 2048
        $region192: #{tpu_custom_call.1} parent=187 // pred_fallthru
          _
        // Predicated region
        $region193: #{tpu_custom_call.1} parent=187 // pred_check
          %p8478 = pneg %p535
        $region194: #{tpu_custom_call.1} parent=187 // pred_check_branch
          %8480 = sbr.rel (%p8478) target = $region196
        $region195: #{tpu_custom_call.1} parent=187 // pred_region
          %p8481 = scmp.lt.s32.totalorder %s56, 1
          %s8482 = scalar_select %p8481, %s56, 1
          %s8483 = smul.addr %s8482, 2
          %s8484 = smul.addr %s8483, 8
          %s8485 = scalar_lea.vmem %s21, %s8484
        $region196: #{tpu_custom_call.1} parent=187 // pred_fallthru
          _
        // Predicated region
        $region197: #{tpu_custom_call.1} parent=187 // pred_check
          %p8486 = pneg %p561
        $region198: #{tpu_custom_call.1} parent=187 // pred_check_branch
          %8488 = sbr.rel (%p8486) target = $region200
        $region199: #{tpu_custom_call.1} parent=187 // pred_region
          %p8489 = scmp.lt.s32.totalorder %s56, 1
          %s8490 = scalar_select %p8489, %s56, 1
          %s8491 = smul.addr %s8490, 8
          %s8492 = scalar_lea.vmem %s22, %s8491
        $region200: #{tpu_custom_call.1} parent=187 // pred_fallthru
          _
        // Predicated region
        $region201: #{tpu_custom_call.1} parent=187 // pred_check
          %p8493 = pneg %p587
        $region202: #{tpu_custom_call.1} parent=187 // pred_check_branch
          %8495 = sbr.rel (%p8493) target = $region204
        $region203: #{tpu_custom_call.1} parent=187 // pred_region
          %s8496 = sand.u32 %s56, 1
          %s8497 = scalar_lea.sflag [#allocation30], %s8496
          %s8498 = sand.u32 %s572, 1
          %s8499 = scalar_lea.vmem [#allocation29], %s8498
          %8500 = dma.done %s8497, 16
        $region204: #{tpu_custom_call.1} parent=187 // pred_fallthru
          _
        // Predicated region
        $region205: #{tpu_custom_call.1} parent=187 // pred_check
          %p8501 = pneg %p613
        $region206: #{tpu_custom_call.1} parent=187 // pred_check_branch
          %8503 = sbr.rel (%p8501) target = $region208
        $region207: #{tpu_custom_call.1} parent=187 // pred_region
          %s8504 = sand.u32 %s56, 1
          %s8505 = scalar_lea.sflag [#allocation30], %s8504
          %s8506 = sand.u32 %s598, 1
          %s8507 = smul.addr %s8506, 7
          %s8508 = scalar_lea.vmem [#allocation31], %s8507
          %8509 = dma.done %s8505, 112
        $region208: #{tpu_custom_call.1} parent=187 // pred_fallthru
          _
      $region188: #{tpu_custom_call.1} parent=5 // pred_fallthru
        _
    $region6: #{tpu_custom_call.1} parent=1 // loop_footer
      %s54 = sadd.s32 1, %s50
    $region7: #{tpu_custom_call.1} parent=1 // loop_footer_branch
      %49 = sbr.rel target = $region3
    $region8: #{tpu_custom_call.1} parent=1 // loop_exit
      _
    %8510 = vsyncpa [#allocation3], 1
    %s8511 = scalar_lea.sflag [#allocation3], 1
    %8512 = vsyncpa %s8511, 1
    %8513 = vsyncpa [#allocation6], 1
    %s8514 = scalar_lea.sflag [#allocation6], 1
    %8515 = vsyncpa %s8514, 1
    %8516 = vsyncpa [#allocation9], 1
    %8517 = vsyncpa [#allocation12], 1
    %8518 = vsyncpa [#allocation15], 1
    %8519 = vsyncpa [#allocation18], 1
    %8520 = vsyncpa [#allocation21], 1
    %8521 = vsyncpa [#allocation24], 1
    %8522 = vsyncpa [#allocation27], 1
    %8523 = vsyncpa [#allocation4], 1
    %s8524 = scalar_lea.sflag [#allocation4], 1
    %8525 = vsyncpa %s8524, 1
    %8526 = vsyncpa [#allocation30], 1
    %s8527 = scalar_lea.sflag [#allocation30], 1
    %8528 = vsyncpa %s8527, 1

</llo_original>
